<compile_context>
chip_gen: v6e
topology: v6e:2x2x1
jax: 0.10.0
libtpu: 0.0.40
codegen_flags: <defaults>
</compile_context>

<pallas_src>
import jax
import jax.numpy as jnp
from jax.experimental import pallas as pl
from jax.experimental.pallas import tpu as pltpu


# ----------------------------------------------------------------------------
# kernels
# ----------------------------------------------------------------------------
def _ff_kernel_resident(x_ref, w1_ref, b1_ref, w2_ref, b2_ref, o_ref):
    """One (tm, d_model) row tile of relu(x@w1+b1)@w2+b2 with resident weights.

    x/w1/w2 are bf16 (MXU-native); both dots accumulate in f32.  Bias-add and
    ReLU are done in f32, then the intermediate is cast to bf16 so the second
    (dominant) matmul also runs at bf16 MXU rate.
    """
    h = jnp.dot(x_ref[...], w1_ref[...], preferred_element_type=jnp.float32)
    h = jnp.maximum(h + b1_ref[...], 0.0).astype(jnp.bfloat16)
    o_ref[...] = (
        jnp.dot(h, w2_ref[...], preferred_element_type=jnp.float32) + b2_ref[...]
    ).astype(o_ref.dtype)


def _ff_kernel_ff_tiled(x_ref, w1_ref, b1_ref, w2_ref, b2_ref, o_ref, acc_ref):
    """d_ff-tiled variant: grid = (row tiles, d_ff tiles), f32 VMEM accumulator.

    Per d_ff tile k:  acc += relu(x @ w1[:, k] + b1[k]) @ w2[k, :]
    b2 is added at finalize.  Used when the full weights do not fit the
    per-generation VMEM budget (e.g. large d_ff on v7x's 64 MiB VMEM).
    """
    k = pl.program_id(1)

    @pl.when(k == 0)
    def _():
        acc_ref[...] = jnp.zeros_like(acc_ref)

    h = jnp.dot(x_ref[...], w1_ref[...], preferred_element_type=jnp.float32)
    h = jnp.maximum(h + b1_ref[...], 0.0).astype(jnp.bfloat16)
    acc_ref[...] += jnp.dot(h, w2_ref[...], preferred_element_type=jnp.float32)

    @pl.when(k == pl.num_programs(1) - 1)
    def _():
        o_ref[...] = (acc_ref[...] + b2_ref[...]).astype(o_ref.dtype)


# ----------------------------------------------------------------------------
# helpers
# ----------------------------------------------------------------------------
def _round_up(v, m):
    return -(-v // m) * m


def _vmem_limit_bytes():
    """Generation-aware scoped-VMEM budget (~75% of physical VMEM)."""
    try:
        cap = pltpu.get_tpu_info().vmem_capacity_bytes  # 128 MiB v5e/v6e, 64 MiB v7x
        return max(32 * 1024 * 1024, int(cap) * 3 // 4)
    except Exception:  # conservative fallback if the query is unavailable
        return 48 * 1024 * 1024


# ----------------------------------------------------------------------------
# wrapper
# ----------------------------------------------------------------------------
def feed_forward(x, w1, b1, w2, b2, *, block_m=256, ff_block=None):
    """Fused l2(relu(l1(x))) over arbitrary leading dims.

    * x/w1/w2 fed to the MXU as bf16, f32 accumulation; output in x.dtype.
    * Weights use constant index_maps (VMEM-resident, single-buffered) when
      they fit the per-generation VMEM budget; otherwise (or if ff_block is
      given) a d_ff-tiled accumulator path is used.
    * Row axis is "parallel" so v7x shards the row tiles across both TCs.
    """
    orig_shape = x.shape
    orig_dtype = x.dtype
    d_model = x.shape[-1]
    d_ff = w1.shape[1]

    x2d = x.reshape(-1, d_model).astype(jnp.bfloat16)
    w1b = w1.astype(jnp.bfloat16)
    w2b = w2.astype(jnp.bfloat16)
    b1f = b1.reshape(1, d_ff).astype(jnp.float32)
    b2f = b2.reshape(1, d_model).astype(jnp.float32)
    M = x2d.shape[0]

    # Row tile: multiple of 8 sublanes; 256 aligns with the 2x256^2 v6e/v7x MXU.
    tm = min(block_m, _round_up(M, 8))
    grid_m = pl.cdiv(M, tm)  # ragged last tile handled by Pallas (no pad/slice pass)

    vmem_limit = _vmem_limit_bytes()

    # Rough VMEM need of the resident-weight path: single-buffered bf16 weights,
    # double-buffered x (bf16) / out (f32) tiles, f32 + bf16 copies of the
    # (tm, d_ff) intermediate.
    resident_bytes = (
        2 * d_model * d_ff * 2
        + (d_ff + d_model) * 4
        + 2 * tm * d_model * (2 + 4)
        + tm * d_ff * (4 + 2)
    )
    use_resident = ff_block is None and resident_bytes < int(0.7 * vmem_limit)

    if use_resident:
        # ---------------- fully-resident weights path ----------------
        def run(single_buffer):
            # Invariant operands (constant index_map) only need one buffer;
            # Pallas double-buffers by default, wasting VMEM on v7x (64 MiB).
            kw = dict(pipeline_mode=pl.Buffered(1)) if single_buffer else {}
            in_specs = [
                pl.BlockSpec((tm, d_model), lambda i: (i, 0)),           # x (streamed)
                pl.BlockSpec((d_model, d_ff), lambda i: (0, 0), **kw),   # w1 resident
                pl.BlockSpec((1, d_ff), lambda i: (0, 0), **kw),         # b1 resident
                pl.BlockSpec((d_ff, d_model), lambda i: (0, 0), **kw),   # w2 resident
                pl.BlockSpec((1, d_model), lambda i: (0, 0), **kw),      # b2 resident
            ]
            return pl.pallas_call(
                _ff_kernel_resident,
                out_shape=jax.ShapeDtypeStruct((M, d_model), orig_dtype),
                grid=(grid_m,),
                in_specs=in_specs,
                out_specs=pl.BlockSpec((tm, d_model), lambda i: (i, 0)),
                compiler_params=pltpu.CompilerParams(
                    dimension_semantics=("parallel",),  # v7x: shard rows across TCs
                    vmem_limit_bytes=vmem_limit,
                ),
            )(x2d, w1b, b1f, w2b, b2f)

        try:
            out = run(single_buffer=True)
        except Exception:
            # Older jax without BlockSpec(pipeline_mode=...): default buffering.
            out = run(single_buffer=False)
    else:
        # ---------------- d_ff-tiled accumulator path ----------------
        if ff_block is None:
            ff_block = d_ff
            for cand in (4096, 2048, 1024, 512, 256, 128):
                if d_ff % cand != 0:
                    continue
                need = (
                    2 * (2 * d_model * cand * 2 + cand * 4)   # dbl-buffered w1/b1/w2 tiles
                    + d_model * 4
                    + 2 * tm * d_model * (2 + 4)
                    + tm * cand * (4 + 2)
                    + tm * d_model * 4                         # f32 accumulator
                )
                if need < int(0.7 * vmem_limit):
                    ff_block = cand
                    break
        tf = ff_block
        assert d_ff % tf == 0, "ff_block must divide d_ff"

        out = pl.pallas_call(
            _ff_kernel_ff_tiled,
            out_shape=jax.ShapeDtypeStruct((M, d_model), orig_dtype),
            grid=(grid_m, d_ff // tf),
            in_specs=[
                pl.BlockSpec((tm, d_model), lambda i, k: (i, 0)),
                pl.BlockSpec((d_model, tf), lambda i, k: (0, k)),
                pl.BlockSpec((1, tf), lambda i, k: (0, k)),
                pl.BlockSpec((tf, d_model), lambda i, k: (k, 0)),
                pl.BlockSpec((1, d_model), lambda i, k: (0, 0)),
            ],
            out_specs=pl.BlockSpec((tm, d_model), lambda i, k: (i, 0)),
            scratch_shapes=[pltpu.VMEM((tm, d_model), jnp.float32)],
            compiler_params=pltpu.CompilerParams(
                dimension_semantics=("parallel", "arbitrary"),  # reduction axis last
                vmem_limit_bytes=vmem_limit,
            ),
        )(x2d, w1b, b1f, w2b, b2f)

    return out.reshape(orig_shape)


# ----------------------------------------------------------------------------
# parameter init (matches torch nn.Linear init; w stored as (din, dout) == W.T)
# ----------------------------------------------------------------------------
def init_ff_params(key, d_model, d_ff):
    k1, k2, k3, k4 = jax.random.split(key, 4)
    lim1 = 1.0 / (d_model ** 0.5)
    lim2 = 1.0 / (d_ff ** 0.5)
    w1 = jax.random.uniform(k1, (d_model, d_ff), jnp.float32, -lim1, lim1)
    b1 = jax.random.uniform(k2, (1, d_ff), jnp.float32, -lim1, lim1)
    w2 = jax.random.uniform(k3, (d_ff, d_model), jnp.float32, -lim2, lim2)
    b2 = jax.random.uniform(k4, (1, d_model), jnp.float32, -lim2, lim2)
    return w1, b1, w2, b2


# ----------------------------------------------------------------------------
if __name__ == "__main__":
    # Small but TPU-aligned shapes: d_model/d_ff multiples of 128 (lane-dense),
    # M = 4*512 = 2048 rows -> 8 row tiles of 256 so v7x's two TensorCores each
    # get >=4 pipelined grid steps.
    batch, seq, d_model, d_ff = 4, 512, 256, 1024

    key = jax.random.PRNGKey(0)
    kx, kp = jax.random.split(key)
    x = jax.random.normal(kx, (batch, seq, d_model), jnp.float32)
    w1, b1, w2, b2 = init_ff_params(kp, d_model, d_ff)

    # bf16-matched reference (same casts as the kernel, f32 accumulation).
    x2d = x.reshape(-1, d_model)
    xb, w1b_r, w2b_r = (a.astype(jnp.bfloat16) for a in (x2d, w1, w2))
    h_ref = jnp.maximum(
        jnp.dot(xb, w1b_r, preferred_element_type=jnp.float32) + b1, 0.0
    )
    ref = (
        jnp.dot(h_ref.astype(jnp.bfloat16), w2b_r, preferred_element_type=jnp.float32)
        + b2
    ).reshape(batch, seq, d_model)
    # pure-f32 reference of the original module semantics
    ref_f32 = (jnp.maximum(x2d @ w1 + b1, 0.0) @ w2 + b2).reshape(batch, seq, d_model)

    # Path A: fully-resident bf16 weights (auto-selected at these sizes).
    out = feed_forward(x, w1, b1, w2, b2)
    jax.block_until_ready(out)
    assert out.shape == (batch, seq, d_model)
    assert jnp.allclose(out, ref, atol=1e-2, rtol=1e-2), "mismatch vs bf16 reference"
    assert jnp.allclose(out, ref_f32, atol=6e-2, rtol=6e-2), "mismatch vs f32 reference"

    # Path B: d_ff-tiled accumulator fallback (forced here to exercise it).
    out_tiled = feed_forward(x, w1, b1, w2, b2, ff_block=256)
    jax.block_until_ready(out_tiled)
    assert jnp.allclose(out_tiled, ref, atol=1e-2, rtol=1e-2), "tiled path mismatch"

    print("KERNEL_OK")
</pallas_src>

<mosaic_0001>
module attributes {stable_mosaic.version = 11 : i64} {
  func.func @_ff_kernel_resident(%arg0: i32, %arg1: memref<256x256xbf16, #tpu.memory_space<vmem>>, %arg2: memref<256x1024xbf16, #tpu.memory_space<vmem>>, %arg3: memref<1x1024xf32, #tpu.memory_space<vmem>>, %arg4: memref<1024x256xbf16, #tpu.memory_space<vmem>>, %arg5: memref<1x256xf32, #tpu.memory_space<vmem>>, %arg6: memref<256x256xf32, #tpu.memory_space<vmem>>) attributes {dimension_semantics = [#tpu.dimension_semantics<parallel>], iteration_bounds = array<i64: 8>, scalar_prefetch = 0 : i64, scratch_operands = 0 : i64, tpu.core_type = #tpu.core_type<tc>, window_params = [{transform_indices = @transform_0, window_bounds = array<i64: 256, 256>}, {pipeline_mode = #tpu.pipeline_mode<synchronous>, transform_indices = @transform_1, window_bounds = array<i64: 256, 1024>}, {pipeline_mode = #tpu.pipeline_mode<synchronous>, transform_indices = @transform_2, window_bounds = array<i64: 1, 1024>}, {pipeline_mode = #tpu.pipeline_mode<synchronous>, transform_indices = @transform_3, window_bounds = array<i64: 1024, 256>}, {pipeline_mode = #tpu.pipeline_mode<synchronous>, transform_indices = @transform_4, window_bounds = array<i64: 1, 256>}, {transform_indices = @transform_5, window_bounds = array<i64: 256, 256>}]} {
    %c0 = arith.constant 0 : index
    %c0_0 = arith.constant 0 : index
    %0 = vector.load %arg1[%c0, %c0_0] : memref<256x256xbf16, #tpu.memory_space<vmem>>, vector<256x256xbf16>
    %c0_1 = arith.constant 0 : index
    %c0_2 = arith.constant 0 : index
    %1 = vector.load %arg2[%c0_1, %c0_2] : memref<256x1024xbf16, #tpu.memory_space<vmem>>, vector<256x1024xbf16>
    %cst = arith.constant dense<0.000000e+00> : vector<256x1024xf32>
    %2 = tpu.matmul %0, %1, %cst {dimension_numbers = #tpu.dot_dimension_numbers<[1], [0], [0], [1], [0, 0, 1, 1], [], []>} : vector<256x256xbf16>, vector<256x1024xbf16>, vector<256x1024xf32> -> vector<256x1024xf32>
    %c0_3 = arith.constant 0 : index
    %c0_4 = arith.constant 0 : index
    %3 = vector.load %arg3[%c0_3, %c0_4] : memref<1x1024xf32, #tpu.memory_space<vmem>>, vector<1x1024xf32>
    %4 = vector.broadcast %3 : vector<1x1024xf32> to vector<256x1024xf32>
    %5 = arith.addf %2, %4 : vector<256x1024xf32>
    %cst_5 = arith.constant 0.000000e+00 : f32
    %6 = vector.broadcast %cst_5 : f32 to vector<256x1024xf32>
    %7 = arith.maximumf %5, %6 : vector<256x1024xf32>
    %8 = arith.truncf %7 : vector<256x1024xf32> to vector<256x1024xbf16>
    %c0_6 = arith.constant 0 : index
    %c0_7 = arith.constant 0 : index
    %9 = vector.load %arg4[%c0_6, %c0_7] : memref<1024x256xbf16, #tpu.memory_space<vmem>>, vector<1024x256xbf16>
    %cst_8 = arith.constant dense<0.000000e+00> : vector<256x256xf32>
    %10 = tpu.matmul %8, %9, %cst_8 {dimension_numbers = #tpu.dot_dimension_numbers<[1], [0], [0], [1], [0, 0, 1, 1], [], []>} : vector<256x1024xbf16>, vector<1024x256xbf16>, vector<256x256xf32> -> vector<256x256xf32>
    %c0_9 = arith.constant 0 : index
    %c0_10 = arith.constant 0 : index
    %11 = vector.load %arg5[%c0_9, %c0_10] : memref<1x256xf32, #tpu.memory_space<vmem>>, vector<1x256xf32>
    %12 = vector.broadcast %11 : vector<1x256xf32> to vector<256x256xf32>
    %13 = arith.addf %10, %12 : vector<256x256xf32>
    %c0_11 = arith.constant 0 : index
    %c0_12 = arith.constant 0 : index
    %14 = vector.load %arg6[%c0_11, %c0_12] : memref<256x256xf32, #tpu.memory_space<vmem>>, vector<256x256xf32>
    tpu.vector_store %arg6[%c0_11, %c0_12], %13 {strides = array<i32>} : memref<256x256xf32, #tpu.memory_space<vmem>>, vector<256x256xf32>,
    return
  }
  func.func @transform_0(%arg0: i32) -> (i32, i32) {
    %c0_i32 = arith.constant 0 : i32
    %c0_i32_0 = arith.constant 0 : i32
    return %arg0, %c0_i32 : i32, i32
  }
  func.func @transform_1(%arg0: i32) -> (i32, i32) {
    %c0_i32 = arith.constant 0 : i32
    %c0_i32_0 = arith.constant 0 : i32
    %c0_i32_1 = arith.constant 0 : i32
    return %c0_i32, %c0_i32_0 : i32, i32
  }
  func.func @transform_2(%arg0: i32) -> (i32, i32) {
    %c0_i32 = arith.constant 0 : i32
    %c0_i32_0 = arith.constant 0 : i32
    %c0_i32_1 = arith.constant 0 : i32
    return %c0_i32, %c0_i32_0 : i32, i32
  }
  func.func @transform_3(%arg0: i32) -> (i32, i32) {
    %c0_i32 = arith.constant 0 : i32
    %c0_i32_0 = arith.constant 0 : i32
    %c0_i32_1 = arith.constant 0 : i32
    return %c0_i32, %c0_i32_0 : i32, i32
  }
  func.func @transform_4(%arg0: i32) -> (i32, i32) {
    %c0_i32 = arith.constant 0 : i32
    %c0_i32_0 = arith.constant 0 : i32
    %c0_i32_1 = arith.constant 0 : i32
    return %c0_i32, %c0_i32_0 : i32, i32
  }
  func.func @transform_5(%arg0: i32) -> (i32, i32) {
    %c0_i32 = arith.constant 0 : i32
    %c0_i32_0 = arith.constant 0 : i32
    return %arg0, %c0_i32 : i32, i32
  }
}

module attributes {stable_mosaic.version = 11 : i64} {
  func.func @_ff_kernel_resident(%arg0: i32, %arg1: memref<256x256xbf16, #tpu.memory_space<vmem>>, %arg2: memref<256x1024xbf16, #tpu.memory_space<vmem>>, %arg3: memref<1x1024xf32, #tpu.memory_space<vmem>>, %arg4: memref<1024x256xbf16, #tpu.memory_space<vmem>>, %arg5: memref<1x256xf32, #tpu.memory_space<vmem>>, %arg6: memref<256x256xf32, #tpu.memory_space<vmem>>) attributes {dimension_semantics = [#tpu.dimension_semantics<parallel>], iteration_bounds = array<i64: 8>, scalar_prefetch = 0 : i64, scratch_operands = 0 : i64, tpu.core_type = #tpu.core_type<tc>, window_params = [{transform_indices = @transform_0, window_bounds = array<i64: 256, 256>}, {pipeline_mode = #tpu.pipeline_mode<synchronous>, transform_indices = @transform_1, window_bounds = array<i64: 256, 1024>}, {pipeline_mode = #tpu.pipeline_mode<synchronous>, transform_indices = @transform_2, window_bounds = array<i64: 1, 1024>}, {pipeline_mode = #tpu.pipeline_mode<synchronous>, transform_indices = @transform_3, window_bounds = array<i64: 1024, 256>}, {pipeline_mode = #tpu.pipeline_mode<synchronous>, transform_indices = @transform_4, window_bounds = array<i64: 1, 256>}, {transform_indices = @transform_5, window_bounds = array<i64: 256, 256>}]} {
    %c0 = arith.constant 0 : index
    %c0_0 = arith.constant 0 : index
    %0 = vector.load %arg1[%c0, %c0_0] : memref<256x256xbf16, #tpu.memory_space<vmem>>, vector<256x256xbf16>
    %c0_1 = arith.constant 0 : index
    %c0_2 = arith.constant 0 : index
    %1 = vector.load %arg2[%c0_1, %c0_2] : memref<256x1024xbf16, #tpu.memory_space<vmem>>, vector<256x1024xbf16>
    %cst = arith.constant dense<0.000000e+00> : vector<256x1024xf32>
    %2 = tpu.matmul %0, %1, %cst {dimension_numbers = #tpu.dot_dimension_numbers<[1], [0], [0], [1], [0, 0, 1, 1], [], []>} : vector<256x256xbf16>, vector<256x1024xbf16>, vector<256x1024xf32> -> vector<256x1024xf32>
    %c0_3 = arith.constant 0 : index
    %c0_4 = arith.constant 0 : index
    %3 = vector.load %arg3[%c0_3, %c0_4] : memref<1x1024xf32, #tpu.memory_space<vmem>>, vector<1x1024xf32>
    %4 = vector.broadcast %3 : vector<1x1024xf32> to vector<256x1024xf32>
    %5 = arith.addf %2, %4 : vector<256x1024xf32>
    %cst_5 = arith.constant 0.000000e+00 : f32
    %6 = vector.broadcast %cst_5 : f32 to vector<256x1024xf32>
    %7 = arith.maximumf %5, %6 : vector<256x1024xf32>
    %8 = arith.truncf %7 : vector<256x1024xf32> to vector<256x1024xbf16>
    %c0_6 = arith.constant 0 : index
    %c0_7 = arith.constant 0 : index
    %9 = vector.load %arg4[%c0_6, %c0_7] : memref<1024x256xbf16, #tpu.memory_space<vmem>>, vector<1024x256xbf16>
    %cst_8 = arith.constant dense<0.000000e+00> : vector<256x256xf32>
    %10 = tpu.matmul %8, %9, %cst_8 {dimension_numbers = #tpu.dot_dimension_numbers<[1], [0], [0], [1], [0, 0, 1, 1], [], []>} : vector<256x1024xbf16>, vector<1024x256xbf16>, vector<256x256xf32> -> vector<256x256xf32>
    %c0_9 = arith.constant 0 : index
    %c0_10 = arith.constant 0 : index
    %11 = vector.load %arg5[%c0_9, %c0_10] : memref<1x256xf32, #tpu.memory_space<vmem>>, vector<1x256xf32>
    %12 = vector.broadcast %11 : vector<1x256xf32> to vector<256x256xf32>
    %13 = arith.addf %10, %12 : vector<256x256xf32>
    %c0_11 = arith.constant 0 : index
    %c0_12 = arith.constant 0 : index
    %14 = vector.load %arg6[%c0_11, %c0_12] : memref<256x256xf32, #tpu.memory_space<vmem>>, vector<256x256xf32>
    tpu.vector_store %arg6[%c0_11, %c0_12], %13 {strides = array<i32>} : memref<256x256xf32, #tpu.memory_space<vmem>>, vector<256x256xf32>,
    return
  }
  func.func @transform_0(%arg0: i32) -> (i32, i32) {
    %c0_i32 = arith.constant 0 : i32
    %c0_i32_0 = arith.constant 0 : i32
    return %arg0, %c0_i32 : i32, i32
  }
  func.func @transform_1(%arg0: i32) -> (i32, i32) {
    %c0_i32 = arith.constant 0 : i32
    %c0_i32_0 = arith.constant 0 : i32
    %c0_i32_1 = arith.constant 0 : i32
    return %c0_i32, %c0_i32_0 : i32, i32
  }
  func.func @transform_2(%arg0: i32) -> (i32, i32) {
    %c0_i32 = arith.constant 0 : i32
    %c0_i32_0 = arith.constant 0 : i32
    %c0_i32_1 = arith.constant 0 : i32
    return %c0_i32, %c0_i32_0 : i32, i32
  }
  func.func @transform_3(%arg0: i32) -> (i32, i32) {
    %c0_i32 = arith.constant 0 : i32
    %c0_i32_0 = arith.constant 0 : i32
    %c0_i32_1 = arith.constant 0 : i32
    return %c0_i32, %c0_i32_0 : i32, i32
  }
  func.func @transform_4(%arg0: i32) -> (i32, i32) {
    %c0_i32 = arith.constant 0 : i32
    %c0_i32_0 = arith.constant 0 : i32
    %c0_i32_1 = arith.constant 0 : i32
    return %c0_i32, %c0_i32_0 : i32, i32
  }
  func.func @transform_5(%arg0: i32) -> (i32, i32) {
    %c0_i32 = arith.constant 0 : i32
    %c0_i32_0 = arith.constant 0 : i32
    return %arg0, %c0_i32 : i32, i32
  }
}

</mosaic_0001>

<llo_original>
// kernel: tpu_custom_call.1
$region0: #{tpu_custom_call.1}
  #allocation0 [shape = 'u32[]', space=smem, size = 0x4, offset = 0x4, fixed_abs, tag = 'smem constant byte address 0x4 - core index']
  #allocation1 [shape = 'u32[144,128]{1,0:T(1,128)}', space=vmem, size = 0x12000, scoped, tag = 'internal scratch']
  %s0 = inlined_call_operand.hbm [shape: bf16[2048,256], index: 0, kind: input, shape index: {}]
  %s1 = inlined_call_operand.hbm [shape: bf16[256,1024], index: 1, kind: input, shape index: {}]
  %s2 = inlined_call_operand.hbm [shape: f32[1,1024], index: 2, kind: input, shape index: {}]
  %s3 = inlined_call_operand.hbm [shape: bf16[1024,256], index: 3, kind: input, shape index: {}]
  %s4 = inlined_call_operand.hbm [shape: f32[1,256], index: 4, kind: input, shape index: {}]
  %s5 = inlined_call_operand.hbm [shape: f32[2048,256], index: 5, kind: output, shape index: {}]
  %s6 = sld [smem:[#allocation0]]
  $region73: #{tpu_custom_call.1} parent=0
    _
  %s8 = ssub.s32 1, %s6
  %s9 = scalar_select 0, %s8, %s6
  $region1: #{tpu_custom_call.1} parent=0
    #allocation2 [shape = 'u8[262144]{0}', space=vmem, size = 0x40000, scoped, tag = 'input window, operand 0']
    #allocation3 [shape = 's32[2]{0}', space=sflag, size = 0x8, scoped, tag = 'scoped memory for tpu_custom_call.1']
    #allocation4 [shape = 's32[2]{0}', space=sflag, size = 0x8, scoped, tag = 'scoped memory for tpu_custom_call.1']
    #allocation5 [shape = 'u8[524288]{0}', space=vmem, size = 0x80000, scoped, tag = 'input window, operand 1, single buffered']
    #allocation6 [shape = 's32[1]{0}', space=sflag, size = 0x4, scoped, tag = 'scoped memory for tpu_custom_call.1']
    #allocation7 [shape = 'u8[4096]{0}', space=vmem, size = 0x1000, scoped, tag = 'input window, operand 2, single buffered']
    #allocation8 [shape = 'u8[524288]{0}', space=vmem, size = 0x80000, scoped, tag = 'input window, operand 3, single buffered']
    #allocation9 [shape = 's32[1]{0}', space=sflag, size = 0x4, scoped, tag = 'scoped memory for tpu_custom_call.1']
    #allocation10 [shape = 'u8[1024]{0}', space=vmem, size = 0x400, scoped, tag = 'input window, operand 4, single buffered']
    #allocation11 [shape = 'u8[524288]{0}', space=vmem, size = 0x80000, scoped, tag = 'output window, operand 0']
    %10 = vsyncpa [#allocation3], 0
    %s11 = scalar_lea.sflag [#allocation3], 1
    %12 = vsyncpa %s11, 0
    %13 = vsyncpa [#allocation6], 0
    %14 = vsyncpa [#allocation9], 0
    %15 = vsyncpa [#allocation4], 0
    %s16 = scalar_lea.sflag [#allocation4], 1
    %17 = vsyncpa %s16, 0
    loop: start=0, step=1, limit=10
    $region2: #{tpu_custom_call.1} parent=1 // loop_pre_header
      _
    $region3: #{tpu_custom_call.1} parent=1 // loop_header
      %s19 = sphi 0, %s23
      %p20 = scmp.ge.s32.totalorder %s19, 10
      %s29 = sphi 0, %s31
      %s32 = sphi 0, %s29
      %s33 = sphi 0, %s32
      %s49 = sphi 0, %s33
      %s53 = sphi 0, %s53
      %s55 = sphi 0, %s53
      %s56 = sphi 0, %s55
      %s70 = sphi 0, %s56
      %s74 = sphi 0, %s74
      %s76 = sphi 0, %s74
      %s77 = sphi 0, %s76
      %s91 = sphi 0, %s77
      %s95 = sphi 0, %s95
      %s97 = sphi 0, %s95
      %s98 = sphi 0, %s97
      %s112 = sphi 0, %s98
      %s116 = sphi 0, %s116
      %s118 = sphi 0, %s116
      %s119 = sphi 0, %s118
      %s133 = sphi 0, %s119
      %s139 = sphi 0, %s141
      %s142 = sphi 0, %s139
      %s143 = sphi 0, %s142
      %s159 = sphi 0, %s143
    $region4: #{tpu_custom_call.1} parent=1 // loop_header_branch
      %22 = sbr.rel (%p20) target = $region8
    $region5: #{tpu_custom_call.1} parent=1 // loop_body
      %s24 = ssub.s32 %s19, 1
      %s25 = ssub.s32 %s19, 2
      %s26 = sadd.s32 %s19, 1
      %s27 = ssub.s32 %s19, %s26
      %p28 = scmp.eq.s32.totalorder %s27, 0
      %s30 = sadd.s32 %s29, 1
      %s31 = scalar_select %p28, %s29, %s30
      %p34 = pneg %p28
      %p35 = scmp.eq.s32.totalorder %s19, 7
      %p36 = por %p34, %p35
      %p37 = scmp.ne.s32.totalorder %s29, %s32
      %p38 = scmp.eq.s32.totalorder %s19, 0
      %p39 = por %p37, %p38
      %p40 = scmp.ne.s32.totalorder %s29, %s32
      %p41 = scmp.eq.s32.totalorder %s24, 7
      %p42 = por %p40, %p41
      %p43 = scmp.ne.s32.totalorder %s32, %s33
      %p44 = scmp.eq.s32.totalorder %s24, 0
      %p45 = por %p43, %p44
      %p46 = scmp.ne.s32.totalorder %s32, %s33
      %p47 = scmp.eq.s32.totalorder %s25, 7
      %p48 = por %p46, %p47
      %p50 = scmp.ne.s32.totalorder %s33, %s49
      %p51 = scmp.eq.s32.totalorder %s25, 0
      %p52 = por %p50, %p51
      %s54 = sadd.s32 %s53, 1
      %p57 = scmp.eq.s32.totalorder %s19, 7
      %p58 = scmp.ne.s32.totalorder %s53, %s55
      %p59 = scmp.eq.s32.totalorder %s19, 0
      %p60 = por %p58, %p59
      %p61 = scmp.ne.s32.totalorder %s53, %s55
      %p62 = scmp.eq.s32.totalorder %s24, 7
      %p63 = por %p61, %p62
      %p64 = scmp.ne.s32.totalorder %s55, %s56
      %p65 = scmp.eq.s32.totalorder %s24, 0
      %p66 = por %p64, %p65
      %p67 = scmp.ne.s32.totalorder %s55, %s56
      %p68 = scmp.eq.s32.totalorder %s25, 7
      %p69 = por %p67, %p68
      %p71 = scmp.ne.s32.totalorder %s56, %s70
      %p72 = scmp.eq.s32.totalorder %s25, 0
      %p73 = por %p71, %p72
      %s75 = sadd.s32 %s74, 1
      %p78 = scmp.eq.s32.totalorder %s19, 7
      %p79 = scmp.ne.s32.totalorder %s74, %s76
      %p80 = scmp.eq.s32.totalorder %s19, 0
      %p81 = por %p79, %p80
      %p82 = scmp.ne.s32.totalorder %s74, %s76
      %p83 = scmp.eq.s32.totalorder %s24, 7
      %p84 = por %p82, %p83
      %p85 = scmp.ne.s32.totalorder %s76, %s77
      %p86 = scmp.eq.s32.totalorder %s24, 0
      %p87 = por %p85, %p86
      %p88 = scmp.ne.s32.totalorder %s76, %s77
      %p89 = scmp.eq.s32.totalorder %s25, 7
      %p90 = por %p88, %p89
      %p92 = scmp.ne.s32.totalorder %s77, %s91
      %p93 = scmp.eq.s32.totalorder %s25, 0
      %p94 = por %p92, %p93
      %s96 = sadd.s32 %s95, 1
      %p99 = scmp.eq.s32.totalorder %s19, 7
      %p100 = scmp.ne.s32.totalorder %s95, %s97
      %p101 = scmp.eq.s32.totalorder %s19, 0
      %p102 = por %p100, %p101
      %p103 = scmp.ne.s32.totalorder %s95, %s97
      %p104 = scmp.eq.s32.totalorder %s24, 7
      %p105 = por %p103, %p104
      %p106 = scmp.ne.s32.totalorder %s97, %s98
      %p107 = scmp.eq.s32.totalorder %s24, 0
      %p108 = por %p106, %p107
      %p109 = scmp.ne.s32.totalorder %s97, %s98
      %p110 = scmp.eq.s32.totalorder %s25, 7
      %p111 = por %p109, %p110
      %p113 = scmp.ne.s32.totalorder %s98, %s112
      %p114 = scmp.eq.s32.totalorder %s25, 0
      %p115 = por %p113, %p114
      %s117 = sadd.s32 %s116, 1
      %p120 = scmp.eq.s32.totalorder %s19, 7
      %p121 = scmp.ne.s32.totalorder %s116, %s118
      %p122 = scmp.eq.s32.totalorder %s19, 0
      %p123 = por %p121, %p122
      %p124 = scmp.ne.s32.totalorder %s116, %s118
      %p125 = scmp.eq.s32.totalorder %s24, 7
      %p126 = por %p124, %p125
      %p127 = scmp.ne.s32.totalorder %s118, %s119
      %p128 = scmp.eq.s32.totalorder %s24, 0
      %p129 = por %p127, %p128
      %p130 = scmp.ne.s32.totalorder %s118, %s119
      %p131 = scmp.eq.s32.totalorder %s25, 7
      %p132 = por %p130, %p131
      %p134 = scmp.ne.s32.totalorder %s119, %s133
      %p135 = scmp.eq.s32.totalorder %s25, 0
      %p136 = por %p134, %p135
      %s137 = ssub.s32 %s19, %s26
      %p138 = scmp.eq.s32.totalorder %s137, 0
      %s140 = sadd.s32 %s139, 1
      %s141 = scalar_select %p138, %s139, %s140
      %p144 = pneg %p138
      %p145 = scmp.eq.s32.totalorder %s19, 7
      %p146 = por %p144, %p145
      %p147 = scmp.ne.s32.totalorder %s139, %s142
      %p148 = scmp.eq.s32.totalorder %s19, 0
      %p149 = por %p147, %p148
      %p150 = scmp.ne.s32.totalorder %s139, %s142
      %p151 = scmp.eq.s32.totalorder %s24, 7
      %p152 = por %p150, %p151
      %p153 = scmp.ne.s32.totalorder %s142, %s143
      %p154 = scmp.eq.s32.totalorder %s24, 0
      %p155 = por %p153, %p154
      %p156 = scmp.ne.s32.totalorder %s142, %s143
      %p157 = scmp.eq.s32.totalorder %s25, 7
      %p158 = por %p156, %p157
      %p160 = scmp.ne.s32.totalorder %s143, %s159
      %p161 = scmp.eq.s32.totalorder %s25, 0
      %p162 = por %p160, %p161
      %p163 = scmp.le.s32.totalorder 1, %s19
      %p164 = scmp.lt.s32.totalorder %s19, 9
      %p165 = pnand %p163, %p164
      %p166 = pneg %p165
      // Predicated region
      $region9: #{tpu_custom_call.1} parent=5 // pred_check
        _
      $region10: #{tpu_custom_call.1} parent=5 // pred_check_branch
        %168 = sbr.rel (%p165) target = $region12
      $region11: #{tpu_custom_call.1} parent=5 // pred_region
        %s169 = ssub.s32 %s19, 1
        // Predicated region
        $region13: #{tpu_custom_call.1} parent=11 // pred_check
          %p170 = pneg %p66
        $region14: #{tpu_custom_call.1} parent=11 // pred_check_branch
          %172 = sbr.rel (%p170) target = $region16
        $region15: #{tpu_custom_call.1} parent=11 // pred_region
          %s174 = ssub.s32 16384, 16384
          %175 = vsyncadd [#allocation6], %s174
          %s176 = sshll.u32 [#allocation5], 4
          %s177 = int_to_ptr.vmem [resolvable:$true] %s176
          %182 = dma.hbm_to_vmem [thread:$0]  %s1, 16384, %s177, [#allocation6], 512, 512, 32
        $region16: #{tpu_custom_call.1} parent=11 // pred_fallthru
          _
        // Predicated region
        $region17: #{tpu_custom_call.1} parent=11 // pred_check
          %p183 = pneg %p87
        $region18: #{tpu_custom_call.1} parent=11 // pred_check_branch
          %185 = sbr.rel (%p183) target = $region20
        $region19: #{tpu_custom_call.1} parent=11 // pred_region
          %s187 = ssub.s32 128, 128
          %188 = vsyncadd [#allocation6], %s187
          %s190 = sshll.u32 [#allocation7], 4
          %s191 = int_to_ptr.vmem [resolvable:$true] %s190
          %193 = dma.hbm_to_vmem [thread:$0]  %s2, 128, %s191, [#allocation6]
        $region20: #{tpu_custom_call.1} parent=11 // pred_fallthru
          _
        // Predicated region
        $region21: #{tpu_custom_call.1} parent=11 // pred_check
          %p194 = pneg %p108
        $region22: #{tpu_custom_call.1} parent=11 // pred_check_branch
          %196 = sbr.rel (%p194) target = $region24
        $region23: #{tpu_custom_call.1} parent=11 // pred_region
          %s198 = ssub.s32 16384, 16384
          %199 = vsyncadd [#allocation9], %s198
          %s200 = sshll.u32 [#allocation8], 4
          %s201 = int_to_ptr.vmem [resolvable:$true] %s200
          %206 = dma.hbm_to_vmem [thread:$0]  %s3, 16384, %s201, [#allocation9], 128, 128, 8
        $region24: #{tpu_custom_call.1} parent=11 // pred_fallthru
          _
        // Predicated region
        $region25: #{tpu_custom_call.1} parent=11 // pred_check
          %p207 = pneg %p129
        $region26: #{tpu_custom_call.1} parent=11 // pred_check_branch
          %209 = sbr.rel (%p207) target = $region28
        $region27: #{tpu_custom_call.1} parent=11 // pred_region
          %s211 = ssub.s32 32, 32
          %212 = vsyncadd [#allocation9], %s211
          %s214 = sshll.u32 [#allocation10], 4
          %s215 = int_to_ptr.vmem [resolvable:$true] %s214
          %217 = dma.hbm_to_vmem [thread:$0]  %s4, 32, %s215, [#allocation9]
        $region28: #{tpu_custom_call.1} parent=11 // pred_fallthru
          _
      $region12: #{tpu_custom_call.1} parent=5 // pred_fallthru
        _
      %p218 = scmp.lt.s32.totalorder %s19, 8
      // Predicated region
      $region29: #{tpu_custom_call.1} parent=5 // pred_check
        %p219 = pneg %p218
      $region30: #{tpu_custom_call.1} parent=5 // pred_check_branch
        %221 = sbr.rel (%p219) target = $region32
      $region31: #{tpu_custom_call.1} parent=5 // pred_region
        // Predicated region
        $region33: #{tpu_custom_call.1} parent=31 // pred_check
          %p222 = pneg %p39
        $region34: #{tpu_custom_call.1} parent=31 // pred_check_branch
          %224 = sbr.rel (%p222) target = $region36
        $region35: #{tpu_custom_call.1} parent=31 // pred_region
          %s225 = sand.u32 %s29, 1
          %s226 = scalar_lea.sflag [#allocation3], %s225
          %s227 = sand.u32 %s29, 1
          %s228 = smul.addr %s227, 256
          %s229 = scalar_lea.vmem [#allocation2], %s228
          %s230 = smul.u32 32, %s19
          %s232 = ssub.s32 4096, 4096
          %233 = vsyncadd %s226, %s232
          %s234 = smul.addr %s230, 2
          %s235 = smul.addr %s234, 64
          %s236 = scalar_lea.hbm %s0, %s235
          %s237 = sshll.u32 %s229, 4
          %s238 = int_to_ptr.vmem [resolvable:$true] %s237
          %243 = dma.hbm_to_vmem [thread:$0]  %s236, 4096, %s238, %s226, 128, 128, 8
        $region36: #{tpu_custom_call.1} parent=31 // pred_fallthru
          _
      $region32: #{tpu_custom_call.1} parent=5 // pred_fallthru
        _
      %p244 = scmp.le.s32.totalorder 1, %s19
      %p245 = scmp.lt.s32.totalorder %s19, 9
      %p246 = pnand %p244, %p245
      %p247 = pneg %p246
      // Predicated region
      $region37: #{tpu_custom_call.1} parent=5 // pred_check
        _
      $region38: #{tpu_custom_call.1} parent=5 // pred_check_branch
        %249 = sbr.rel (%p246) target = $region40
      $region39: #{tpu_custom_call.1} parent=5 // pred_region
        %s250 = ssub.s32 %s19, 1
        %s251 = sand.u32 %s32, 1
        %s252 = scalar_lea.sflag [#allocation3], %s251
        %s253 = sand.u32 %s32, 1
        %s254 = smul.addr %s253, 256
        %s255 = scalar_lea.vmem [#allocation2], %s254
        // Predicated region
        $region41: #{tpu_custom_call.1} parent=39 // pred_check
          %p256 = pneg %p45
        $region42: #{tpu_custom_call.1} parent=39 // pred_check_branch
          %258 = sbr.rel (%p256) target = $region44
        $region43: #{tpu_custom_call.1} parent=39 // pred_region
          %259 = dma.done %s252, 4096
        $region44: #{tpu_custom_call.1} parent=39 // pred_fallthru
          _
        // Predicated region
        $region45: #{tpu_custom_call.1} parent=39 // pred_check
          %p260 = pneg %p66
        $region46: #{tpu_custom_call.1} parent=39 // pred_check_branch
          %262 = sbr.rel (%p260) target = $region48
        $region47: #{tpu_custom_call.1} parent=39 // pred_region
          %263 = dma.done [#allocation6], 16384
        $region48: #{tpu_custom_call.1} parent=39 // pred_fallthru
          _
        // Predicated region
        $region49: #{tpu_custom_call.1} parent=39 // pred_check
          %p264 = pneg %p87
        $region50: #{tpu_custom_call.1} parent=39 // pred_check_branch
          %266 = sbr.rel (%p264) target = $region52
        $region51: #{tpu_custom_call.1} parent=39 // pred_region
          %267 = dma.done [#allocation6], 128
        $region52: #{tpu_custom_call.1} parent=39 // pred_fallthru
          _
        // Predicated region
        $region53: #{tpu_custom_call.1} parent=39 // pred_check
          %p268 = pneg %p108
        $region54: #{tpu_custom_call.1} parent=39 // pred_check_branch
          %270 = sbr.rel (%p268) target = $region56
        $region55: #{tpu_custom_call.1} parent=39 // pred_region
          %271 = dma.done [#allocation9], 16384
        $region56: #{tpu_custom_call.1} parent=39 // pred_fallthru
          _
        // Predicated region
        $region57: #{tpu_custom_call.1} parent=39 // pred_check
          %p272 = pneg %p129
        $region58: #{tpu_custom_call.1} parent=39 // pred_check_branch
          %274 = sbr.rel (%p272) target = $region60
        $region59: #{tpu_custom_call.1} parent=39 // pred_region
          %275 = dma.done [#allocation9], 32
        $region60: #{tpu_custom_call.1} parent=39 // pred_fallthru
          _
        %s276 = sand.u32 %s32, 1
        %s277 = scalar_lea.sflag [#allocation3], %s276
        %s278 = sand.u32 %s32, 1
        %s279 = smul.addr %s278, 256
        %s280 = scalar_lea.vmem [#allocation2], %s279
        %p281 = pneg %p45
        %p282 = pneg %p42
        %p283 = pneg %p66
        %p284 = pneg %p63
        %p285 = pneg %p87
        %p286 = pneg %p84
        %p287 = pneg %p108
        %p288 = pneg %p105
        %p289 = pneg %p129
        %p290 = pneg %p126
        %p291 = pneg %p155
        %p292 = pneg %p152
        %s293 = sand.u32 %s142, 1
        %s294 = scalar_lea.sflag [#allocation4], %s293
        %s295 = sand.u32 %s142, 1
        %s296 = smul.addr %s295, 512
        %s297 = scalar_lea.vmem [#allocation11], %s296
        %s298 = smul.u32 32, %s24
        %s299 = smul.u32 32, %s24
        %v300 = vld [vmem:[%s255] sm:$0xff]
        %v301 = vld [vmem:[%s255 + $0x8] sm:$0xff]
        %v302 = vld [vmem:[%s255 + $0x10] sm:$0xff]
        %v303 = vld [vmem:[%s255 + $0x18] sm:$0xff]
        %v304 = vld [vmem:[%s255 + $0x20] sm:$0xff]
        %v305 = vld [vmem:[%s255 + $0x28] sm:$0xff]
        %v306 = vld [vmem:[%s255 + $0x30] sm:$0xff]
        %v307 = vld [vmem:[%s255 + $0x38] sm:$0xff]
        %v308 = vld [vmem:[%s255 + $0x40] sm:$0xff]
        %v309 = vld [vmem:[%s255 + $0x48] sm:$0xff]
        %v310 = vld [vmem:[%s255 + $0x50] sm:$0xff]
        %v311 = vld [vmem:[%s255 + $0x58] sm:$0xff]
        %v312 = vld [vmem:[%s255 + $0x60] sm:$0xff]
        %v313 = vld [vmem:[%s255 + $0x68] sm:$0xff]
        %v314 = vld [vmem:[%s255 + $0x70] sm:$0xff]
        %v315 = vld [vmem:[%s255 + $0x78] sm:$0xff]
        %v316 = vld [vmem:[%s255 + $0x80] sm:$0xff]
        %v317 = vld [vmem:[%s255 + $0x88] sm:$0xff]
        %v318 = vld [vmem:[%s255 + $0x90] sm:$0xff]
        %v319 = vld [vmem:[%s255 + $0x98] sm:$0xff]
        %v320 = vld [vmem:[%s255 + $0xa0] sm:$0xff]
        %v321 = vld [vmem:[%s255 + $0xa8] sm:$0xff]
        %v322 = vld [vmem:[%s255 + $0xb0] sm:$0xff]
        %v323 = vld [vmem:[%s255 + $0xb8] sm:$0xff]
        %v324 = vld [vmem:[%s255 + $0xc0] sm:$0xff]
        %v325 = vld [vmem:[%s255 + $0xc8] sm:$0xff]
        %v326 = vld [vmem:[%s255 + $0xd0] sm:$0xff]
        %v327 = vld [vmem:[%s255 + $0xd8] sm:$0xff]
        %v328 = vld [vmem:[%s255 + $0xe0] sm:$0xff]
        %v329 = vld [vmem:[%s255 + $0xe8] sm:$0xff]
        %v330 = vld [vmem:[%s255 + $0xf0] sm:$0xff]
        %v331 = vld [vmem:[%s255 + $0xf8] sm:$0xff]
        %v332 = vld [vmem:[#allocation5] sm:$0xff]
        %v333 = vld [vmem:[#allocation5 + $0x8] sm:$0xff]
        %v334 = vld [vmem:[#allocation5 + $0x10] sm:$0xff]
        %v335 = vld [vmem:[#allocation5 + $0x18] sm:$0xff]
        %v336 = vld [vmem:[#allocation5 + $0x20] sm:$0xff]
        %v337 = vld [vmem:[#allocation5 + $0x28] sm:$0xff]
        %v338 = vld [vmem:[#allocation5 + $0x30] sm:$0xff]
        %v339 = vld [vmem:[#allocation5 + $0x38] sm:$0xff]
        %v340 = vld [vmem:[#allocation5 + $0x40] sm:$0xff]
        %v341 = vld [vmem:[#allocation5 + $0x48] sm:$0xff]
        %v342 = vld [vmem:[#allocation5 + $0x50] sm:$0xff]
        %v343 = vld [vmem:[#allocation5 + $0x58] sm:$0xff]
        %v344 = vld [vmem:[#allocation5 + $0x60] sm:$0xff]
        %v345 = vld [vmem:[#allocation5 + $0x68] sm:$0xff]
        %v346 = vld [vmem:[#allocation5 + $0x70] sm:$0xff]
        %v347 = vld [vmem:[#allocation5 + $0x78] sm:$0xff]
        %v348 = vld [vmem:[#allocation5 + $0x80] sm:$0xff]
        %v349 = vld [vmem:[#allocation5 + $0x88] sm:$0xff]
        %v350 = vld [vmem:[#allocation5 + $0x90] sm:$0xff]
        %v351 = vld [vmem:[#allocation5 + $0x98] sm:$0xff]
        %v352 = vld [vmem:[#allocation5 + $0xa0] sm:$0xff]
        %v353 = vld [vmem:[#allocation5 + $0xa8] sm:$0xff]
        %v354 = vld [vmem:[#allocation5 + $0xb0] sm:$0xff]
        %v355 = vld [vmem:[#allocation5 + $0xb8] sm:$0xff]
        %v356 = vld [vmem:[#allocation5 + $0xc0] sm:$0xff]
        %v357 = vld [vmem:[#allocation5 + $0xc8] sm:$0xff]
        %v358 = vld [vmem:[#allocation5 + $0xd0] sm:$0xff]
        %v359 = vld [vmem:[#allocation5 + $0xd8] sm:$0xff]
        %v360 = vld [vmem:[#allocation5 + $0xe0] sm:$0xff]
        %v361 = vld [vmem:[#allocation5 + $0xe8] sm:$0xff]
        %v362 = vld [vmem:[#allocation5 + $0xf0] sm:$0xff]
        %v363 = vld [vmem:[#allocation5 + $0xf8] sm:$0xff]
        %v364 = vld [vmem:[#allocation5 + $0x100] sm:$0xff]
        %v365 = vld [vmem:[#allocation5 + $0x108] sm:$0xff]
        %v366 = vld [vmem:[#allocation5 + $0x110] sm:$0xff]
        %v367 = vld [vmem:[#allocation5 + $0x118] sm:$0xff]
        %v368 = vld [vmem:[#allocation5 + $0x120] sm:$0xff]
        %v369 = vld [vmem:[#allocation5 + $0x128] sm:$0xff]
        %v370 = vld [vmem:[#allocation5 + $0x130] sm:$0xff]
        %v371 = vld [vmem:[#allocation5 + $0x138] sm:$0xff]
        %v372 = vld [vmem:[#allocation5 + $0x140] sm:$0xff]
        %v373 = vld [vmem:[#allocation5 + $0x148] sm:$0xff]
        %v374 = vld [vmem:[#allocation5 + $0x150] sm:$0xff]
        %v375 = vld [vmem:[#allocation5 + $0x158] sm:$0xff]
        %v376 = vld [vmem:[#allocation5 + $0x160] sm:$0xff]
        %v377 = vld [vmem:[#allocation5 + $0x168] sm:$0xff]
        %v378 = vld [vmem:[#allocation5 + $0x170] sm:$0xff]
        %v379 = vld [vmem:[#allocation5 + $0x178] sm:$0xff]
        %v380 = vld [vmem:[#allocation5 + $0x180] sm:$0xff]
        %v381 = vld [vmem:[#allocation5 + $0x188] sm:$0xff]
        %v382 = vld [vmem:[#allocation5 + $0x190] sm:$0xff]
        %v383 = vld [vmem:[#allocation5 + $0x198] sm:$0xff]
        %v384 = vld [vmem:[#allocation5 + $0x1a0] sm:$0xff]
        %v385 = vld [vmem:[#allocation5 + $0x1a8] sm:$0xff]
        %v386 = vld [vmem:[#allocation5 + $0x1b0] sm:$0xff]
        %v387 = vld [vmem:[#allocation5 + $0x1b8] sm:$0xff]
        %v388 = vld [vmem:[#allocation5 + $0x1c0] sm:$0xff]
        %v389 = vld [vmem:[#allocation5 + $0x1c8] sm:$0xff]
        %v390 = vld [vmem:[#allocation5 + $0x1d0] sm:$0xff]
        %v391 = vld [vmem:[#allocation5 + $0x1d8] sm:$0xff]
        %v392 = vld [vmem:[#allocation5 + $0x1e0] sm:$0xff]
        %v393 = vld [vmem:[#allocation5 + $0x1e8] sm:$0xff]
        %v394 = vld [vmem:[#allocation5 + $0x1f0] sm:$0xff]
        %v395 = vld [vmem:[#allocation5 + $0x1f8] sm:$0xff]
        %v396 = vld [vmem:[#allocation5 + $0x200] sm:$0xff]
        %v397 = vld [vmem:[#allocation5 + $0x208] sm:$0xff]
        %v398 = vld [vmem:[#allocation5 + $0x210] sm:$0xff]
        %v399 = vld [vmem:[#allocation5 + $0x218] sm:$0xff]
        %v400 = vld [vmem:[#allocation5 + $0x220] sm:$0xff]
        %v401 = vld [vmem:[#allocation5 + $0x228] sm:$0xff]
        %v402 = vld [vmem:[#allocation5 + $0x230] sm:$0xff]
        %v403 = vld [vmem:[#allocation5 + $0x238] sm:$0xff]
        %v404 = vld [vmem:[#allocation5 + $0x240] sm:$0xff]
        %v405 = vld [vmem:[#allocation5 + $0x248] sm:$0xff]
        %v406 = vld [vmem:[#allocation5 + $0x250] sm:$0xff]
        %v407 = vld [vmem:[#allocation5 + $0x258] sm:$0xff]
        %v408 = vld [vmem:[#allocation5 + $0x260] sm:$0xff]
        %v409 = vld [vmem:[#allocation5 + $0x268] sm:$0xff]
        %v410 = vld [vmem:[#allocation5 + $0x270] sm:$0xff]
        %v411 = vld [vmem:[#allocation5 + $0x278] sm:$0xff]
        %v412 = vld [vmem:[#allocation5 + $0x280] sm:$0xff]
        %v413 = vld [vmem:[#allocation5 + $0x288] sm:$0xff]
        %v414 = vld [vmem:[#allocation5 + $0x290] sm:$0xff]
        %v415 = vld [vmem:[#allocation5 + $0x298] sm:$0xff]
        %v416 = vld [vmem:[#allocation5 + $0x2a0] sm:$0xff]
        %v417 = vld [vmem:[#allocation5 + $0x2a8] sm:$0xff]
        %v418 = vld [vmem:[#allocation5 + $0x2b0] sm:$0xff]
        %v419 = vld [vmem:[#allocation5 + $0x2b8] sm:$0xff]
        %v420 = vld [vmem:[#allocation5 + $0x2c0] sm:$0xff]
        %v421 = vld [vmem:[#allocation5 + $0x2c8] sm:$0xff]
        %v422 = vld [vmem:[#allocation5 + $0x2d0] sm:$0xff]
        %v423 = vld [vmem:[#allocation5 + $0x2d8] sm:$0xff]
        %v424 = vld [vmem:[#allocation5 + $0x2e0] sm:$0xff]
        %v425 = vld [vmem:[#allocation5 + $0x2e8] sm:$0xff]
        %v426 = vld [vmem:[#allocation5 + $0x2f0] sm:$0xff]
        %v427 = vld [vmem:[#allocation5 + $0x2f8] sm:$0xff]
        %v428 = vld [vmem:[#allocation5 + $0x300] sm:$0xff]
        %v429 = vld [vmem:[#allocation5 + $0x308] sm:$0xff]
        %v430 = vld [vmem:[#allocation5 + $0x310] sm:$0xff]
        %v431 = vld [vmem:[#allocation5 + $0x318] sm:$0xff]
        %v432 = vld [vmem:[#allocation5 + $0x320] sm:$0xff]
        %v433 = vld [vmem:[#allocation5 + $0x328] sm:$0xff]
        %v434 = vld [vmem:[#allocation5 + $0x330] sm:$0xff]
        %v435 = vld [vmem:[#allocation5 + $0x338] sm:$0xff]
        %v436 = vld [vmem:[#allocation5 + $0x340] sm:$0xff]
        %v437 = vld [vmem:[#allocation5 + $0x348] sm:$0xff]
        %v438 = vld [vmem:[#allocation5 + $0x350] sm:$0xff]
        %v439 = vld [vmem:[#allocation5 + $0x358] sm:$0xff]
        %v440 = vld [vmem:[#allocation5 + $0x360] sm:$0xff]
        %v441 = vld [vmem:[#allocation5 + $0x368] sm:$0xff]
        %v442 = vld [vmem:[#allocation5 + $0x370] sm:$0xff]
        %v443 = vld [vmem:[#allocation5 + $0x378] sm:$0xff]
        %v444 = vld [vmem:[#allocation5 + $0x380] sm:$0xff]
        %v445 = vld [vmem:[#allocation5 + $0x388] sm:$0xff]
        %v446 = vld [vmem:[#allocation5 + $0x390] sm:$0xff]
        %v447 = vld [vmem:[#allocation5 + $0x398] sm:$0xff]
        %v448 = vld [vmem:[#allocation5 + $0x3a0] sm:$0xff]
        %v449 = vld [vmem:[#allocation5 + $0x3a8] sm:$0xff]
        %v450 = vld [vmem:[#allocation5 + $0x3b0] sm:$0xff]
        %v451 = vld [vmem:[#allocation5 + $0x3b8] sm:$0xff]
        %v452 = vld [vmem:[#allocation5 + $0x3c0] sm:$0xff]
        %v453 = vld [vmem:[#allocation5 + $0x3c8] sm:$0xff]
        %v454 = vld [vmem:[#allocation5 + $0x3d0] sm:$0xff]
        %v455 = vld [vmem:[#allocation5 + $0x3d8] sm:$0xff]
        %v456 = vld [vmem:[#allocation5 + $0x3e0] sm:$0xff]
        %v457 = vld [vmem:[#allocation5 + $0x3e8] sm:$0xff]
        %v458 = vld [vmem:[#allocation5 + $0x3f0] sm:$0xff]
        %v459 = vld [vmem:[#allocation5 + $0x3f8] sm:$0xff]
        %v460 = vld [vmem:[#allocation7] sm:$0xff]
        %v462 = vlaneseq
        %v463 = vshrl.u32 %v462, 7
        %v464 = vsub.s32 0, %v463
        %v465 = vrot.slane %v460, %v464
        %v466 = vlaneseq
        %v467 = vshrl.u32 %v466, 7
        %v468 = vsub.s32 1, %v467
        %v469 = vrot.slane %v460, %v468
        %v470 = vlaneseq
        %v471 = vshrl.u32 %v470, 7
        %v472 = vsub.s32 2, %v471
        %v473 = vrot.slane %v460, %v472
        %v474 = vlaneseq
        %v475 = vshrl.u32 %v474, 7
        %v476 = vsub.s32 3, %v475
        %v477 = vrot.slane %v460, %v476
        %v478 = vlaneseq
        %v479 = vshrl.u32 %v478, 7
        %v480 = vsub.s32 4, %v479
        %v481 = vrot.slane %v460, %v480
        %v482 = vlaneseq
        %v483 = vshrl.u32 %v482, 7
        %v484 = vsub.s32 5, %v483
        %v485 = vrot.slane %v460, %v484
        %v486 = vlaneseq
        %v487 = vshrl.u32 %v486, 7
        %v488 = vsub.s32 6, %v487
        %v489 = vrot.slane %v460, %v488
        %v490 = vlaneseq
        %v491 = vshrl.u32 %v490, 7
        %v492 = vsub.s32 7, %v491
        %v493 = vrot.slane %v460, %v492
        %v534 = vunpack.c.l.b16 %v300
        %v535 = vunpack.c.h.b16 %v300
        %v536 = vunpack.c.l.b16 %v301
        %v537 = vunpack.c.h.b16 %v301
        %v538 = vunpack.c.l.b16 %v302
        %v539 = vunpack.c.h.b16 %v302
        %v540 = vunpack.c.l.b16 %v303
        %v541 = vunpack.c.h.b16 %v303
        %v542 = vunpack.c.l.b16 %v304
        %v543 = vunpack.c.h.b16 %v304
        %v544 = vunpack.c.l.b16 %v305
        %v545 = vunpack.c.h.b16 %v305
        %v546 = vunpack.c.l.b16 %v306
        %v547 = vunpack.c.h.b16 %v306
        %v548 = vunpack.c.l.b16 %v307
        %v549 = vunpack.c.h.b16 %v307
        %v550 = vunpack.c.l.b16 %v308
        %v551 = vunpack.c.h.b16 %v308
        %v552 = vunpack.c.l.b16 %v309
        %v553 = vunpack.c.h.b16 %v309
        %v554 = vunpack.c.l.b16 %v310
        %v555 = vunpack.c.h.b16 %v310
        %v556 = vunpack.c.l.b16 %v311
        %v557 = vunpack.c.h.b16 %v311
        %v558 = vunpack.c.l.b16 %v312
        %v559 = vunpack.c.h.b16 %v312
        %v560 = vunpack.c.l.b16 %v313
        %v561 = vunpack.c.h.b16 %v313
        %v562 = vunpack.c.l.b16 %v314
        %v563 = vunpack.c.h.b16 %v314
        %v564 = vunpack.c.l.b16 %v315
        %v565 = vunpack.c.h.b16 %v315
        %v566 = vunpack.c.l.b16 %v316
        %v567 = vunpack.c.h.b16 %v316
        %v568 = vunpack.c.l.b16 %v317
        %v569 = vunpack.c.h.b16 %v317
        %v570 = vunpack.c.l.b16 %v318
        %v571 = vunpack.c.h.b16 %v318
        %v572 = vunpack.c.l.b16 %v319
        %v573 = vunpack.c.h.b16 %v319
        %v574 = vunpack.c.l.b16 %v320
        %v575 = vunpack.c.h.b16 %v320
        %v576 = vunpack.c.l.b16 %v321
        %v577 = vunpack.c.h.b16 %v321
        %v578 = vunpack.c.l.b16 %v322
        %v579 = vunpack.c.h.b16 %v322
        %v580 = vunpack.c.l.b16 %v323
        %v581 = vunpack.c.h.b16 %v323
        %v582 = vunpack.c.l.b16 %v324
        %v583 = vunpack.c.h.b16 %v324
        %v584 = vunpack.c.l.b16 %v325
        %v585 = vunpack.c.h.b16 %v325
        %v586 = vunpack.c.l.b16 %v326
        %v587 = vunpack.c.h.b16 %v326
        %v588 = vunpack.c.l.b16 %v327
        %v589 = vunpack.c.h.b16 %v327
        %v590 = vunpack.c.l.b16 %v328
        %v591 = vunpack.c.h.b16 %v328
        %v592 = vunpack.c.l.b16 %v329
        %v593 = vunpack.c.h.b16 %v329
        %v594 = vunpack.c.l.b16 %v330
        %v595 = vunpack.c.h.b16 %v330
        %v596 = vunpack.c.l.b16 %v331
        %v597 = vunpack.c.h.b16 %v331
        %v598 = vpack.c.b16 %v536, %v534
        %v599 = vpack.c.b16 %v537, %v535
        %v600 = vpack.c.b16 %v540, %v538
        %v601 = vpack.c.b16 %v541, %v539
        %v602 = vpack.c.b16 %v544, %v542
        %v603 = vpack.c.b16 %v545, %v543
        %v604 = vpack.c.b16 %v548, %v546
        %v605 = vpack.c.b16 %v549, %v547
        %v606 = vpack.c.b16 %v552, %v550
        %v607 = vpack.c.b16 %v553, %v551
        %v608 = vpack.c.b16 %v556, %v554
        %v609 = vpack.c.b16 %v557, %v555
        %v610 = vpack.c.b16 %v560, %v558
        %v611 = vpack.c.b16 %v561, %v559
        %v612 = vpack.c.b16 %v564, %v562
        %v613 = vpack.c.b16 %v565, %v563
        %v614 = vpack.c.b16 %v568, %v566
        %v615 = vpack.c.b16 %v569, %v567
        %v616 = vpack.c.b16 %v572, %v570
        %v617 = vpack.c.b16 %v573, %v571
        %v618 = vpack.c.b16 %v576, %v574
        %v619 = vpack.c.b16 %v577, %v575
        %v620 = vpack.c.b16 %v580, %v578
        %v621 = vpack.c.b16 %v581, %v579
        %v622 = vpack.c.b16 %v584, %v582
        %v623 = vpack.c.b16 %v585, %v583
        %v624 = vpack.c.b16 %v588, %v586
        %v625 = vpack.c.b16 %v589, %v587
        %v626 = vpack.c.b16 %v592, %v590
        %v627 = vpack.c.b16 %v593, %v591
        %v628 = vpack.c.b16 %v596, %v594
        %v629 = vpack.c.b16 %v597, %v595
        %v790 = vunpack.c.l.b16 %v332
        %v791 = vunpack.c.h.b16 %v332
        %v792 = vunpack.c.l.b16 %v333
        %v793 = vunpack.c.h.b16 %v333
        %v794 = vunpack.c.l.b16 %v334
        %v795 = vunpack.c.h.b16 %v334
        %v796 = vunpack.c.l.b16 %v335
        %v797 = vunpack.c.h.b16 %v335
        %v798 = vunpack.c.l.b16 %v336
        %v799 = vunpack.c.h.b16 %v336
        %v800 = vunpack.c.l.b16 %v337
        %v801 = vunpack.c.h.b16 %v337
        %v802 = vunpack.c.l.b16 %v338
        %v803 = vunpack.c.h.b16 %v338
        %v804 = vunpack.c.l.b16 %v339
        %v805 = vunpack.c.h.b16 %v339
        %v806 = vunpack.c.l.b16 %v340
        %v807 = vunpack.c.h.b16 %v340
        %v808 = vunpack.c.l.b16 %v341
        %v809 = vunpack.c.h.b16 %v341
        %v810 = vunpack.c.l.b16 %v342
        %v811 = vunpack.c.h.b16 %v342
        %v812 = vunpack.c.l.b16 %v343
        %v813 = vunpack.c.h.b16 %v343
        %v814 = vunpack.c.l.b16 %v344
        %v815 = vunpack.c.h.b16 %v344
        %v816 = vunpack.c.l.b16 %v345
        %v817 = vunpack.c.h.b16 %v345
        %v818 = vunpack.c.l.b16 %v346
        %v819 = vunpack.c.h.b16 %v346
        %v820 = vunpack.c.l.b16 %v347
        %v821 = vunpack.c.h.b16 %v347
        %v822 = vunpack.c.l.b16 %v348
        %v823 = vunpack.c.h.b16 %v348
        %v824 = vunpack.c.l.b16 %v349
        %v825 = vunpack.c.h.b16 %v349
        %v826 = vunpack.c.l.b16 %v350
        %v827 = vunpack.c.h.b16 %v350
        %v828 = vunpack.c.l.b16 %v351
        %v829 = vunpack.c.h.b16 %v351
        %v830 = vunpack.c.l.b16 %v352
        %v831 = vunpack.c.h.b16 %v352
        %v832 = vunpack.c.l.b16 %v353
        %v833 = vunpack.c.h.b16 %v353
        %v834 = vunpack.c.l.b16 %v354
        %v835 = vunpack.c.h.b16 %v354
        %v836 = vunpack.c.l.b16 %v355
        %v837 = vunpack.c.h.b16 %v355
        %v838 = vunpack.c.l.b16 %v356
        %v839 = vunpack.c.h.b16 %v356
        %v840 = vunpack.c.l.b16 %v357
        %v841 = vunpack.c.h.b16 %v357
        %v842 = vunpack.c.l.b16 %v358
        %v843 = vunpack.c.h.b16 %v358
        %v844 = vunpack.c.l.b16 %v359
        %v845 = vunpack.c.h.b16 %v359
        %v846 = vunpack.c.l.b16 %v360
        %v847 = vunpack.c.h.b16 %v360
        %v848 = vunpack.c.l.b16 %v361
        %v849 = vunpack.c.h.b16 %v361
        %v850 = vunpack.c.l.b16 %v362
        %v851 = vunpack.c.h.b16 %v362
        %v852 = vunpack.c.l.b16 %v363
        %v853 = vunpack.c.h.b16 %v363
        %v854 = vunpack.c.l.b16 %v364
        %v855 = vunpack.c.h.b16 %v364
        %v856 = vunpack.c.l.b16 %v365
        %v857 = vunpack.c.h.b16 %v365
        %v858 = vunpack.c.l.b16 %v366
        %v859 = vunpack.c.h.b16 %v366
        %v860 = vunpack.c.l.b16 %v367
        %v861 = vunpack.c.h.b16 %v367
        %v862 = vunpack.c.l.b16 %v368
        %v863 = vunpack.c.h.b16 %v368
        %v864 = vunpack.c.l.b16 %v369
        %v865 = vunpack.c.h.b16 %v369
        %v866 = vunpack.c.l.b16 %v370
        %v867 = vunpack.c.h.b16 %v370
        %v868 = vunpack.c.l.b16 %v371
        %v869 = vunpack.c.h.b16 %v371
        %v870 = vunpack.c.l.b16 %v372
        %v871 = vunpack.c.h.b16 %v372
        %v872 = vunpack.c.l.b16 %v373
        %v873 = vunpack.c.h.b16 %v373
        %v874 = vunpack.c.l.b16 %v374
        %v875 = vunpack.c.h.b16 %v374
        %v876 = vunpack.c.l.b16 %v375
        %v877 = vunpack.c.h.b16 %v375
        %v878 = vunpack.c.l.b16 %v376
        %v879 = vunpack.c.h.b16 %v376
        %v880 = vunpack.c.l.b16 %v377
        %v881 = vunpack.c.h.b16 %v377
        %v882 = vunpack.c.l.b16 %v378
        %v883 = vunpack.c.h.b16 %v378
        %v884 = vunpack.c.l.b16 %v379
        %v885 = vunpack.c.h.b16 %v379
        %v886 = vunpack.c.l.b16 %v380
        %v887 = vunpack.c.h.b16 %v380
        %v888 = vunpack.c.l.b16 %v381
        %v889 = vunpack.c.h.b16 %v381
        %v890 = vunpack.c.l.b16 %v382
        %v891 = vunpack.c.h.b16 %v382
        %v892 = vunpack.c.l.b16 %v383
        %v893 = vunpack.c.h.b16 %v383
        %v894 = vunpack.c.l.b16 %v384
        %v895 = vunpack.c.h.b16 %v384
        %v896 = vunpack.c.l.b16 %v385
        %v897 = vunpack.c.h.b16 %v385
        %v898 = vunpack.c.l.b16 %v386
        %v899 = vunpack.c.h.b16 %v386
        %v900 = vunpack.c.l.b16 %v387
        %v901 = vunpack.c.h.b16 %v387
        %v902 = vunpack.c.l.b16 %v388
        %v903 = vunpack.c.h.b16 %v388
        %v904 = vunpack.c.l.b16 %v389
        %v905 = vunpack.c.h.b16 %v389
        %v906 = vunpack.c.l.b16 %v390
        %v907 = vunpack.c.h.b16 %v390
        %v908 = vunpack.c.l.b16 %v391
        %v909 = vunpack.c.h.b16 %v391
        %v910 = vunpack.c.l.b16 %v392
        %v911 = vunpack.c.h.b16 %v392
        %v912 = vunpack.c.l.b16 %v393
        %v913 = vunpack.c.h.b16 %v393
        %v914 = vunpack.c.l.b16 %v394
        %v915 = vunpack.c.h.b16 %v394
        %v916 = vunpack.c.l.b16 %v395
        %v917 = vunpack.c.h.b16 %v395
        %v918 = vunpack.c.l.b16 %v396
        %v919 = vunpack.c.h.b16 %v396
        %v920 = vunpack.c.l.b16 %v397
        %v921 = vunpack.c.h.b16 %v397
        %v922 = vunpack.c.l.b16 %v398
        %v923 = vunpack.c.h.b16 %v398
        %v924 = vunpack.c.l.b16 %v399
        %v925 = vunpack.c.h.b16 %v399
        %v926 = vunpack.c.l.b16 %v400
        %v927 = vunpack.c.h.b16 %v400
        %v928 = vunpack.c.l.b16 %v401
        %v929 = vunpack.c.h.b16 %v401
        %v930 = vunpack.c.l.b16 %v402
        %v931 = vunpack.c.h.b16 %v402
        %v932 = vunpack.c.l.b16 %v403
        %v933 = vunpack.c.h.b16 %v403
        %v934 = vunpack.c.l.b16 %v404
        %v935 = vunpack.c.h.b16 %v404
        %v936 = vunpack.c.l.b16 %v405
        %v937 = vunpack.c.h.b16 %v405
        %v938 = vunpack.c.l.b16 %v406
        %v939 = vunpack.c.h.b16 %v406
        %v940 = vunpack.c.l.b16 %v407
        %v941 = vunpack.c.h.b16 %v407
        %v942 = vunpack.c.l.b16 %v408
        %v943 = vunpack.c.h.b16 %v408
        %v944 = vunpack.c.l.b16 %v409
        %v945 = vunpack.c.h.b16 %v409
        %v946 = vunpack.c.l.b16 %v410
        %v947 = vunpack.c.h.b16 %v410
        %v948 = vunpack.c.l.b16 %v411
        %v949 = vunpack.c.h.b16 %v411
        %v950 = vunpack.c.l.b16 %v412
        %v951 = vunpack.c.h.b16 %v412
        %v952 = vunpack.c.l.b16 %v413
        %v953 = vunpack.c.h.b16 %v413
        %v954 = vunpack.c.l.b16 %v414
        %v955 = vunpack.c.h.b16 %v414
        %v956 = vunpack.c.l.b16 %v415
        %v957 = vunpack.c.h.b16 %v415
        %v958 = vunpack.c.l.b16 %v416
        %v959 = vunpack.c.h.b16 %v416
        %v960 = vunpack.c.l.b16 %v417
        %v961 = vunpack.c.h.b16 %v417
        %v962 = vunpack.c.l.b16 %v418
        %v963 = vunpack.c.h.b16 %v418
        %v964 = vunpack.c.l.b16 %v419
        %v965 = vunpack.c.h.b16 %v419
        %v966 = vunpack.c.l.b16 %v420
        %v967 = vunpack.c.h.b16 %v420
        %v968 = vunpack.c.l.b16 %v421
        %v969 = vunpack.c.h.b16 %v421
        %v970 = vunpack.c.l.b16 %v422
        %v971 = vunpack.c.h.b16 %v422
        %v972 = vunpack.c.l.b16 %v423
        %v973 = vunpack.c.h.b16 %v423
        %v974 = vunpack.c.l.b16 %v424
        %v975 = vunpack.c.h.b16 %v424
        %v976 = vunpack.c.l.b16 %v425
        %v977 = vunpack.c.h.b16 %v425
        %v978 = vunpack.c.l.b16 %v426
        %v979 = vunpack.c.h.b16 %v426
        %v980 = vunpack.c.l.b16 %v427
        %v981 = vunpack.c.h.b16 %v427
        %v982 = vunpack.c.l.b16 %v428
        %v983 = vunpack.c.h.b16 %v428
        %v984 = vunpack.c.l.b16 %v429
        %v985 = vunpack.c.h.b16 %v429
        %v986 = vunpack.c.l.b16 %v430
        %v987 = vunpack.c.h.b16 %v430
        %v988 = vunpack.c.l.b16 %v431
        %v989 = vunpack.c.h.b16 %v431
        %v990 = vunpack.c.l.b16 %v432
        %v991 = vunpack.c.h.b16 %v432
        %v992 = vunpack.c.l.b16 %v433
        %v993 = vunpack.c.h.b16 %v433
        %v994 = vunpack.c.l.b16 %v434
        %v995 = vunpack.c.h.b16 %v434
        %v996 = vunpack.c.l.b16 %v435
        %v997 = vunpack.c.h.b16 %v435
        %v998 = vunpack.c.l.b16 %v436
        %v999 = vunpack.c.h.b16 %v436
        %v1000 = vunpack.c.l.b16 %v437
        %v1001 = vunpack.c.h.b16 %v437
        %v1002 = vunpack.c.l.b16 %v438
        %v1003 = vunpack.c.h.b16 %v438
        %v1004 = vunpack.c.l.b16 %v439
        %v1005 = vunpack.c.h.b16 %v439
        %v1006 = vunpack.c.l.b16 %v440
        %v1007 = vunpack.c.h.b16 %v440
        %v1008 = vunpack.c.l.b16 %v441
        %v1009 = vunpack.c.h.b16 %v441
        %v1010 = vunpack.c.l.b16 %v442
        %v1011 = vunpack.c.h.b16 %v442
        %v1012 = vunpack.c.l.b16 %v443
        %v1013 = vunpack.c.h.b16 %v443
        %v1014 = vunpack.c.l.b16 %v444
        %v1015 = vunpack.c.h.b16 %v444
        %v1016 = vunpack.c.l.b16 %v445
        %v1017 = vunpack.c.h.b16 %v445
        %v1018 = vunpack.c.l.b16 %v446
        %v1019 = vunpack.c.h.b16 %v446
        %v1020 = vunpack.c.l.b16 %v447
        %v1021 = vunpack.c.h.b16 %v447
        %v1022 = vunpack.c.l.b16 %v448
        %v1023 = vunpack.c.h.b16 %v448
        %v1024 = vunpack.c.l.b16 %v449
        %v1025 = vunpack.c.h.b16 %v449
        %v1026 = vunpack.c.l.b16 %v450
        %v1027 = vunpack.c.h.b16 %v450
        %v1028 = vunpack.c.l.b16 %v451
        %v1029 = vunpack.c.h.b16 %v451
        %v1030 = vunpack.c.l.b16 %v452
        %v1031 = vunpack.c.h.b16 %v452
        %v1032 = vunpack.c.l.b16 %v453
        %v1033 = vunpack.c.h.b16 %v453
        %v1034 = vunpack.c.l.b16 %v454
        %v1035 = vunpack.c.h.b16 %v454
        %v1036 = vunpack.c.l.b16 %v455
        %v1037 = vunpack.c.h.b16 %v455
        %v1038 = vunpack.c.l.b16 %v456
        %v1039 = vunpack.c.h.b16 %v456
        %v1040 = vunpack.c.l.b16 %v457
        %v1041 = vunpack.c.h.b16 %v457
        %v1042 = vunpack.c.l.b16 %v458
        %v1043 = vunpack.c.h.b16 %v458
        %v1044 = vunpack.c.l.b16 %v459
        %v1045 = vunpack.c.h.b16 %v459
        %v1046 = vpack.c.b16 %v798, %v790
        %v1047 = vpack.c.b16 %v799, %v791
        %v1048 = vpack.c.b16 %v800, %v792
        %v1049 = vpack.c.b16 %v801, %v793
        %v1050 = vpack.c.b16 %v802, %v794
        %v1051 = vpack.c.b16 %v803, %v795
        %v1052 = vpack.c.b16 %v804, %v796
        %v1053 = vpack.c.b16 %v805, %v797
        %v1054 = vpack.c.b16 %v814, %v806
        %v1055 = vpack.c.b16 %v815, %v807
        %v1056 = vpack.c.b16 %v816, %v808
        %v1057 = vpack.c.b16 %v817, %v809
        %v1058 = vpack.c.b16 %v818, %v810
        %v1059 = vpack.c.b16 %v819, %v811
        %v1060 = vpack.c.b16 %v820, %v812
        %v1061 = vpack.c.b16 %v821, %v813
        %v1062 = vpack.c.b16 %v830, %v822
        %v1063 = vpack.c.b16 %v831, %v823
        %v1064 = vpack.c.b16 %v832, %v824
        %v1065 = vpack.c.b16 %v833, %v825
        %v1066 = vpack.c.b16 %v834, %v826
        %v1067 = vpack.c.b16 %v835, %v827
        %v1068 = vpack.c.b16 %v836, %v828
        %v1069 = vpack.c.b16 %v837, %v829
        %v1070 = vpack.c.b16 %v846, %v838
        %v1071 = vpack.c.b16 %v847, %v839
        %v1072 = vpack.c.b16 %v848, %v840
        %v1073 = vpack.c.b16 %v849, %v841
        %v1074 = vpack.c.b16 %v850, %v842
        %v1075 = vpack.c.b16 %v851, %v843
        %v1076 = vpack.c.b16 %v852, %v844
        %v1077 = vpack.c.b16 %v853, %v845
        %v1078 = vpack.c.b16 %v862, %v854
        %v1079 = vpack.c.b16 %v863, %v855
        %v1080 = vpack.c.b16 %v864, %v856
        %v1081 = vpack.c.b16 %v865, %v857
        %v1082 = vpack.c.b16 %v866, %v858
        %v1083 = vpack.c.b16 %v867, %v859
        %v1084 = vpack.c.b16 %v868, %v860
        %v1085 = vpack.c.b16 %v869, %v861
        %v1086 = vpack.c.b16 %v878, %v870
        %v1087 = vpack.c.b16 %v879, %v871
        %v1088 = vpack.c.b16 %v880, %v872
        %v1089 = vpack.c.b16 %v881, %v873
        %v1090 = vpack.c.b16 %v882, %v874
        %v1091 = vpack.c.b16 %v883, %v875
        %v1092 = vpack.c.b16 %v884, %v876
        %v1093 = vpack.c.b16 %v885, %v877
        %v1094 = vpack.c.b16 %v894, %v886
        %v1095 = vpack.c.b16 %v895, %v887
        %v1096 = vpack.c.b16 %v896, %v888
        %v1097 = vpack.c.b16 %v897, %v889
        %v1098 = vpack.c.b16 %v898, %v890
        %v1099 = vpack.c.b16 %v899, %v891
        %v1100 = vpack.c.b16 %v900, %v892
        %v1101 = vpack.c.b16 %v901, %v893
        %v1102 = vpack.c.b16 %v910, %v902
        %v1103 = vpack.c.b16 %v911, %v903
        %v1104 = vpack.c.b16 %v912, %v904
        %v1105 = vpack.c.b16 %v913, %v905
        %v1106 = vpack.c.b16 %v914, %v906
        %v1107 = vpack.c.b16 %v915, %v907
        %v1108 = vpack.c.b16 %v916, %v908
        %v1109 = vpack.c.b16 %v917, %v909
        %v1110 = vpack.c.b16 %v926, %v918
        %v1111 = vpack.c.b16 %v927, %v919
        %v1112 = vpack.c.b16 %v928, %v920
        %v1113 = vpack.c.b16 %v929, %v921
        %v1114 = vpack.c.b16 %v930, %v922
        %v1115 = vpack.c.b16 %v931, %v923
        %v1116 = vpack.c.b16 %v932, %v924
        %v1117 = vpack.c.b16 %v933, %v925
        %v1118 = vpack.c.b16 %v942, %v934
        %v1119 = vpack.c.b16 %v943, %v935
        %v1120 = vpack.c.b16 %v944, %v936
        %v1121 = vpack.c.b16 %v945, %v937
        %v1122 = vpack.c.b16 %v946, %v938
        %v1123 = vpack.c.b16 %v947, %v939
        %v1124 = vpack.c.b16 %v948, %v940
        %v1125 = vpack.c.b16 %v949, %v941
        %v1126 = vpack.c.b16 %v958, %v950
        %v1127 = vpack.c.b16 %v959, %v951
        %v1128 = vpack.c.b16 %v960, %v952
        %v1129 = vpack.c.b16 %v961, %v953
        %v1130 = vpack.c.b16 %v962, %v954
        %v1131 = vpack.c.b16 %v963, %v955
        %v1132 = vpack.c.b16 %v964, %v956
        %v1133 = vpack.c.b16 %v965, %v957
        %v1134 = vpack.c.b16 %v974, %v966
        %v1135 = vpack.c.b16 %v975, %v967
        %v1136 = vpack.c.b16 %v976, %v968
        %v1137 = vpack.c.b16 %v977, %v969
        %v1138 = vpack.c.b16 %v978, %v970
        %v1139 = vpack.c.b16 %v979, %v971
        %v1140 = vpack.c.b16 %v980, %v972
        %v1141 = vpack.c.b16 %v981, %v973
        %v1142 = vpack.c.b16 %v990, %v982
        %v1143 = vpack.c.b16 %v991, %v983
        %v1144 = vpack.c.b16 %v992, %v984
        %v1145 = vpack.c.b16 %v993, %v985
        %v1146 = vpack.c.b16 %v994, %v986
        %v1147 = vpack.c.b16 %v995, %v987
        %v1148 = vpack.c.b16 %v996, %v988
        %v1149 = vpack.c.b16 %v997, %v989
        %v1150 = vpack.c.b16 %v1006, %v998
        %v1151 = vpack.c.b16 %v1007, %v999
        %v1152 = vpack.c.b16 %v1008, %v1000
        %v1153 = vpack.c.b16 %v1009, %v1001
        %v1154 = vpack.c.b16 %v1010, %v1002
        %v1155 = vpack.c.b16 %v1011, %v1003
        %v1156 = vpack.c.b16 %v1012, %v1004
        %v1157 = vpack.c.b16 %v1013, %v1005
        %v1158 = vpack.c.b16 %v1022, %v1014
        %v1159 = vpack.c.b16 %v1023, %v1015
        %v1160 = vpack.c.b16 %v1024, %v1016
        %v1161 = vpack.c.b16 %v1025, %v1017
        %v1162 = vpack.c.b16 %v1026, %v1018
        %v1163 = vpack.c.b16 %v1027, %v1019
        %v1164 = vpack.c.b16 %v1028, %v1020
        %v1165 = vpack.c.b16 %v1029, %v1021
        %v1166 = vpack.c.b16 %v1038, %v1030
        %v1167 = vpack.c.b16 %v1039, %v1031
        %v1168 = vpack.c.b16 %v1040, %v1032
        %v1169 = vpack.c.b16 %v1041, %v1033
        %v1170 = vpack.c.b16 %v1042, %v1034
        %v1171 = vpack.c.b16 %v1043, %v1035
        %v1172 = vpack.c.b16 %v1044, %v1036
        %v1173 = vpack.c.b16 %v1045, %v1037
        %1302 = vmatprep.subr.bf16.mxu0 %v1103
        %1303 = vmatpush1.bf16.msra.mxu0 %v1102
        %1304 = vmatprep.subr.bf16.mxu0 %v1095
        %1305 = vmatpush1.bf16.msra.mxu0 %v1094
        %1306 = vmatprep.subr.bf16.mxu0 %v1087
        %1307 = vmatpush1.bf16.msra.mxu0 %v1086
        %1308 = vmatprep.subr.bf16.mxu0 %v1079
        %1309 = vmatpush1.bf16.msra.mxu0 %v1078
        %1310 = vmatprep.subr.bf16.mxu0 %v1071
        %1311 = vmatpush1.bf16.msra.mxu0 %v1070
        %1312 = vmatprep.subr.bf16.mxu0 %v1063
        %1313 = vmatpush1.bf16.msra.mxu0 %v1062
        %1314 = vmatprep.subr.bf16.mxu0 %v1055
        %1315 = vmatpush1.bf16.msra.mxu0 %v1054
        %1316 = vmatprep.subr.bf16.mxu0 %v1047
        %1317 = vmatpush1.bf16.msra.mxu0 %v1046
        %1318 = vmatprep.subr.bf16.mxu0 %v1167
        %1319 = vmatpush2.bf16.msra.mxu0 %v1166
        %1320 = vmatprep.subr.bf16.mxu0 %v1159
        %1321 = vmatpush2.bf16.msra.mxu0 %v1158
        %1322 = vmatprep.subr.bf16.mxu0 %v1151
        %1323 = vmatpush2.bf16.msra.mxu0 %v1150
        %1324 = vmatprep.subr.bf16.mxu0 %v1143
        %1325 = vmatpush2.bf16.msra.mxu0 %v1142
        %1326 = vmatprep.subr.bf16.mxu0 %v1135
        %1327 = vmatpush2.bf16.msra.mxu0 %v1134
        %1328 = vmatprep.subr.bf16.mxu0 %v1127
        %1329 = vmatpush2.bf16.msra.mxu0 %v1126
        %1330 = vmatprep.subr.bf16.mxu0 %v1119
        %1331 = vmatpush2.bf16.msra.mxu0 %v1118
        %1332 = vmatprep.subr.bf16.mxu0 %v1111
        %1333 = vmatpush2.bf16.msra.mxu0 %v1110
        %1334 = vmatprep.mubr.bf16.mxu0 %v599
        %1335 = vmatmul.mubr.bf16.gmra.mxu0 %v598
        %v1336 = vpop.f32.mrf.mxu0
        %v1337 = vadd.f32 %v465, %v1336
        %v1338 = vpop.f32.mrf.mxu0
        %v1339 = vadd.f32 %v469, %v1338
        %v1340 = vpop.f32.mrf.mxu0
        %v1341 = vadd.f32 %v465, %v1340
        %v1342 = vpop.f32.mrf.mxu0
        %v1343 = vadd.f32 %v469, %v1342
        %1344 = vmatprep.mubr.bf16.mxu0 %v601
        %1345 = vmatmul.mubr.bf16.gmra.mxu0 %v600
        %v1346 = vpop.f32.mrf.mxu0
        %v1347 = vadd.f32 %v465, %v1346
        %v1348 = vpop.f32.mrf.mxu0
        %v1349 = vadd.f32 %v469, %v1348
        %v1350 = vpop.f32.mrf.mxu0
        %v1351 = vadd.f32 %v465, %v1350
        %v1352 = vpop.f32.mrf.mxu0
        %v1353 = vadd.f32 %v469, %v1352
        %1354 = vmatprep.mubr.bf16.mxu0 %v603
        %1355 = vmatmul.mubr.bf16.gmra.mxu0 %v602
        %v1356 = vpop.f32.mrf.mxu0
        %v1357 = vadd.f32 %v465, %v1356
        %v1358 = vpop.f32.mrf.mxu0
        %v1359 = vadd.f32 %v469, %v1358
        %v1360 = vpop.f32.mrf.mxu0
        %v1361 = vadd.f32 %v465, %v1360
        %v1362 = vpop.f32.mrf.mxu0
        %v1363 = vadd.f32 %v469, %v1362
        %1364 = vmatprep.mubr.bf16.mxu0 %v605
        %1365 = vmatmul.mubr.bf16.gmra.mxu0 %v604
        %v1366 = vpop.f32.mrf.mxu0
        %v1367 = vadd.f32 %v465, %v1366
        %v1368 = vpop.f32.mrf.mxu0
        %v1369 = vadd.f32 %v469, %v1368
        %v1370 = vpop.f32.mrf.mxu0
        %v1371 = vadd.f32 %v465, %v1370
        %v1372 = vpop.f32.mrf.mxu0
        %v1373 = vadd.f32 %v469, %v1372
        %1374 = vmatprep.mubr.bf16.mxu0 %v607
        %1375 = vmatmul.mubr.bf16.gmra.mxu0 %v606
        %v1376 = vpop.f32.mrf.mxu0
        %v1377 = vadd.f32 %v465, %v1376
        %v1378 = vpop.f32.mrf.mxu0
        %v1379 = vadd.f32 %v469, %v1378
        %v1380 = vpop.f32.mrf.mxu0
        %v1381 = vadd.f32 %v465, %v1380
        %v1382 = vpop.f32.mrf.mxu0
        %v1383 = vadd.f32 %v469, %v1382
        %1384 = vmatprep.mubr.bf16.mxu0 %v609
        %1385 = vmatmul.mubr.bf16.gmra.mxu0 %v608
        %v1386 = vpop.f32.mrf.mxu0
        %v1387 = vadd.f32 %v465, %v1386
        %v1388 = vpop.f32.mrf.mxu0
        %v1389 = vadd.f32 %v469, %v1388
        %v1390 = vpop.f32.mrf.mxu0
        %v1391 = vadd.f32 %v465, %v1390
        %v1392 = vpop.f32.mrf.mxu0
        %v1393 = vadd.f32 %v469, %v1392
        %1394 = vmatprep.mubr.bf16.mxu0 %v611
        %1395 = vmatmul.mubr.bf16.gmra.mxu0 %v610
        %v1396 = vpop.f32.mrf.mxu0
        %v1397 = vadd.f32 %v465, %v1396
        %v1398 = vpop.f32.mrf.mxu0
        %v1399 = vadd.f32 %v469, %v1398
        %v1400 = vpop.f32.mrf.mxu0
        %v1401 = vadd.f32 %v465, %v1400
        %v1402 = vpop.f32.mrf.mxu0
        %v1403 = vadd.f32 %v469, %v1402
        %1404 = vmatprep.mubr.bf16.mxu0 %v613
        %1405 = vmatmul.mubr.bf16.gmra.mxu0 %v612
        %v1406 = vpop.f32.mrf.mxu0
        %v1407 = vadd.f32 %v465, %v1406
        %v1408 = vpop.f32.mrf.mxu0
        %v1409 = vadd.f32 %v469, %v1408
        %v1410 = vpop.f32.mrf.mxu0
        %v1411 = vadd.f32 %v465, %v1410
        %v1412 = vpop.f32.mrf.mxu0
        %v1413 = vadd.f32 %v469, %v1412
        %1414 = vmatprep.mubr.bf16.mxu0 %v615
        %1415 = vmatmul.mubr.bf16.gmra.mxu0 %v614
        %v1416 = vpop.f32.mrf.mxu0
        %v1417 = vadd.f32 %v465, %v1416
        %v1418 = vpop.f32.mrf.mxu0
        %v1419 = vadd.f32 %v469, %v1418
        %v1420 = vpop.f32.mrf.mxu0
        %v1421 = vadd.f32 %v465, %v1420
        %v1422 = vpop.f32.mrf.mxu0
        %v1423 = vadd.f32 %v469, %v1422
        %1424 = vmatprep.mubr.bf16.mxu0 %v617
        %1425 = vmatmul.mubr.bf16.gmra.mxu0 %v616
        %v1426 = vpop.f32.mrf.mxu0
        %v1427 = vadd.f32 %v465, %v1426
        %v1428 = vpop.f32.mrf.mxu0
        %v1429 = vadd.f32 %v469, %v1428
        %v1430 = vpop.f32.mrf.mxu0
        %v1431 = vadd.f32 %v465, %v1430
        %v1432 = vpop.f32.mrf.mxu0
        %v1433 = vadd.f32 %v469, %v1432
        %1434 = vmatprep.mubr.bf16.mxu0 %v619
        %1435 = vmatmul.mubr.bf16.gmra.mxu0 %v618
        %v1436 = vpop.f32.mrf.mxu0
        %v1437 = vadd.f32 %v465, %v1436
        %v1438 = vpop.f32.mrf.mxu0
        %v1439 = vadd.f32 %v469, %v1438
        %v1440 = vpop.f32.mrf.mxu0
        %v1441 = vadd.f32 %v465, %v1440
        %v1442 = vpop.f32.mrf.mxu0
        %v1443 = vadd.f32 %v469, %v1442
        %1444 = vmatprep.mubr.bf16.mxu0 %v621
        %1445 = vmatmul.mubr.bf16.gmra.mxu0 %v620
        %v1446 = vpop.f32.mrf.mxu0
        %v1447 = vadd.f32 %v465, %v1446
        %v1448 = vpop.f32.mrf.mxu0
        %v1449 = vadd.f32 %v469, %v1448
        %v1450 = vpop.f32.mrf.mxu0
        %v1451 = vadd.f32 %v465, %v1450
        %v1452 = vpop.f32.mrf.mxu0
        %v1453 = vadd.f32 %v469, %v1452
        %1454 = vmatprep.mubr.bf16.mxu0 %v623
        %1455 = vmatmul.mubr.bf16.gmra.mxu0 %v622
        %v1456 = vpop.f32.mrf.mxu0
        %v1457 = vadd.f32 %v465, %v1456
        %v1458 = vpop.f32.mrf.mxu0
        %v1459 = vadd.f32 %v469, %v1458
        %v1460 = vpop.f32.mrf.mxu0
        %v1461 = vadd.f32 %v465, %v1460
        %v1462 = vpop.f32.mrf.mxu0
        %v1463 = vadd.f32 %v469, %v1462
        %1464 = vmatprep.mubr.bf16.mxu0 %v625
        %1465 = vmatmul.mubr.bf16.gmra.mxu0 %v624
        %v1466 = vpop.f32.mrf.mxu0
        %v1467 = vadd.f32 %v465, %v1466
        %v1468 = vpop.f32.mrf.mxu0
        %v1469 = vadd.f32 %v469, %v1468
        %v1470 = vpop.f32.mrf.mxu0
        %v1471 = vadd.f32 %v465, %v1470
        %v1472 = vpop.f32.mrf.mxu0
        %v1473 = vadd.f32 %v469, %v1472
        %1474 = vmatprep.mubr.bf16.mxu0 %v627
        %1475 = vmatmul.mubr.bf16.gmra.mxu0 %v626
        %v1476 = vpop.f32.mrf.mxu0
        %v1477 = vadd.f32 %v465, %v1476
        %v1478 = vpop.f32.mrf.mxu0
        %v1479 = vadd.f32 %v469, %v1478
        %v1480 = vpop.f32.mrf.mxu0
        %v1481 = vadd.f32 %v465, %v1480
        %v1482 = vpop.f32.mrf.mxu0
        %v1483 = vadd.f32 %v469, %v1482
        %1484 = vmatprep.mubr.bf16.mxu0 %v629
        %1485 = vmatmul.mubr.bf16.gmra.mxu0 %v628
        %v1486 = vpop.f32.mrf.mxu0
        %v1487 = vadd.f32 %v465, %v1486
        %v1488 = vpop.f32.mrf.mxu0
        %v1489 = vadd.f32 %v469, %v1488
        %v1490 = vpop.f32.mrf.mxu0
        %v1491 = vadd.f32 %v465, %v1490
        %v1492 = vpop.f32.mrf.mxu0
        %v1493 = vadd.f32 %v469, %v1492
        %1494 = vdwg.mxu0
        %1495 = vmatprep.subr.bf16.mxu0 %v1105
        %1496 = vmatpush1.bf16.msra.mxu0 %v1104
        %1497 = vmatprep.subr.bf16.mxu0 %v1097
        %1498 = vmatpush1.bf16.msra.mxu0 %v1096
        %1499 = vmatprep.subr.bf16.mxu0 %v1089
        %1500 = vmatpush1.bf16.msra.mxu0 %v1088
        %1501 = vmatprep.subr.bf16.mxu0 %v1081
        %1502 = vmatpush1.bf16.msra.mxu0 %v1080
        %1503 = vmatprep.subr.bf16.mxu0 %v1073
        %1504 = vmatpush1.bf16.msra.mxu0 %v1072
        %1505 = vmatprep.subr.bf16.mxu0 %v1065
        %1506 = vmatpush1.bf16.msra.mxu0 %v1064
        %1507 = vmatprep.subr.bf16.mxu0 %v1057
        %1508 = vmatpush1.bf16.msra.mxu0 %v1056
        %1509 = vmatprep.subr.bf16.mxu0 %v1049
        %1510 = vmatpush1.bf16.msra.mxu0 %v1048
        %1511 = vmatprep.subr.bf16.mxu0 %v1169
        %1512 = vmatpush2.bf16.msra.mxu0 %v1168
        %1513 = vmatprep.subr.bf16.mxu0 %v1161
        %1514 = vmatpush2.bf16.msra.mxu0 %v1160
        %1515 = vmatprep.subr.bf16.mxu0 %v1153
        %1516 = vmatpush2.bf16.msra.mxu0 %v1152
        %1517 = vmatprep.subr.bf16.mxu0 %v1145
        %1518 = vmatpush2.bf16.msra.mxu0 %v1144
        %1519 = vmatprep.subr.bf16.mxu0 %v1137
        %1520 = vmatpush2.bf16.msra.mxu0 %v1136
        %1521 = vmatprep.subr.bf16.mxu0 %v1129
        %1522 = vmatpush2.bf16.msra.mxu0 %v1128
        %1523 = vmatprep.subr.bf16.mxu0 %v1121
        %1524 = vmatpush2.bf16.msra.mxu0 %v1120
        %1525 = vmatprep.subr.bf16.mxu0 %v1113
        %1526 = vmatpush2.bf16.msra.mxu0 %v1112
        %1527 = vmatprep.mubr.bf16.mxu0 %v599
        %1528 = vmatmul.mubr.bf16.gmra.mxu0 %v598
        %v1529 = vpop.f32.mrf.mxu0
        %v1530 = vadd.f32 %v473, %v1529
        %v1531 = vpop.f32.mrf.mxu0
        %v1532 = vadd.f32 %v477, %v1531
        %v1533 = vpop.f32.mrf.mxu0
        %v1534 = vadd.f32 %v473, %v1533
        %v1535 = vpop.f32.mrf.mxu0
        %v1536 = vadd.f32 %v477, %v1535
        %1537 = vmatprep.mubr.bf16.mxu0 %v601
        %1538 = vmatmul.mubr.bf16.gmra.mxu0 %v600
        %v1539 = vpop.f32.mrf.mxu0
        %v1540 = vadd.f32 %v473, %v1539
        %v1541 = vpop.f32.mrf.mxu0
        %v1542 = vadd.f32 %v477, %v1541
        %v1543 = vpop.f32.mrf.mxu0
        %v1544 = vadd.f32 %v473, %v1543
        %v1545 = vpop.f32.mrf.mxu0
        %v1546 = vadd.f32 %v477, %v1545
        %1547 = vmatprep.mubr.bf16.mxu0 %v603
        %1548 = vmatmul.mubr.bf16.gmra.mxu0 %v602
        %v1549 = vpop.f32.mrf.mxu0
        %v1550 = vadd.f32 %v473, %v1549
        %v1551 = vpop.f32.mrf.mxu0
        %v1552 = vadd.f32 %v477, %v1551
        %v1553 = vpop.f32.mrf.mxu0
        %v1554 = vadd.f32 %v473, %v1553
        %v1555 = vpop.f32.mrf.mxu0
        %v1556 = vadd.f32 %v477, %v1555
        %1557 = vmatprep.mubr.bf16.mxu0 %v605
        %1558 = vmatmul.mubr.bf16.gmra.mxu0 %v604
        %v1559 = vpop.f32.mrf.mxu0
        %v1560 = vadd.f32 %v473, %v1559
        %v1561 = vpop.f32.mrf.mxu0
        %v1562 = vadd.f32 %v477, %v1561
        %v1563 = vpop.f32.mrf.mxu0
        %v1564 = vadd.f32 %v473, %v1563
        %v1565 = vpop.f32.mrf.mxu0
        %v1566 = vadd.f32 %v477, %v1565
        %1567 = vmatprep.mubr.bf16.mxu0 %v607
        %1568 = vmatmul.mubr.bf16.gmra.mxu0 %v606
        %v1569 = vpop.f32.mrf.mxu0
        %v1570 = vadd.f32 %v473, %v1569
        %v1571 = vpop.f32.mrf.mxu0
        %v1572 = vadd.f32 %v477, %v1571
        %v1573 = vpop.f32.mrf.mxu0
        %v1574 = vadd.f32 %v473, %v1573
        %v1575 = vpop.f32.mrf.mxu0
        %v1576 = vadd.f32 %v477, %v1575
        %1577 = vmatprep.mubr.bf16.mxu0 %v609
        %1578 = vmatmul.mubr.bf16.gmra.mxu0 %v608
        %v1579 = vpop.f32.mrf.mxu0
        %v1580 = vadd.f32 %v473, %v1579
        %v1581 = vpop.f32.mrf.mxu0
        %v1582 = vadd.f32 %v477, %v1581
        %v1583 = vpop.f32.mrf.mxu0
        %v1584 = vadd.f32 %v473, %v1583
        %v1585 = vpop.f32.mrf.mxu0
        %v1586 = vadd.f32 %v477, %v1585
        %1587 = vmatprep.mubr.bf16.mxu0 %v611
        %1588 = vmatmul.mubr.bf16.gmra.mxu0 %v610
        %v1589 = vpop.f32.mrf.mxu0
        %v1590 = vadd.f32 %v473, %v1589
        %v1591 = vpop.f32.mrf.mxu0
        %v1592 = vadd.f32 %v477, %v1591
        %v1593 = vpop.f32.mrf.mxu0
        %v1594 = vadd.f32 %v473, %v1593
        %v1595 = vpop.f32.mrf.mxu0
        %v1596 = vadd.f32 %v477, %v1595
        %1597 = vmatprep.mubr.bf16.mxu0 %v613
        %1598 = vmatmul.mubr.bf16.gmra.mxu0 %v612
        %v1599 = vpop.f32.mrf.mxu0
        %v1600 = vadd.f32 %v473, %v1599
        %v1601 = vpop.f32.mrf.mxu0
        %v1602 = vadd.f32 %v477, %v1601
        %v1603 = vpop.f32.mrf.mxu0
        %v1604 = vadd.f32 %v473, %v1603
        %v1605 = vpop.f32.mrf.mxu0
        %v1606 = vadd.f32 %v477, %v1605
        %1607 = vmatprep.mubr.bf16.mxu0 %v615
        %1608 = vmatmul.mubr.bf16.gmra.mxu0 %v614
        %v1609 = vpop.f32.mrf.mxu0
        %v1610 = vadd.f32 %v473, %v1609
        %v1611 = vpop.f32.mrf.mxu0
        %v1612 = vadd.f32 %v477, %v1611
        %v1613 = vpop.f32.mrf.mxu0
        %v1614 = vadd.f32 %v473, %v1613
        %v1615 = vpop.f32.mrf.mxu0
        %v1616 = vadd.f32 %v477, %v1615
        %1617 = vmatprep.mubr.bf16.mxu0 %v617
        %1618 = vmatmul.mubr.bf16.gmra.mxu0 %v616
        %v1619 = vpop.f32.mrf.mxu0
        %v1620 = vadd.f32 %v473, %v1619
        %v1621 = vpop.f32.mrf.mxu0
        %v1622 = vadd.f32 %v477, %v1621
        %v1623 = vpop.f32.mrf.mxu0
        %v1624 = vadd.f32 %v473, %v1623
        %v1625 = vpop.f32.mrf.mxu0
        %v1626 = vadd.f32 %v477, %v1625
        %1627 = vmatprep.mubr.bf16.mxu0 %v619
        %1628 = vmatmul.mubr.bf16.gmra.mxu0 %v618
        %v1629 = vpop.f32.mrf.mxu0
        %v1630 = vadd.f32 %v473, %v1629
        %v1631 = vpop.f32.mrf.mxu0
        %v1632 = vadd.f32 %v477, %v1631
        %v1633 = vpop.f32.mrf.mxu0
        %v1634 = vadd.f32 %v473, %v1633
        %v1635 = vpop.f32.mrf.mxu0
        %v1636 = vadd.f32 %v477, %v1635
        %1637 = vmatprep.mubr.bf16.mxu0 %v621
        %1638 = vmatmul.mubr.bf16.gmra.mxu0 %v620
        %v1639 = vpop.f32.mrf.mxu0
        %v1640 = vadd.f32 %v473, %v1639
        %v1641 = vpop.f32.mrf.mxu0
        %v1642 = vadd.f32 %v477, %v1641
        %v1643 = vpop.f32.mrf.mxu0
        %v1644 = vadd.f32 %v473, %v1643
        %v1645 = vpop.f32.mrf.mxu0
        %v1646 = vadd.f32 %v477, %v1645
        %1647 = vmatprep.mubr.bf16.mxu0 %v623
        %1648 = vmatmul.mubr.bf16.gmra.mxu0 %v622
        %v1649 = vpop.f32.mrf.mxu0
        %v1650 = vadd.f32 %v473, %v1649
        %v1651 = vpop.f32.mrf.mxu0
        %v1652 = vadd.f32 %v477, %v1651
        %v1653 = vpop.f32.mrf.mxu0
        %v1654 = vadd.f32 %v473, %v1653
        %v1655 = vpop.f32.mrf.mxu0
        %v1656 = vadd.f32 %v477, %v1655
        %1657 = vmatprep.mubr.bf16.mxu0 %v625
        %1658 = vmatmul.mubr.bf16.gmra.mxu0 %v624
        %v1659 = vpop.f32.mrf.mxu0
        %v1660 = vadd.f32 %v473, %v1659
        %v1661 = vpop.f32.mrf.mxu0
        %v1662 = vadd.f32 %v477, %v1661
        %v1663 = vpop.f32.mrf.mxu0
        %v1664 = vadd.f32 %v473, %v1663
        %v1665 = vpop.f32.mrf.mxu0
        %v1666 = vadd.f32 %v477, %v1665
        %1667 = vmatprep.mubr.bf16.mxu0 %v627
        %1668 = vmatmul.mubr.bf16.gmra.mxu0 %v626
        %v1669 = vpop.f32.mrf.mxu0
        %v1670 = vadd.f32 %v473, %v1669
        %v1671 = vpop.f32.mrf.mxu0
        %v1672 = vadd.f32 %v477, %v1671
        %v1673 = vpop.f32.mrf.mxu0
        %v1674 = vadd.f32 %v473, %v1673
        %v1675 = vpop.f32.mrf.mxu0
        %v1676 = vadd.f32 %v477, %v1675
        %1677 = vmatprep.mubr.bf16.mxu0 %v629
        %1678 = vmatmul.mubr.bf16.gmra.mxu0 %v628
        %v1679 = vpop.f32.mrf.mxu0
        %v1680 = vadd.f32 %v473, %v1679
        %v1681 = vpop.f32.mrf.mxu0
        %v1682 = vadd.f32 %v477, %v1681
        %v1683 = vpop.f32.mrf.mxu0
        %v1684 = vadd.f32 %v473, %v1683
        %v1685 = vpop.f32.mrf.mxu0
        %v1686 = vadd.f32 %v477, %v1685
        %1687 = vdwg.mxu0
        %1688 = vmatprep.subr.bf16.mxu0 %v1107
        %1689 = vmatpush1.bf16.msra.mxu0 %v1106
        %1690 = vmatprep.subr.bf16.mxu0 %v1099
        %1691 = vmatpush1.bf16.msra.mxu0 %v1098
        %1692 = vmatprep.subr.bf16.mxu0 %v1091
        %1693 = vmatpush1.bf16.msra.mxu0 %v1090
        %1694 = vmatprep.subr.bf16.mxu0 %v1083
        %1695 = vmatpush1.bf16.msra.mxu0 %v1082
        %1696 = vmatprep.subr.bf16.mxu0 %v1075
        %1697 = vmatpush1.bf16.msra.mxu0 %v1074
        %1698 = vmatprep.subr.bf16.mxu0 %v1067
        %1699 = vmatpush1.bf16.msra.mxu0 %v1066
        %1700 = vmatprep.subr.bf16.mxu0 %v1059
        %1701 = vmatpush1.bf16.msra.mxu0 %v1058
        %1702 = vmatprep.subr.bf16.mxu0 %v1051
        %1703 = vmatpush1.bf16.msra.mxu0 %v1050
        %1704 = vmatprep.subr.bf16.mxu0 %v1171
        %1705 = vmatpush2.bf16.msra.mxu0 %v1170
        %1706 = vmatprep.subr.bf16.mxu0 %v1163
        %1707 = vmatpush2.bf16.msra.mxu0 %v1162
        %1708 = vmatprep.subr.bf16.mxu0 %v1155
        %1709 = vmatpush2.bf16.msra.mxu0 %v1154
        %1710 = vmatprep.subr.bf16.mxu0 %v1147
        %1711 = vmatpush2.bf16.msra.mxu0 %v1146
        %1712 = vmatprep.subr.bf16.mxu0 %v1139
        %1713 = vmatpush2.bf16.msra.mxu0 %v1138
        %1714 = vmatprep.subr.bf16.mxu0 %v1131
        %1715 = vmatpush2.bf16.msra.mxu0 %v1130
        %1716 = vmatprep.subr.bf16.mxu0 %v1123
        %1717 = vmatpush2.bf16.msra.mxu0 %v1122
        %1718 = vmatprep.subr.bf16.mxu0 %v1115
        %1719 = vmatpush2.bf16.msra.mxu0 %v1114
        %1720 = vmatprep.mubr.bf16.mxu0 %v599
        %1721 = vmatmul.mubr.bf16.gmra.mxu0 %v598
        %v1722 = vpop.f32.mrf.mxu0
        %v1723 = vadd.f32 %v481, %v1722
        %v1724 = vpop.f32.mrf.mxu0
        %v1725 = vadd.f32 %v485, %v1724
        %v1726 = vpop.f32.mrf.mxu0
        %v1727 = vadd.f32 %v481, %v1726
        %v1728 = vpop.f32.mrf.mxu0
        %v1729 = vadd.f32 %v485, %v1728
        %1730 = vmatprep.mubr.bf16.mxu0 %v601
        %1731 = vmatmul.mubr.bf16.gmra.mxu0 %v600
        %v1732 = vpop.f32.mrf.mxu0
        %v1733 = vadd.f32 %v481, %v1732
        %v1734 = vpop.f32.mrf.mxu0
        %v1735 = vadd.f32 %v485, %v1734
        %v1736 = vpop.f32.mrf.mxu0
        %v1737 = vadd.f32 %v481, %v1736
        %v1738 = vpop.f32.mrf.mxu0
        %v1739 = vadd.f32 %v485, %v1738
        %1740 = vmatprep.mubr.bf16.mxu0 %v603
        %1741 = vmatmul.mubr.bf16.gmra.mxu0 %v602
        %v1742 = vpop.f32.mrf.mxu0
        %v1743 = vadd.f32 %v481, %v1742
        %v1744 = vpop.f32.mrf.mxu0
        %v1745 = vadd.f32 %v485, %v1744
        %v1746 = vpop.f32.mrf.mxu0
        %v1747 = vadd.f32 %v481, %v1746
        %v1748 = vpop.f32.mrf.mxu0
        %v1749 = vadd.f32 %v485, %v1748
        %1750 = vmatprep.mubr.bf16.mxu0 %v605
        %1751 = vmatmul.mubr.bf16.gmra.mxu0 %v604
        %v1752 = vpop.f32.mrf.mxu0
        %v1753 = vadd.f32 %v481, %v1752
        %v1754 = vpop.f32.mrf.mxu0
        %v1755 = vadd.f32 %v485, %v1754
        %v1756 = vpop.f32.mrf.mxu0
        %v1757 = vadd.f32 %v481, %v1756
        %v1758 = vpop.f32.mrf.mxu0
        %v1759 = vadd.f32 %v485, %v1758
        %1760 = vmatprep.mubr.bf16.mxu0 %v607
        %1761 = vmatmul.mubr.bf16.gmra.mxu0 %v606
        %v1762 = vpop.f32.mrf.mxu0
        %v1763 = vadd.f32 %v481, %v1762
        %v1764 = vpop.f32.mrf.mxu0
        %v1765 = vadd.f32 %v485, %v1764
        %v1766 = vpop.f32.mrf.mxu0
        %v1767 = vadd.f32 %v481, %v1766
        %v1768 = vpop.f32.mrf.mxu0
        %v1769 = vadd.f32 %v485, %v1768
        %1770 = vmatprep.mubr.bf16.mxu0 %v609
        %1771 = vmatmul.mubr.bf16.gmra.mxu0 %v608
        %v1772 = vpop.f32.mrf.mxu0
        %v1773 = vadd.f32 %v481, %v1772
        %v1774 = vpop.f32.mrf.mxu0
        %v1775 = vadd.f32 %v485, %v1774
        %v1776 = vpop.f32.mrf.mxu0
        %v1777 = vadd.f32 %v481, %v1776
        %v1778 = vpop.f32.mrf.mxu0
        %v1779 = vadd.f32 %v485, %v1778
        %1780 = vmatprep.mubr.bf16.mxu0 %v611
        %1781 = vmatmul.mubr.bf16.gmra.mxu0 %v610
        %v1782 = vpop.f32.mrf.mxu0
        %v1783 = vadd.f32 %v481, %v1782
        %v1784 = vpop.f32.mrf.mxu0
        %v1785 = vadd.f32 %v485, %v1784
        %v1786 = vpop.f32.mrf.mxu0
        %v1787 = vadd.f32 %v481, %v1786
        %v1788 = vpop.f32.mrf.mxu0
        %v1789 = vadd.f32 %v485, %v1788
        %1790 = vmatprep.mubr.bf16.mxu0 %v613
        %1791 = vmatmul.mubr.bf16.gmra.mxu0 %v612
        %v1792 = vpop.f32.mrf.mxu0
        %v1793 = vadd.f32 %v481, %v1792
        %v1794 = vpop.f32.mrf.mxu0
        %v1795 = vadd.f32 %v485, %v1794
        %v1796 = vpop.f32.mrf.mxu0
        %v1797 = vadd.f32 %v481, %v1796
        %v1798 = vpop.f32.mrf.mxu0
        %v1799 = vadd.f32 %v485, %v1798
        %1800 = vmatprep.mubr.bf16.mxu0 %v615
        %1801 = vmatmul.mubr.bf16.gmra.mxu0 %v614
        %v1802 = vpop.f32.mrf.mxu0
        %v1803 = vadd.f32 %v481, %v1802
        %v1804 = vpop.f32.mrf.mxu0
        %v1805 = vadd.f32 %v485, %v1804
        %v1806 = vpop.f32.mrf.mxu0
        %v1807 = vadd.f32 %v481, %v1806
        %v1808 = vpop.f32.mrf.mxu0
        %v1809 = vadd.f32 %v485, %v1808
        %1810 = vmatprep.mubr.bf16.mxu0 %v617
        %1811 = vmatmul.mubr.bf16.gmra.mxu0 %v616
        %v1812 = vpop.f32.mrf.mxu0
        %v1813 = vadd.f32 %v481, %v1812
        %v1814 = vpop.f32.mrf.mxu0
        %v1815 = vadd.f32 %v485, %v1814
        %v1816 = vpop.f32.mrf.mxu0
        %v1817 = vadd.f32 %v481, %v1816
        %v1818 = vpop.f32.mrf.mxu0
        %v1819 = vadd.f32 %v485, %v1818
        %1820 = vmatprep.mubr.bf16.mxu0 %v619
        %1821 = vmatmul.mubr.bf16.gmra.mxu0 %v618
        %v1822 = vpop.f32.mrf.mxu0
        %v1823 = vadd.f32 %v481, %v1822
        %v1824 = vpop.f32.mrf.mxu0
        %v1825 = vadd.f32 %v485, %v1824
        %v1826 = vpop.f32.mrf.mxu0
        %v1827 = vadd.f32 %v481, %v1826
        %v1828 = vpop.f32.mrf.mxu0
        %v1829 = vadd.f32 %v485, %v1828
        %1830 = vmatprep.mubr.bf16.mxu0 %v621
        %1831 = vmatmul.mubr.bf16.gmra.mxu0 %v620
        %v1832 = vpop.f32.mrf.mxu0
        %v1833 = vadd.f32 %v481, %v1832
        %v1834 = vpop.f32.mrf.mxu0
        %v1835 = vadd.f32 %v485, %v1834
        %v1836 = vpop.f32.mrf.mxu0
        %v1837 = vadd.f32 %v481, %v1836
        %v1838 = vpop.f32.mrf.mxu0
        %v1839 = vadd.f32 %v485, %v1838
        %1840 = vmatprep.mubr.bf16.mxu0 %v623
        %1841 = vmatmul.mubr.bf16.gmra.mxu0 %v622
        %v1842 = vpop.f32.mrf.mxu0
        %v1843 = vadd.f32 %v481, %v1842
        %v1844 = vpop.f32.mrf.mxu0
        %v1845 = vadd.f32 %v485, %v1844
        %v1846 = vpop.f32.mrf.mxu0
        %v1847 = vadd.f32 %v481, %v1846
        %v1848 = vpop.f32.mrf.mxu0
        %v1849 = vadd.f32 %v485, %v1848
        %1850 = vmatprep.mubr.bf16.mxu0 %v625
        %1851 = vmatmul.mubr.bf16.gmra.mxu0 %v624
        %v1852 = vpop.f32.mrf.mxu0
        %v1853 = vadd.f32 %v481, %v1852
        %v1854 = vpop.f32.mrf.mxu0
        %v1855 = vadd.f32 %v485, %v1854
        %v1856 = vpop.f32.mrf.mxu0
        %v1857 = vadd.f32 %v481, %v1856
        %v1858 = vpop.f32.mrf.mxu0
        %v1859 = vadd.f32 %v485, %v1858
        %1860 = vmatprep.mubr.bf16.mxu0 %v627
        %1861 = vmatmul.mubr.bf16.gmra.mxu0 %v626
        %v1862 = vpop.f32.mrf.mxu0
        %v1863 = vadd.f32 %v481, %v1862
        %v1864 = vpop.f32.mrf.mxu0
        %v1865 = vadd.f32 %v485, %v1864
        %v1866 = vpop.f32.mrf.mxu0
        %v1867 = vadd.f32 %v481, %v1866
        %v1868 = vpop.f32.mrf.mxu0
        %v1869 = vadd.f32 %v485, %v1868
        %1870 = vmatprep.mubr.bf16.mxu0 %v629
        %1871 = vmatmul.mubr.bf16.gmra.mxu0 %v628
        %v1872 = vpop.f32.mrf.mxu0
        %v1873 = vadd.f32 %v481, %v1872
        %v1874 = vpop.f32.mrf.mxu0
        %v1875 = vadd.f32 %v485, %v1874
        %v1876 = vpop.f32.mrf.mxu0
        %v1877 = vadd.f32 %v481, %v1876
        %v1878 = vpop.f32.mrf.mxu0
        %v1879 = vadd.f32 %v485, %v1878
        %1880 = vdwg.mxu0
        %1881 = vmatprep.subr.bf16.mxu0 %v1109
        %1882 = vmatpush1.bf16.msra.mxu0 %v1108
        %1883 = vmatprep.subr.bf16.mxu0 %v1101
        %1884 = vmatpush1.bf16.msra.mxu0 %v1100
        %1885 = vmatprep.subr.bf16.mxu0 %v1093
        %1886 = vmatpush1.bf16.msra.mxu0 %v1092
        %1887 = vmatprep.subr.bf16.mxu0 %v1085
        %1888 = vmatpush1.bf16.msra.mxu0 %v1084
        %1889 = vmatprep.subr.bf16.mxu0 %v1077
        %1890 = vmatpush1.bf16.msra.mxu0 %v1076
        %1891 = vmatprep.subr.bf16.mxu0 %v1069
        %1892 = vmatpush1.bf16.msra.mxu0 %v1068
        %1893 = vmatprep.subr.bf16.mxu0 %v1061
        %1894 = vmatpush1.bf16.msra.mxu0 %v1060
        %1895 = vmatprep.subr.bf16.mxu0 %v1053
        %1896 = vmatpush1.bf16.msra.mxu0 %v1052
        %1897 = vmatprep.subr.bf16.mxu0 %v1173
        %1898 = vmatpush2.bf16.msra.mxu0 %v1172
        %1899 = vmatprep.subr.bf16.mxu0 %v1165
        %1900 = vmatpush2.bf16.msra.mxu0 %v1164
        %1901 = vmatprep.subr.bf16.mxu0 %v1157
        %1902 = vmatpush2.bf16.msra.mxu0 %v1156
        %1903 = vmatprep.subr.bf16.mxu0 %v1149
        %1904 = vmatpush2.bf16.msra.mxu0 %v1148
        %1905 = vmatprep.subr.bf16.mxu0 %v1141
        %1906 = vmatpush2.bf16.msra.mxu0 %v1140
        %1907 = vmatprep.subr.bf16.mxu0 %v1133
        %1908 = vmatpush2.bf16.msra.mxu0 %v1132
        %1909 = vmatprep.subr.bf16.mxu0 %v1125
        %1910 = vmatpush2.bf16.msra.mxu0 %v1124
        %1911 = vmatprep.subr.bf16.mxu0 %v1117
        %1912 = vmatpush2.bf16.msra.mxu0 %v1116
        %1913 = vmatprep.mubr.bf16.mxu0 %v599
        %1914 = vmatmul.mubr.bf16.gmra.mxu0 %v598
        %v1915 = vpop.f32.mrf.mxu0
        %v1916 = vadd.f32 %v489, %v1915
        %v1917 = vpop.f32.mrf.mxu0
        %v1918 = vadd.f32 %v493, %v1917
        %v1919 = vpop.f32.mrf.mxu0
        %v1920 = vadd.f32 %v489, %v1919
        %v1921 = vpop.f32.mrf.mxu0
        %v1922 = vadd.f32 %v493, %v1921
        %1923 = vmatprep.mubr.bf16.mxu0 %v601
        %1924 = vmatmul.mubr.bf16.gmra.mxu0 %v600
        %v1925 = vpop.f32.mrf.mxu0
        %v1926 = vadd.f32 %v489, %v1925
        %v1927 = vpop.f32.mrf.mxu0
        %v1928 = vadd.f32 %v493, %v1927
        %v1929 = vpop.f32.mrf.mxu0
        %v1930 = vadd.f32 %v489, %v1929
        %v1931 = vpop.f32.mrf.mxu0
        %v1932 = vadd.f32 %v493, %v1931
        %1933 = vmatprep.mubr.bf16.mxu0 %v603
        %1934 = vmatmul.mubr.bf16.gmra.mxu0 %v602
        %v1935 = vpop.f32.mrf.mxu0
        %v1936 = vadd.f32 %v489, %v1935
        %v1937 = vpop.f32.mrf.mxu0
        %v1938 = vadd.f32 %v493, %v1937
        %v1939 = vpop.f32.mrf.mxu0
        %v1940 = vadd.f32 %v489, %v1939
        %v1941 = vpop.f32.mrf.mxu0
        %v1942 = vadd.f32 %v493, %v1941
        %1943 = vmatprep.mubr.bf16.mxu0 %v605
        %1944 = vmatmul.mubr.bf16.gmra.mxu0 %v604
        %v1945 = vpop.f32.mrf.mxu0
        %v1946 = vadd.f32 %v489, %v1945
        %v1947 = vpop.f32.mrf.mxu0
        %v1948 = vadd.f32 %v493, %v1947
        %v1949 = vpop.f32.mrf.mxu0
        %v1950 = vadd.f32 %v489, %v1949
        %v1951 = vpop.f32.mrf.mxu0
        %v1952 = vadd.f32 %v493, %v1951
        %1953 = vmatprep.mubr.bf16.mxu0 %v607
        %1954 = vmatmul.mubr.bf16.gmra.mxu0 %v606
        %v1955 = vpop.f32.mrf.mxu0
        %v1956 = vadd.f32 %v489, %v1955
        %v1957 = vpop.f32.mrf.mxu0
        %v1958 = vadd.f32 %v493, %v1957
        %v1959 = vpop.f32.mrf.mxu0
        %v1960 = vadd.f32 %v489, %v1959
        %v1961 = vpop.f32.mrf.mxu0
        %v1962 = vadd.f32 %v493, %v1961
        %1963 = vmatprep.mubr.bf16.mxu0 %v609
        %1964 = vmatmul.mubr.bf16.gmra.mxu0 %v608
        %v1965 = vpop.f32.mrf.mxu0
        %v1966 = vadd.f32 %v489, %v1965
        %v1967 = vpop.f32.mrf.mxu0
        %v1968 = vadd.f32 %v493, %v1967
        %v1969 = vpop.f32.mrf.mxu0
        %v1970 = vadd.f32 %v489, %v1969
        %v1971 = vpop.f32.mrf.mxu0
        %v1972 = vadd.f32 %v493, %v1971
        %1973 = vmatprep.mubr.bf16.mxu0 %v611
        %1974 = vmatmul.mubr.bf16.gmra.mxu0 %v610
        %v1975 = vpop.f32.mrf.mxu0
        %v1976 = vadd.f32 %v489, %v1975
        %v1977 = vpop.f32.mrf.mxu0
        %v1978 = vadd.f32 %v493, %v1977
        %v1979 = vpop.f32.mrf.mxu0
        %v1980 = vadd.f32 %v489, %v1979
        %v1981 = vpop.f32.mrf.mxu0
        %v1982 = vadd.f32 %v493, %v1981
        %1983 = vmatprep.mubr.bf16.mxu0 %v613
        %1984 = vmatmul.mubr.bf16.gmra.mxu0 %v612
        %v1985 = vpop.f32.mrf.mxu0
        %v1986 = vadd.f32 %v489, %v1985
        %v1987 = vpop.f32.mrf.mxu0
        %v1988 = vadd.f32 %v493, %v1987
        %v1989 = vpop.f32.mrf.mxu0
        %v1990 = vadd.f32 %v489, %v1989
        %v1991 = vpop.f32.mrf.mxu0
        %v1992 = vadd.f32 %v493, %v1991
        %1993 = vmatprep.mubr.bf16.mxu0 %v615
        %1994 = vmatmul.mubr.bf16.gmra.mxu0 %v614
        %v1995 = vpop.f32.mrf.mxu0
        %v1996 = vadd.f32 %v489, %v1995
        %v1997 = vpop.f32.mrf.mxu0
        %v1998 = vadd.f32 %v493, %v1997
        %v1999 = vpop.f32.mrf.mxu0
        %v2000 = vadd.f32 %v489, %v1999
        %v2001 = vpop.f32.mrf.mxu0
        %v2002 = vadd.f32 %v493, %v2001
        %2003 = vmatprep.mubr.bf16.mxu0 %v617
        %2004 = vmatmul.mubr.bf16.gmra.mxu0 %v616
        %v2005 = vpop.f32.mrf.mxu0
        %v2006 = vadd.f32 %v489, %v2005
        %v2007 = vpop.f32.mrf.mxu0
        %v2008 = vadd.f32 %v493, %v2007
        %v2009 = vpop.f32.mrf.mxu0
        %v2010 = vadd.f32 %v489, %v2009
        %v2011 = vpop.f32.mrf.mxu0
        %v2012 = vadd.f32 %v493, %v2011
        %2013 = vmatprep.mubr.bf16.mxu0 %v619
        %2014 = vmatmul.mubr.bf16.gmra.mxu0 %v618
        %v2015 = vpop.f32.mrf.mxu0
        %v2016 = vadd.f32 %v489, %v2015
        %v2017 = vpop.f32.mrf.mxu0
        %v2018 = vadd.f32 %v493, %v2017
        %v2019 = vpop.f32.mrf.mxu0
        %v2020 = vadd.f32 %v489, %v2019
        %v2021 = vpop.f32.mrf.mxu0
        %v2022 = vadd.f32 %v493, %v2021
        %2023 = vmatprep.mubr.bf16.mxu0 %v621
        %2024 = vmatmul.mubr.bf16.gmra.mxu0 %v620
        %v2025 = vpop.f32.mrf.mxu0
        %v2026 = vadd.f32 %v489, %v2025
        %v2027 = vpop.f32.mrf.mxu0
        %v2028 = vadd.f32 %v493, %v2027
        %v2029 = vpop.f32.mrf.mxu0
        %v2030 = vadd.f32 %v489, %v2029
        %v2031 = vpop.f32.mrf.mxu0
        %v2032 = vadd.f32 %v493, %v2031
        %2033 = vmatprep.mubr.bf16.mxu0 %v623
        %2034 = vmatmul.mubr.bf16.gmra.mxu0 %v622
        %v2035 = vpop.f32.mrf.mxu0
        %v2036 = vadd.f32 %v489, %v2035
        %v2037 = vpop.f32.mrf.mxu0
        %v2038 = vadd.f32 %v493, %v2037
        %v2039 = vpop.f32.mrf.mxu0
        %v2040 = vadd.f32 %v489, %v2039
        %v2041 = vpop.f32.mrf.mxu0
        %v2042 = vadd.f32 %v493, %v2041
        %2043 = vmatprep.mubr.bf16.mxu0 %v625
        %2044 = vmatmul.mubr.bf16.gmra.mxu0 %v624
        %v2045 = vpop.f32.mrf.mxu0
        %v2046 = vadd.f32 %v489, %v2045
        %v2047 = vpop.f32.mrf.mxu0
        %v2048 = vadd.f32 %v493, %v2047
        %v2049 = vpop.f32.mrf.mxu0
        %v2050 = vadd.f32 %v489, %v2049
        %v2051 = vpop.f32.mrf.mxu0
        %v2052 = vadd.f32 %v493, %v2051
        %2053 = vmatprep.mubr.bf16.mxu0 %v627
        %2054 = vmatmul.mubr.bf16.gmra.mxu0 %v626
        %v2055 = vpop.f32.mrf.mxu0
        %v2056 = vadd.f32 %v489, %v2055
        %v2057 = vpop.f32.mrf.mxu0
        %v2058 = vadd.f32 %v493, %v2057
        %v2059 = vpop.f32.mrf.mxu0
        %v2060 = vadd.f32 %v489, %v2059
        %v2061 = vpop.f32.mrf.mxu0
        %v2062 = vadd.f32 %v493, %v2061
        %2063 = vmatprep.mubr.bf16.mxu0 %v629
        %2064 = vmatmul.mubr.bf16.gmra.mxu0 %v628
        %v2065 = vpop.f32.mrf.mxu0
        %v2066 = vadd.f32 %v489, %v2065
        %v2067 = vpop.f32.mrf.mxu0
        %v2068 = vadd.f32 %v493, %v2067
        %v2069 = vpop.f32.mrf.mxu0
        %v2070 = vadd.f32 %v489, %v2069
        %v2071 = vpop.f32.mrf.mxu0
        %v2072 = vadd.f32 %v493, %v2071
        %2073 = vdwg.mxu0
        %v2074 = vmax.f32 %v1337, 0.0
        %v2075 = vmax.f32 %v1339, 0.0
        %v2076 = vmax.f32 %v1530, 0.0
        %v2077 = vmax.f32 %v1532, 0.0
        %v2078 = vmax.f32 %v1723, 0.0
        %v2079 = vmax.f32 %v1725, 0.0
        %v2080 = vmax.f32 %v1916, 0.0
        %v2081 = vmax.f32 %v1918, 0.0
        %v2082 = vmax.f32 %v1341, 0.0
        %v2083 = vmax.f32 %v1343, 0.0
        %v2084 = vmax.f32 %v1534, 0.0
        %v2085 = vmax.f32 %v1536, 0.0
        %v2086 = vmax.f32 %v1727, 0.0
        %v2087 = vmax.f32 %v1729, 0.0
        %v2088 = vmax.f32 %v1920, 0.0
        %v2089 = vmax.f32 %v1922, 0.0
        %v2090 = vmax.f32 %v1347, 0.0
        %v2091 = vmax.f32 %v1349, 0.0
        %v2092 = vmax.f32 %v1540, 0.0
        %v2093 = vmax.f32 %v1542, 0.0
        %v2094 = vmax.f32 %v1733, 0.0
        %v2095 = vmax.f32 %v1735, 0.0
        %v2096 = vmax.f32 %v1926, 0.0
        %v2097 = vmax.f32 %v1928, 0.0
        %v2098 = vmax.f32 %v1351, 0.0
        %v2099 = vmax.f32 %v1353, 0.0
        %v2100 = vmax.f32 %v1544, 0.0
        %v2101 = vmax.f32 %v1546, 0.0
        %v2102 = vmax.f32 %v1737, 0.0
        %v2103 = vmax.f32 %v1739, 0.0
        %v2104 = vmax.f32 %v1930, 0.0
        %v2105 = vmax.f32 %v1932, 0.0
        %v2106 = vmax.f32 %v1357, 0.0
        %v2107 = vmax.f32 %v1359, 0.0
        %v2108 = vmax.f32 %v1550, 0.0
        %v2109 = vmax.f32 %v1552, 0.0
        %v2110 = vmax.f32 %v1743, 0.0
        %v2111 = vmax.f32 %v1745, 0.0
        %v2112 = vmax.f32 %v1936, 0.0
        %v2113 = vmax.f32 %v1938, 0.0
        %v2114 = vmax.f32 %v1361, 0.0
        %v2115 = vmax.f32 %v1363, 0.0
        %v2116 = vmax.f32 %v1554, 0.0
        %v2117 = vmax.f32 %v1556, 0.0
        %v2118 = vmax.f32 %v1747, 0.0
        %v2119 = vmax.f32 %v1749, 0.0
        %v2120 = vmax.f32 %v1940, 0.0
        %v2121 = vmax.f32 %v1942, 0.0
        %v2122 = vmax.f32 %v1367, 0.0
        %v2123 = vmax.f32 %v1369, 0.0
        %v2124 = vmax.f32 %v1560, 0.0
        %v2125 = vmax.f32 %v1562, 0.0
        %v2126 = vmax.f32 %v1753, 0.0
        %v2127 = vmax.f32 %v1755, 0.0
        %v2128 = vmax.f32 %v1946, 0.0
        %v2129 = vmax.f32 %v1948, 0.0
        %v2130 = vmax.f32 %v1371, 0.0
        %v2131 = vmax.f32 %v1373, 0.0
        %v2132 = vmax.f32 %v1564, 0.0
        %v2133 = vmax.f32 %v1566, 0.0
        %v2134 = vmax.f32 %v1757, 0.0
        %v2135 = vmax.f32 %v1759, 0.0
        %v2136 = vmax.f32 %v1950, 0.0
        %v2137 = vmax.f32 %v1952, 0.0
        %v2138 = vmax.f32 %v1377, 0.0
        %v2139 = vmax.f32 %v1379, 0.0
        %v2140 = vmax.f32 %v1570, 0.0
        %v2141 = vmax.f32 %v1572, 0.0
        %v2142 = vmax.f32 %v1763, 0.0
        %v2143 = vmax.f32 %v1765, 0.0
        %v2144 = vmax.f32 %v1956, 0.0
        %v2145 = vmax.f32 %v1958, 0.0
        %v2146 = vmax.f32 %v1381, 0.0
        %v2147 = vmax.f32 %v1383, 0.0
        %v2148 = vmax.f32 %v1574, 0.0
        %v2149 = vmax.f32 %v1576, 0.0
        %v2150 = vmax.f32 %v1767, 0.0
        %v2151 = vmax.f32 %v1769, 0.0
        %v2152 = vmax.f32 %v1960, 0.0
        %v2153 = vmax.f32 %v1962, 0.0
        %v2154 = vmax.f32 %v1387, 0.0
        %v2155 = vmax.f32 %v1389, 0.0
        %v2156 = vmax.f32 %v1580, 0.0
        %v2157 = vmax.f32 %v1582, 0.0
        %v2158 = vmax.f32 %v1773, 0.0
        %v2159 = vmax.f32 %v1775, 0.0
        %v2160 = vmax.f32 %v1966, 0.0
        %v2161 = vmax.f32 %v1968, 0.0
        %v2162 = vmax.f32 %v1391, 0.0
        %v2163 = vmax.f32 %v1393, 0.0
        %v2164 = vmax.f32 %v1584, 0.0
        %v2165 = vmax.f32 %v1586, 0.0
        %v2166 = vmax.f32 %v1777, 0.0
        %v2167 = vmax.f32 %v1779, 0.0
        %v2168 = vmax.f32 %v1970, 0.0
        %v2169 = vmax.f32 %v1972, 0.0
        %v2170 = vmax.f32 %v1397, 0.0
        %v2171 = vmax.f32 %v1399, 0.0
        %v2172 = vmax.f32 %v1590, 0.0
        %v2173 = vmax.f32 %v1592, 0.0
        %v2174 = vmax.f32 %v1783, 0.0
        %v2175 = vmax.f32 %v1785, 0.0
        %v2176 = vmax.f32 %v1976, 0.0
        %v2177 = vmax.f32 %v1978, 0.0
        %v2178 = vmax.f32 %v1401, 0.0
        %v2179 = vmax.f32 %v1403, 0.0
        %v2180 = vmax.f32 %v1594, 0.0
        %v2181 = vmax.f32 %v1596, 0.0
        %v2182 = vmax.f32 %v1787, 0.0
        %v2183 = vmax.f32 %v1789, 0.0
        %v2184 = vmax.f32 %v1980, 0.0
        %v2185 = vmax.f32 %v1982, 0.0
        %v2186 = vmax.f32 %v1407, 0.0
        %v2187 = vmax.f32 %v1409, 0.0
        %v2188 = vmax.f32 %v1600, 0.0
        %v2189 = vmax.f32 %v1602, 0.0
        %v2190 = vmax.f32 %v1793, 0.0
        %v2191 = vmax.f32 %v1795, 0.0
        %v2192 = vmax.f32 %v1986, 0.0
        %v2193 = vmax.f32 %v1988, 0.0
        %v2194 = vmax.f32 %v1411, 0.0
        %v2195 = vmax.f32 %v1413, 0.0
        %v2196 = vmax.f32 %v1604, 0.0
        %v2197 = vmax.f32 %v1606, 0.0
        %v2198 = vmax.f32 %v1797, 0.0
        %v2199 = vmax.f32 %v1799, 0.0
        %v2200 = vmax.f32 %v1990, 0.0
        %v2201 = vmax.f32 %v1992, 0.0
        %v2202 = vmax.f32 %v1417, 0.0
        %v2203 = vmax.f32 %v1419, 0.0
        %v2204 = vmax.f32 %v1610, 0.0
        %v2205 = vmax.f32 %v1612, 0.0
        %v2206 = vmax.f32 %v1803, 0.0
        %v2207 = vmax.f32 %v1805, 0.0
        %v2208 = vmax.f32 %v1996, 0.0
        %v2209 = vmax.f32 %v1998, 0.0
        %v2210 = vmax.f32 %v1421, 0.0
        %v2211 = vmax.f32 %v1423, 0.0
        %v2212 = vmax.f32 %v1614, 0.0
        %v2213 = vmax.f32 %v1616, 0.0
        %v2214 = vmax.f32 %v1807, 0.0
        %v2215 = vmax.f32 %v1809, 0.0
        %v2216 = vmax.f32 %v2000, 0.0
        %v2217 = vmax.f32 %v2002, 0.0
        %v2218 = vmax.f32 %v1427, 0.0
        %v2219 = vmax.f32 %v1429, 0.0
        %v2220 = vmax.f32 %v1620, 0.0
        %v2221 = vmax.f32 %v1622, 0.0
        %v2222 = vmax.f32 %v1813, 0.0
        %v2223 = vmax.f32 %v1815, 0.0
        %v2224 = vmax.f32 %v2006, 0.0
        %v2225 = vmax.f32 %v2008, 0.0
        %v2226 = vmax.f32 %v1431, 0.0
        %v2227 = vmax.f32 %v1433, 0.0
        %v2228 = vmax.f32 %v1624, 0.0
        %v2229 = vmax.f32 %v1626, 0.0
        %v2230 = vmax.f32 %v1817, 0.0
        %v2231 = vmax.f32 %v1819, 0.0
        %v2232 = vmax.f32 %v2010, 0.0
        %v2233 = vmax.f32 %v2012, 0.0
        %v2234 = vmax.f32 %v1437, 0.0
        %v2235 = vmax.f32 %v1439, 0.0
        %v2236 = vmax.f32 %v1630, 0.0
        %v2237 = vmax.f32 %v1632, 0.0
        %v2238 = vmax.f32 %v1823, 0.0
        %v2239 = vmax.f32 %v1825, 0.0
        %v2240 = vmax.f32 %v2016, 0.0
        %v2241 = vmax.f32 %v2018, 0.0
        %v2242 = vmax.f32 %v1441, 0.0
        %v2243 = vmax.f32 %v1443, 0.0
        %v2244 = vmax.f32 %v1634, 0.0
        %v2245 = vmax.f32 %v1636, 0.0
        %v2246 = vmax.f32 %v1827, 0.0
        %v2247 = vmax.f32 %v1829, 0.0
        %v2248 = vmax.f32 %v2020, 0.0
        %v2249 = vmax.f32 %v2022, 0.0
        %v2250 = vmax.f32 %v1447, 0.0
        %v2251 = vmax.f32 %v1449, 0.0
        %v2252 = vmax.f32 %v1640, 0.0
        %v2253 = vmax.f32 %v1642, 0.0
        %v2254 = vmax.f32 %v1833, 0.0
        %v2255 = vmax.f32 %v1835, 0.0
        %v2256 = vmax.f32 %v2026, 0.0
        %v2257 = vmax.f32 %v2028, 0.0
        %v2258 = vmax.f32 %v1451, 0.0
        %v2259 = vmax.f32 %v1453, 0.0
        %v2260 = vmax.f32 %v1644, 0.0
        %v2261 = vmax.f32 %v1646, 0.0
        %v2262 = vmax.f32 %v1837, 0.0
        %v2263 = vmax.f32 %v1839, 0.0
        %v2264 = vmax.f32 %v2030, 0.0
        %v2265 = vmax.f32 %v2032, 0.0
        %v2266 = vmax.f32 %v1457, 0.0
        %v2267 = vmax.f32 %v1459, 0.0
        %v2268 = vmax.f32 %v1650, 0.0
        %v2269 = vmax.f32 %v1652, 0.0
        %v2270 = vmax.f32 %v1843, 0.0
        %v2271 = vmax.f32 %v1845, 0.0
        %v2272 = vmax.f32 %v2036, 0.0
        %v2273 = vmax.f32 %v2038, 0.0
        %v2274 = vmax.f32 %v1461, 0.0
        %v2275 = vmax.f32 %v1463, 0.0
        %v2276 = vmax.f32 %v1654, 0.0
        %v2277 = vmax.f32 %v1656, 0.0
        %v2278 = vmax.f32 %v1847, 0.0
        %v2279 = vmax.f32 %v1849, 0.0
        %v2280 = vmax.f32 %v2040, 0.0
        %v2281 = vmax.f32 %v2042, 0.0
        %v2282 = vmax.f32 %v1467, 0.0
        %v2283 = vmax.f32 %v1469, 0.0
        %v2284 = vmax.f32 %v1660, 0.0
        %v2285 = vmax.f32 %v1662, 0.0
        %v2286 = vmax.f32 %v1853, 0.0
        %v2287 = vmax.f32 %v1855, 0.0
        %v2288 = vmax.f32 %v2046, 0.0
        %v2289 = vmax.f32 %v2048, 0.0
        %v2290 = vmax.f32 %v1471, 0.0
        %v2291 = vmax.f32 %v1473, 0.0
        %v2292 = vmax.f32 %v1664, 0.0
        %v2293 = vmax.f32 %v1666, 0.0
        %v2294 = vmax.f32 %v1857, 0.0
        %v2295 = vmax.f32 %v1859, 0.0
        %v2296 = vmax.f32 %v2050, 0.0
        %v2297 = vmax.f32 %v2052, 0.0
        %v2298 = vmax.f32 %v1477, 0.0
        %v2299 = vmax.f32 %v1479, 0.0
        %v2300 = vmax.f32 %v1670, 0.0
        %v2301 = vmax.f32 %v1672, 0.0
        %v2302 = vmax.f32 %v1863, 0.0
        %v2303 = vmax.f32 %v1865, 0.0
        %v2304 = vmax.f32 %v2056, 0.0
        %v2305 = vmax.f32 %v2058, 0.0
        %v2306 = vmax.f32 %v1481, 0.0
        %v2307 = vmax.f32 %v1483, 0.0
        %v2308 = vmax.f32 %v1674, 0.0
        %v2309 = vmax.f32 %v1676, 0.0
        %v2310 = vmax.f32 %v1867, 0.0
        %v2311 = vmax.f32 %v1869, 0.0
        %v2312 = vmax.f32 %v2060, 0.0
        %v2313 = vmax.f32 %v2062, 0.0
        %v2314 = vmax.f32 %v1487, 0.0
        %v2315 = vmax.f32 %v1489, 0.0
        %v2316 = vmax.f32 %v1680, 0.0
        %v2317 = vmax.f32 %v1682, 0.0
        %v2318 = vmax.f32 %v1873, 0.0
        %v2319 = vmax.f32 %v1875, 0.0
        %v2320 = vmax.f32 %v2066, 0.0
        %v2321 = vmax.f32 %v2068, 0.0
        %v2322 = vmax.f32 %v1491, 0.0
        %v2323 = vmax.f32 %v1493, 0.0
        %v2324 = vmax.f32 %v1684, 0.0
        %v2325 = vmax.f32 %v1686, 0.0
        %v2326 = vmax.f32 %v1877, 0.0
        %v2327 = vmax.f32 %v1879, 0.0
        %v2328 = vmax.f32 %v2070, 0.0
        %v2329 = vmax.f32 %v2072, 0.0
        %v2330 = vpack.c.bf16 %v2082, %v2074
        %v2331 = vpack.c.bf16 %v2083, %v2075
        %v2332 = vpack.c.bf16 %v2084, %v2076
        %v2333 = vpack.c.bf16 %v2085, %v2077
        %v2334 = vpack.c.bf16 %v2086, %v2078
        %v2335 = vpack.c.bf16 %v2087, %v2079
        %v2336 = vpack.c.bf16 %v2088, %v2080
        %v2337 = vpack.c.bf16 %v2089, %v2081
        %v2338 = vpack.c.bf16 %v2098, %v2090
        %v2339 = vpack.c.bf16 %v2099, %v2091
        %v2340 = vpack.c.bf16 %v2100, %v2092
        %v2341 = vpack.c.bf16 %v2101, %v2093
        %v2342 = vpack.c.bf16 %v2102, %v2094
        %v2343 = vpack.c.bf16 %v2103, %v2095
        %v2344 = vpack.c.bf16 %v2104, %v2096
        %v2345 = vpack.c.bf16 %v2105, %v2097
        %v2346 = vpack.c.bf16 %v2114, %v2106
        %v2347 = vpack.c.bf16 %v2115, %v2107
        %v2348 = vpack.c.bf16 %v2116, %v2108
        %v2349 = vpack.c.bf16 %v2117, %v2109
        %v2350 = vpack.c.bf16 %v2118, %v2110
        %v2351 = vpack.c.bf16 %v2119, %v2111
        %v2352 = vpack.c.bf16 %v2120, %v2112
        %v2353 = vpack.c.bf16 %v2121, %v2113
        %v2354 = vpack.c.bf16 %v2130, %v2122
        %v2355 = vpack.c.bf16 %v2131, %v2123
        %v2356 = vpack.c.bf16 %v2132, %v2124
        %v2357 = vpack.c.bf16 %v2133, %v2125
        %v2358 = vpack.c.bf16 %v2134, %v2126
        %v2359 = vpack.c.bf16 %v2135, %v2127
        %v2360 = vpack.c.bf16 %v2136, %v2128
        %v2361 = vpack.c.bf16 %v2137, %v2129
        %v2362 = vpack.c.bf16 %v2146, %v2138
        %v2363 = vpack.c.bf16 %v2147, %v2139
        %v2364 = vpack.c.bf16 %v2148, %v2140
        %v2365 = vpack.c.bf16 %v2149, %v2141
        %v2366 = vpack.c.bf16 %v2150, %v2142
        %v2367 = vpack.c.bf16 %v2151, %v2143
        %v2368 = vpack.c.bf16 %v2152, %v2144
        %v2369 = vpack.c.bf16 %v2153, %v2145
        %v2370 = vpack.c.bf16 %v2162, %v2154
        %v2371 = vpack.c.bf16 %v2163, %v2155
        %v2372 = vpack.c.bf16 %v2164, %v2156
        %v2373 = vpack.c.bf16 %v2165, %v2157
        %v2374 = vpack.c.bf16 %v2166, %v2158
        %v2375 = vpack.c.bf16 %v2167, %v2159
        %v2376 = vpack.c.bf16 %v2168, %v2160
        %v2377 = vpack.c.bf16 %v2169, %v2161
        %v2378 = vpack.c.bf16 %v2178, %v2170
        %v2379 = vpack.c.bf16 %v2179, %v2171
        %v2380 = vpack.c.bf16 %v2180, %v2172
        %v2381 = vpack.c.bf16 %v2181, %v2173
        %v2382 = vpack.c.bf16 %v2182, %v2174
        %v2383 = vpack.c.bf16 %v2183, %v2175
        %v2384 = vpack.c.bf16 %v2184, %v2176
        %v2385 = vpack.c.bf16 %v2185, %v2177
        %v2386 = vpack.c.bf16 %v2194, %v2186
        %v2387 = vpack.c.bf16 %v2195, %v2187
        %v2388 = vpack.c.bf16 %v2196, %v2188
        %v2389 = vpack.c.bf16 %v2197, %v2189
        %v2390 = vpack.c.bf16 %v2198, %v2190
        %v2391 = vpack.c.bf16 %v2199, %v2191
        %v2392 = vpack.c.bf16 %v2200, %v2192
        %v2393 = vpack.c.bf16 %v2201, %v2193
        %v2394 = vpack.c.bf16 %v2210, %v2202
        %v2395 = vpack.c.bf16 %v2211, %v2203
        %v2396 = vpack.c.bf16 %v2212, %v2204
        %v2397 = vpack.c.bf16 %v2213, %v2205
        %v2398 = vpack.c.bf16 %v2214, %v2206
        %v2399 = vpack.c.bf16 %v2215, %v2207
        %v2400 = vpack.c.bf16 %v2216, %v2208
        %v2401 = vpack.c.bf16 %v2217, %v2209
        %v2402 = vpack.c.bf16 %v2226, %v2218
        %v2403 = vpack.c.bf16 %v2227, %v2219
        %v2404 = vpack.c.bf16 %v2228, %v2220
        %v2405 = vpack.c.bf16 %v2229, %v2221
        %v2406 = vpack.c.bf16 %v2230, %v2222
        %v2407 = vpack.c.bf16 %v2231, %v2223
        %v2408 = vpack.c.bf16 %v2232, %v2224
        %v2409 = vpack.c.bf16 %v2233, %v2225
        %v2410 = vpack.c.bf16 %v2242, %v2234
        %v2411 = vpack.c.bf16 %v2243, %v2235
        %v2412 = vpack.c.bf16 %v2244, %v2236
        %v2413 = vpack.c.bf16 %v2245, %v2237
        %v2414 = vpack.c.bf16 %v2246, %v2238
        %v2415 = vpack.c.bf16 %v2247, %v2239
        %v2416 = vpack.c.bf16 %v2248, %v2240
        %v2417 = vpack.c.bf16 %v2249, %v2241
        %v2418 = vpack.c.bf16 %v2258, %v2250
        %v2419 = vpack.c.bf16 %v2259, %v2251
        %v2420 = vpack.c.bf16 %v2260, %v2252
        %v2421 = vpack.c.bf16 %v2261, %v2253
        %v2422 = vpack.c.bf16 %v2262, %v2254
        %v2423 = vpack.c.bf16 %v2263, %v2255
        %v2424 = vpack.c.bf16 %v2264, %v2256
        %v2425 = vpack.c.bf16 %v2265, %v2257
        %v2426 = vpack.c.bf16 %v2274, %v2266
        %v2427 = vpack.c.bf16 %v2275, %v2267
        %v2428 = vpack.c.bf16 %v2276, %v2268
        %v2429 = vpack.c.bf16 %v2277, %v2269
        %v2430 = vpack.c.bf16 %v2278, %v2270
        %v2431 = vpack.c.bf16 %v2279, %v2271
        %v2432 = vpack.c.bf16 %v2280, %v2272
        %v2433 = vpack.c.bf16 %v2281, %v2273
        %v2434 = vpack.c.bf16 %v2290, %v2282
        %v2435 = vpack.c.bf16 %v2291, %v2283
        %v2436 = vpack.c.bf16 %v2292, %v2284
        %v2437 = vpack.c.bf16 %v2293, %v2285
        %v2438 = vpack.c.bf16 %v2294, %v2286
        %v2439 = vpack.c.bf16 %v2295, %v2287
        %v2440 = vpack.c.bf16 %v2296, %v2288
        %v2441 = vpack.c.bf16 %v2297, %v2289
        %v2442 = vpack.c.bf16 %v2306, %v2298
        %v2443 = vpack.c.bf16 %v2307, %v2299
        %v2444 = vpack.c.bf16 %v2308, %v2300
        %v2445 = vpack.c.bf16 %v2309, %v2301
        %v2446 = vpack.c.bf16 %v2310, %v2302
        %v2447 = vpack.c.bf16 %v2311, %v2303
        %v2448 = vpack.c.bf16 %v2312, %v2304
        %v2449 = vpack.c.bf16 %v2313, %v2305
        %v2450 = vpack.c.bf16 %v2322, %v2314
        %v2451 = vpack.c.bf16 %v2323, %v2315
        %v2452 = vpack.c.bf16 %v2324, %v2316
        %v2453 = vpack.c.bf16 %v2325, %v2317
        %v2454 = vpack.c.bf16 %v2326, %v2318
        %v2455 = vpack.c.bf16 %v2327, %v2319
        %v2456 = vpack.c.bf16 %v2328, %v2320
        %v2457 = vpack.c.bf16 %v2329, %v2321
        %v2458 = vld [vmem:[#allocation8] sm:$0xff]
        %v2459 = vld [vmem:[#allocation8 + $0x8] sm:$0xff]
        %v2460 = vld [vmem:[#allocation8 + $0x10] sm:$0xff]
        %v2461 = vld [vmem:[#allocation8 + $0x18] sm:$0xff]
        %v2462 = vld [vmem:[#allocation8 + $0x20] sm:$0xff]
        %v2463 = vld [vmem:[#allocation8 + $0x28] sm:$0xff]
        %v2464 = vld [vmem:[#allocation8 + $0x30] sm:$0xff]
        %v2465 = vld [vmem:[#allocation8 + $0x38] sm:$0xff]
        %v2466 = vld [vmem:[#allocation8 + $0x40] sm:$0xff]
        %v2467 = vld [vmem:[#allocation8 + $0x48] sm:$0xff]
        %v2468 = vld [vmem:[#allocation8 + $0x50] sm:$0xff]
        %v2469 = vld [vmem:[#allocation8 + $0x58] sm:$0xff]
        %v2470 = vld [vmem:[#allocation8 + $0x60] sm:$0xff]
        %v2471 = vld [vmem:[#allocation8 + $0x68] sm:$0xff]
        %v2472 = vld [vmem:[#allocation8 + $0x70] sm:$0xff]
        %v2473 = vld [vmem:[#allocation8 + $0x78] sm:$0xff]
        %v2474 = vld [vmem:[#allocation8 + $0x80] sm:$0xff]
        %v2475 = vld [vmem:[#allocation8 + $0x88] sm:$0xff]
        %v2476 = vld [vmem:[#allocation8 + $0x90] sm:$0xff]
        %v2477 = vld [vmem:[#allocation8 + $0x98] sm:$0xff]
        %v2478 = vld [vmem:[#allocation8 + $0xa0] sm:$0xff]
        %v2479 = vld [vmem:[#allocation8 + $0xa8] sm:$0xff]
        %v2480 = vld [vmem:[#allocation8 + $0xb0] sm:$0xff]
        %v2481 = vld [vmem:[#allocation8 + $0xb8] sm:$0xff]
        %v2482 = vld [vmem:[#allocation8 + $0xc0] sm:$0xff]
        %v2483 = vld [vmem:[#allocation8 + $0xc8] sm:$0xff]
        %v2484 = vld [vmem:[#allocation8 + $0xd0] sm:$0xff]
        %v2485 = vld [vmem:[#allocation8 + $0xd8] sm:$0xff]
        %v2486 = vld [vmem:[#allocation8 + $0xe0] sm:$0xff]
        %v2487 = vld [vmem:[#allocation8 + $0xe8] sm:$0xff]
        %v2488 = vld [vmem:[#allocation8 + $0xf0] sm:$0xff]
        %v2489 = vld [vmem:[#allocation8 + $0xf8] sm:$0xff]
        %v2490 = vld [vmem:[#allocation8 + $0x100] sm:$0xff]
        %v2491 = vld [vmem:[#allocation8 + $0x108] sm:$0xff]
        %v2492 = vld [vmem:[#allocation8 + $0x110] sm:$0xff]
        %v2493 = vld [vmem:[#allocation8 + $0x118] sm:$0xff]
        %v2494 = vld [vmem:[#allocation8 + $0x120] sm:$0xff]
        %v2495 = vld [vmem:[#allocation8 + $0x128] sm:$0xff]
        %v2496 = vld [vmem:[#allocation8 + $0x130] sm:$0xff]
        %v2497 = vld [vmem:[#allocation8 + $0x138] sm:$0xff]
        %v2498 = vld [vmem:[#allocation8 + $0x140] sm:$0xff]
        %v2499 = vld [vmem:[#allocation8 + $0x148] sm:$0xff]
        %v2500 = vld [vmem:[#allocation8 + $0x150] sm:$0xff]
        %v2501 = vld [vmem:[#allocation8 + $0x158] sm:$0xff]
        %v2502 = vld [vmem:[#allocation8 + $0x160] sm:$0xff]
        %v2503 = vld [vmem:[#allocation8 + $0x168] sm:$0xff]
        %v2504 = vld [vmem:[#allocation8 + $0x170] sm:$0xff]
        %v2505 = vld [vmem:[#allocation8 + $0x178] sm:$0xff]
        %v2506 = vld [vmem:[#allocation8 + $0x180] sm:$0xff]
        %v2507 = vld [vmem:[#allocation8 + $0x188] sm:$0xff]
        %v2508 = vld [vmem:[#allocation8 + $0x190] sm:$0xff]
        %v2509 = vld [vmem:[#allocation8 + $0x198] sm:$0xff]
        %v2510 = vld [vmem:[#allocation8 + $0x1a0] sm:$0xff]
        %v2511 = vld [vmem:[#allocation8 + $0x1a8] sm:$0xff]
        %v2512 = vld [vmem:[#allocation8 + $0x1b0] sm:$0xff]
        %v2513 = vld [vmem:[#allocation8 + $0x1b8] sm:$0xff]
        %v2514 = vld [vmem:[#allocation8 + $0x1c0] sm:$0xff]
        %v2515 = vld [vmem:[#allocation8 + $0x1c8] sm:$0xff]
        %v2516 = vld [vmem:[#allocation8 + $0x1d0] sm:$0xff]
        %v2517 = vld [vmem:[#allocation8 + $0x1d8] sm:$0xff]
        %v2518 = vld [vmem:[#allocation8 + $0x1e0] sm:$0xff]
        %v2519 = vld [vmem:[#allocation8 + $0x1e8] sm:$0xff]
        %v2520 = vld [vmem:[#allocation8 + $0x1f0] sm:$0xff]
        %v2521 = vld [vmem:[#allocation8 + $0x1f8] sm:$0xff]
        %v2522 = vld [vmem:[#allocation8 + $0x200] sm:$0xff]
        %v2523 = vld [vmem:[#allocation8 + $0x208] sm:$0xff]
        %v2524 = vld [vmem:[#allocation8 + $0x210] sm:$0xff]
        %v2525 = vld [vmem:[#allocation8 + $0x218] sm:$0xff]
        %v2526 = vld [vmem:[#allocation8 + $0x220] sm:$0xff]
        %v2527 = vld [vmem:[#allocation8 + $0x228] sm:$0xff]
        %v2528 = vld [vmem:[#allocation8 + $0x230] sm:$0xff]
        %v2529 = vld [vmem:[#allocation8 + $0x238] sm:$0xff]
        %v2530 = vld [vmem:[#allocation8 + $0x240] sm:$0xff]
        %v2531 = vld [vmem:[#allocation8 + $0x248] sm:$0xff]
        %v2532 = vld [vmem:[#allocation8 + $0x250] sm:$0xff]
        %v2533 = vld [vmem:[#allocation8 + $0x258] sm:$0xff]
        %v2534 = vld [vmem:[#allocation8 + $0x260] sm:$0xff]
        %v2535 = vld [vmem:[#allocation8 + $0x268] sm:$0xff]
        %v2536 = vld [vmem:[#allocation8 + $0x270] sm:$0xff]
        %v2537 = vld [vmem:[#allocation8 + $0x278] sm:$0xff]
        %v2538 = vld [vmem:[#allocation8 + $0x280] sm:$0xff]
        %v2539 = vld [vmem:[#allocation8 + $0x288] sm:$0xff]
        %v2540 = vld [vmem:[#allocation8 + $0x290] sm:$0xff]
        %v2541 = vld [vmem:[#allocation8 + $0x298] sm:$0xff]
        %v2542 = vld [vmem:[#allocation8 + $0x2a0] sm:$0xff]
        %v2543 = vld [vmem:[#allocation8 + $0x2a8] sm:$0xff]
        %v2544 = vld [vmem:[#allocation8 + $0x2b0] sm:$0xff]
        %v2545 = vld [vmem:[#allocation8 + $0x2b8] sm:$0xff]
        %v2546 = vld [vmem:[#allocation8 + $0x2c0] sm:$0xff]
        %v2547 = vld [vmem:[#allocation8 + $0x2c8] sm:$0xff]
        %v2548 = vld [vmem:[#allocation8 + $0x2d0] sm:$0xff]
        %v2549 = vld [vmem:[#allocation8 + $0x2d8] sm:$0xff]
        %v2550 = vld [vmem:[#allocation8 + $0x2e0] sm:$0xff]
        %v2551 = vld [vmem:[#allocation8 + $0x2e8] sm:$0xff]
        %v2552 = vld [vmem:[#allocation8 + $0x2f0] sm:$0xff]
        %v2553 = vld [vmem:[#allocation8 + $0x2f8] sm:$0xff]
        %v2554 = vld [vmem:[#allocation8 + $0x300] sm:$0xff]
        %v2555 = vld [vmem:[#allocation8 + $0x308] sm:$0xff]
        %v2556 = vld [vmem:[#allocation8 + $0x310] sm:$0xff]
        %v2557 = vld [vmem:[#allocation8 + $0x318] sm:$0xff]
        %v2558 = vld [vmem:[#allocation8 + $0x320] sm:$0xff]
        %v2559 = vld [vmem:[#allocation8 + $0x328] sm:$0xff]
        %v2560 = vld [vmem:[#allocation8 + $0x330] sm:$0xff]
        %v2561 = vld [vmem:[#allocation8 + $0x338] sm:$0xff]
        %v2562 = vld [vmem:[#allocation8 + $0x340] sm:$0xff]
        %v2563 = vld [vmem:[#allocation8 + $0x348] sm:$0xff]
        %v2564 = vld [vmem:[#allocation8 + $0x350] sm:$0xff]
        %v2565 = vld [vmem:[#allocation8 + $0x358] sm:$0xff]
        %v2566 = vld [vmem:[#allocation8 + $0x360] sm:$0xff]
        %v2567 = vld [vmem:[#allocation8 + $0x368] sm:$0xff]
        %v2568 = vld [vmem:[#allocation8 + $0x370] sm:$0xff]
        %v2569 = vld [vmem:[#allocation8 + $0x378] sm:$0xff]
        %v2570 = vld [vmem:[#allocation8 + $0x380] sm:$0xff]
        %v2571 = vld [vmem:[#allocation8 + $0x388] sm:$0xff]
        %v2572 = vld [vmem:[#allocation8 + $0x390] sm:$0xff]
        %v2573 = vld [vmem:[#allocation8 + $0x398] sm:$0xff]
        %v2574 = vld [vmem:[#allocation8 + $0x3a0] sm:$0xff]
        %v2575 = vld [vmem:[#allocation8 + $0x3a8] sm:$0xff]
        %v2576 = vld [vmem:[#allocation8 + $0x3b0] sm:$0xff]
        %v2577 = vld [vmem:[#allocation8 + $0x3b8] sm:$0xff]
        %v2578 = vld [vmem:[#allocation8 + $0x3c0] sm:$0xff]
        %v2579 = vld [vmem:[#allocation8 + $0x3c8] sm:$0xff]
        %v2580 = vld [vmem:[#allocation8 + $0x3d0] sm:$0xff]
        %v2581 = vld [vmem:[#allocation8 + $0x3d8] sm:$0xff]
        %v2582 = vld [vmem:[#allocation8 + $0x3e0] sm:$0xff]
        %v2583 = vld [vmem:[#allocation8 + $0x3e8] sm:$0xff]
        %v2584 = vld [vmem:[#allocation8 + $0x3f0] sm:$0xff]
        %v2585 = vld [vmem:[#allocation8 + $0x3f8] sm:$0xff]
        %v2586 = vld [vmem:[#allocation10] sm:$0x3]
        %v2588 = vlaneseq
        %v2589 = vshrl.u32 %v2588, 7
        %v2590 = vsub.s32 0, %v2589
        %v2591 = vrot.slane %v2586, %v2590
        %v2592 = vlaneseq
        %v2593 = vshrl.u32 %v2592, 7
        %v2594 = vsub.s32 1, %v2593
        %v2595 = vrot.slane %v2586, %v2594
        %v2726 = vunpack.c.l.b16 %v2458
        %v2727 = vunpack.c.h.b16 %v2458
        %v2728 = vunpack.c.l.b16 %v2459
        %v2729 = vunpack.c.h.b16 %v2459
        %v2730 = vunpack.c.l.b16 %v2460
        %v2731 = vunpack.c.h.b16 %v2460
        %v2732 = vunpack.c.l.b16 %v2461
        %v2733 = vunpack.c.h.b16 %v2461
        %v2734 = vunpack.c.l.b16 %v2462
        %v2735 = vunpack.c.h.b16 %v2462
        %v2736 = vunpack.c.l.b16 %v2463
        %v2737 = vunpack.c.h.b16 %v2463
        %v2738 = vunpack.c.l.b16 %v2464
        %v2739 = vunpack.c.h.b16 %v2464
        %v2740 = vunpack.c.l.b16 %v2465
        %v2741 = vunpack.c.h.b16 %v2465
        %v2742 = vunpack.c.l.b16 %v2466
        %v2743 = vunpack.c.h.b16 %v2466
        %v2744 = vunpack.c.l.b16 %v2467
        %v2745 = vunpack.c.h.b16 %v2467
        %v2746 = vunpack.c.l.b16 %v2468
        %v2747 = vunpack.c.h.b16 %v2468
        %v2748 = vunpack.c.l.b16 %v2469
        %v2749 = vunpack.c.h.b16 %v2469
        %v2750 = vunpack.c.l.b16 %v2470
        %v2751 = vunpack.c.h.b16 %v2470
        %v2752 = vunpack.c.l.b16 %v2471
        %v2753 = vunpack.c.h.b16 %v2471
        %v2754 = vunpack.c.l.b16 %v2472
        %v2755 = vunpack.c.h.b16 %v2472
        %v2756 = vunpack.c.l.b16 %v2473
        %v2757 = vunpack.c.h.b16 %v2473
        %v2758 = vunpack.c.l.b16 %v2474
        %v2759 = vunpack.c.h.b16 %v2474
        %v2760 = vunpack.c.l.b16 %v2475
        %v2761 = vunpack.c.h.b16 %v2475
        %v2762 = vunpack.c.l.b16 %v2476
        %v2763 = vunpack.c.h.b16 %v2476
        %v2764 = vunpack.c.l.b16 %v2477
        %v2765 = vunpack.c.h.b16 %v2477
        %v2766 = vunpack.c.l.b16 %v2478
        %v2767 = vunpack.c.h.b16 %v2478
        %v2768 = vunpack.c.l.b16 %v2479
        %v2769 = vunpack.c.h.b16 %v2479
        %v2770 = vunpack.c.l.b16 %v2480
        %v2771 = vunpack.c.h.b16 %v2480
        %v2772 = vunpack.c.l.b16 %v2481
        %v2773 = vunpack.c.h.b16 %v2481
        %v2774 = vunpack.c.l.b16 %v2482
        %v2775 = vunpack.c.h.b16 %v2482
        %v2776 = vunpack.c.l.b16 %v2483
        %v2777 = vunpack.c.h.b16 %v2483
        %v2778 = vunpack.c.l.b16 %v2484
        %v2779 = vunpack.c.h.b16 %v2484
        %v2780 = vunpack.c.l.b16 %v2485
        %v2781 = vunpack.c.h.b16 %v2485
        %v2782 = vunpack.c.l.b16 %v2486
        %v2783 = vunpack.c.h.b16 %v2486
        %v2784 = vunpack.c.l.b16 %v2487
        %v2785 = vunpack.c.h.b16 %v2487
        %v2786 = vunpack.c.l.b16 %v2488
        %v2787 = vunpack.c.h.b16 %v2488
        %v2788 = vunpack.c.l.b16 %v2489
        %v2789 = vunpack.c.h.b16 %v2489
        %v2790 = vunpack.c.l.b16 %v2490
        %v2791 = vunpack.c.h.b16 %v2490
        %v2792 = vunpack.c.l.b16 %v2491
        %v2793 = vunpack.c.h.b16 %v2491
        %v2794 = vunpack.c.l.b16 %v2492
        %v2795 = vunpack.c.h.b16 %v2492
        %v2796 = vunpack.c.l.b16 %v2493
        %v2797 = vunpack.c.h.b16 %v2493
        %v2798 = vunpack.c.l.b16 %v2494
        %v2799 = vunpack.c.h.b16 %v2494
        %v2800 = vunpack.c.l.b16 %v2495
        %v2801 = vunpack.c.h.b16 %v2495
        %v2802 = vunpack.c.l.b16 %v2496
        %v2803 = vunpack.c.h.b16 %v2496
        %v2804 = vunpack.c.l.b16 %v2497
        %v2805 = vunpack.c.h.b16 %v2497
        %v2806 = vunpack.c.l.b16 %v2498
        %v2807 = vunpack.c.h.b16 %v2498
        %v2808 = vunpack.c.l.b16 %v2499
        %v2809 = vunpack.c.h.b16 %v2499
        %v2810 = vunpack.c.l.b16 %v2500
        %v2811 = vunpack.c.h.b16 %v2500
        %v2812 = vunpack.c.l.b16 %v2501
        %v2813 = vunpack.c.h.b16 %v2501
        %v2814 = vunpack.c.l.b16 %v2502
        %v2815 = vunpack.c.h.b16 %v2502
        %v2816 = vunpack.c.l.b16 %v2503
        %v2817 = vunpack.c.h.b16 %v2503
        %v2818 = vunpack.c.l.b16 %v2504
        %v2819 = vunpack.c.h.b16 %v2504
        %v2820 = vunpack.c.l.b16 %v2505
        %v2821 = vunpack.c.h.b16 %v2505
        %v2822 = vunpack.c.l.b16 %v2506
        %v2823 = vunpack.c.h.b16 %v2506
        %v2824 = vunpack.c.l.b16 %v2507
        %v2825 = vunpack.c.h.b16 %v2507
        %v2826 = vunpack.c.l.b16 %v2508
        %v2827 = vunpack.c.h.b16 %v2508
        %v2828 = vunpack.c.l.b16 %v2509
        %v2829 = vunpack.c.h.b16 %v2509
        %v2830 = vunpack.c.l.b16 %v2510
        %v2831 = vunpack.c.h.b16 %v2510
        %v2832 = vunpack.c.l.b16 %v2511
        %v2833 = vunpack.c.h.b16 %v2511
        %v2834 = vunpack.c.l.b16 %v2512
        %v2835 = vunpack.c.h.b16 %v2512
        %v2836 = vunpack.c.l.b16 %v2513
        %v2837 = vunpack.c.h.b16 %v2513
        %v2838 = vunpack.c.l.b16 %v2514
        %v2839 = vunpack.c.h.b16 %v2514
        %v2840 = vunpack.c.l.b16 %v2515
        %v2841 = vunpack.c.h.b16 %v2515
        %v2842 = vunpack.c.l.b16 %v2516
        %v2843 = vunpack.c.h.b16 %v2516
        %v2844 = vunpack.c.l.b16 %v2517
        %v2845 = vunpack.c.h.b16 %v2517
        %v2846 = vunpack.c.l.b16 %v2518
        %v2847 = vunpack.c.h.b16 %v2518
        %v2848 = vunpack.c.l.b16 %v2519
        %v2849 = vunpack.c.h.b16 %v2519
        %v2850 = vunpack.c.l.b16 %v2520
        %v2851 = vunpack.c.h.b16 %v2520
        %v2852 = vunpack.c.l.b16 %v2521
        %v2853 = vunpack.c.h.b16 %v2521
        %v2854 = vunpack.c.l.b16 %v2522
        %v2855 = vunpack.c.h.b16 %v2522
        %v2856 = vunpack.c.l.b16 %v2523
        %v2857 = vunpack.c.h.b16 %v2523
        %v2858 = vunpack.c.l.b16 %v2524
        %v2859 = vunpack.c.h.b16 %v2524
        %v2860 = vunpack.c.l.b16 %v2525
        %v2861 = vunpack.c.h.b16 %v2525
        %v2862 = vunpack.c.l.b16 %v2526
        %v2863 = vunpack.c.h.b16 %v2526
        %v2864 = vunpack.c.l.b16 %v2527
        %v2865 = vunpack.c.h.b16 %v2527
        %v2866 = vunpack.c.l.b16 %v2528
        %v2867 = vunpack.c.h.b16 %v2528
        %v2868 = vunpack.c.l.b16 %v2529
        %v2869 = vunpack.c.h.b16 %v2529
        %v2870 = vunpack.c.l.b16 %v2530
        %v2871 = vunpack.c.h.b16 %v2530
        %v2872 = vunpack.c.l.b16 %v2531
        %v2873 = vunpack.c.h.b16 %v2531
        %v2874 = vunpack.c.l.b16 %v2532
        %v2875 = vunpack.c.h.b16 %v2532
        %v2876 = vunpack.c.l.b16 %v2533
        %v2877 = vunpack.c.h.b16 %v2533
        %v2878 = vunpack.c.l.b16 %v2534
        %v2879 = vunpack.c.h.b16 %v2534
        %v2880 = vunpack.c.l.b16 %v2535
        %v2881 = vunpack.c.h.b16 %v2535
        %v2882 = vunpack.c.l.b16 %v2536
        %v2883 = vunpack.c.h.b16 %v2536
        %v2884 = vunpack.c.l.b16 %v2537
        %v2885 = vunpack.c.h.b16 %v2537
        %v2886 = vunpack.c.l.b16 %v2538
        %v2887 = vunpack.c.h.b16 %v2538
        %v2888 = vunpack.c.l.b16 %v2539
        %v2889 = vunpack.c.h.b16 %v2539
        %v2890 = vunpack.c.l.b16 %v2540
        %v2891 = vunpack.c.h.b16 %v2540
        %v2892 = vunpack.c.l.b16 %v2541
        %v2893 = vunpack.c.h.b16 %v2541
        %v2894 = vunpack.c.l.b16 %v2542
        %v2895 = vunpack.c.h.b16 %v2542
        %v2896 = vunpack.c.l.b16 %v2543
        %v2897 = vunpack.c.h.b16 %v2543
        %v2898 = vunpack.c.l.b16 %v2544
        %v2899 = vunpack.c.h.b16 %v2544
        %v2900 = vunpack.c.l.b16 %v2545
        %v2901 = vunpack.c.h.b16 %v2545
        %v2902 = vunpack.c.l.b16 %v2546
        %v2903 = vunpack.c.h.b16 %v2546
        %v2904 = vunpack.c.l.b16 %v2547
        %v2905 = vunpack.c.h.b16 %v2547
        %v2906 = vunpack.c.l.b16 %v2548
        %v2907 = vunpack.c.h.b16 %v2548
        %v2908 = vunpack.c.l.b16 %v2549
        %v2909 = vunpack.c.h.b16 %v2549
        %v2910 = vunpack.c.l.b16 %v2550
        %v2911 = vunpack.c.h.b16 %v2550
        %v2912 = vunpack.c.l.b16 %v2551
        %v2913 = vunpack.c.h.b16 %v2551
        %v2914 = vunpack.c.l.b16 %v2552
        %v2915 = vunpack.c.h.b16 %v2552
        %v2916 = vunpack.c.l.b16 %v2553
        %v2917 = vunpack.c.h.b16 %v2553
        %v2918 = vunpack.c.l.b16 %v2554
        %v2919 = vunpack.c.h.b16 %v2554
        %v2920 = vunpack.c.l.b16 %v2555
        %v2921 = vunpack.c.h.b16 %v2555
        %v2922 = vunpack.c.l.b16 %v2556
        %v2923 = vunpack.c.h.b16 %v2556
        %v2924 = vunpack.c.l.b16 %v2557
        %v2925 = vunpack.c.h.b16 %v2557
        %v2926 = vunpack.c.l.b16 %v2558
        %v2927 = vunpack.c.h.b16 %v2558
        %v2928 = vunpack.c.l.b16 %v2559
        %v2929 = vunpack.c.h.b16 %v2559
        %v2930 = vunpack.c.l.b16 %v2560
        %v2931 = vunpack.c.h.b16 %v2560
        %v2932 = vunpack.c.l.b16 %v2561
        %v2933 = vunpack.c.h.b16 %v2561
        %v2934 = vunpack.c.l.b16 %v2562
        %v2935 = vunpack.c.h.b16 %v2562
        %v2936 = vunpack.c.l.b16 %v2563
        %v2937 = vunpack.c.h.b16 %v2563
        %v2938 = vunpack.c.l.b16 %v2564
        %v2939 = vunpack.c.h.b16 %v2564
        %v2940 = vunpack.c.l.b16 %v2565
        %v2941 = vunpack.c.h.b16 %v2565
        %v2942 = vunpack.c.l.b16 %v2566
        %v2943 = vunpack.c.h.b16 %v2566
        %v2944 = vunpack.c.l.b16 %v2567
        %v2945 = vunpack.c.h.b16 %v2567
        %v2946 = vunpack.c.l.b16 %v2568
        %v2947 = vunpack.c.h.b16 %v2568
        %v2948 = vunpack.c.l.b16 %v2569
        %v2949 = vunpack.c.h.b16 %v2569
        %v2950 = vunpack.c.l.b16 %v2570
        %v2951 = vunpack.c.h.b16 %v2570
        %v2952 = vunpack.c.l.b16 %v2571
        %v2953 = vunpack.c.h.b16 %v2571
        %v2954 = vunpack.c.l.b16 %v2572
        %v2955 = vunpack.c.h.b16 %v2572
        %v2956 = vunpack.c.l.b16 %v2573
        %v2957 = vunpack.c.h.b16 %v2573
        %v2958 = vunpack.c.l.b16 %v2574
        %v2959 = vunpack.c.h.b16 %v2574
        %v2960 = vunpack.c.l.b16 %v2575
        %v2961 = vunpack.c.h.b16 %v2575
        %v2962 = vunpack.c.l.b16 %v2576
        %v2963 = vunpack.c.h.b16 %v2576
        %v2964 = vunpack.c.l.b16 %v2577
        %v2965 = vunpack.c.h.b16 %v2577
        %v2966 = vunpack.c.l.b16 %v2578
        %v2967 = vunpack.c.h.b16 %v2578
        %v2968 = vunpack.c.l.b16 %v2579
        %v2969 = vunpack.c.h.b16 %v2579
        %v2970 = vunpack.c.l.b16 %v2580
        %v2971 = vunpack.c.h.b16 %v2580
        %v2972 = vunpack.c.l.b16 %v2581
        %v2973 = vunpack.c.h.b16 %v2581
        %v2974 = vunpack.c.l.b16 %v2582
        %v2975 = vunpack.c.h.b16 %v2582
        %v2976 = vunpack.c.l.b16 %v2583
        %v2977 = vunpack.c.h.b16 %v2583
        %v2978 = vunpack.c.l.b16 %v2584
        %v2979 = vunpack.c.h.b16 %v2584
        %v2980 = vunpack.c.l.b16 %v2585
        %v2981 = vunpack.c.h.b16 %v2585
        %v2982 = vpack.c.b16 %v2728, %v2726
        %v2983 = vpack.c.b16 %v2729, %v2727
        %v2984 = vpack.c.b16 %v2732, %v2730
        %v2985 = vpack.c.b16 %v2733, %v2731
        %v2986 = vpack.c.b16 %v2736, %v2734
        %v2987 = vpack.c.b16 %v2737, %v2735
        %v2988 = vpack.c.b16 %v2740, %v2738
        %v2989 = vpack.c.b16 %v2741, %v2739
        %v2990 = vpack.c.b16 %v2744, %v2742
        %v2991 = vpack.c.b16 %v2745, %v2743
        %v2992 = vpack.c.b16 %v2748, %v2746
        %v2993 = vpack.c.b16 %v2749, %v2747
        %v2994 = vpack.c.b16 %v2752, %v2750
        %v2995 = vpack.c.b16 %v2753, %v2751
        %v2996 = vpack.c.b16 %v2756, %v2754
        %v2997 = vpack.c.b16 %v2757, %v2755
        %v2998 = vpack.c.b16 %v2760, %v2758
        %v2999 = vpack.c.b16 %v2761, %v2759
        %v3000 = vpack.c.b16 %v2764, %v2762
        %v3001 = vpack.c.b16 %v2765, %v2763
        %v3002 = vpack.c.b16 %v2768, %v2766
        %v3003 = vpack.c.b16 %v2769, %v2767
        %v3004 = vpack.c.b16 %v2772, %v2770
        %v3005 = vpack.c.b16 %v2773, %v2771
        %v3006 = vpack.c.b16 %v2776, %v2774
        %v3007 = vpack.c.b16 %v2777, %v2775
        %v3008 = vpack.c.b16 %v2780, %v2778
        %v3009 = vpack.c.b16 %v2781, %v2779
        %v3010 = vpack.c.b16 %v2784, %v2782
        %v3011 = vpack.c.b16 %v2785, %v2783
        %v3012 = vpack.c.b16 %v2788, %v2786
        %v3013 = vpack.c.b16 %v2789, %v2787
        %v3014 = vpack.c.b16 %v2792, %v2790
        %v3015 = vpack.c.b16 %v2793, %v2791
        %v3016 = vpack.c.b16 %v2796, %v2794
        %v3017 = vpack.c.b16 %v2797, %v2795
        %v3018 = vpack.c.b16 %v2800, %v2798
        %v3019 = vpack.c.b16 %v2801, %v2799
        %v3020 = vpack.c.b16 %v2804, %v2802
        %v3021 = vpack.c.b16 %v2805, %v2803
        %v3022 = vpack.c.b16 %v2808, %v2806
        %v3023 = vpack.c.b16 %v2809, %v2807
        %v3024 = vpack.c.b16 %v2812, %v2810
        %v3025 = vpack.c.b16 %v2813, %v2811
        %v3026 = vpack.c.b16 %v2816, %v2814
        %v3027 = vpack.c.b16 %v2817, %v2815
        %v3028 = vpack.c.b16 %v2820, %v2818
        %v3029 = vpack.c.b16 %v2821, %v2819
        %v3030 = vpack.c.b16 %v2824, %v2822
        %v3031 = vpack.c.b16 %v2825, %v2823
        %v3032 = vpack.c.b16 %v2828, %v2826
        %v3033 = vpack.c.b16 %v2829, %v2827
        %v3034 = vpack.c.b16 %v2832, %v2830
        %v3035 = vpack.c.b16 %v2833, %v2831
        %v3036 = vpack.c.b16 %v2836, %v2834
        %v3037 = vpack.c.b16 %v2837, %v2835
        %v3038 = vpack.c.b16 %v2840, %v2838
        %v3039 = vpack.c.b16 %v2841, %v2839
        %v3040 = vpack.c.b16 %v2844, %v2842
        %v3041 = vpack.c.b16 %v2845, %v2843
        %v3042 = vpack.c.b16 %v2848, %v2846
        %v3043 = vpack.c.b16 %v2849, %v2847
        %v3044 = vpack.c.b16 %v2852, %v2850
        %v3045 = vpack.c.b16 %v2853, %v2851
        %v3046 = vpack.c.b16 %v2856, %v2854
        %v3047 = vpack.c.b16 %v2857, %v2855
        %v3048 = vpack.c.b16 %v2860, %v2858
        %v3049 = vpack.c.b16 %v2861, %v2859
        %v3050 = vpack.c.b16 %v2864, %v2862
        %v3051 = vpack.c.b16 %v2865, %v2863
        %v3052 = vpack.c.b16 %v2868, %v2866
        %v3053 = vpack.c.b16 %v2869, %v2867
        %v3054 = vpack.c.b16 %v2872, %v2870
        %v3055 = vpack.c.b16 %v2873, %v2871
        %v3056 = vpack.c.b16 %v2876, %v2874
        %v3057 = vpack.c.b16 %v2877, %v2875
        %v3058 = vpack.c.b16 %v2880, %v2878
        %v3059 = vpack.c.b16 %v2881, %v2879
        %v3060 = vpack.c.b16 %v2884, %v2882
        %v3061 = vpack.c.b16 %v2885, %v2883
        %v3062 = vpack.c.b16 %v2888, %v2886
        %v3063 = vpack.c.b16 %v2889, %v2887
        %v3064 = vpack.c.b16 %v2892, %v2890
        %v3065 = vpack.c.b16 %v2893, %v2891
        %v3066 = vpack.c.b16 %v2896, %v2894
        %v3067 = vpack.c.b16 %v2897, %v2895
        %v3068 = vpack.c.b16 %v2900, %v2898
        %v3069 = vpack.c.b16 %v2901, %v2899
        %v3070 = vpack.c.b16 %v2904, %v2902
        %v3071 = vpack.c.b16 %v2905, %v2903
        %v3072 = vpack.c.b16 %v2908, %v2906
        %v3073 = vpack.c.b16 %v2909, %v2907
        %v3074 = vpack.c.b16 %v2912, %v2910
        %v3075 = vpack.c.b16 %v2913, %v2911
        %v3076 = vpack.c.b16 %v2916, %v2914
        %v3077 = vpack.c.b16 %v2917, %v2915
        %v3078 = vpack.c.b16 %v2920, %v2918
        %v3079 = vpack.c.b16 %v2921, %v2919
        %v3080 = vpack.c.b16 %v2924, %v2922
        %v3081 = vpack.c.b16 %v2925, %v2923
        %v3082 = vpack.c.b16 %v2928, %v2926
        %v3083 = vpack.c.b16 %v2929, %v2927
        %v3084 = vpack.c.b16 %v2932, %v2930
        %v3085 = vpack.c.b16 %v2933, %v2931
        %v3086 = vpack.c.b16 %v2936, %v2934
        %v3087 = vpack.c.b16 %v2937, %v2935
        %v3088 = vpack.c.b16 %v2940, %v2938
        %v3089 = vpack.c.b16 %v2941, %v2939
        %v3090 = vpack.c.b16 %v2944, %v2942
        %v3091 = vpack.c.b16 %v2945, %v2943
        %v3092 = vpack.c.b16 %v2948, %v2946
        %v3093 = vpack.c.b16 %v2949, %v2947
        %v3094 = vpack.c.b16 %v2952, %v2950
        %v3095 = vpack.c.b16 %v2953, %v2951
        %v3096 = vpack.c.b16 %v2956, %v2954
        %v3097 = vpack.c.b16 %v2957, %v2955
        %v3098 = vpack.c.b16 %v2960, %v2958
        %v3099 = vpack.c.b16 %v2961, %v2959
        %v3100 = vpack.c.b16 %v2964, %v2962
        %v3101 = vpack.c.b16 %v2965, %v2963
        %v3102 = vpack.c.b16 %v2968, %v2966
        %v3103 = vpack.c.b16 %v2969, %v2967
        %v3104 = vpack.c.b16 %v2972, %v2970
        %v3105 = vpack.c.b16 %v2973, %v2971
        %v3106 = vpack.c.b16 %v2976, %v2974
        %v3107 = vpack.c.b16 %v2977, %v2975
        %v3108 = vpack.c.b16 %v2980, %v2978
        %v3109 = vpack.c.b16 %v2981, %v2979
        %3238 = vmatprep.subr.bf16.mxu0 %v2997
        %3239 = vmatpush1.bf16.msra.mxu0 %v2996
        %3240 = vmatprep.subr.bf16.mxu0 %v2995
        %3241 = vmatpush1.bf16.msra.mxu0 %v2994
        %3242 = vmatprep.subr.bf16.mxu0 %v2993
        %3243 = vmatpush1.bf16.msra.mxu0 %v2992
        %3244 = vmatprep.subr.bf16.mxu0 %v2991
        %3245 = vmatpush1.bf16.msra.mxu0 %v2990
        %3246 = vmatprep.subr.bf16.mxu0 %v2989
        %3247 = vmatpush1.bf16.msra.mxu0 %v2988
        %3248 = vmatprep.subr.bf16.mxu0 %v2987
        %3249 = vmatpush1.bf16.msra.mxu0 %v2986
        %3250 = vmatprep.subr.bf16.mxu0 %v2985
        %3251 = vmatpush1.bf16.msra.mxu0 %v2984
        %3252 = vmatprep.subr.bf16.mxu0 %v2983
        %3253 = vmatpush1.bf16.msra.mxu0 %v2982
        %3254 = vmatprep.subr.bf16.mxu0 %v3013
        %3255 = vmatpush2.bf16.msra.mxu0 %v3012
        %3256 = vmatprep.subr.bf16.mxu0 %v3011
        %3257 = vmatpush2.bf16.msra.mxu0 %v3010
        %3258 = vmatprep.subr.bf16.mxu0 %v3009
        %3259 = vmatpush2.bf16.msra.mxu0 %v3008
        %3260 = vmatprep.subr.bf16.mxu0 %v3007
        %3261 = vmatpush2.bf16.msra.mxu0 %v3006
        %3262 = vmatprep.subr.bf16.mxu0 %v3005
        %3263 = vmatpush2.bf16.msra.mxu0 %v3004
        %3264 = vmatprep.subr.bf16.mxu0 %v3003
        %3265 = vmatpush2.bf16.msra.mxu0 %v3002
        %3266 = vmatprep.subr.bf16.mxu0 %v3001
        %3267 = vmatpush2.bf16.msra.mxu0 %v3000
        %3268 = vmatprep.subr.bf16.mxu0 %v2999
        %3269 = vmatpush2.bf16.msra.mxu0 %v2998
        %3270 = vmatprep.mubr.bf16.mxu0 %v2331
        %3271 = vmatmul.mubr.bf16.gmra.mxu0 %v2330
        %v3272 = vpop.f32.mrf.mxu0
        %v3273 = vadd.f32 %v2591, %v3272
        %v3274 = vpop.f32.mrf.mxu0
        %v3275 = vadd.f32 %v2595, %v3274
        %v3276 = vpop.f32.mrf.mxu0
        %v3277 = vadd.f32 %v2591, %v3276
        %v3278 = vpop.f32.mrf.mxu0
        %v3279 = vadd.f32 %v2595, %v3278
        %3280 = vmatprep.mubr.bf16.mxu0 %v2339
        %3281 = vmatmul.mubr.bf16.gmra.mxu0 %v2338
        %v3282 = vpop.f32.mrf.mxu0
        %v3283 = vadd.f32 %v2591, %v3282
        %v3284 = vpop.f32.mrf.mxu0
        %v3285 = vadd.f32 %v2595, %v3284
        %v3286 = vpop.f32.mrf.mxu0
        %v3287 = vadd.f32 %v2591, %v3286
        %v3288 = vpop.f32.mrf.mxu0
        %v3289 = vadd.f32 %v2595, %v3288
        %3290 = vmatprep.mubr.bf16.mxu0 %v2347
        %3291 = vmatmul.mubr.bf16.gmra.mxu0 %v2346
        %v3292 = vpop.f32.mrf.mxu0
        %v3293 = vadd.f32 %v2591, %v3292
        %v3294 = vpop.f32.mrf.mxu0
        %v3295 = vadd.f32 %v2595, %v3294
        %v3296 = vpop.f32.mrf.mxu0
        %v3297 = vadd.f32 %v2591, %v3296
        %v3298 = vpop.f32.mrf.mxu0
        %v3299 = vadd.f32 %v2595, %v3298
        %3300 = vmatprep.mubr.bf16.mxu0 %v2355
        %3301 = vmatmul.mubr.bf16.gmra.mxu0 %v2354
        %v3302 = vpop.f32.mrf.mxu0
        %v3303 = vadd.f32 %v2591, %v3302
        %v3304 = vpop.f32.mrf.mxu0
        %v3305 = vadd.f32 %v2595, %v3304
        %v3306 = vpop.f32.mrf.mxu0
        %v3307 = vadd.f32 %v2591, %v3306
        %v3308 = vpop.f32.mrf.mxu0
        %v3309 = vadd.f32 %v2595, %v3308
        %3310 = vmatprep.mubr.bf16.mxu0 %v2363
        %3311 = vmatmul.mubr.bf16.gmra.mxu0 %v2362
        %v3312 = vpop.f32.mrf.mxu0
        %v3313 = vadd.f32 %v2591, %v3312
        %v3314 = vpop.f32.mrf.mxu0
        %v3315 = vadd.f32 %v2595, %v3314
        %v3316 = vpop.f32.mrf.mxu0
        %v3317 = vadd.f32 %v2591, %v3316
        %v3318 = vpop.f32.mrf.mxu0
        %v3319 = vadd.f32 %v2595, %v3318
        %3320 = vmatprep.mubr.bf16.mxu0 %v2371
        %3321 = vmatmul.mubr.bf16.gmra.mxu0 %v2370
        %v3322 = vpop.f32.mrf.mxu0
        %v3323 = vadd.f32 %v2591, %v3322
        %v3324 = vpop.f32.mrf.mxu0
        %v3325 = vadd.f32 %v2595, %v3324
        %v3326 = vpop.f32.mrf.mxu0
        %v3327 = vadd.f32 %v2591, %v3326
        %v3328 = vpop.f32.mrf.mxu0
        %v3329 = vadd.f32 %v2595, %v3328
        %3330 = vmatprep.mubr.bf16.mxu0 %v2379
        %3331 = vmatmul.mubr.bf16.gmra.mxu0 %v2378
        %v3332 = vpop.f32.mrf.mxu0
        %v3333 = vadd.f32 %v2591, %v3332
        %v3334 = vpop.f32.mrf.mxu0
        %v3335 = vadd.f32 %v2595, %v3334
        %v3336 = vpop.f32.mrf.mxu0
        %v3337 = vadd.f32 %v2591, %v3336
        %v3338 = vpop.f32.mrf.mxu0
        %v3339 = vadd.f32 %v2595, %v3338
        %3340 = vmatprep.mubr.bf16.mxu0 %v2387
        %3341 = vmatmul.mubr.bf16.gmra.mxu0 %v2386
        %v3342 = vpop.f32.mrf.mxu0
        %v3343 = vadd.f32 %v2591, %v3342
        %v3344 = vpop.f32.mrf.mxu0
        %v3345 = vadd.f32 %v2595, %v3344
        %v3346 = vpop.f32.mrf.mxu0
        %v3347 = vadd.f32 %v2591, %v3346
        %v3348 = vpop.f32.mrf.mxu0
        %v3349 = vadd.f32 %v2595, %v3348
        %3350 = vmatprep.mubr.bf16.mxu0 %v2395
        %3351 = vmatmul.mubr.bf16.gmra.mxu0 %v2394
        %v3352 = vpop.f32.mrf.mxu0
        %v3353 = vadd.f32 %v2591, %v3352
        %v3354 = vpop.f32.mrf.mxu0
        %v3355 = vadd.f32 %v2595, %v3354
        %v3356 = vpop.f32.mrf.mxu0
        %v3357 = vadd.f32 %v2591, %v3356
        %v3358 = vpop.f32.mrf.mxu0
        %v3359 = vadd.f32 %v2595, %v3358
        %3360 = vmatprep.mubr.bf16.mxu0 %v2403
        %3361 = vmatmul.mubr.bf16.gmra.mxu0 %v2402
        %v3362 = vpop.f32.mrf.mxu0
        %v3363 = vadd.f32 %v2591, %v3362
        %v3364 = vpop.f32.mrf.mxu0
        %v3365 = vadd.f32 %v2595, %v3364
        %v3366 = vpop.f32.mrf.mxu0
        %v3367 = vadd.f32 %v2591, %v3366
        %v3368 = vpop.f32.mrf.mxu0
        %v3369 = vadd.f32 %v2595, %v3368
        %3370 = vmatprep.mubr.bf16.mxu0 %v2411
        %3371 = vmatmul.mubr.bf16.gmra.mxu0 %v2410
        %v3372 = vpop.f32.mrf.mxu0
        %v3373 = vadd.f32 %v2591, %v3372
        %v3374 = vpop.f32.mrf.mxu0
        %v3375 = vadd.f32 %v2595, %v3374
        %v3376 = vpop.f32.mrf.mxu0
        %v3377 = vadd.f32 %v2591, %v3376
        %v3378 = vpop.f32.mrf.mxu0
        %v3379 = vadd.f32 %v2595, %v3378
        %3380 = vmatprep.mubr.bf16.mxu0 %v2419
        %3381 = vmatmul.mubr.bf16.gmra.mxu0 %v2418
        %v3382 = vpop.f32.mrf.mxu0
        %v3383 = vadd.f32 %v2591, %v3382
        %v3384 = vpop.f32.mrf.mxu0
        %v3385 = vadd.f32 %v2595, %v3384
        %v3386 = vpop.f32.mrf.mxu0
        %v3387 = vadd.f32 %v2591, %v3386
        %v3388 = vpop.f32.mrf.mxu0
        %v3389 = vadd.f32 %v2595, %v3388
        %3390 = vmatprep.mubr.bf16.mxu0 %v2427
        %3391 = vmatmul.mubr.bf16.gmra.mxu0 %v2426
        %v3392 = vpop.f32.mrf.mxu0
        %v3393 = vadd.f32 %v2591, %v3392
        %v3394 = vpop.f32.mrf.mxu0
        %v3395 = vadd.f32 %v2595, %v3394
        %v3396 = vpop.f32.mrf.mxu0
        %v3397 = vadd.f32 %v2591, %v3396
        %v3398 = vpop.f32.mrf.mxu0
        %v3399 = vadd.f32 %v2595, %v3398
        %3400 = vmatprep.mubr.bf16.mxu0 %v2435
        %3401 = vmatmul.mubr.bf16.gmra.mxu0 %v2434
        %v3402 = vpop.f32.mrf.mxu0
        %v3403 = vadd.f32 %v2591, %v3402
        %v3404 = vpop.f32.mrf.mxu0
        %v3405 = vadd.f32 %v2595, %v3404
        %v3406 = vpop.f32.mrf.mxu0
        %v3407 = vadd.f32 %v2591, %v3406
        %v3408 = vpop.f32.mrf.mxu0
        %v3409 = vadd.f32 %v2595, %v3408
        %3410 = vmatprep.mubr.bf16.mxu0 %v2443
        %3411 = vmatmul.mubr.bf16.gmra.mxu0 %v2442
        %v3412 = vpop.f32.mrf.mxu0
        %v3413 = vadd.f32 %v2591, %v3412
        %v3414 = vpop.f32.mrf.mxu0
        %v3415 = vadd.f32 %v2595, %v3414
        %v3416 = vpop.f32.mrf.mxu0
        %v3417 = vadd.f32 %v2591, %v3416
        %v3418 = vpop.f32.mrf.mxu0
        %v3419 = vadd.f32 %v2595, %v3418
        %3420 = vmatprep.mubr.bf16.mxu0 %v2451
        %3421 = vmatmul.mubr.bf16.gmra.mxu0 %v2450
        %v3422 = vpop.f32.mrf.mxu0
        %v3423 = vadd.f32 %v2591, %v3422
        %v3424 = vpop.f32.mrf.mxu0
        %v3425 = vadd.f32 %v2595, %v3424
        %v3426 = vpop.f32.mrf.mxu0
        %v3427 = vadd.f32 %v2591, %v3426
        %v3428 = vpop.f32.mrf.mxu0
        %v3429 = vadd.f32 %v2595, %v3428
        %3430 = vdwg.mxu0
        %3431 = vmatprep.subr.bf16.mxu0 %v3029
        %3432 = vmatpush1.bf16.msra.mxu0 %v3028
        %3433 = vmatprep.subr.bf16.mxu0 %v3027
        %3434 = vmatpush1.bf16.msra.mxu0 %v3026
        %3435 = vmatprep.subr.bf16.mxu0 %v3025
        %3436 = vmatpush1.bf16.msra.mxu0 %v3024
        %3437 = vmatprep.subr.bf16.mxu0 %v3023
        %3438 = vmatpush1.bf16.msra.mxu0 %v3022
        %3439 = vmatprep.subr.bf16.mxu0 %v3021
        %3440 = vmatpush1.bf16.msra.mxu0 %v3020
        %3441 = vmatprep.subr.bf16.mxu0 %v3019
        %3442 = vmatpush1.bf16.msra.mxu0 %v3018
        %3443 = vmatprep.subr.bf16.mxu0 %v3017
        %3444 = vmatpush1.bf16.msra.mxu0 %v3016
        %3445 = vmatprep.subr.bf16.mxu0 %v3015
        %3446 = vmatpush1.bf16.msra.mxu0 %v3014
        %3447 = vmatprep.subr.bf16.mxu0 %v3045
        %3448 = vmatpush2.bf16.msra.mxu0 %v3044
        %3449 = vmatprep.subr.bf16.mxu0 %v3043
        %3450 = vmatpush2.bf16.msra.mxu0 %v3042
        %3451 = vmatprep.subr.bf16.mxu0 %v3041
        %3452 = vmatpush2.bf16.msra.mxu0 %v3040
        %3453 = vmatprep.subr.bf16.mxu0 %v3039
        %3454 = vmatpush2.bf16.msra.mxu0 %v3038
        %3455 = vmatprep.subr.bf16.mxu0 %v3037
        %3456 = vmatpush2.bf16.msra.mxu0 %v3036
        %3457 = vmatprep.subr.bf16.mxu0 %v3035
        %3458 = vmatpush2.bf16.msra.mxu0 %v3034
        %3459 = vmatprep.subr.bf16.mxu0 %v3033
        %3460 = vmatpush2.bf16.msra.mxu0 %v3032
        %3461 = vmatprep.subr.bf16.mxu0 %v3031
        %3462 = vmatpush2.bf16.msra.mxu0 %v3030
        %3463 = vmatprep.mubr.bf16.mxu0 %v2333
        %3464 = vmatmul.mubr.bf16.gmra.mxu0 %v2332
        %v3465 = vpop.f32.mrf.mxu0
        %v3466 = vadd.f32 %v3273, %v3465
        %v3467 = vpop.f32.mrf.mxu0
        %v3468 = vadd.f32 %v3275, %v3467
        %v3469 = vpop.f32.mrf.mxu0
        %v3470 = vadd.f32 %v3277, %v3469
        %v3471 = vpop.f32.mrf.mxu0
        %v3472 = vadd.f32 %v3279, %v3471
        %3473 = vmatprep.mubr.bf16.mxu0 %v2341
        %3474 = vmatmul.mubr.bf16.gmra.mxu0 %v2340
        %v3475 = vpop.f32.mrf.mxu0
        %v3476 = vadd.f32 %v3283, %v3475
        %v3477 = vpop.f32.mrf.mxu0
        %v3478 = vadd.f32 %v3285, %v3477
        %v3479 = vpop.f32.mrf.mxu0
        %v3480 = vadd.f32 %v3287, %v3479
        %v3481 = vpop.f32.mrf.mxu0
        %v3482 = vadd.f32 %v3289, %v3481
        %3483 = vmatprep.mubr.bf16.mxu0 %v2349
        %3484 = vmatmul.mubr.bf16.gmra.mxu0 %v2348
        %v3485 = vpop.f32.mrf.mxu0
        %v3486 = vadd.f32 %v3293, %v3485
        %v3487 = vpop.f32.mrf.mxu0
        %v3488 = vadd.f32 %v3295, %v3487
        %v3489 = vpop.f32.mrf.mxu0
        %v3490 = vadd.f32 %v3297, %v3489
        %v3491 = vpop.f32.mrf.mxu0
        %v3492 = vadd.f32 %v3299, %v3491
        %3493 = vmatprep.mubr.bf16.mxu0 %v2357
        %3494 = vmatmul.mubr.bf16.gmra.mxu0 %v2356
        %v3495 = vpop.f32.mrf.mxu0
        %v3496 = vadd.f32 %v3303, %v3495
        %v3497 = vpop.f32.mrf.mxu0
        %v3498 = vadd.f32 %v3305, %v3497
        %v3499 = vpop.f32.mrf.mxu0
        %v3500 = vadd.f32 %v3307, %v3499
        %v3501 = vpop.f32.mrf.mxu0
        %v3502 = vadd.f32 %v3309, %v3501
        %3503 = vmatprep.mubr.bf16.mxu0 %v2365
        %3504 = vmatmul.mubr.bf16.gmra.mxu0 %v2364
        %v3505 = vpop.f32.mrf.mxu0
        %v3506 = vadd.f32 %v3313, %v3505
        %v3507 = vpop.f32.mrf.mxu0
        %v3508 = vadd.f32 %v3315, %v3507
        %v3509 = vpop.f32.mrf.mxu0
        %v3510 = vadd.f32 %v3317, %v3509
        %v3511 = vpop.f32.mrf.mxu0
        %v3512 = vadd.f32 %v3319, %v3511
        %3513 = vmatprep.mubr.bf16.mxu0 %v2373
        %3514 = vmatmul.mubr.bf16.gmra.mxu0 %v2372
        %v3515 = vpop.f32.mrf.mxu0
        %v3516 = vadd.f32 %v3323, %v3515
        %v3517 = vpop.f32.mrf.mxu0
        %v3518 = vadd.f32 %v3325, %v3517
        %v3519 = vpop.f32.mrf.mxu0
        %v3520 = vadd.f32 %v3327, %v3519
        %v3521 = vpop.f32.mrf.mxu0
        %v3522 = vadd.f32 %v3329, %v3521
        %3523 = vmatprep.mubr.bf16.mxu0 %v2381
        %3524 = vmatmul.mubr.bf16.gmra.mxu0 %v2380
        %v3525 = vpop.f32.mrf.mxu0
        %v3526 = vadd.f32 %v3333, %v3525
        %v3527 = vpop.f32.mrf.mxu0
        %v3528 = vadd.f32 %v3335, %v3527
        %v3529 = vpop.f32.mrf.mxu0
        %v3530 = vadd.f32 %v3337, %v3529
        %v3531 = vpop.f32.mrf.mxu0
        %v3532 = vadd.f32 %v3339, %v3531
        %3533 = vmatprep.mubr.bf16.mxu0 %v2389
        %3534 = vmatmul.mubr.bf16.gmra.mxu0 %v2388
        %v3535 = vpop.f32.mrf.mxu0
        %v3536 = vadd.f32 %v3343, %v3535
        %v3537 = vpop.f32.mrf.mxu0
        %v3538 = vadd.f32 %v3345, %v3537
        %v3539 = vpop.f32.mrf.mxu0
        %v3540 = vadd.f32 %v3347, %v3539
        %v3541 = vpop.f32.mrf.mxu0
        %v3542 = vadd.f32 %v3349, %v3541
        %3543 = vmatprep.mubr.bf16.mxu0 %v2397
        %3544 = vmatmul.mubr.bf16.gmra.mxu0 %v2396
        %v3545 = vpop.f32.mrf.mxu0
        %v3546 = vadd.f32 %v3353, %v3545
        %v3547 = vpop.f32.mrf.mxu0
        %v3548 = vadd.f32 %v3355, %v3547
        %v3549 = vpop.f32.mrf.mxu0
        %v3550 = vadd.f32 %v3357, %v3549
        %v3551 = vpop.f32.mrf.mxu0
        %v3552 = vadd.f32 %v3359, %v3551
        %3553 = vmatprep.mubr.bf16.mxu0 %v2405
        %3554 = vmatmul.mubr.bf16.gmra.mxu0 %v2404
        %v3555 = vpop.f32.mrf.mxu0
        %v3556 = vadd.f32 %v3363, %v3555
        %v3557 = vpop.f32.mrf.mxu0
        %v3558 = vadd.f32 %v3365, %v3557
        %v3559 = vpop.f32.mrf.mxu0
        %v3560 = vadd.f32 %v3367, %v3559
        %v3561 = vpop.f32.mrf.mxu0
        %v3562 = vadd.f32 %v3369, %v3561
        %3563 = vmatprep.mubr.bf16.mxu0 %v2413
        %3564 = vmatmul.mubr.bf16.gmra.mxu0 %v2412
        %v3565 = vpop.f32.mrf.mxu0
        %v3566 = vadd.f32 %v3373, %v3565
        %v3567 = vpop.f32.mrf.mxu0
        %v3568 = vadd.f32 %v3375, %v3567
        %v3569 = vpop.f32.mrf.mxu0
        %v3570 = vadd.f32 %v3377, %v3569
        %v3571 = vpop.f32.mrf.mxu0
        %v3572 = vadd.f32 %v3379, %v3571
        %3573 = vmatprep.mubr.bf16.mxu0 %v2421
        %3574 = vmatmul.mubr.bf16.gmra.mxu0 %v2420
        %v3575 = vpop.f32.mrf.mxu0
        %v3576 = vadd.f32 %v3383, %v3575
        %v3577 = vpop.f32.mrf.mxu0
        %v3578 = vadd.f32 %v3385, %v3577
        %v3579 = vpop.f32.mrf.mxu0
        %v3580 = vadd.f32 %v3387, %v3579
        %v3581 = vpop.f32.mrf.mxu0
        %v3582 = vadd.f32 %v3389, %v3581
        %3583 = vmatprep.mubr.bf16.mxu0 %v2429
        %3584 = vmatmul.mubr.bf16.gmra.mxu0 %v2428
        %v3585 = vpop.f32.mrf.mxu0
        %v3586 = vadd.f32 %v3393, %v3585
        %v3587 = vpop.f32.mrf.mxu0
        %v3588 = vadd.f32 %v3395, %v3587
        %v3589 = vpop.f32.mrf.mxu0
        %v3590 = vadd.f32 %v3397, %v3589
        %v3591 = vpop.f32.mrf.mxu0
        %v3592 = vadd.f32 %v3399, %v3591
        %3593 = vmatprep.mubr.bf16.mxu0 %v2437
        %3594 = vmatmul.mubr.bf16.gmra.mxu0 %v2436
        %v3595 = vpop.f32.mrf.mxu0
        %v3596 = vadd.f32 %v3403, %v3595
        %v3597 = vpop.f32.mrf.mxu0
        %v3598 = vadd.f32 %v3405, %v3597
        %v3599 = vpop.f32.mrf.mxu0
        %v3600 = vadd.f32 %v3407, %v3599
        %v3601 = vpop.f32.mrf.mxu0
        %v3602 = vadd.f32 %v3409, %v3601
        %3603 = vmatprep.mubr.bf16.mxu0 %v2445
        %3604 = vmatmul.mubr.bf16.gmra.mxu0 %v2444
        %v3605 = vpop.f32.mrf.mxu0
        %v3606 = vadd.f32 %v3413, %v3605
        %v3607 = vpop.f32.mrf.mxu0
        %v3608 = vadd.f32 %v3415, %v3607
        %v3609 = vpop.f32.mrf.mxu0
        %v3610 = vadd.f32 %v3417, %v3609
        %v3611 = vpop.f32.mrf.mxu0
        %v3612 = vadd.f32 %v3419, %v3611
        %3613 = vmatprep.mubr.bf16.mxu0 %v2453
        %3614 = vmatmul.mubr.bf16.gmra.mxu0 %v2452
        %v3615 = vpop.f32.mrf.mxu0
        %v3616 = vadd.f32 %v3423, %v3615
        %v3617 = vpop.f32.mrf.mxu0
        %v3618 = vadd.f32 %v3425, %v3617
        %v3619 = vpop.f32.mrf.mxu0
        %v3620 = vadd.f32 %v3427, %v3619
        %v3621 = vpop.f32.mrf.mxu0
        %v3622 = vadd.f32 %v3429, %v3621
        %3623 = vdwg.mxu0
        %3624 = vmatprep.subr.bf16.mxu0 %v3061
        %3625 = vmatpush1.bf16.msra.mxu0 %v3060
        %3626 = vmatprep.subr.bf16.mxu0 %v3059
        %3627 = vmatpush1.bf16.msra.mxu0 %v3058
        %3628 = vmatprep.subr.bf16.mxu0 %v3057
        %3629 = vmatpush1.bf16.msra.mxu0 %v3056
        %3630 = vmatprep.subr.bf16.mxu0 %v3055
        %3631 = vmatpush1.bf16.msra.mxu0 %v3054
        %3632 = vmatprep.subr.bf16.mxu0 %v3053
        %3633 = vmatpush1.bf16.msra.mxu0 %v3052
        %3634 = vmatprep.subr.bf16.mxu0 %v3051
        %3635 = vmatpush1.bf16.msra.mxu0 %v3050
        %3636 = vmatprep.subr.bf16.mxu0 %v3049
        %3637 = vmatpush1.bf16.msra.mxu0 %v3048
        %3638 = vmatprep.subr.bf16.mxu0 %v3047
        %3639 = vmatpush1.bf16.msra.mxu0 %v3046
        %3640 = vmatprep.subr.bf16.mxu0 %v3077
        %3641 = vmatpush2.bf16.msra.mxu0 %v3076
        %3642 = vmatprep.subr.bf16.mxu0 %v3075
        %3643 = vmatpush2.bf16.msra.mxu0 %v3074
        %3644 = vmatprep.subr.bf16.mxu0 %v3073
        %3645 = vmatpush2.bf16.msra.mxu0 %v3072
        %3646 = vmatprep.subr.bf16.mxu0 %v3071
        %3647 = vmatpush2.bf16.msra.mxu0 %v3070
        %3648 = vmatprep.subr.bf16.mxu0 %v3069
        %3649 = vmatpush2.bf16.msra.mxu0 %v3068
        %3650 = vmatprep.subr.bf16.mxu0 %v3067
        %3651 = vmatpush2.bf16.msra.mxu0 %v3066
        %3652 = vmatprep.subr.bf16.mxu0 %v3065
        %3653 = vmatpush2.bf16.msra.mxu0 %v3064
        %3654 = vmatprep.subr.bf16.mxu0 %v3063
        %3655 = vmatpush2.bf16.msra.mxu0 %v3062
        %3656 = vmatprep.mubr.bf16.mxu0 %v2335
        %3657 = vmatmul.mubr.bf16.gmra.mxu0 %v2334
        %v3658 = vpop.f32.mrf.mxu0
        %v3659 = vadd.f32 %v3466, %v3658
        %v3660 = vpop.f32.mrf.mxu0
        %v3661 = vadd.f32 %v3468, %v3660
        %v3662 = vpop.f32.mrf.mxu0
        %v3663 = vadd.f32 %v3470, %v3662
        %v3664 = vpop.f32.mrf.mxu0
        %v3665 = vadd.f32 %v3472, %v3664
        %3666 = vmatprep.mubr.bf16.mxu0 %v2343
        %3667 = vmatmul.mubr.bf16.gmra.mxu0 %v2342
        %v3668 = vpop.f32.mrf.mxu0
        %v3669 = vadd.f32 %v3476, %v3668
        %v3670 = vpop.f32.mrf.mxu0
        %v3671 = vadd.f32 %v3478, %v3670
        %v3672 = vpop.f32.mrf.mxu0
        %v3673 = vadd.f32 %v3480, %v3672
        %v3674 = vpop.f32.mrf.mxu0
        %v3675 = vadd.f32 %v3482, %v3674
        %3676 = vmatprep.mubr.bf16.mxu0 %v2351
        %3677 = vmatmul.mubr.bf16.gmra.mxu0 %v2350
        %v3678 = vpop.f32.mrf.mxu0
        %v3679 = vadd.f32 %v3486, %v3678
        %v3680 = vpop.f32.mrf.mxu0
        %v3681 = vadd.f32 %v3488, %v3680
        %v3682 = vpop.f32.mrf.mxu0
        %v3683 = vadd.f32 %v3490, %v3682
        %v3684 = vpop.f32.mrf.mxu0
        %v3685 = vadd.f32 %v3492, %v3684
        %3686 = vmatprep.mubr.bf16.mxu0 %v2359
        %3687 = vmatmul.mubr.bf16.gmra.mxu0 %v2358
        %v3688 = vpop.f32.mrf.mxu0
        %v3689 = vadd.f32 %v3496, %v3688
        %v3690 = vpop.f32.mrf.mxu0
        %v3691 = vadd.f32 %v3498, %v3690
        %v3692 = vpop.f32.mrf.mxu0
        %v3693 = vadd.f32 %v3500, %v3692
        %v3694 = vpop.f32.mrf.mxu0
        %v3695 = vadd.f32 %v3502, %v3694
        %3696 = vmatprep.mubr.bf16.mxu0 %v2367
        %3697 = vmatmul.mubr.bf16.gmra.mxu0 %v2366
        %v3698 = vpop.f32.mrf.mxu0
        %v3699 = vadd.f32 %v3506, %v3698
        %v3700 = vpop.f32.mrf.mxu0
        %v3701 = vadd.f32 %v3508, %v3700
        %v3702 = vpop.f32.mrf.mxu0
        %v3703 = vadd.f32 %v3510, %v3702
        %v3704 = vpop.f32.mrf.mxu0
        %v3705 = vadd.f32 %v3512, %v3704
        %3706 = vmatprep.mubr.bf16.mxu0 %v2375
        %3707 = vmatmul.mubr.bf16.gmra.mxu0 %v2374
        %v3708 = vpop.f32.mrf.mxu0
        %v3709 = vadd.f32 %v3516, %v3708
        %v3710 = vpop.f32.mrf.mxu0
        %v3711 = vadd.f32 %v3518, %v3710
        %v3712 = vpop.f32.mrf.mxu0
        %v3713 = vadd.f32 %v3520, %v3712
        %v3714 = vpop.f32.mrf.mxu0
        %v3715 = vadd.f32 %v3522, %v3714
        %3716 = vmatprep.mubr.bf16.mxu0 %v2383
        %3717 = vmatmul.mubr.bf16.gmra.mxu0 %v2382
        %v3718 = vpop.f32.mrf.mxu0
        %v3719 = vadd.f32 %v3526, %v3718
        %v3720 = vpop.f32.mrf.mxu0
        %v3721 = vadd.f32 %v3528, %v3720
        %v3722 = vpop.f32.mrf.mxu0
        %v3723 = vadd.f32 %v3530, %v3722
        %v3724 = vpop.f32.mrf.mxu0
        %v3725 = vadd.f32 %v3532, %v3724
        %3726 = vmatprep.mubr.bf16.mxu0 %v2391
        %3727 = vmatmul.mubr.bf16.gmra.mxu0 %v2390
        %v3728 = vpop.f32.mrf.mxu0
        %v3729 = vadd.f32 %v3536, %v3728
        %v3730 = vpop.f32.mrf.mxu0
        %v3731 = vadd.f32 %v3538, %v3730
        %v3732 = vpop.f32.mrf.mxu0
        %v3733 = vadd.f32 %v3540, %v3732
        %v3734 = vpop.f32.mrf.mxu0
        %v3735 = vadd.f32 %v3542, %v3734
        %3736 = vmatprep.mubr.bf16.mxu0 %v2399
        %3737 = vmatmul.mubr.bf16.gmra.mxu0 %v2398
        %v3738 = vpop.f32.mrf.mxu0
        %v3739 = vadd.f32 %v3546, %v3738
        %v3740 = vpop.f32.mrf.mxu0
        %v3741 = vadd.f32 %v3548, %v3740
        %v3742 = vpop.f32.mrf.mxu0
        %v3743 = vadd.f32 %v3550, %v3742
        %v3744 = vpop.f32.mrf.mxu0
        %v3745 = vadd.f32 %v3552, %v3744
        %3746 = vmatprep.mubr.bf16.mxu0 %v2407
        %3747 = vmatmul.mubr.bf16.gmra.mxu0 %v2406
        %v3748 = vpop.f32.mrf.mxu0
        %v3749 = vadd.f32 %v3556, %v3748
        %v3750 = vpop.f32.mrf.mxu0
        %v3751 = vadd.f32 %v3558, %v3750
        %v3752 = vpop.f32.mrf.mxu0
        %v3753 = vadd.f32 %v3560, %v3752
        %v3754 = vpop.f32.mrf.mxu0
        %v3755 = vadd.f32 %v3562, %v3754
        %3756 = vmatprep.mubr.bf16.mxu0 %v2415
        %3757 = vmatmul.mubr.bf16.gmra.mxu0 %v2414
        %v3758 = vpop.f32.mrf.mxu0
        %v3759 = vadd.f32 %v3566, %v3758
        %v3760 = vpop.f32.mrf.mxu0
        %v3761 = vadd.f32 %v3568, %v3760
        %v3762 = vpop.f32.mrf.mxu0
        %v3763 = vadd.f32 %v3570, %v3762
        %v3764 = vpop.f32.mrf.mxu0
        %v3765 = vadd.f32 %v3572, %v3764
        %3766 = vmatprep.mubr.bf16.mxu0 %v2423
        %3767 = vmatmul.mubr.bf16.gmra.mxu0 %v2422
        %v3768 = vpop.f32.mrf.mxu0
        %v3769 = vadd.f32 %v3576, %v3768
        %v3770 = vpop.f32.mrf.mxu0
        %v3771 = vadd.f32 %v3578, %v3770
        %v3772 = vpop.f32.mrf.mxu0
        %v3773 = vadd.f32 %v3580, %v3772
        %v3774 = vpop.f32.mrf.mxu0
        %v3775 = vadd.f32 %v3582, %v3774
        %3776 = vmatprep.mubr.bf16.mxu0 %v2431
        %3777 = vmatmul.mubr.bf16.gmra.mxu0 %v2430
        %v3778 = vpop.f32.mrf.mxu0
        %v3779 = vadd.f32 %v3586, %v3778
        %v3780 = vpop.f32.mrf.mxu0
        %v3781 = vadd.f32 %v3588, %v3780
        %v3782 = vpop.f32.mrf.mxu0
        %v3783 = vadd.f32 %v3590, %v3782
        %v3784 = vpop.f32.mrf.mxu0
        %v3785 = vadd.f32 %v3592, %v3784
        %3786 = vmatprep.mubr.bf16.mxu0 %v2439
        %3787 = vmatmul.mubr.bf16.gmra.mxu0 %v2438
        %v3788 = vpop.f32.mrf.mxu0
        %v3789 = vadd.f32 %v3596, %v3788
        %v3790 = vpop.f32.mrf.mxu0
        %v3791 = vadd.f32 %v3598, %v3790
        %v3792 = vpop.f32.mrf.mxu0
        %v3793 = vadd.f32 %v3600, %v3792
        %v3794 = vpop.f32.mrf.mxu0
        %v3795 = vadd.f32 %v3602, %v3794
        %3796 = vmatprep.mubr.bf16.mxu0 %v2447
        %3797 = vmatmul.mubr.bf16.gmra.mxu0 %v2446
        %v3798 = vpop.f32.mrf.mxu0
        %v3799 = vadd.f32 %v3606, %v3798
        %v3800 = vpop.f32.mrf.mxu0
        %v3801 = vadd.f32 %v3608, %v3800
        %v3802 = vpop.f32.mrf.mxu0
        %v3803 = vadd.f32 %v3610, %v3802
        %v3804 = vpop.f32.mrf.mxu0
        %v3805 = vadd.f32 %v3612, %v3804
        %3806 = vmatprep.mubr.bf16.mxu0 %v2455
        %3807 = vmatmul.mubr.bf16.gmra.mxu0 %v2454
        %v3808 = vpop.f32.mrf.mxu0
        %v3809 = vadd.f32 %v3616, %v3808
        %v3810 = vpop.f32.mrf.mxu0
        %v3811 = vadd.f32 %v3618, %v3810
        %v3812 = vpop.f32.mrf.mxu0
        %v3813 = vadd.f32 %v3620, %v3812
        %v3814 = vpop.f32.mrf.mxu0
        %v3815 = vadd.f32 %v3622, %v3814
        %3816 = vdwg.mxu0
        %3817 = vmatprep.subr.bf16.mxu0 %v3093
        %3818 = vmatpush1.bf16.msra.mxu0 %v3092
        %3819 = vmatprep.subr.bf16.mxu0 %v3091
        %3820 = vmatpush1.bf16.msra.mxu0 %v3090
        %3821 = vmatprep.subr.bf16.mxu0 %v3089
        %3822 = vmatpush1.bf16.msra.mxu0 %v3088
        %3823 = vmatprep.subr.bf16.mxu0 %v3087
        %3824 = vmatpush1.bf16.msra.mxu0 %v3086
        %3825 = vmatprep.subr.bf16.mxu0 %v3085
        %3826 = vmatpush1.bf16.msra.mxu0 %v3084
        %3827 = vmatprep.subr.bf16.mxu0 %v3083
        %3828 = vmatpush1.bf16.msra.mxu0 %v3082
        %3829 = vmatprep.subr.bf16.mxu0 %v3081
        %3830 = vmatpush1.bf16.msra.mxu0 %v3080
        %3831 = vmatprep.subr.bf16.mxu0 %v3079
        %3832 = vmatpush1.bf16.msra.mxu0 %v3078
        %3833 = vmatprep.subr.bf16.mxu0 %v3109
        %3834 = vmatpush2.bf16.msra.mxu0 %v3108
        %3835 = vmatprep.subr.bf16.mxu0 %v3107
        %3836 = vmatpush2.bf16.msra.mxu0 %v3106
        %3837 = vmatprep.subr.bf16.mxu0 %v3105
        %3838 = vmatpush2.bf16.msra.mxu0 %v3104
        %3839 = vmatprep.subr.bf16.mxu0 %v3103
        %3840 = vmatpush2.bf16.msra.mxu0 %v3102
        %3841 = vmatprep.subr.bf16.mxu0 %v3101
        %3842 = vmatpush2.bf16.msra.mxu0 %v3100
        %3843 = vmatprep.subr.bf16.mxu0 %v3099
        %3844 = vmatpush2.bf16.msra.mxu0 %v3098
        %3845 = vmatprep.subr.bf16.mxu0 %v3097
        %3846 = vmatpush2.bf16.msra.mxu0 %v3096
        %3847 = vmatprep.subr.bf16.mxu0 %v3095
        %3848 = vmatpush2.bf16.msra.mxu0 %v3094
        %3849 = vmatprep.mubr.bf16.mxu0 %v2337
        %3850 = vmatmul.mubr.bf16.gmra.mxu0 %v2336
        %v3851 = vpop.f32.mrf.mxu0
        %v3852 = vadd.f32 %v3659, %v3851
        %v3853 = vpop.f32.mrf.mxu0
        %v3854 = vadd.f32 %v3661, %v3853
        %v3855 = vpop.f32.mrf.mxu0
        %v3856 = vadd.f32 %v3663, %v3855
        %v3857 = vpop.f32.mrf.mxu0
        %v3858 = vadd.f32 %v3665, %v3857
        %3859 = vmatprep.mubr.bf16.mxu0 %v2345
        %3860 = vmatmul.mubr.bf16.gmra.mxu0 %v2344
        %v3861 = vpop.f32.mrf.mxu0
        %v3862 = vadd.f32 %v3669, %v3861
        %v3863 = vpop.f32.mrf.mxu0
        %v3864 = vadd.f32 %v3671, %v3863
        %v3865 = vpop.f32.mrf.mxu0
        %v3866 = vadd.f32 %v3673, %v3865
        %v3867 = vpop.f32.mrf.mxu0
        %v3868 = vadd.f32 %v3675, %v3867
        %3869 = vmatprep.mubr.bf16.mxu0 %v2353
        %3870 = vmatmul.mubr.bf16.gmra.mxu0 %v2352
        %v3871 = vpop.f32.mrf.mxu0
        %v3872 = vadd.f32 %v3679, %v3871
        %v3873 = vpop.f32.mrf.mxu0
        %v3874 = vadd.f32 %v3681, %v3873
        %v3875 = vpop.f32.mrf.mxu0
        %v3876 = vadd.f32 %v3683, %v3875
        %v3877 = vpop.f32.mrf.mxu0
        %v3878 = vadd.f32 %v3685, %v3877
        %3879 = vmatprep.mubr.bf16.mxu0 %v2361
        %3880 = vmatmul.mubr.bf16.gmra.mxu0 %v2360
        %v3881 = vpop.f32.mrf.mxu0
        %v3882 = vadd.f32 %v3689, %v3881
        %v3883 = vpop.f32.mrf.mxu0
        %v3884 = vadd.f32 %v3691, %v3883
        %v3885 = vpop.f32.mrf.mxu0
        %v3886 = vadd.f32 %v3693, %v3885
        %v3887 = vpop.f32.mrf.mxu0
        %v3888 = vadd.f32 %v3695, %v3887
        %3889 = vmatprep.mubr.bf16.mxu0 %v2369
        %3890 = vmatmul.mubr.bf16.gmra.mxu0 %v2368
        %v3891 = vpop.f32.mrf.mxu0
        %v3892 = vadd.f32 %v3699, %v3891
        %v3893 = vpop.f32.mrf.mxu0
        %v3894 = vadd.f32 %v3701, %v3893
        %v3895 = vpop.f32.mrf.mxu0
        %v3896 = vadd.f32 %v3703, %v3895
        %v3897 = vpop.f32.mrf.mxu0
        %v3898 = vadd.f32 %v3705, %v3897
        %3899 = vmatprep.mubr.bf16.mxu0 %v2377
        %3900 = vmatmul.mubr.bf16.gmra.mxu0 %v2376
        %v3901 = vpop.f32.mrf.mxu0
        %v3902 = vadd.f32 %v3709, %v3901
        %v3903 = vpop.f32.mrf.mxu0
        %v3904 = vadd.f32 %v3711, %v3903
        %v3905 = vpop.f32.mrf.mxu0
        %v3906 = vadd.f32 %v3713, %v3905
        %v3907 = vpop.f32.mrf.mxu0
        %v3908 = vadd.f32 %v3715, %v3907
        %3909 = vmatprep.mubr.bf16.mxu0 %v2385
        %3910 = vmatmul.mubr.bf16.gmra.mxu0 %v2384
        %v3911 = vpop.f32.mrf.mxu0
        %v3912 = vadd.f32 %v3719, %v3911
        %v3913 = vpop.f32.mrf.mxu0
        %v3914 = vadd.f32 %v3721, %v3913
        %v3915 = vpop.f32.mrf.mxu0
        %v3916 = vadd.f32 %v3723, %v3915
        %v3917 = vpop.f32.mrf.mxu0
        %v3918 = vadd.f32 %v3725, %v3917
        %3919 = vmatprep.mubr.bf16.mxu0 %v2393
        %3920 = vmatmul.mubr.bf16.gmra.mxu0 %v2392
        %v3921 = vpop.f32.mrf.mxu0
        %v3922 = vadd.f32 %v3729, %v3921
        %v3923 = vpop.f32.mrf.mxu0
        %v3924 = vadd.f32 %v3731, %v3923
        %v3925 = vpop.f32.mrf.mxu0
        %v3926 = vadd.f32 %v3733, %v3925
        %v3927 = vpop.f32.mrf.mxu0
        %v3928 = vadd.f32 %v3735, %v3927
        %3929 = vmatprep.mubr.bf16.mxu0 %v2401
        %3930 = vmatmul.mubr.bf16.gmra.mxu0 %v2400
        %v3931 = vpop.f32.mrf.mxu0
        %v3932 = vadd.f32 %v3739, %v3931
        %v3933 = vpop.f32.mrf.mxu0
        %v3934 = vadd.f32 %v3741, %v3933
        %v3935 = vpop.f32.mrf.mxu0
        %v3936 = vadd.f32 %v3743, %v3935
        %v3937 = vpop.f32.mrf.mxu0
        %v3938 = vadd.f32 %v3745, %v3937
        %3939 = vmatprep.mubr.bf16.mxu0 %v2409
        %3940 = vmatmul.mubr.bf16.gmra.mxu0 %v2408
        %v3941 = vpop.f32.mrf.mxu0
        %v3942 = vadd.f32 %v3749, %v3941
        %v3943 = vpop.f32.mrf.mxu0
        %v3944 = vadd.f32 %v3751, %v3943
        %v3945 = vpop.f32.mrf.mxu0
        %v3946 = vadd.f32 %v3753, %v3945
        %v3947 = vpop.f32.mrf.mxu0
        %v3948 = vadd.f32 %v3755, %v3947
        %3949 = vmatprep.mubr.bf16.mxu0 %v2417
        %3950 = vmatmul.mubr.bf16.gmra.mxu0 %v2416
        %v3951 = vpop.f32.mrf.mxu0
        %v3952 = vadd.f32 %v3759, %v3951
        %v3953 = vpop.f32.mrf.mxu0
        %v3954 = vadd.f32 %v3761, %v3953
        %v3955 = vpop.f32.mrf.mxu0
        %v3956 = vadd.f32 %v3763, %v3955
        %v3957 = vpop.f32.mrf.mxu0
        %v3958 = vadd.f32 %v3765, %v3957
        %3959 = vmatprep.mubr.bf16.mxu0 %v2425
        %3960 = vmatmul.mubr.bf16.gmra.mxu0 %v2424
        %v3961 = vpop.f32.mrf.mxu0
        %v3962 = vadd.f32 %v3769, %v3961
        %v3963 = vpop.f32.mrf.mxu0
        %v3964 = vadd.f32 %v3771, %v3963
        %v3965 = vpop.f32.mrf.mxu0
        %v3966 = vadd.f32 %v3773, %v3965
        %v3967 = vpop.f32.mrf.mxu0
        %v3968 = vadd.f32 %v3775, %v3967
        %3969 = vmatprep.mubr.bf16.mxu0 %v2433
        %3970 = vmatmul.mubr.bf16.gmra.mxu0 %v2432
        %v3971 = vpop.f32.mrf.mxu0
        %v3972 = vadd.f32 %v3779, %v3971
        %v3973 = vpop.f32.mrf.mxu0
        %v3974 = vadd.f32 %v3781, %v3973
        %v3975 = vpop.f32.mrf.mxu0
        %v3976 = vadd.f32 %v3783, %v3975
        %v3977 = vpop.f32.mrf.mxu0
        %v3978 = vadd.f32 %v3785, %v3977
        %3979 = vmatprep.mubr.bf16.mxu0 %v2441
        %3980 = vmatmul.mubr.bf16.gmra.mxu0 %v2440
        %v3981 = vpop.f32.mrf.mxu0
        %v3982 = vadd.f32 %v3789, %v3981
        %v3983 = vpop.f32.mrf.mxu0
        %v3984 = vadd.f32 %v3791, %v3983
        %v3985 = vpop.f32.mrf.mxu0
        %v3986 = vadd.f32 %v3793, %v3985
        %v3987 = vpop.f32.mrf.mxu0
        %v3988 = vadd.f32 %v3795, %v3987
        %3989 = vmatprep.mubr.bf16.mxu0 %v2449
        %3990 = vmatmul.mubr.bf16.gmra.mxu0 %v2448
        %v3991 = vpop.f32.mrf.mxu0
        %v3992 = vadd.f32 %v3799, %v3991
        %v3993 = vpop.f32.mrf.mxu0
        %v3994 = vadd.f32 %v3801, %v3993
        %v3995 = vpop.f32.mrf.mxu0
        %v3996 = vadd.f32 %v3803, %v3995
        %v3997 = vpop.f32.mrf.mxu0
        %v3998 = vadd.f32 %v3805, %v3997
        %3999 = vmatprep.mubr.bf16.mxu0 %v2457
        %4000 = vmatmul.mubr.bf16.gmra.mxu0 %v2456
        %v4001 = vpop.f32.mrf.mxu0
        %v4002 = vadd.f32 %v3809, %v4001
        %v4003 = vpop.f32.mrf.mxu0
        %v4004 = vadd.f32 %v3811, %v4003
        %v4005 = vpop.f32.mrf.mxu0
        %v4006 = vadd.f32 %v3813, %v4005
        %v4007 = vpop.f32.mrf.mxu0
        %v4008 = vadd.f32 %v3815, %v4007
        %4009 = vdwg.mxu0
        %4010 = vst [vmem:[%s297] sm:$0xff] %v3852
        %4011 = vst [vmem:[%s297 + $0x8] sm:$0xff] %v3854
        %4012 = vst [vmem:[%s297 + $0x10] sm:$0xff] %v3856
        %4013 = vst [vmem:[%s297 + $0x18] sm:$0xff] %v3858
        %4014 = vst [vmem:[%s297 + $0x20] sm:$0xff] %v3862
        %4015 = vst [vmem:[%s297 + $0x28] sm:$0xff] %v3864
        %4016 = vst [vmem:[%s297 + $0x30] sm:$0xff] %v3866
        %4017 = vst [vmem:[%s297 + $0x38] sm:$0xff] %v3868
        %4018 = vst [vmem:[%s297 + $0x40] sm:$0xff] %v3872
        %4019 = vst [vmem:[%s297 + $0x48] sm:$0xff] %v3874
        %4020 = vst [vmem:[%s297 + $0x50] sm:$0xff] %v3876
        %4021 = vst [vmem:[%s297 + $0x58] sm:$0xff] %v3878
        %4022 = vst [vmem:[%s297 + $0x60] sm:$0xff] %v3882
        %4023 = vst [vmem:[%s297 + $0x68] sm:$0xff] %v3884
        %4024 = vst [vmem:[%s297 + $0x70] sm:$0xff] %v3886
        %4025 = vst [vmem:[%s297 + $0x78] sm:$0xff] %v3888
        %4026 = vst [vmem:[%s297 + $0x80] sm:$0xff] %v3892
        %4027 = vst [vmem:[%s297 + $0x88] sm:$0xff] %v3894
        %4028 = vst [vmem:[%s297 + $0x90] sm:$0xff] %v3896
        %4029 = vst [vmem:[%s297 + $0x98] sm:$0xff] %v3898
        %4030 = vst [vmem:[%s297 + $0xa0] sm:$0xff] %v3902
        %4031 = vst [vmem:[%s297 + $0xa8] sm:$0xff] %v3904
        %4032 = vst [vmem:[%s297 + $0xb0] sm:$0xff] %v3906
        %4033 = vst [vmem:[%s297 + $0xb8] sm:$0xff] %v3908
        %4034 = vst [vmem:[%s297 + $0xc0] sm:$0xff] %v3912
        %4035 = vst [vmem:[%s297 + $0xc8] sm:$0xff] %v3914
        %4036 = vst [vmem:[%s297 + $0xd0] sm:$0xff] %v3916
        %4037 = vst [vmem:[%s297 + $0xd8] sm:$0xff] %v3918
        %4038 = vst [vmem:[%s297 + $0xe0] sm:$0xff] %v3922
        %4039 = vst [vmem:[%s297 + $0xe8] sm:$0xff] %v3924
        %4040 = vst [vmem:[%s297 + $0xf0] sm:$0xff] %v3926
        %4041 = vst [vmem:[%s297 + $0xf8] sm:$0xff] %v3928
        %4042 = vst [vmem:[%s297 + $0x100] sm:$0xff] %v3932
        %4043 = vst [vmem:[%s297 + $0x108] sm:$0xff] %v3934
        %4044 = vst [vmem:[%s297 + $0x110] sm:$0xff] %v3936
        %4045 = vst [vmem:[%s297 + $0x118] sm:$0xff] %v3938
        %4046 = vst [vmem:[%s297 + $0x120] sm:$0xff] %v3942
        %4047 = vst [vmem:[%s297 + $0x128] sm:$0xff] %v3944
        %4048 = vst [vmem:[%s297 + $0x130] sm:$0xff] %v3946
        %4049 = vst [vmem:[%s297 + $0x138] sm:$0xff] %v3948
        %4050 = vst [vmem:[%s297 + $0x140] sm:$0xff] %v3952
        %4051 = vst [vmem:[%s297 + $0x148] sm:$0xff] %v3954
        %4052 = vst [vmem:[%s297 + $0x150] sm:$0xff] %v3956
        %4053 = vst [vmem:[%s297 + $0x158] sm:$0xff] %v3958
        %4054 = vst [vmem:[%s297 + $0x160] sm:$0xff] %v3962
        %4055 = vst [vmem:[%s297 + $0x168] sm:$0xff] %v3964
        %4056 = vst [vmem:[%s297 + $0x170] sm:$0xff] %v3966
        %4057 = vst [vmem:[%s297 + $0x178] sm:$0xff] %v3968
        %4058 = vst [vmem:[%s297 + $0x180] sm:$0xff] %v3972
        %4059 = vst [vmem:[%s297 + $0x188] sm:$0xff] %v3974
        %4060 = vst [vmem:[%s297 + $0x190] sm:$0xff] %v3976
        %4061 = vst [vmem:[%s297 + $0x198] sm:$0xff] %v3978
        %4062 = vst [vmem:[%s297 + $0x1a0] sm:$0xff] %v3982
        %4063 = vst [vmem:[%s297 + $0x1a8] sm:$0xff] %v3984
        %4064 = vst [vmem:[%s297 + $0x1b0] sm:$0xff] %v3986
        %4065 = vst [vmem:[%s297 + $0x1b8] sm:$0xff] %v3988
        %4066 = vst [vmem:[%s297 + $0x1c0] sm:$0xff] %v3992
        %4067 = vst [vmem:[%s297 + $0x1c8] sm:$0xff] %v3994
        %4068 = vst [vmem:[%s297 + $0x1d0] sm:$0xff] %v3996
        %4069 = vst [vmem:[%s297 + $0x1d8] sm:$0xff] %v3998
        %4070 = vst [vmem:[%s297 + $0x1e0] sm:$0xff] %v4002
        %4071 = vst [vmem:[%s297 + $0x1e8] sm:$0xff] %v4004
        %4072 = vst [vmem:[%s297 + $0x1f0] sm:$0xff] %v4006
        %4073 = vst [vmem:[%s297 + $0x1f8] sm:$0xff] %v4008
        %s4074 = sand.u32 %s142, 1
        %s4075 = scalar_lea.sflag [#allocation4], %s4074
        %s4076 = sand.u32 %s142, 1
        %s4077 = smul.addr %s4076, 512
        %s4078 = scalar_lea.vmem [#allocation11], %s4077
        // Predicated region
        $region61: #{tpu_custom_call.1} parent=39 // pred_check
          %p4079 = pneg %p152
        $region62: #{tpu_custom_call.1} parent=39 // pred_check_branch
          %4081 = sbr.rel (%p4079) target = $region64
        $region63: #{tpu_custom_call.1} parent=39 // pred_region
          %s4082 = smul.u32 32, %s24
          %s4084 = ssub.s32 8192, 8192
          %4085 = vsyncadd %s4075, %s4084
          %s4086 = smul.addr %s4082, 2
          %s4087 = smul.addr %s4086, 128
          %s4088 = scalar_lea.hbm %s5, %s4087
          %s4089 = sshll.u32 %s4078, 4
          %s4090 = int_to_ptr.vmem [resolvable:$true] %s4089
          %4095 = dma.vmem_to_hbm [thread:$0]  %s4090, 8192, %s4088, %s4075, 256, 256, 16
        $region64: #{tpu_custom_call.1} parent=39 // pred_fallthru
          _
      $region40: #{tpu_custom_call.1} parent=5 // pred_fallthru
        _
      %p4096 = scmp.le.s32.totalorder 2, %s19
      // Predicated region
      $region65: #{tpu_custom_call.1} parent=5 // pred_check
        %p4097 = pneg %p4096
      $region66: #{tpu_custom_call.1} parent=5 // pred_check_branch
        %4099 = sbr.rel (%p4097) target = $region68
      $region67: #{tpu_custom_call.1} parent=5 // pred_region
        %s4100 = ssub.s32 %s19, 2
        // Predicated region
        $region69: #{tpu_custom_call.1} parent=67 // pred_check
          %p4101 = pneg %p158
        $region70: #{tpu_custom_call.1} parent=67 // pred_check_branch
          %4103 = sbr.rel (%p4101) target = $region72
        $region71: #{tpu_custom_call.1} parent=67 // pred_region
          %s4104 = sand.u32 %s143, 1
          %s4105 = scalar_lea.sflag [#allocation4], %s4104
          %s4106 = sand.u32 %s143, 1
          %s4107 = smul.addr %s4106, 512
          %s4108 = scalar_lea.vmem [#allocation11], %s4107
          %4109 = dma.done %s4105, 8192
        $region72: #{tpu_custom_call.1} parent=67 // pred_fallthru
          _
      $region68: #{tpu_custom_call.1} parent=5 // pred_fallthru
        _
    $region6: #{tpu_custom_call.1} parent=1 // loop_footer
      %s23 = sadd.s32 1, %s19
    $region7: #{tpu_custom_call.1} parent=1 // loop_footer_branch
      %18 = sbr.rel target = $region3
    $region8: #{tpu_custom_call.1} parent=1 // loop_exit
      _
    %4110 = vsyncpa [#allocation3], 1
    %s4111 = scalar_lea.sflag [#allocation3], 1
    %4112 = vsyncpa %s4111, 1
    %4113 = vsyncpa [#allocation6], 1
    %4114 = vsyncpa [#allocation9], 1
    %4115 = vsyncpa [#allocation4], 1
    %s4116 = scalar_lea.sflag [#allocation4], 1
    %4117 = vsyncpa %s4116, 1

// kernel: tpu_custom_call.1
$region0: #{tpu_custom_call.1}
  #allocation0 [shape = 'u32[]', space=smem, size = 0x4, offset = 0x4, fixed_abs, tag = 'smem constant byte address 0x4 - core index']
  #allocation1 [shape = 'u32[144,128]{1,0:T(1,128)}', space=vmem, size = 0x12000, scoped, tag = 'internal scratch']
  %s0 = inlined_call_operand.hbm [shape: bf16[2048,256], index: 0, kind: input, shape index: {}]
  %s1 = inlined_call_operand.hbm [shape: bf16[256,1024], index: 1, kind: input, shape index: {}]
  %s2 = inlined_call_operand.hbm [shape: f32[1,1024], index: 2, kind: input, shape index: {}]
  %s3 = inlined_call_operand.hbm [shape: bf16[1024,256], index: 3, kind: input, shape index: {}]
  %s4 = inlined_call_operand.hbm [shape: f32[1,256], index: 4, kind: input, shape index: {}]
  %s5 = inlined_call_operand.hbm [shape: f32[2048,256], index: 5, kind: output, shape index: {}]
  %s6 = sld [smem:[#allocation0]]
  $region73: #{tpu_custom_call.1} parent=0
    _
  %s8 = ssub.s32 1, %s6
  %s9 = scalar_select 0, %s8, %s6
  $region1: #{tpu_custom_call.1} parent=0
    #allocation2 [shape = 'u8[262144]{0}', space=vmem, size = 0x40000, scoped, tag = 'input window, operand 0']
    #allocation3 [shape = 's32[2]{0}', space=sflag, size = 0x8, scoped, tag = 'scoped memory for tpu_custom_call.1']
    #allocation4 [shape = 's32[2]{0}', space=sflag, size = 0x8, scoped, tag = 'scoped memory for tpu_custom_call.1']
    #allocation5 [shape = 'u8[524288]{0}', space=vmem, size = 0x80000, scoped, tag = 'input window, operand 1, single buffered']
    #allocation6 [shape = 's32[1]{0}', space=sflag, size = 0x4, scoped, tag = 'scoped memory for tpu_custom_call.1']
    #allocation7 [shape = 'u8[4096]{0}', space=vmem, size = 0x1000, scoped, tag = 'input window, operand 2, single buffered']
    #allocation8 [shape = 'u8[524288]{0}', space=vmem, size = 0x80000, scoped, tag = 'input window, operand 3, single buffered']
    #allocation9 [shape = 's32[1]{0}', space=sflag, size = 0x4, scoped, tag = 'scoped memory for tpu_custom_call.1']
    #allocation10 [shape = 'u8[1024]{0}', space=vmem, size = 0x400, scoped, tag = 'input window, operand 4, single buffered']
    #allocation11 [shape = 'u8[524288]{0}', space=vmem, size = 0x80000, scoped, tag = 'output window, operand 0']
    %10 = vsyncpa [#allocation3], 0
    %s11 = scalar_lea.sflag [#allocation3], 1
    %12 = vsyncpa %s11, 0
    %13 = vsyncpa [#allocation6], 0
    %14 = vsyncpa [#allocation9], 0
    %15 = vsyncpa [#allocation4], 0
    %s16 = scalar_lea.sflag [#allocation4], 1
    %17 = vsyncpa %s16, 0
    loop: start=0, step=1, limit=10
    $region2: #{tpu_custom_call.1} parent=1 // loop_pre_header
      _
    $region3: #{tpu_custom_call.1} parent=1 // loop_header
      %s19 = sphi 0, %s23
      %p20 = scmp.ge.s32.totalorder %s19, 10
      %s29 = sphi 0, %s31
      %s32 = sphi 0, %s29
      %s33 = sphi 0, %s32
      %s49 = sphi 0, %s33
      %s53 = sphi 0, %s53
      %s55 = sphi 0, %s53
      %s56 = sphi 0, %s55
      %s70 = sphi 0, %s56
      %s74 = sphi 0, %s74
      %s76 = sphi 0, %s74
      %s77 = sphi 0, %s76
      %s91 = sphi 0, %s77
      %s95 = sphi 0, %s95
      %s97 = sphi 0, %s95
      %s98 = sphi 0, %s97
      %s112 = sphi 0, %s98
      %s116 = sphi 0, %s116
      %s118 = sphi 0, %s116
      %s119 = sphi 0, %s118
      %s133 = sphi 0, %s119
      %s139 = sphi 0, %s141
      %s142 = sphi 0, %s139
      %s143 = sphi 0, %s142
      %s159 = sphi 0, %s143
    $region4: #{tpu_custom_call.1} parent=1 // loop_header_branch
      %22 = sbr.rel (%p20) target = $region8
    $region5: #{tpu_custom_call.1} parent=1 // loop_body
      %s24 = ssub.s32 %s19, 1
      %s25 = ssub.s32 %s19, 2
      %s26 = sadd.s32 %s19, 1
      %s27 = ssub.s32 %s19, %s26
      %p28 = scmp.eq.s32.totalorder %s27, 0
      %s30 = sadd.s32 %s29, 1
      %s31 = scalar_select %p28, %s29, %s30
      %p34 = pneg %p28
      %p35 = scmp.eq.s32.totalorder %s19, 7
      %p36 = por %p34, %p35
      %p37 = scmp.ne.s32.totalorder %s29, %s32
      %p38 = scmp.eq.s32.totalorder %s19, 0
      %p39 = por %p37, %p38
      %p40 = scmp.ne.s32.totalorder %s29, %s32
      %p41 = scmp.eq.s32.totalorder %s24, 7
      %p42 = por %p40, %p41
      %p43 = scmp.ne.s32.totalorder %s32, %s33
      %p44 = scmp.eq.s32.totalorder %s24, 0
      %p45 = por %p43, %p44
      %p46 = scmp.ne.s32.totalorder %s32, %s33
      %p47 = scmp.eq.s32.totalorder %s25, 7
      %p48 = por %p46, %p47
      %p50 = scmp.ne.s32.totalorder %s33, %s49
      %p51 = scmp.eq.s32.totalorder %s25, 0
      %p52 = por %p50, %p51
      %s54 = sadd.s32 %s53, 1
      %p57 = scmp.eq.s32.totalorder %s19, 7
      %p58 = scmp.ne.s32.totalorder %s53, %s55
      %p59 = scmp.eq.s32.totalorder %s19, 0
      %p60 = por %p58, %p59
      %p61 = scmp.ne.s32.totalorder %s53, %s55
      %p62 = scmp.eq.s32.totalorder %s24, 7
      %p63 = por %p61, %p62
      %p64 = scmp.ne.s32.totalorder %s55, %s56
      %p65 = scmp.eq.s32.totalorder %s24, 0
      %p66 = por %p64, %p65
      %p67 = scmp.ne.s32.totalorder %s55, %s56
      %p68 = scmp.eq.s32.totalorder %s25, 7
      %p69 = por %p67, %p68
      %p71 = scmp.ne.s32.totalorder %s56, %s70
      %p72 = scmp.eq.s32.totalorder %s25, 0
      %p73 = por %p71, %p72
      %s75 = sadd.s32 %s74, 1
      %p78 = scmp.eq.s32.totalorder %s19, 7
      %p79 = scmp.ne.s32.totalorder %s74, %s76
      %p80 = scmp.eq.s32.totalorder %s19, 0
      %p81 = por %p79, %p80
      %p82 = scmp.ne.s32.totalorder %s74, %s76
      %p83 = scmp.eq.s32.totalorder %s24, 7
      %p84 = por %p82, %p83
      %p85 = scmp.ne.s32.totalorder %s76, %s77
      %p86 = scmp.eq.s32.totalorder %s24, 0
      %p87 = por %p85, %p86
      %p88 = scmp.ne.s32.totalorder %s76, %s77
      %p89 = scmp.eq.s32.totalorder %s25, 7
      %p90 = por %p88, %p89
      %p92 = scmp.ne.s32.totalorder %s77, %s91
      %p93 = scmp.eq.s32.totalorder %s25, 0
      %p94 = por %p92, %p93
      %s96 = sadd.s32 %s95, 1
      %p99 = scmp.eq.s32.totalorder %s19, 7
      %p100 = scmp.ne.s32.totalorder %s95, %s97
      %p101 = scmp.eq.s32.totalorder %s19, 0
      %p102 = por %p100, %p101
      %p103 = scmp.ne.s32.totalorder %s95, %s97
      %p104 = scmp.eq.s32.totalorder %s24, 7
      %p105 = por %p103, %p104
      %p106 = scmp.ne.s32.totalorder %s97, %s98
      %p107 = scmp.eq.s32.totalorder %s24, 0
      %p108 = por %p106, %p107
      %p109 = scmp.ne.s32.totalorder %s97, %s98
      %p110 = scmp.eq.s32.totalorder %s25, 7
      %p111 = por %p109, %p110
      %p113 = scmp.ne.s32.totalorder %s98, %s112
      %p114 = scmp.eq.s32.totalorder %s25, 0
      %p115 = por %p113, %p114
      %s117 = sadd.s32 %s116, 1
      %p120 = scmp.eq.s32.totalorder %s19, 7
      %p121 = scmp.ne.s32.totalorder %s116, %s118
      %p122 = scmp.eq.s32.totalorder %s19, 0
      %p123 = por %p121, %p122
      %p124 = scmp.ne.s32.totalorder %s116, %s118
      %p125 = scmp.eq.s32.totalorder %s24, 7
      %p126 = por %p124, %p125
      %p127 = scmp.ne.s32.totalorder %s118, %s119
      %p128 = scmp.eq.s32.totalorder %s24, 0
      %p129 = por %p127, %p128
      %p130 = scmp.ne.s32.totalorder %s118, %s119
      %p131 = scmp.eq.s32.totalorder %s25, 7
      %p132 = por %p130, %p131
      %p134 = scmp.ne.s32.totalorder %s119, %s133
      %p135 = scmp.eq.s32.totalorder %s25, 0
      %p136 = por %p134, %p135
      %s137 = ssub.s32 %s19, %s26
      %p138 = scmp.eq.s32.totalorder %s137, 0
      %s140 = sadd.s32 %s139, 1
      %s141 = scalar_select %p138, %s139, %s140
      %p144 = pneg %p138
      %p145 = scmp.eq.s32.totalorder %s19, 7
      %p146 = por %p144, %p145
      %p147 = scmp.ne.s32.totalorder %s139, %s142
      %p148 = scmp.eq.s32.totalorder %s19, 0
      %p149 = por %p147, %p148
      %p150 = scmp.ne.s32.totalorder %s139, %s142
      %p151 = scmp.eq.s32.totalorder %s24, 7
      %p152 = por %p150, %p151
      %p153 = scmp.ne.s32.totalorder %s142, %s143
      %p154 = scmp.eq.s32.totalorder %s24, 0
      %p155 = por %p153, %p154
      %p156 = scmp.ne.s32.totalorder %s142, %s143
      %p157 = scmp.eq.s32.totalorder %s25, 7
      %p158 = por %p156, %p157
      %p160 = scmp.ne.s32.totalorder %s143, %s159
      %p161 = scmp.eq.s32.totalorder %s25, 0
      %p162 = por %p160, %p161
      %p163 = scmp.le.s32.totalorder 1, %s19
      %p164 = scmp.lt.s32.totalorder %s19, 9
      %p165 = pnand %p163, %p164
      %p166 = pneg %p165
      // Predicated region
      $region9: #{tpu_custom_call.1} parent=5 // pred_check
        _
      $region10: #{tpu_custom_call.1} parent=5 // pred_check_branch
        %168 = sbr.rel (%p165) target = $region12
      $region11: #{tpu_custom_call.1} parent=5 // pred_region
        %s169 = ssub.s32 %s19, 1
        // Predicated region
        $region13: #{tpu_custom_call.1} parent=11 // pred_check
          %p170 = pneg %p66
        $region14: #{tpu_custom_call.1} parent=11 // pred_check_branch
          %172 = sbr.rel (%p170) target = $region16
        $region15: #{tpu_custom_call.1} parent=11 // pred_region
          %s174 = ssub.s32 16384, 16384
          %175 = vsyncadd [#allocation6], %s174
          %s176 = sshll.u32 [#allocation5], 4
          %s177 = int_to_ptr.vmem [resolvable:$true] %s176
          %182 = dma.hbm_to_vmem [thread:$0]  %s1, 16384, %s177, [#allocation6], 512, 512, 32
        $region16: #{tpu_custom_call.1} parent=11 // pred_fallthru
          _
        // Predicated region
        $region17: #{tpu_custom_call.1} parent=11 // pred_check
          %p183 = pneg %p87
        $region18: #{tpu_custom_call.1} parent=11 // pred_check_branch
          %185 = sbr.rel (%p183) target = $region20
        $region19: #{tpu_custom_call.1} parent=11 // pred_region
          %s187 = ssub.s32 128, 128
          %188 = vsyncadd [#allocation6], %s187
          %s190 = sshll.u32 [#allocation7], 4
          %s191 = int_to_ptr.vmem [resolvable:$true] %s190
          %193 = dma.hbm_to_vmem [thread:$0]  %s2, 128, %s191, [#allocation6]
        $region20: #{tpu_custom_call.1} parent=11 // pred_fallthru
          _
        // Predicated region
        $region21: #{tpu_custom_call.1} parent=11 // pred_check
          %p194 = pneg %p108
        $region22: #{tpu_custom_call.1} parent=11 // pred_check_branch
          %196 = sbr.rel (%p194) target = $region24
        $region23: #{tpu_custom_call.1} parent=11 // pred_region
          %s198 = ssub.s32 16384, 16384
          %199 = vsyncadd [#allocation9], %s198
          %s200 = sshll.u32 [#allocation8], 4
          %s201 = int_to_ptr.vmem [resolvable:$true] %s200
          %206 = dma.hbm_to_vmem [thread:$0]  %s3, 16384, %s201, [#allocation9], 128, 128, 8
        $region24: #{tpu_custom_call.1} parent=11 // pred_fallthru
          _
        // Predicated region
        $region25: #{tpu_custom_call.1} parent=11 // pred_check
          %p207 = pneg %p129
        $region26: #{tpu_custom_call.1} parent=11 // pred_check_branch
          %209 = sbr.rel (%p207) target = $region28
        $region27: #{tpu_custom_call.1} parent=11 // pred_region
          %s211 = ssub.s32 32, 32
          %212 = vsyncadd [#allocation9], %s211
          %s214 = sshll.u32 [#allocation10], 4
          %s215 = int_to_ptr.vmem [resolvable:$true] %s214
          %217 = dma.hbm_to_vmem [thread:$0]  %s4, 32, %s215, [#allocation9]
        $region28: #{tpu_custom_call.1} parent=11 // pred_fallthru
          _
      $region12: #{tpu_custom_call.1} parent=5 // pred_fallthru
        _
      %p218 = scmp.lt.s32.totalorder %s19, 8
      // Predicated region
      $region29: #{tpu_custom_call.1} parent=5 // pred_check
        %p219 = pneg %p218
      $region30: #{tpu_custom_call.1} parent=5 // pred_check_branch
        %221 = sbr.rel (%p219) target = $region32
      $region31: #{tpu_custom_call.1} parent=5 // pred_region
        // Predicated region
        $region33: #{tpu_custom_call.1} parent=31 // pred_check
          %p222 = pneg %p39
        $region34: #{tpu_custom_call.1} parent=31 // pred_check_branch
          %224 = sbr.rel (%p222) target = $region36
        $region35: #{tpu_custom_call.1} parent=31 // pred_region
          %s225 = sand.u32 %s29, 1
          %s226 = scalar_lea.sflag [#allocation3], %s225
          %s227 = sand.u32 %s29, 1
          %s228 = smul.addr %s227, 256
          %s229 = scalar_lea.vmem [#allocation2], %s228
          %s230 = smul.u32 32, %s19
          %s232 = ssub.s32 4096, 4096
          %233 = vsyncadd %s226, %s232
          %s234 = smul.addr %s230, 2
          %s235 = smul.addr %s234, 64
          %s236 = scalar_lea.hbm %s0, %s235
          %s237 = sshll.u32 %s229, 4
          %s238 = int_to_ptr.vmem [resolvable:$true] %s237
          %243 = dma.hbm_to_vmem [thread:$0]  %s236, 4096, %s238, %s226, 128, 128, 8
        $region36: #{tpu_custom_call.1} parent=31 // pred_fallthru
          _
      $region32: #{tpu_custom_call.1} parent=5 // pred_fallthru
        _
      %p244 = scmp.le.s32.totalorder 1, %s19
      %p245 = scmp.lt.s32.totalorder %s19, 9
      %p246 = pnand %p244, %p245
      %p247 = pneg %p246
      // Predicated region
      $region37: #{tpu_custom_call.1} parent=5 // pred_check
        _
      $region38: #{tpu_custom_call.1} parent=5 // pred_check_branch
        %249 = sbr.rel (%p246) target = $region40
      $region39: #{tpu_custom_call.1} parent=5 // pred_region
        %s250 = ssub.s32 %s19, 1
        %s251 = sand.u32 %s32, 1
        %s252 = scalar_lea.sflag [#allocation3], %s251
        %s253 = sand.u32 %s32, 1
        %s254 = smul.addr %s253, 256
        %s255 = scalar_lea.vmem [#allocation2], %s254
        // Predicated region
        $region41: #{tpu_custom_call.1} parent=39 // pred_check
          %p256 = pneg %p45
        $region42: #{tpu_custom_call.1} parent=39 // pred_check_branch
          %258 = sbr.rel (%p256) target = $region44
        $region43: #{tpu_custom_call.1} parent=39 // pred_region
          %259 = dma.done %s252, 4096
        $region44: #{tpu_custom_call.1} parent=39 // pred_fallthru
          _
        // Predicated region
        $region45: #{tpu_custom_call.1} parent=39 // pred_check
          %p260 = pneg %p66
        $region46: #{tpu_custom_call.1} parent=39 // pred_check_branch
          %262 = sbr.rel (%p260) target = $region48
        $region47: #{tpu_custom_call.1} parent=39 // pred_region
          %263 = dma.done [#allocation6], 16384
        $region48: #{tpu_custom_call.1} parent=39 // pred_fallthru
          _
        // Predicated region
        $region49: #{tpu_custom_call.1} parent=39 // pred_check
          %p264 = pneg %p87
        $region50: #{tpu_custom_call.1} parent=39 // pred_check_branch
          %266 = sbr.rel (%p264) target = $region52
        $region51: #{tpu_custom_call.1} parent=39 // pred_region
          %267 = dma.done [#allocation6], 128
        $region52: #{tpu_custom_call.1} parent=39 // pred_fallthru
          _
        // Predicated region
        $region53: #{tpu_custom_call.1} parent=39 // pred_check
          %p268 = pneg %p108
        $region54: #{tpu_custom_call.1} parent=39 // pred_check_branch
          %270 = sbr.rel (%p268) target = $region56
        $region55: #{tpu_custom_call.1} parent=39 // pred_region
          %271 = dma.done [#allocation9], 16384
        $region56: #{tpu_custom_call.1} parent=39 // pred_fallthru
          _
        // Predicated region
        $region57: #{tpu_custom_call.1} parent=39 // pred_check
          %p272 = pneg %p129
        $region58: #{tpu_custom_call.1} parent=39 // pred_check_branch
          %274 = sbr.rel (%p272) target = $region60
        $region59: #{tpu_custom_call.1} parent=39 // pred_region
          %275 = dma.done [#allocation9], 32
        $region60: #{tpu_custom_call.1} parent=39 // pred_fallthru
          _
        %s276 = sand.u32 %s32, 1
        %s277 = scalar_lea.sflag [#allocation3], %s276
        %s278 = sand.u32 %s32, 1
        %s279 = smul.addr %s278, 256
        %s280 = scalar_lea.vmem [#allocation2], %s279
        %p281 = pneg %p45
        %p282 = pneg %p42
        %p283 = pneg %p66
        %p284 = pneg %p63
        %p285 = pneg %p87
        %p286 = pneg %p84
        %p287 = pneg %p108
        %p288 = pneg %p105
        %p289 = pneg %p129
        %p290 = pneg %p126
        %p291 = pneg %p155
        %p292 = pneg %p152
        %s293 = sand.u32 %s142, 1
        %s294 = scalar_lea.sflag [#allocation4], %s293
        %s295 = sand.u32 %s142, 1
        %s296 = smul.addr %s295, 512
        %s297 = scalar_lea.vmem [#allocation11], %s296
        %s298 = smul.u32 32, %s24
        %s299 = smul.u32 32, %s24
        %v300 = vld [vmem:[%s255] sm:$0xff]
        %v301 = vld [vmem:[%s255 + $0x8] sm:$0xff]
        %v302 = vld [vmem:[%s255 + $0x10] sm:$0xff]
        %v303 = vld [vmem:[%s255 + $0x18] sm:$0xff]
        %v304 = vld [vmem:[%s255 + $0x20] sm:$0xff]
        %v305 = vld [vmem:[%s255 + $0x28] sm:$0xff]
        %v306 = vld [vmem:[%s255 + $0x30] sm:$0xff]
        %v307 = vld [vmem:[%s255 + $0x38] sm:$0xff]
        %v308 = vld [vmem:[%s255 + $0x40] sm:$0xff]
        %v309 = vld [vmem:[%s255 + $0x48] sm:$0xff]
        %v310 = vld [vmem:[%s255 + $0x50] sm:$0xff]
        %v311 = vld [vmem:[%s255 + $0x58] sm:$0xff]
        %v312 = vld [vmem:[%s255 + $0x60] sm:$0xff]
        %v313 = vld [vmem:[%s255 + $0x68] sm:$0xff]
        %v314 = vld [vmem:[%s255 + $0x70] sm:$0xff]
        %v315 = vld [vmem:[%s255 + $0x78] sm:$0xff]
        %v316 = vld [vmem:[%s255 + $0x80] sm:$0xff]
        %v317 = vld [vmem:[%s255 + $0x88] sm:$0xff]
        %v318 = vld [vmem:[%s255 + $0x90] sm:$0xff]
        %v319 = vld [vmem:[%s255 + $0x98] sm:$0xff]
        %v320 = vld [vmem:[%s255 + $0xa0] sm:$0xff]
        %v321 = vld [vmem:[%s255 + $0xa8] sm:$0xff]
        %v322 = vld [vmem:[%s255 + $0xb0] sm:$0xff]
        %v323 = vld [vmem:[%s255 + $0xb8] sm:$0xff]
        %v324 = vld [vmem:[%s255 + $0xc0] sm:$0xff]
        %v325 = vld [vmem:[%s255 + $0xc8] sm:$0xff]
        %v326 = vld [vmem:[%s255 + $0xd0] sm:$0xff]
        %v327 = vld [vmem:[%s255 + $0xd8] sm:$0xff]
        %v328 = vld [vmem:[%s255 + $0xe0] sm:$0xff]
        %v329 = vld [vmem:[%s255 + $0xe8] sm:$0xff]
        %v330 = vld [vmem:[%s255 + $0xf0] sm:$0xff]
        %v331 = vld [vmem:[%s255 + $0xf8] sm:$0xff]
        %v332 = vld [vmem:[#allocation5] sm:$0xff]
        %v333 = vld [vmem:[#allocation5 + $0x8] sm:$0xff]
        %v334 = vld [vmem:[#allocation5 + $0x10] sm:$0xff]
        %v335 = vld [vmem:[#allocation5 + $0x18] sm:$0xff]
        %v336 = vld [vmem:[#allocation5 + $0x20] sm:$0xff]
        %v337 = vld [vmem:[#allocation5 + $0x28] sm:$0xff]
        %v338 = vld [vmem:[#allocation5 + $0x30] sm:$0xff]
        %v339 = vld [vmem:[#allocation5 + $0x38] sm:$0xff]
        %v340 = vld [vmem:[#allocation5 + $0x40] sm:$0xff]
        %v341 = vld [vmem:[#allocation5 + $0x48] sm:$0xff]
        %v342 = vld [vmem:[#allocation5 + $0x50] sm:$0xff]
        %v343 = vld [vmem:[#allocation5 + $0x58] sm:$0xff]
        %v344 = vld [vmem:[#allocation5 + $0x60] sm:$0xff]
        %v345 = vld [vmem:[#allocation5 + $0x68] sm:$0xff]
        %v346 = vld [vmem:[#allocation5 + $0x70] sm:$0xff]
        %v347 = vld [vmem:[#allocation5 + $0x78] sm:$0xff]
        %v348 = vld [vmem:[#allocation5 + $0x80] sm:$0xff]
        %v349 = vld [vmem:[#allocation5 + $0x88] sm:$0xff]
        %v350 = vld [vmem:[#allocation5 + $0x90] sm:$0xff]
        %v351 = vld [vmem:[#allocation5 + $0x98] sm:$0xff]
        %v352 = vld [vmem:[#allocation5 + $0xa0] sm:$0xff]
        %v353 = vld [vmem:[#allocation5 + $0xa8] sm:$0xff]
        %v354 = vld [vmem:[#allocation5 + $0xb0] sm:$0xff]
        %v355 = vld [vmem:[#allocation5 + $0xb8] sm:$0xff]
        %v356 = vld [vmem:[#allocation5 + $0xc0] sm:$0xff]
        %v357 = vld [vmem:[#allocation5 + $0xc8] sm:$0xff]
        %v358 = vld [vmem:[#allocation5 + $0xd0] sm:$0xff]
        %v359 = vld [vmem:[#allocation5 + $0xd8] sm:$0xff]
        %v360 = vld [vmem:[#allocation5 + $0xe0] sm:$0xff]
        %v361 = vld [vmem:[#allocation5 + $0xe8] sm:$0xff]
        %v362 = vld [vmem:[#allocation5 + $0xf0] sm:$0xff]
        %v363 = vld [vmem:[#allocation5 + $0xf8] sm:$0xff]
        %v364 = vld [vmem:[#allocation5 + $0x100] sm:$0xff]
        %v365 = vld [vmem:[#allocation5 + $0x108] sm:$0xff]
        %v366 = vld [vmem:[#allocation5 + $0x110] sm:$0xff]
        %v367 = vld [vmem:[#allocation5 + $0x118] sm:$0xff]
        %v368 = vld [vmem:[#allocation5 + $0x120] sm:$0xff]
        %v369 = vld [vmem:[#allocation5 + $0x128] sm:$0xff]
        %v370 = vld [vmem:[#allocation5 + $0x130] sm:$0xff]
        %v371 = vld [vmem:[#allocation5 + $0x138] sm:$0xff]
        %v372 = vld [vmem:[#allocation5 + $0x140] sm:$0xff]
        %v373 = vld [vmem:[#allocation5 + $0x148] sm:$0xff]
        %v374 = vld [vmem:[#allocation5 + $0x150] sm:$0xff]
        %v375 = vld [vmem:[#allocation5 + $0x158] sm:$0xff]
        %v376 = vld [vmem:[#allocation5 + $0x160] sm:$0xff]
        %v377 = vld [vmem:[#allocation5 + $0x168] sm:$0xff]
        %v378 = vld [vmem:[#allocation5 + $0x170] sm:$0xff]
        %v379 = vld [vmem:[#allocation5 + $0x178] sm:$0xff]
        %v380 = vld [vmem:[#allocation5 + $0x180] sm:$0xff]
        %v381 = vld [vmem:[#allocation5 + $0x188] sm:$0xff]
        %v382 = vld [vmem:[#allocation5 + $0x190] sm:$0xff]
        %v383 = vld [vmem:[#allocation5 + $0x198] sm:$0xff]
        %v384 = vld [vmem:[#allocation5 + $0x1a0] sm:$0xff]
        %v385 = vld [vmem:[#allocation5 + $0x1a8] sm:$0xff]
        %v386 = vld [vmem:[#allocation5 + $0x1b0] sm:$0xff]
        %v387 = vld [vmem:[#allocation5 + $0x1b8] sm:$0xff]
        %v388 = vld [vmem:[#allocation5 + $0x1c0] sm:$0xff]
        %v389 = vld [vmem:[#allocation5 + $0x1c8] sm:$0xff]
        %v390 = vld [vmem:[#allocation5 + $0x1d0] sm:$0xff]
        %v391 = vld [vmem:[#allocation5 + $0x1d8] sm:$0xff]
        %v392 = vld [vmem:[#allocation5 + $0x1e0] sm:$0xff]
        %v393 = vld [vmem:[#allocation5 + $0x1e8] sm:$0xff]
        %v394 = vld [vmem:[#allocation5 + $0x1f0] sm:$0xff]
        %v395 = vld [vmem:[#allocation5 + $0x1f8] sm:$0xff]
        %v396 = vld [vmem:[#allocation5 + $0x200] sm:$0xff]
        %v397 = vld [vmem:[#allocation5 + $0x208] sm:$0xff]
        %v398 = vld [vmem:[#allocation5 + $0x210] sm:$0xff]
        %v399 = vld [vmem:[#allocation5 + $0x218] sm:$0xff]
        %v400 = vld [vmem:[#allocation5 + $0x220] sm:$0xff]
        %v401 = vld [vmem:[#allocation5 + $0x228] sm:$0xff]
        %v402 = vld [vmem:[#allocation5 + $0x230] sm:$0xff]
        %v403 = vld [vmem:[#allocation5 + $0x238] sm:$0xff]
        %v404 = vld [vmem:[#allocation5 + $0x240] sm:$0xff]
        %v405 = vld [vmem:[#allocation5 + $0x248] sm:$0xff]
        %v406 = vld [vmem:[#allocation5 + $0x250] sm:$0xff]
        %v407 = vld [vmem:[#allocation5 + $0x258] sm:$0xff]
        %v408 = vld [vmem:[#allocation5 + $0x260] sm:$0xff]
        %v409 = vld [vmem:[#allocation5 + $0x268] sm:$0xff]
        %v410 = vld [vmem:[#allocation5 + $0x270] sm:$0xff]
        %v411 = vld [vmem:[#allocation5 + $0x278] sm:$0xff]
        %v412 = vld [vmem:[#allocation5 + $0x280] sm:$0xff]
        %v413 = vld [vmem:[#allocation5 + $0x288] sm:$0xff]
        %v414 = vld [vmem:[#allocation5 + $0x290] sm:$0xff]
        %v415 = vld [vmem:[#allocation5 + $0x298] sm:$0xff]
        %v416 = vld [vmem:[#allocation5 + $0x2a0] sm:$0xff]
        %v417 = vld [vmem:[#allocation5 + $0x2a8] sm:$0xff]
        %v418 = vld [vmem:[#allocation5 + $0x2b0] sm:$0xff]
        %v419 = vld [vmem:[#allocation5 + $0x2b8] sm:$0xff]
        %v420 = vld [vmem:[#allocation5 + $0x2c0] sm:$0xff]
        %v421 = vld [vmem:[#allocation5 + $0x2c8] sm:$0xff]
        %v422 = vld [vmem:[#allocation5 + $0x2d0] sm:$0xff]
        %v423 = vld [vmem:[#allocation5 + $0x2d8] sm:$0xff]
        %v424 = vld [vmem:[#allocation5 + $0x2e0] sm:$0xff]
        %v425 = vld [vmem:[#allocation5 + $0x2e8] sm:$0xff]
        %v426 = vld [vmem:[#allocation5 + $0x2f0] sm:$0xff]
        %v427 = vld [vmem:[#allocation5 + $0x2f8] sm:$0xff]
        %v428 = vld [vmem:[#allocation5 + $0x300] sm:$0xff]
        %v429 = vld [vmem:[#allocation5 + $0x308] sm:$0xff]
        %v430 = vld [vmem:[#allocation5 + $0x310] sm:$0xff]
        %v431 = vld [vmem:[#allocation5 + $0x318] sm:$0xff]
        %v432 = vld [vmem:[#allocation5 + $0x320] sm:$0xff]
        %v433 = vld [vmem:[#allocation5 + $0x328] sm:$0xff]
        %v434 = vld [vmem:[#allocation5 + $0x330] sm:$0xff]
        %v435 = vld [vmem:[#allocation5 + $0x338] sm:$0xff]
        %v436 = vld [vmem:[#allocation5 + $0x340] sm:$0xff]
        %v437 = vld [vmem:[#allocation5 + $0x348] sm:$0xff]
        %v438 = vld [vmem:[#allocation5 + $0x350] sm:$0xff]
        %v439 = vld [vmem:[#allocation5 + $0x358] sm:$0xff]
        %v440 = vld [vmem:[#allocation5 + $0x360] sm:$0xff]
        %v441 = vld [vmem:[#allocation5 + $0x368] sm:$0xff]
        %v442 = vld [vmem:[#allocation5 + $0x370] sm:$0xff]
        %v443 = vld [vmem:[#allocation5 + $0x378] sm:$0xff]
        %v444 = vld [vmem:[#allocation5 + $0x380] sm:$0xff]
        %v445 = vld [vmem:[#allocation5 + $0x388] sm:$0xff]
        %v446 = vld [vmem:[#allocation5 + $0x390] sm:$0xff]
        %v447 = vld [vmem:[#allocation5 + $0x398] sm:$0xff]
        %v448 = vld [vmem:[#allocation5 + $0x3a0] sm:$0xff]
        %v449 = vld [vmem:[#allocation5 + $0x3a8] sm:$0xff]
        %v450 = vld [vmem:[#allocation5 + $0x3b0] sm:$0xff]
        %v451 = vld [vmem:[#allocation5 + $0x3b8] sm:$0xff]
        %v452 = vld [vmem:[#allocation5 + $0x3c0] sm:$0xff]
        %v453 = vld [vmem:[#allocation5 + $0x3c8] sm:$0xff]
        %v454 = vld [vmem:[#allocation5 + $0x3d0] sm:$0xff]
        %v455 = vld [vmem:[#allocation5 + $0x3d8] sm:$0xff]
        %v456 = vld [vmem:[#allocation5 + $0x3e0] sm:$0xff]
        %v457 = vld [vmem:[#allocation5 + $0x3e8] sm:$0xff]
        %v458 = vld [vmem:[#allocation5 + $0x3f0] sm:$0xff]
        %v459 = vld [vmem:[#allocation5 + $0x3f8] sm:$0xff]
        %v460 = vld [vmem:[#allocation7] sm:$0xff]
        %v462 = vlaneseq
        %v463 = vshrl.u32 %v462, 7
        %v464 = vsub.s32 0, %v463
        %v465 = vrot.slane %v460, %v464
        %v466 = vlaneseq
        %v467 = vshrl.u32 %v466, 7
        %v468 = vsub.s32 1, %v467
        %v469 = vrot.slane %v460, %v468
        %v470 = vlaneseq
        %v471 = vshrl.u32 %v470, 7
        %v472 = vsub.s32 2, %v471
        %v473 = vrot.slane %v460, %v472
        %v474 = vlaneseq
        %v475 = vshrl.u32 %v474, 7
        %v476 = vsub.s32 3, %v475
        %v477 = vrot.slane %v460, %v476
        %v478 = vlaneseq
        %v479 = vshrl.u32 %v478, 7
        %v480 = vsub.s32 4, %v479
        %v481 = vrot.slane %v460, %v480
        %v482 = vlaneseq
        %v483 = vshrl.u32 %v482, 7
        %v484 = vsub.s32 5, %v483
        %v485 = vrot.slane %v460, %v484
        %v486 = vlaneseq
        %v487 = vshrl.u32 %v486, 7
        %v488 = vsub.s32 6, %v487
        %v489 = vrot.slane %v460, %v488
        %v490 = vlaneseq
        %v491 = vshrl.u32 %v490, 7
        %v492 = vsub.s32 7, %v491
        %v493 = vrot.slane %v460, %v492
        %v534 = vunpack.c.l.b16 %v300
        %v535 = vunpack.c.h.b16 %v300
        %v536 = vunpack.c.l.b16 %v301
        %v537 = vunpack.c.h.b16 %v301
        %v538 = vunpack.c.l.b16 %v302
        %v539 = vunpack.c.h.b16 %v302
        %v540 = vunpack.c.l.b16 %v303
        %v541 = vunpack.c.h.b16 %v303
        %v542 = vunpack.c.l.b16 %v304
        %v543 = vunpack.c.h.b16 %v304
        %v544 = vunpack.c.l.b16 %v305
        %v545 = vunpack.c.h.b16 %v305
        %v546 = vunpack.c.l.b16 %v306
        %v547 = vunpack.c.h.b16 %v306
        %v548 = vunpack.c.l.b16 %v307
        %v549 = vunpack.c.h.b16 %v307
        %v550 = vunpack.c.l.b16 %v308
        %v551 = vunpack.c.h.b16 %v308
        %v552 = vunpack.c.l.b16 %v309
        %v553 = vunpack.c.h.b16 %v309
        %v554 = vunpack.c.l.b16 %v310
        %v555 = vunpack.c.h.b16 %v310
        %v556 = vunpack.c.l.b16 %v311
        %v557 = vunpack.c.h.b16 %v311
        %v558 = vunpack.c.l.b16 %v312
        %v559 = vunpack.c.h.b16 %v312
        %v560 = vunpack.c.l.b16 %v313
        %v561 = vunpack.c.h.b16 %v313
        %v562 = vunpack.c.l.b16 %v314
        %v563 = vunpack.c.h.b16 %v314
        %v564 = vunpack.c.l.b16 %v315
        %v565 = vunpack.c.h.b16 %v315
        %v566 = vunpack.c.l.b16 %v316
        %v567 = vunpack.c.h.b16 %v316
        %v568 = vunpack.c.l.b16 %v317
        %v569 = vunpack.c.h.b16 %v317
        %v570 = vunpack.c.l.b16 %v318
        %v571 = vunpack.c.h.b16 %v318
        %v572 = vunpack.c.l.b16 %v319
        %v573 = vunpack.c.h.b16 %v319
        %v574 = vunpack.c.l.b16 %v320
        %v575 = vunpack.c.h.b16 %v320
        %v576 = vunpack.c.l.b16 %v321
        %v577 = vunpack.c.h.b16 %v321
        %v578 = vunpack.c.l.b16 %v322
        %v579 = vunpack.c.h.b16 %v322
        %v580 = vunpack.c.l.b16 %v323
        %v581 = vunpack.c.h.b16 %v323
        %v582 = vunpack.c.l.b16 %v324
        %v583 = vunpack.c.h.b16 %v324
        %v584 = vunpack.c.l.b16 %v325
        %v585 = vunpack.c.h.b16 %v325
        %v586 = vunpack.c.l.b16 %v326
        %v587 = vunpack.c.h.b16 %v326
        %v588 = vunpack.c.l.b16 %v327
        %v589 = vunpack.c.h.b16 %v327
        %v590 = vunpack.c.l.b16 %v328
        %v591 = vunpack.c.h.b16 %v328
        %v592 = vunpack.c.l.b16 %v329
        %v593 = vunpack.c.h.b16 %v329
        %v594 = vunpack.c.l.b16 %v330
        %v595 = vunpack.c.h.b16 %v330
        %v596 = vunpack.c.l.b16 %v331
        %v597 = vunpack.c.h.b16 %v331
        %v598 = vpack.c.b16 %v536, %v534
        %v599 = vpack.c.b16 %v537, %v535
        %v600 = vpack.c.b16 %v540, %v538
        %v601 = vpack.c.b16 %v541, %v539
        %v602 = vpack.c.b16 %v544, %v542
        %v603 = vpack.c.b16 %v545, %v543
        %v604 = vpack.c.b16 %v548, %v546
        %v605 = vpack.c.b16 %v549, %v547
        %v606 = vpack.c.b16 %v552, %v550
        %v607 = vpack.c.b16 %v553, %v551
        %v608 = vpack.c.b16 %v556, %v554
        %v609 = vpack.c.b16 %v557, %v555
        %v610 = vpack.c.b16 %v560, %v558
        %v611 = vpack.c.b16 %v561, %v559
        %v612 = vpack.c.b16 %v564, %v562
        %v613 = vpack.c.b16 %v565, %v563
        %v614 = vpack.c.b16 %v568, %v566
        %v615 = vpack.c.b16 %v569, %v567
        %v616 = vpack.c.b16 %v572, %v570
        %v617 = vpack.c.b16 %v573, %v571
        %v618 = vpack.c.b16 %v576, %v574
        %v619 = vpack.c.b16 %v577, %v575
        %v620 = vpack.c.b16 %v580, %v578
        %v621 = vpack.c.b16 %v581, %v579
        %v622 = vpack.c.b16 %v584, %v582
        %v623 = vpack.c.b16 %v585, %v583
        %v624 = vpack.c.b16 %v588, %v586
        %v625 = vpack.c.b16 %v589, %v587
        %v626 = vpack.c.b16 %v592, %v590
        %v627 = vpack.c.b16 %v593, %v591
        %v628 = vpack.c.b16 %v596, %v594
        %v629 = vpack.c.b16 %v597, %v595
        %v790 = vunpack.c.l.b16 %v332
        %v791 = vunpack.c.h.b16 %v332
        %v792 = vunpack.c.l.b16 %v333
        %v793 = vunpack.c.h.b16 %v333
        %v794 = vunpack.c.l.b16 %v334
        %v795 = vunpack.c.h.b16 %v334
        %v796 = vunpack.c.l.b16 %v335
        %v797 = vunpack.c.h.b16 %v335
        %v798 = vunpack.c.l.b16 %v336
        %v799 = vunpack.c.h.b16 %v336
        %v800 = vunpack.c.l.b16 %v337
        %v801 = vunpack.c.h.b16 %v337
        %v802 = vunpack.c.l.b16 %v338
        %v803 = vunpack.c.h.b16 %v338
        %v804 = vunpack.c.l.b16 %v339
        %v805 = vunpack.c.h.b16 %v339
        %v806 = vunpack.c.l.b16 %v340
        %v807 = vunpack.c.h.b16 %v340
        %v808 = vunpack.c.l.b16 %v341
        %v809 = vunpack.c.h.b16 %v341
        %v810 = vunpack.c.l.b16 %v342
        %v811 = vunpack.c.h.b16 %v342
        %v812 = vunpack.c.l.b16 %v343
        %v813 = vunpack.c.h.b16 %v343
        %v814 = vunpack.c.l.b16 %v344
        %v815 = vunpack.c.h.b16 %v344
        %v816 = vunpack.c.l.b16 %v345
        %v817 = vunpack.c.h.b16 %v345
        %v818 = vunpack.c.l.b16 %v346
        %v819 = vunpack.c.h.b16 %v346
        %v820 = vunpack.c.l.b16 %v347
        %v821 = vunpack.c.h.b16 %v347
        %v822 = vunpack.c.l.b16 %v348
        %v823 = vunpack.c.h.b16 %v348
        %v824 = vunpack.c.l.b16 %v349
        %v825 = vunpack.c.h.b16 %v349
        %v826 = vunpack.c.l.b16 %v350
        %v827 = vunpack.c.h.b16 %v350
        %v828 = vunpack.c.l.b16 %v351
        %v829 = vunpack.c.h.b16 %v351
        %v830 = vunpack.c.l.b16 %v352
        %v831 = vunpack.c.h.b16 %v352
        %v832 = vunpack.c.l.b16 %v353
        %v833 = vunpack.c.h.b16 %v353
        %v834 = vunpack.c.l.b16 %v354
        %v835 = vunpack.c.h.b16 %v354
        %v836 = vunpack.c.l.b16 %v355
        %v837 = vunpack.c.h.b16 %v355
        %v838 = vunpack.c.l.b16 %v356
        %v839 = vunpack.c.h.b16 %v356
        %v840 = vunpack.c.l.b16 %v357
        %v841 = vunpack.c.h.b16 %v357
        %v842 = vunpack.c.l.b16 %v358
        %v843 = vunpack.c.h.b16 %v358
        %v844 = vunpack.c.l.b16 %v359
        %v845 = vunpack.c.h.b16 %v359
        %v846 = vunpack.c.l.b16 %v360
        %v847 = vunpack.c.h.b16 %v360
        %v848 = vunpack.c.l.b16 %v361
        %v849 = vunpack.c.h.b16 %v361
        %v850 = vunpack.c.l.b16 %v362
        %v851 = vunpack.c.h.b16 %v362
        %v852 = vunpack.c.l.b16 %v363
        %v853 = vunpack.c.h.b16 %v363
        %v854 = vunpack.c.l.b16 %v364
        %v855 = vunpack.c.h.b16 %v364
        %v856 = vunpack.c.l.b16 %v365
        %v857 = vunpack.c.h.b16 %v365
        %v858 = vunpack.c.l.b16 %v366
        %v859 = vunpack.c.h.b16 %v366
        %v860 = vunpack.c.l.b16 %v367
        %v861 = vunpack.c.h.b16 %v367
        %v862 = vunpack.c.l.b16 %v368
        %v863 = vunpack.c.h.b16 %v368
        %v864 = vunpack.c.l.b16 %v369
        %v865 = vunpack.c.h.b16 %v369
        %v866 = vunpack.c.l.b16 %v370
        %v867 = vunpack.c.h.b16 %v370
        %v868 = vunpack.c.l.b16 %v371
        %v869 = vunpack.c.h.b16 %v371
        %v870 = vunpack.c.l.b16 %v372
        %v871 = vunpack.c.h.b16 %v372
        %v872 = vunpack.c.l.b16 %v373
        %v873 = vunpack.c.h.b16 %v373
        %v874 = vunpack.c.l.b16 %v374
        %v875 = vunpack.c.h.b16 %v374
        %v876 = vunpack.c.l.b16 %v375
        %v877 = vunpack.c.h.b16 %v375
        %v878 = vunpack.c.l.b16 %v376
        %v879 = vunpack.c.h.b16 %v376
        %v880 = vunpack.c.l.b16 %v377
        %v881 = vunpack.c.h.b16 %v377
        %v882 = vunpack.c.l.b16 %v378
        %v883 = vunpack.c.h.b16 %v378
        %v884 = vunpack.c.l.b16 %v379
        %v885 = vunpack.c.h.b16 %v379
        %v886 = vunpack.c.l.b16 %v380
        %v887 = vunpack.c.h.b16 %v380
        %v888 = vunpack.c.l.b16 %v381
        %v889 = vunpack.c.h.b16 %v381
        %v890 = vunpack.c.l.b16 %v382
        %v891 = vunpack.c.h.b16 %v382
        %v892 = vunpack.c.l.b16 %v383
        %v893 = vunpack.c.h.b16 %v383
        %v894 = vunpack.c.l.b16 %v384
        %v895 = vunpack.c.h.b16 %v384
        %v896 = vunpack.c.l.b16 %v385
        %v897 = vunpack.c.h.b16 %v385
        %v898 = vunpack.c.l.b16 %v386
        %v899 = vunpack.c.h.b16 %v386
        %v900 = vunpack.c.l.b16 %v387
        %v901 = vunpack.c.h.b16 %v387
        %v902 = vunpack.c.l.b16 %v388
        %v903 = vunpack.c.h.b16 %v388
        %v904 = vunpack.c.l.b16 %v389
        %v905 = vunpack.c.h.b16 %v389
        %v906 = vunpack.c.l.b16 %v390
        %v907 = vunpack.c.h.b16 %v390
        %v908 = vunpack.c.l.b16 %v391
        %v909 = vunpack.c.h.b16 %v391
        %v910 = vunpack.c.l.b16 %v392
        %v911 = vunpack.c.h.b16 %v392
        %v912 = vunpack.c.l.b16 %v393
        %v913 = vunpack.c.h.b16 %v393
        %v914 = vunpack.c.l.b16 %v394
        %v915 = vunpack.c.h.b16 %v394
        %v916 = vunpack.c.l.b16 %v395
        %v917 = vunpack.c.h.b16 %v395
        %v918 = vunpack.c.l.b16 %v396
        %v919 = vunpack.c.h.b16 %v396
        %v920 = vunpack.c.l.b16 %v397
        %v921 = vunpack.c.h.b16 %v397
        %v922 = vunpack.c.l.b16 %v398
        %v923 = vunpack.c.h.b16 %v398
        %v924 = vunpack.c.l.b16 %v399
        %v925 = vunpack.c.h.b16 %v399
        %v926 = vunpack.c.l.b16 %v400
        %v927 = vunpack.c.h.b16 %v400
        %v928 = vunpack.c.l.b16 %v401
        %v929 = vunpack.c.h.b16 %v401
        %v930 = vunpack.c.l.b16 %v402
        %v931 = vunpack.c.h.b16 %v402
        %v932 = vunpack.c.l.b16 %v403
        %v933 = vunpack.c.h.b16 %v403
        %v934 = vunpack.c.l.b16 %v404
        %v935 = vunpack.c.h.b16 %v404
        %v936 = vunpack.c.l.b16 %v405
        %v937 = vunpack.c.h.b16 %v405
        %v938 = vunpack.c.l.b16 %v406
        %v939 = vunpack.c.h.b16 %v406
        %v940 = vunpack.c.l.b16 %v407
        %v941 = vunpack.c.h.b16 %v407
        %v942 = vunpack.c.l.b16 %v408
        %v943 = vunpack.c.h.b16 %v408
        %v944 = vunpack.c.l.b16 %v409
        %v945 = vunpack.c.h.b16 %v409
        %v946 = vunpack.c.l.b16 %v410
        %v947 = vunpack.c.h.b16 %v410
        %v948 = vunpack.c.l.b16 %v411
        %v949 = vunpack.c.h.b16 %v411
        %v950 = vunpack.c.l.b16 %v412
        %v951 = vunpack.c.h.b16 %v412
        %v952 = vunpack.c.l.b16 %v413
        %v953 = vunpack.c.h.b16 %v413
        %v954 = vunpack.c.l.b16 %v414
        %v955 = vunpack.c.h.b16 %v414
        %v956 = vunpack.c.l.b16 %v415
        %v957 = vunpack.c.h.b16 %v415
        %v958 = vunpack.c.l.b16 %v416
        %v959 = vunpack.c.h.b16 %v416
        %v960 = vunpack.c.l.b16 %v417
        %v961 = vunpack.c.h.b16 %v417
        %v962 = vunpack.c.l.b16 %v418
        %v963 = vunpack.c.h.b16 %v418
        %v964 = vunpack.c.l.b16 %v419
        %v965 = vunpack.c.h.b16 %v419
        %v966 = vunpack.c.l.b16 %v420
        %v967 = vunpack.c.h.b16 %v420
        %v968 = vunpack.c.l.b16 %v421
        %v969 = vunpack.c.h.b16 %v421
        %v970 = vunpack.c.l.b16 %v422
        %v971 = vunpack.c.h.b16 %v422
        %v972 = vunpack.c.l.b16 %v423
        %v973 = vunpack.c.h.b16 %v423
        %v974 = vunpack.c.l.b16 %v424
        %v975 = vunpack.c.h.b16 %v424
        %v976 = vunpack.c.l.b16 %v425
        %v977 = vunpack.c.h.b16 %v425
        %v978 = vunpack.c.l.b16 %v426
        %v979 = vunpack.c.h.b16 %v426
        %v980 = vunpack.c.l.b16 %v427
        %v981 = vunpack.c.h.b16 %v427
        %v982 = vunpack.c.l.b16 %v428
        %v983 = vunpack.c.h.b16 %v428
        %v984 = vunpack.c.l.b16 %v429
        %v985 = vunpack.c.h.b16 %v429
        %v986 = vunpack.c.l.b16 %v430
        %v987 = vunpack.c.h.b16 %v430
        %v988 = vunpack.c.l.b16 %v431
        %v989 = vunpack.c.h.b16 %v431
        %v990 = vunpack.c.l.b16 %v432
        %v991 = vunpack.c.h.b16 %v432
        %v992 = vunpack.c.l.b16 %v433
        %v993 = vunpack.c.h.b16 %v433
        %v994 = vunpack.c.l.b16 %v434
        %v995 = vunpack.c.h.b16 %v434
        %v996 = vunpack.c.l.b16 %v435
        %v997 = vunpack.c.h.b16 %v435
        %v998 = vunpack.c.l.b16 %v436
        %v999 = vunpack.c.h.b16 %v436
        %v1000 = vunpack.c.l.b16 %v437
        %v1001 = vunpack.c.h.b16 %v437
        %v1002 = vunpack.c.l.b16 %v438
        %v1003 = vunpack.c.h.b16 %v438
        %v1004 = vunpack.c.l.b16 %v439
        %v1005 = vunpack.c.h.b16 %v439
        %v1006 = vunpack.c.l.b16 %v440
        %v1007 = vunpack.c.h.b16 %v440
        %v1008 = vunpack.c.l.b16 %v441
        %v1009 = vunpack.c.h.b16 %v441
        %v1010 = vunpack.c.l.b16 %v442
        %v1011 = vunpack.c.h.b16 %v442
        %v1012 = vunpack.c.l.b16 %v443
        %v1013 = vunpack.c.h.b16 %v443
        %v1014 = vunpack.c.l.b16 %v444
        %v1015 = vunpack.c.h.b16 %v444
        %v1016 = vunpack.c.l.b16 %v445
        %v1017 = vunpack.c.h.b16 %v445
        %v1018 = vunpack.c.l.b16 %v446
        %v1019 = vunpack.c.h.b16 %v446
        %v1020 = vunpack.c.l.b16 %v447
        %v1021 = vunpack.c.h.b16 %v447
        %v1022 = vunpack.c.l.b16 %v448
        %v1023 = vunpack.c.h.b16 %v448
        %v1024 = vunpack.c.l.b16 %v449
        %v1025 = vunpack.c.h.b16 %v449
        %v1026 = vunpack.c.l.b16 %v450
        %v1027 = vunpack.c.h.b16 %v450
        %v1028 = vunpack.c.l.b16 %v451
        %v1029 = vunpack.c.h.b16 %v451
        %v1030 = vunpack.c.l.b16 %v452
        %v1031 = vunpack.c.h.b16 %v452
        %v1032 = vunpack.c.l.b16 %v453
        %v1033 = vunpack.c.h.b16 %v453
        %v1034 = vunpack.c.l.b16 %v454
        %v1035 = vunpack.c.h.b16 %v454
        %v1036 = vunpack.c.l.b16 %v455
        %v1037 = vunpack.c.h.b16 %v455
        %v1038 = vunpack.c.l.b16 %v456
        %v1039 = vunpack.c.h.b16 %v456
        %v1040 = vunpack.c.l.b16 %v457
        %v1041 = vunpack.c.h.b16 %v457
        %v1042 = vunpack.c.l.b16 %v458
        %v1043 = vunpack.c.h.b16 %v458
        %v1044 = vunpack.c.l.b16 %v459
        %v1045 = vunpack.c.h.b16 %v459
        %v1046 = vpack.c.b16 %v798, %v790
        %v1047 = vpack.c.b16 %v799, %v791
        %v1048 = vpack.c.b16 %v800, %v792
        %v1049 = vpack.c.b16 %v801, %v793
        %v1050 = vpack.c.b16 %v802, %v794
        %v1051 = vpack.c.b16 %v803, %v795
        %v1052 = vpack.c.b16 %v804, %v796
        %v1053 = vpack.c.b16 %v805, %v797
        %v1054 = vpack.c.b16 %v814, %v806
        %v1055 = vpack.c.b16 %v815, %v807
        %v1056 = vpack.c.b16 %v816, %v808
        %v1057 = vpack.c.b16 %v817, %v809
        %v1058 = vpack.c.b16 %v818, %v810
        %v1059 = vpack.c.b16 %v819, %v811
        %v1060 = vpack.c.b16 %v820, %v812
        %v1061 = vpack.c.b16 %v821, %v813
        %v1062 = vpack.c.b16 %v830, %v822
        %v1063 = vpack.c.b16 %v831, %v823
        %v1064 = vpack.c.b16 %v832, %v824
        %v1065 = vpack.c.b16 %v833, %v825
        %v1066 = vpack.c.b16 %v834, %v826
        %v1067 = vpack.c.b16 %v835, %v827
        %v1068 = vpack.c.b16 %v836, %v828
        %v1069 = vpack.c.b16 %v837, %v829
        %v1070 = vpack.c.b16 %v846, %v838
        %v1071 = vpack.c.b16 %v847, %v839
        %v1072 = vpack.c.b16 %v848, %v840
        %v1073 = vpack.c.b16 %v849, %v841
        %v1074 = vpack.c.b16 %v850, %v842
        %v1075 = vpack.c.b16 %v851, %v843
        %v1076 = vpack.c.b16 %v852, %v844
        %v1077 = vpack.c.b16 %v853, %v845
        %v1078 = vpack.c.b16 %v862, %v854
        %v1079 = vpack.c.b16 %v863, %v855
        %v1080 = vpack.c.b16 %v864, %v856
        %v1081 = vpack.c.b16 %v865, %v857
        %v1082 = vpack.c.b16 %v866, %v858
        %v1083 = vpack.c.b16 %v867, %v859
        %v1084 = vpack.c.b16 %v868, %v860
        %v1085 = vpack.c.b16 %v869, %v861
        %v1086 = vpack.c.b16 %v878, %v870
        %v1087 = vpack.c.b16 %v879, %v871
        %v1088 = vpack.c.b16 %v880, %v872
        %v1089 = vpack.c.b16 %v881, %v873
        %v1090 = vpack.c.b16 %v882, %v874
        %v1091 = vpack.c.b16 %v883, %v875
        %v1092 = vpack.c.b16 %v884, %v876
        %v1093 = vpack.c.b16 %v885, %v877
        %v1094 = vpack.c.b16 %v894, %v886
        %v1095 = vpack.c.b16 %v895, %v887
        %v1096 = vpack.c.b16 %v896, %v888
        %v1097 = vpack.c.b16 %v897, %v889
        %v1098 = vpack.c.b16 %v898, %v890
        %v1099 = vpack.c.b16 %v899, %v891
        %v1100 = vpack.c.b16 %v900, %v892
        %v1101 = vpack.c.b16 %v901, %v893
        %v1102 = vpack.c.b16 %v910, %v902
        %v1103 = vpack.c.b16 %v911, %v903
        %v1104 = vpack.c.b16 %v912, %v904
        %v1105 = vpack.c.b16 %v913, %v905
        %v1106 = vpack.c.b16 %v914, %v906
        %v1107 = vpack.c.b16 %v915, %v907
        %v1108 = vpack.c.b16 %v916, %v908
        %v1109 = vpack.c.b16 %v917, %v909
        %v1110 = vpack.c.b16 %v926, %v918
        %v1111 = vpack.c.b16 %v927, %v919
        %v1112 = vpack.c.b16 %v928, %v920
        %v1113 = vpack.c.b16 %v929, %v921
        %v1114 = vpack.c.b16 %v930, %v922
        %v1115 = vpack.c.b16 %v931, %v923
        %v1116 = vpack.c.b16 %v932, %v924
        %v1117 = vpack.c.b16 %v933, %v925
        %v1118 = vpack.c.b16 %v942, %v934
        %v1119 = vpack.c.b16 %v943, %v935
        %v1120 = vpack.c.b16 %v944, %v936
        %v1121 = vpack.c.b16 %v945, %v937
        %v1122 = vpack.c.b16 %v946, %v938
        %v1123 = vpack.c.b16 %v947, %v939
        %v1124 = vpack.c.b16 %v948, %v940
        %v1125 = vpack.c.b16 %v949, %v941
        %v1126 = vpack.c.b16 %v958, %v950
        %v1127 = vpack.c.b16 %v959, %v951
        %v1128 = vpack.c.b16 %v960, %v952
        %v1129 = vpack.c.b16 %v961, %v953
        %v1130 = vpack.c.b16 %v962, %v954
        %v1131 = vpack.c.b16 %v963, %v955
        %v1132 = vpack.c.b16 %v964, %v956
        %v1133 = vpack.c.b16 %v965, %v957
        %v1134 = vpack.c.b16 %v974, %v966
        %v1135 = vpack.c.b16 %v975, %v967
        %v1136 = vpack.c.b16 %v976, %v968
        %v1137 = vpack.c.b16 %v977, %v969
        %v1138 = vpack.c.b16 %v978, %v970
        %v1139 = vpack.c.b16 %v979, %v971
        %v1140 = vpack.c.b16 %v980, %v972
        %v1141 = vpack.c.b16 %v981, %v973
        %v1142 = vpack.c.b16 %v990, %v982
        %v1143 = vpack.c.b16 %v991, %v983
        %v1144 = vpack.c.b16 %v992, %v984
        %v1145 = vpack.c.b16 %v993, %v985
        %v1146 = vpack.c.b16 %v994, %v986
        %v1147 = vpack.c.b16 %v995, %v987
        %v1148 = vpack.c.b16 %v996, %v988
        %v1149 = vpack.c.b16 %v997, %v989
        %v1150 = vpack.c.b16 %v1006, %v998
        %v1151 = vpack.c.b16 %v1007, %v999
        %v1152 = vpack.c.b16 %v1008, %v1000
        %v1153 = vpack.c.b16 %v1009, %v1001
        %v1154 = vpack.c.b16 %v1010, %v1002
        %v1155 = vpack.c.b16 %v1011, %v1003
        %v1156 = vpack.c.b16 %v1012, %v1004
        %v1157 = vpack.c.b16 %v1013, %v1005
        %v1158 = vpack.c.b16 %v1022, %v1014
        %v1159 = vpack.c.b16 %v1023, %v1015
        %v1160 = vpack.c.b16 %v1024, %v1016
        %v1161 = vpack.c.b16 %v1025, %v1017
        %v1162 = vpack.c.b16 %v1026, %v1018
        %v1163 = vpack.c.b16 %v1027, %v1019
        %v1164 = vpack.c.b16 %v1028, %v1020
        %v1165 = vpack.c.b16 %v1029, %v1021
        %v1166 = vpack.c.b16 %v1038, %v1030
        %v1167 = vpack.c.b16 %v1039, %v1031
        %v1168 = vpack.c.b16 %v1040, %v1032
        %v1169 = vpack.c.b16 %v1041, %v1033
        %v1170 = vpack.c.b16 %v1042, %v1034
        %v1171 = vpack.c.b16 %v1043, %v1035
        %v1172 = vpack.c.b16 %v1044, %v1036
        %v1173 = vpack.c.b16 %v1045, %v1037
        %1302 = vmatprep.subr.bf16.mxu0 %v1103
        %1303 = vmatpush1.bf16.msra.mxu0 %v1102
        %1304 = vmatprep.subr.bf16.mxu0 %v1095
        %1305 = vmatpush1.bf16.msra.mxu0 %v1094
        %1306 = vmatprep.subr.bf16.mxu0 %v1087
        %1307 = vmatpush1.bf16.msra.mxu0 %v1086
        %1308 = vmatprep.subr.bf16.mxu0 %v1079
        %1309 = vmatpush1.bf16.msra.mxu0 %v1078
        %1310 = vmatprep.subr.bf16.mxu0 %v1071
        %1311 = vmatpush1.bf16.msra.mxu0 %v1070
        %1312 = vmatprep.subr.bf16.mxu0 %v1063
        %1313 = vmatpush1.bf16.msra.mxu0 %v1062
        %1314 = vmatprep.subr.bf16.mxu0 %v1055
        %1315 = vmatpush1.bf16.msra.mxu0 %v1054
        %1316 = vmatprep.subr.bf16.mxu0 %v1047
        %1317 = vmatpush1.bf16.msra.mxu0 %v1046
        %1318 = vmatprep.subr.bf16.mxu0 %v1167
        %1319 = vmatpush2.bf16.msra.mxu0 %v1166
        %1320 = vmatprep.subr.bf16.mxu0 %v1159
        %1321 = vmatpush2.bf16.msra.mxu0 %v1158
        %1322 = vmatprep.subr.bf16.mxu0 %v1151
        %1323 = vmatpush2.bf16.msra.mxu0 %v1150
        %1324 = vmatprep.subr.bf16.mxu0 %v1143
        %1325 = vmatpush2.bf16.msra.mxu0 %v1142
        %1326 = vmatprep.subr.bf16.mxu0 %v1135
        %1327 = vmatpush2.bf16.msra.mxu0 %v1134
        %1328 = vmatprep.subr.bf16.mxu0 %v1127
        %1329 = vmatpush2.bf16.msra.mxu0 %v1126
        %1330 = vmatprep.subr.bf16.mxu0 %v1119
        %1331 = vmatpush2.bf16.msra.mxu0 %v1118
        %1332 = vmatprep.subr.bf16.mxu0 %v1111
        %1333 = vmatpush2.bf16.msra.mxu0 %v1110
        %1334 = vmatprep.mubr.bf16.mxu0 %v599
        %1335 = vmatmul.mubr.bf16.gmra.mxu0 %v598
        %v1336 = vpop.f32.mrf.mxu0
        %v1337 = vadd.f32 %v465, %v1336
        %v1338 = vpop.f32.mrf.mxu0
        %v1339 = vadd.f32 %v469, %v1338
        %v1340 = vpop.f32.mrf.mxu0
        %v1341 = vadd.f32 %v465, %v1340
        %v1342 = vpop.f32.mrf.mxu0
        %v1343 = vadd.f32 %v469, %v1342
        %1344 = vmatprep.mubr.bf16.mxu0 %v601
        %1345 = vmatmul.mubr.bf16.gmra.mxu0 %v600
        %v1346 = vpop.f32.mrf.mxu0
        %v1347 = vadd.f32 %v465, %v1346
        %v1348 = vpop.f32.mrf.mxu0
        %v1349 = vadd.f32 %v469, %v1348
        %v1350 = vpop.f32.mrf.mxu0
        %v1351 = vadd.f32 %v465, %v1350
        %v1352 = vpop.f32.mrf.mxu0
        %v1353 = vadd.f32 %v469, %v1352
        %1354 = vmatprep.mubr.bf16.mxu0 %v603
        %1355 = vmatmul.mubr.bf16.gmra.mxu0 %v602
        %v1356 = vpop.f32.mrf.mxu0
        %v1357 = vadd.f32 %v465, %v1356
        %v1358 = vpop.f32.mrf.mxu0
        %v1359 = vadd.f32 %v469, %v1358
        %v1360 = vpop.f32.mrf.mxu0
        %v1361 = vadd.f32 %v465, %v1360
        %v1362 = vpop.f32.mrf.mxu0
        %v1363 = vadd.f32 %v469, %v1362
        %1364 = vmatprep.mubr.bf16.mxu0 %v605
        %1365 = vmatmul.mubr.bf16.gmra.mxu0 %v604
        %v1366 = vpop.f32.mrf.mxu0
        %v1367 = vadd.f32 %v465, %v1366
        %v1368 = vpop.f32.mrf.mxu0
        %v1369 = vadd.f32 %v469, %v1368
        %v1370 = vpop.f32.mrf.mxu0
        %v1371 = vadd.f32 %v465, %v1370
        %v1372 = vpop.f32.mrf.mxu0
        %v1373 = vadd.f32 %v469, %v1372
        %1374 = vmatprep.mubr.bf16.mxu0 %v607
        %1375 = vmatmul.mubr.bf16.gmra.mxu0 %v606
        %v1376 = vpop.f32.mrf.mxu0
        %v1377 = vadd.f32 %v465, %v1376
        %v1378 = vpop.f32.mrf.mxu0
        %v1379 = vadd.f32 %v469, %v1378
        %v1380 = vpop.f32.mrf.mxu0
        %v1381 = vadd.f32 %v465, %v1380
        %v1382 = vpop.f32.mrf.mxu0
        %v1383 = vadd.f32 %v469, %v1382
        %1384 = vmatprep.mubr.bf16.mxu0 %v609
        %1385 = vmatmul.mubr.bf16.gmra.mxu0 %v608
        %v1386 = vpop.f32.mrf.mxu0
        %v1387 = vadd.f32 %v465, %v1386
        %v1388 = vpop.f32.mrf.mxu0
        %v1389 = vadd.f32 %v469, %v1388
        %v1390 = vpop.f32.mrf.mxu0
        %v1391 = vadd.f32 %v465, %v1390
        %v1392 = vpop.f32.mrf.mxu0
        %v1393 = vadd.f32 %v469, %v1392
        %1394 = vmatprep.mubr.bf16.mxu0 %v611
        %1395 = vmatmul.mubr.bf16.gmra.mxu0 %v610
        %v1396 = vpop.f32.mrf.mxu0
        %v1397 = vadd.f32 %v465, %v1396
        %v1398 = vpop.f32.mrf.mxu0
        %v1399 = vadd.f32 %v469, %v1398
        %v1400 = vpop.f32.mrf.mxu0
        %v1401 = vadd.f32 %v465, %v1400
        %v1402 = vpop.f32.mrf.mxu0
        %v1403 = vadd.f32 %v469, %v1402
        %1404 = vmatprep.mubr.bf16.mxu0 %v613
        %1405 = vmatmul.mubr.bf16.gmra.mxu0 %v612
        %v1406 = vpop.f32.mrf.mxu0
        %v1407 = vadd.f32 %v465, %v1406
        %v1408 = vpop.f32.mrf.mxu0
        %v1409 = vadd.f32 %v469, %v1408
        %v1410 = vpop.f32.mrf.mxu0
        %v1411 = vadd.f32 %v465, %v1410
        %v1412 = vpop.f32.mrf.mxu0
        %v1413 = vadd.f32 %v469, %v1412
        %1414 = vmatprep.mubr.bf16.mxu0 %v615
        %1415 = vmatmul.mubr.bf16.gmra.mxu0 %v614
        %v1416 = vpop.f32.mrf.mxu0
        %v1417 = vadd.f32 %v465, %v1416
        %v1418 = vpop.f32.mrf.mxu0
        %v1419 = vadd.f32 %v469, %v1418
        %v1420 = vpop.f32.mrf.mxu0
        %v1421 = vadd.f32 %v465, %v1420
        %v1422 = vpop.f32.mrf.mxu0
        %v1423 = vadd.f32 %v469, %v1422
        %1424 = vmatprep.mubr.bf16.mxu0 %v617
        %1425 = vmatmul.mubr.bf16.gmra.mxu0 %v616
        %v1426 = vpop.f32.mrf.mxu0
        %v1427 = vadd.f32 %v465, %v1426
        %v1428 = vpop.f32.mrf.mxu0
        %v1429 = vadd.f32 %v469, %v1428
        %v1430 = vpop.f32.mrf.mxu0
        %v1431 = vadd.f32 %v465, %v1430
        %v1432 = vpop.f32.mrf.mxu0
        %v1433 = vadd.f32 %v469, %v1432
        %1434 = vmatprep.mubr.bf16.mxu0 %v619
        %1435 = vmatmul.mubr.bf16.gmra.mxu0 %v618
        %v1436 = vpop.f32.mrf.mxu0
        %v1437 = vadd.f32 %v465, %v1436
        %v1438 = vpop.f32.mrf.mxu0
        %v1439 = vadd.f32 %v469, %v1438
        %v1440 = vpop.f32.mrf.mxu0
        %v1441 = vadd.f32 %v465, %v1440
        %v1442 = vpop.f32.mrf.mxu0
        %v1443 = vadd.f32 %v469, %v1442
        %1444 = vmatprep.mubr.bf16.mxu0 %v621
        %1445 = vmatmul.mubr.bf16.gmra.mxu0 %v620
        %v1446 = vpop.f32.mrf.mxu0
        %v1447 = vadd.f32 %v465, %v1446
        %v1448 = vpop.f32.mrf.mxu0
        %v1449 = vadd.f32 %v469, %v1448
        %v1450 = vpop.f32.mrf.mxu0
        %v1451 = vadd.f32 %v465, %v1450
        %v1452 = vpop.f32.mrf.mxu0
        %v1453 = vadd.f32 %v469, %v1452
        %1454 = vmatprep.mubr.bf16.mxu0 %v623
        %1455 = vmatmul.mubr.bf16.gmra.mxu0 %v622
        %v1456 = vpop.f32.mrf.mxu0
        %v1457 = vadd.f32 %v465, %v1456
        %v1458 = vpop.f32.mrf.mxu0
        %v1459 = vadd.f32 %v469, %v1458
        %v1460 = vpop.f32.mrf.mxu0
        %v1461 = vadd.f32 %v465, %v1460
        %v1462 = vpop.f32.mrf.mxu0
        %v1463 = vadd.f32 %v469, %v1462
        %1464 = vmatprep.mubr.bf16.mxu0 %v625
        %1465 = vmatmul.mubr.bf16.gmra.mxu0 %v624
        %v1466 = vpop.f32.mrf.mxu0
        %v1467 = vadd.f32 %v465, %v1466
        %v1468 = vpop.f32.mrf.mxu0
        %v1469 = vadd.f32 %v469, %v1468
        %v1470 = vpop.f32.mrf.mxu0
        %v1471 = vadd.f32 %v465, %v1470
        %v1472 = vpop.f32.mrf.mxu0
        %v1473 = vadd.f32 %v469, %v1472
        %1474 = vmatprep.mubr.bf16.mxu0 %v627
        %1475 = vmatmul.mubr.bf16.gmra.mxu0 %v626
        %v1476 = vpop.f32.mrf.mxu0
        %v1477 = vadd.f32 %v465, %v1476
        %v1478 = vpop.f32.mrf.mxu0
        %v1479 = vadd.f32 %v469, %v1478
        %v1480 = vpop.f32.mrf.mxu0
        %v1481 = vadd.f32 %v465, %v1480
        %v1482 = vpop.f32.mrf.mxu0
        %v1483 = vadd.f32 %v469, %v1482
        %1484 = vmatprep.mubr.bf16.mxu0 %v629
        %1485 = vmatmul.mubr.bf16.gmra.mxu0 %v628
        %v1486 = vpop.f32.mrf.mxu0
        %v1487 = vadd.f32 %v465, %v1486
        %v1488 = vpop.f32.mrf.mxu0
        %v1489 = vadd.f32 %v469, %v1488
        %v1490 = vpop.f32.mrf.mxu0
        %v1491 = vadd.f32 %v465, %v1490
        %v1492 = vpop.f32.mrf.mxu0
        %v1493 = vadd.f32 %v469, %v1492
        %1494 = vdwg.mxu0
        %1495 = vmatprep.subr.bf16.mxu0 %v1105
        %1496 = vmatpush1.bf16.msra.mxu0 %v1104
        %1497 = vmatprep.subr.bf16.mxu0 %v1097
        %1498 = vmatpush1.bf16.msra.mxu0 %v1096
        %1499 = vmatprep.subr.bf16.mxu0 %v1089
        %1500 = vmatpush1.bf16.msra.mxu0 %v1088
        %1501 = vmatprep.subr.bf16.mxu0 %v1081
        %1502 = vmatpush1.bf16.msra.mxu0 %v1080
        %1503 = vmatprep.subr.bf16.mxu0 %v1073
        %1504 = vmatpush1.bf16.msra.mxu0 %v1072
        %1505 = vmatprep.subr.bf16.mxu0 %v1065
        %1506 = vmatpush1.bf16.msra.mxu0 %v1064
        %1507 = vmatprep.subr.bf16.mxu0 %v1057
        %1508 = vmatpush1.bf16.msra.mxu0 %v1056
        %1509 = vmatprep.subr.bf16.mxu0 %v1049
        %1510 = vmatpush1.bf16.msra.mxu0 %v1048
        %1511 = vmatprep.subr.bf16.mxu0 %v1169
        %1512 = vmatpush2.bf16.msra.mxu0 %v1168
        %1513 = vmatprep.subr.bf16.mxu0 %v1161
        %1514 = vmatpush2.bf16.msra.mxu0 %v1160
        %1515 = vmatprep.subr.bf16.mxu0 %v1153
        %1516 = vmatpush2.bf16.msra.mxu0 %v1152
        %1517 = vmatprep.subr.bf16.mxu0 %v1145
        %1518 = vmatpush2.bf16.msra.mxu0 %v1144
        %1519 = vmatprep.subr.bf16.mxu0 %v1137
        %1520 = vmatpush2.bf16.msra.mxu0 %v1136
        %1521 = vmatprep.subr.bf16.mxu0 %v1129
        %1522 = vmatpush2.bf16.msra.mxu0 %v1128
        %1523 = vmatprep.subr.bf16.mxu0 %v1121
        %1524 = vmatpush2.bf16.msra.mxu0 %v1120
        %1525 = vmatprep.subr.bf16.mxu0 %v1113
        %1526 = vmatpush2.bf16.msra.mxu0 %v1112
        %1527 = vmatprep.mubr.bf16.mxu0 %v599
        %1528 = vmatmul.mubr.bf16.gmra.mxu0 %v598
        %v1529 = vpop.f32.mrf.mxu0
        %v1530 = vadd.f32 %v473, %v1529
        %v1531 = vpop.f32.mrf.mxu0
        %v1532 = vadd.f32 %v477, %v1531
        %v1533 = vpop.f32.mrf.mxu0
        %v1534 = vadd.f32 %v473, %v1533
        %v1535 = vpop.f32.mrf.mxu0
        %v1536 = vadd.f32 %v477, %v1535
        %1537 = vmatprep.mubr.bf16.mxu0 %v601
        %1538 = vmatmul.mubr.bf16.gmra.mxu0 %v600
        %v1539 = vpop.f32.mrf.mxu0
        %v1540 = vadd.f32 %v473, %v1539
        %v1541 = vpop.f32.mrf.mxu0
        %v1542 = vadd.f32 %v477, %v1541
        %v1543 = vpop.f32.mrf.mxu0
        %v1544 = vadd.f32 %v473, %v1543
        %v1545 = vpop.f32.mrf.mxu0
        %v1546 = vadd.f32 %v477, %v1545
        %1547 = vmatprep.mubr.bf16.mxu0 %v603
        %1548 = vmatmul.mubr.bf16.gmra.mxu0 %v602
        %v1549 = vpop.f32.mrf.mxu0
        %v1550 = vadd.f32 %v473, %v1549
        %v1551 = vpop.f32.mrf.mxu0
        %v1552 = vadd.f32 %v477, %v1551
        %v1553 = vpop.f32.mrf.mxu0
        %v1554 = vadd.f32 %v473, %v1553
        %v1555 = vpop.f32.mrf.mxu0
        %v1556 = vadd.f32 %v477, %v1555
        %1557 = vmatprep.mubr.bf16.mxu0 %v605
        %1558 = vmatmul.mubr.bf16.gmra.mxu0 %v604
        %v1559 = vpop.f32.mrf.mxu0
        %v1560 = vadd.f32 %v473, %v1559
        %v1561 = vpop.f32.mrf.mxu0
        %v1562 = vadd.f32 %v477, %v1561
        %v1563 = vpop.f32.mrf.mxu0
        %v1564 = vadd.f32 %v473, %v1563
        %v1565 = vpop.f32.mrf.mxu0
        %v1566 = vadd.f32 %v477, %v1565
        %1567 = vmatprep.mubr.bf16.mxu0 %v607
        %1568 = vmatmul.mubr.bf16.gmra.mxu0 %v606
        %v1569 = vpop.f32.mrf.mxu0
        %v1570 = vadd.f32 %v473, %v1569
        %v1571 = vpop.f32.mrf.mxu0
        %v1572 = vadd.f32 %v477, %v1571
        %v1573 = vpop.f32.mrf.mxu0
        %v1574 = vadd.f32 %v473, %v1573
        %v1575 = vpop.f32.mrf.mxu0
        %v1576 = vadd.f32 %v477, %v1575
        %1577 = vmatprep.mubr.bf16.mxu0 %v609
        %1578 = vmatmul.mubr.bf16.gmra.mxu0 %v608
        %v1579 = vpop.f32.mrf.mxu0
        %v1580 = vadd.f32 %v473, %v1579
        %v1581 = vpop.f32.mrf.mxu0
        %v1582 = vadd.f32 %v477, %v1581
        %v1583 = vpop.f32.mrf.mxu0
        %v1584 = vadd.f32 %v473, %v1583
        %v1585 = vpop.f32.mrf.mxu0
        %v1586 = vadd.f32 %v477, %v1585
        %1587 = vmatprep.mubr.bf16.mxu0 %v611
        %1588 = vmatmul.mubr.bf16.gmra.mxu0 %v610
        %v1589 = vpop.f32.mrf.mxu0
        %v1590 = vadd.f32 %v473, %v1589
        %v1591 = vpop.f32.mrf.mxu0
        %v1592 = vadd.f32 %v477, %v1591
        %v1593 = vpop.f32.mrf.mxu0
        %v1594 = vadd.f32 %v473, %v1593
        %v1595 = vpop.f32.mrf.mxu0
        %v1596 = vadd.f32 %v477, %v1595
        %1597 = vmatprep.mubr.bf16.mxu0 %v613
        %1598 = vmatmul.mubr.bf16.gmra.mxu0 %v612
        %v1599 = vpop.f32.mrf.mxu0
        %v1600 = vadd.f32 %v473, %v1599
        %v1601 = vpop.f32.mrf.mxu0
        %v1602 = vadd.f32 %v477, %v1601
        %v1603 = vpop.f32.mrf.mxu0
        %v1604 = vadd.f32 %v473, %v1603
        %v1605 = vpop.f32.mrf.mxu0
        %v1606 = vadd.f32 %v477, %v1605
        %1607 = vmatprep.mubr.bf16.mxu0 %v615
        %1608 = vmatmul.mubr.bf16.gmra.mxu0 %v614
        %v1609 = vpop.f32.mrf.mxu0
        %v1610 = vadd.f32 %v473, %v1609
        %v1611 = vpop.f32.mrf.mxu0
        %v1612 = vadd.f32 %v477, %v1611
        %v1613 = vpop.f32.mrf.mxu0
        %v1614 = vadd.f32 %v473, %v1613
        %v1615 = vpop.f32.mrf.mxu0
        %v1616 = vadd.f32 %v477, %v1615
        %1617 = vmatprep.mubr.bf16.mxu0 %v617
        %1618 = vmatmul.mubr.bf16.gmra.mxu0 %v616
        %v1619 = vpop.f32.mrf.mxu0
        %v1620 = vadd.f32 %v473, %v1619
        %v1621 = vpop.f32.mrf.mxu0
        %v1622 = vadd.f32 %v477, %v1621
        %v1623 = vpop.f32.mrf.mxu0
        %v1624 = vadd.f32 %v473, %v1623
        %v1625 = vpop.f32.mrf.mxu0
        %v1626 = vadd.f32 %v477, %v1625
        %1627 = vmatprep.mubr.bf16.mxu0 %v619
        %1628 = vmatmul.mubr.bf16.gmra.mxu0 %v618
        %v1629 = vpop.f32.mrf.mxu0
        %v1630 = vadd.f32 %v473, %v1629
        %v1631 = vpop.f32.mrf.mxu0
        %v1632 = vadd.f32 %v477, %v1631
        %v1633 = vpop.f32.mrf.mxu0
        %v1634 = vadd.f32 %v473, %v1633
        %v1635 = vpop.f32.mrf.mxu0
        %v1636 = vadd.f32 %v477, %v1635
        %1637 = vmatprep.mubr.bf16.mxu0 %v621
        %1638 = vmatmul.mubr.bf16.gmra.mxu0 %v620
        %v1639 = vpop.f32.mrf.mxu0
        %v1640 = vadd.f32 %v473, %v1639
        %v1641 = vpop.f32.mrf.mxu0
        %v1642 = vadd.f32 %v477, %v1641
        %v1643 = vpop.f32.mrf.mxu0
        %v1644 = vadd.f32 %v473, %v1643
        %v1645 = vpop.f32.mrf.mxu0
        %v1646 = vadd.f32 %v477, %v1645
        %1647 = vmatprep.mubr.bf16.mxu0 %v623
        %1648 = vmatmul.mubr.bf16.gmra.mxu0 %v622
        %v1649 = vpop.f32.mrf.mxu0
        %v1650 = vadd.f32 %v473, %v1649
        %v1651 = vpop.f32.mrf.mxu0
        %v1652 = vadd.f32 %v477, %v1651
        %v1653 = vpop.f32.mrf.mxu0
        %v1654 = vadd.f32 %v473, %v1653
        %v1655 = vpop.f32.mrf.mxu0
        %v1656 = vadd.f32 %v477, %v1655
        %1657 = vmatprep.mubr.bf16.mxu0 %v625
        %1658 = vmatmul.mubr.bf16.gmra.mxu0 %v624
        %v1659 = vpop.f32.mrf.mxu0
        %v1660 = vadd.f32 %v473, %v1659
        %v1661 = vpop.f32.mrf.mxu0
        %v1662 = vadd.f32 %v477, %v1661
        %v1663 = vpop.f32.mrf.mxu0
        %v1664 = vadd.f32 %v473, %v1663
        %v1665 = vpop.f32.mrf.mxu0
        %v1666 = vadd.f32 %v477, %v1665
        %1667 = vmatprep.mubr.bf16.mxu0 %v627
        %1668 = vmatmul.mubr.bf16.gmra.mxu0 %v626
        %v1669 = vpop.f32.mrf.mxu0
        %v1670 = vadd.f32 %v473, %v1669
        %v1671 = vpop.f32.mrf.mxu0
        %v1672 = vadd.f32 %v477, %v1671
        %v1673 = vpop.f32.mrf.mxu0
        %v1674 = vadd.f32 %v473, %v1673
        %v1675 = vpop.f32.mrf.mxu0
        %v1676 = vadd.f32 %v477, %v1675
        %1677 = vmatprep.mubr.bf16.mxu0 %v629
        %1678 = vmatmul.mubr.bf16.gmra.mxu0 %v628
        %v1679 = vpop.f32.mrf.mxu0
        %v1680 = vadd.f32 %v473, %v1679
        %v1681 = vpop.f32.mrf.mxu0
        %v1682 = vadd.f32 %v477, %v1681
        %v1683 = vpop.f32.mrf.mxu0
        %v1684 = vadd.f32 %v473, %v1683
        %v1685 = vpop.f32.mrf.mxu0
        %v1686 = vadd.f32 %v477, %v1685
        %1687 = vdwg.mxu0
        %1688 = vmatprep.subr.bf16.mxu0 %v1107
        %1689 = vmatpush1.bf16.msra.mxu0 %v1106
        %1690 = vmatprep.subr.bf16.mxu0 %v1099
        %1691 = vmatpush1.bf16.msra.mxu0 %v1098
        %1692 = vmatprep.subr.bf16.mxu0 %v1091
        %1693 = vmatpush1.bf16.msra.mxu0 %v1090
        %1694 = vmatprep.subr.bf16.mxu0 %v1083
        %1695 = vmatpush1.bf16.msra.mxu0 %v1082
        %1696 = vmatprep.subr.bf16.mxu0 %v1075
        %1697 = vmatpush1.bf16.msra.mxu0 %v1074
        %1698 = vmatprep.subr.bf16.mxu0 %v1067
        %1699 = vmatpush1.bf16.msra.mxu0 %v1066
        %1700 = vmatprep.subr.bf16.mxu0 %v1059
        %1701 = vmatpush1.bf16.msra.mxu0 %v1058
        %1702 = vmatprep.subr.bf16.mxu0 %v1051
        %1703 = vmatpush1.bf16.msra.mxu0 %v1050
        %1704 = vmatprep.subr.bf16.mxu0 %v1171
        %1705 = vmatpush2.bf16.msra.mxu0 %v1170
        %1706 = vmatprep.subr.bf16.mxu0 %v1163
        %1707 = vmatpush2.bf16.msra.mxu0 %v1162
        %1708 = vmatprep.subr.bf16.mxu0 %v1155
        %1709 = vmatpush2.bf16.msra.mxu0 %v1154
        %1710 = vmatprep.subr.bf16.mxu0 %v1147
        %1711 = vmatpush2.bf16.msra.mxu0 %v1146
        %1712 = vmatprep.subr.bf16.mxu0 %v1139
        %1713 = vmatpush2.bf16.msra.mxu0 %v1138
        %1714 = vmatprep.subr.bf16.mxu0 %v1131
        %1715 = vmatpush2.bf16.msra.mxu0 %v1130
        %1716 = vmatprep.subr.bf16.mxu0 %v1123
        %1717 = vmatpush2.bf16.msra.mxu0 %v1122
        %1718 = vmatprep.subr.bf16.mxu0 %v1115
        %1719 = vmatpush2.bf16.msra.mxu0 %v1114
        %1720 = vmatprep.mubr.bf16.mxu0 %v599
        %1721 = vmatmul.mubr.bf16.gmra.mxu0 %v598
        %v1722 = vpop.f32.mrf.mxu0
        %v1723 = vadd.f32 %v481, %v1722
        %v1724 = vpop.f32.mrf.mxu0
        %v1725 = vadd.f32 %v485, %v1724
        %v1726 = vpop.f32.mrf.mxu0
        %v1727 = vadd.f32 %v481, %v1726
        %v1728 = vpop.f32.mrf.mxu0
        %v1729 = vadd.f32 %v485, %v1728
        %1730 = vmatprep.mubr.bf16.mxu0 %v601
        %1731 = vmatmul.mubr.bf16.gmra.mxu0 %v600
        %v1732 = vpop.f32.mrf.mxu0
        %v1733 = vadd.f32 %v481, %v1732
        %v1734 = vpop.f32.mrf.mxu0
        %v1735 = vadd.f32 %v485, %v1734
        %v1736 = vpop.f32.mrf.mxu0
        %v1737 = vadd.f32 %v481, %v1736
        %v1738 = vpop.f32.mrf.mxu0
        %v1739 = vadd.f32 %v485, %v1738
        %1740 = vmatprep.mubr.bf16.mxu0 %v603
        %1741 = vmatmul.mubr.bf16.gmra.mxu0 %v602
        %v1742 = vpop.f32.mrf.mxu0
        %v1743 = vadd.f32 %v481, %v1742
        %v1744 = vpop.f32.mrf.mxu0
        %v1745 = vadd.f32 %v485, %v1744
        %v1746 = vpop.f32.mrf.mxu0
        %v1747 = vadd.f32 %v481, %v1746
        %v1748 = vpop.f32.mrf.mxu0
        %v1749 = vadd.f32 %v485, %v1748
        %1750 = vmatprep.mubr.bf16.mxu0 %v605
        %1751 = vmatmul.mubr.bf16.gmra.mxu0 %v604
        %v1752 = vpop.f32.mrf.mxu0
        %v1753 = vadd.f32 %v481, %v1752
        %v1754 = vpop.f32.mrf.mxu0
        %v1755 = vadd.f32 %v485, %v1754
        %v1756 = vpop.f32.mrf.mxu0
        %v1757 = vadd.f32 %v481, %v1756
        %v1758 = vpop.f32.mrf.mxu0
        %v1759 = vadd.f32 %v485, %v1758
        %1760 = vmatprep.mubr.bf16.mxu0 %v607
        %1761 = vmatmul.mubr.bf16.gmra.mxu0 %v606
        %v1762 = vpop.f32.mrf.mxu0
        %v1763 = vadd.f32 %v481, %v1762
        %v1764 = vpop.f32.mrf.mxu0
        %v1765 = vadd.f32 %v485, %v1764
        %v1766 = vpop.f32.mrf.mxu0
        %v1767 = vadd.f32 %v481, %v1766
        %v1768 = vpop.f32.mrf.mxu0
        %v1769 = vadd.f32 %v485, %v1768
        %1770 = vmatprep.mubr.bf16.mxu0 %v609
        %1771 = vmatmul.mubr.bf16.gmra.mxu0 %v608
        %v1772 = vpop.f32.mrf.mxu0
        %v1773 = vadd.f32 %v481, %v1772
        %v1774 = vpop.f32.mrf.mxu0
        %v1775 = vadd.f32 %v485, %v1774
        %v1776 = vpop.f32.mrf.mxu0
        %v1777 = vadd.f32 %v481, %v1776
        %v1778 = vpop.f32.mrf.mxu0
        %v1779 = vadd.f32 %v485, %v1778
        %1780 = vmatprep.mubr.bf16.mxu0 %v611
        %1781 = vmatmul.mubr.bf16.gmra.mxu0 %v610
        %v1782 = vpop.f32.mrf.mxu0
        %v1783 = vadd.f32 %v481, %v1782
        %v1784 = vpop.f32.mrf.mxu0
        %v1785 = vadd.f32 %v485, %v1784
        %v1786 = vpop.f32.mrf.mxu0
        %v1787 = vadd.f32 %v481, %v1786
        %v1788 = vpop.f32.mrf.mxu0
        %v1789 = vadd.f32 %v485, %v1788
        %1790 = vmatprep.mubr.bf16.mxu0 %v613
        %1791 = vmatmul.mubr.bf16.gmra.mxu0 %v612
        %v1792 = vpop.f32.mrf.mxu0
        %v1793 = vadd.f32 %v481, %v1792
        %v1794 = vpop.f32.mrf.mxu0
        %v1795 = vadd.f32 %v485, %v1794
        %v1796 = vpop.f32.mrf.mxu0
        %v1797 = vadd.f32 %v481, %v1796
        %v1798 = vpop.f32.mrf.mxu0
        %v1799 = vadd.f32 %v485, %v1798
        %1800 = vmatprep.mubr.bf16.mxu0 %v615
        %1801 = vmatmul.mubr.bf16.gmra.mxu0 %v614
        %v1802 = vpop.f32.mrf.mxu0
        %v1803 = vadd.f32 %v481, %v1802
        %v1804 = vpop.f32.mrf.mxu0
        %v1805 = vadd.f32 %v485, %v1804
        %v1806 = vpop.f32.mrf.mxu0
        %v1807 = vadd.f32 %v481, %v1806
        %v1808 = vpop.f32.mrf.mxu0
        %v1809 = vadd.f32 %v485, %v1808
        %1810 = vmatprep.mubr.bf16.mxu0 %v617
        %1811 = vmatmul.mubr.bf16.gmra.mxu0 %v616
        %v1812 = vpop.f32.mrf.mxu0
        %v1813 = vadd.f32 %v481, %v1812
        %v1814 = vpop.f32.mrf.mxu0
        %v1815 = vadd.f32 %v485, %v1814
        %v1816 = vpop.f32.mrf.mxu0
        %v1817 = vadd.f32 %v481, %v1816
        %v1818 = vpop.f32.mrf.mxu0
        %v1819 = vadd.f32 %v485, %v1818
        %1820 = vmatprep.mubr.bf16.mxu0 %v619
        %1821 = vmatmul.mubr.bf16.gmra.mxu0 %v618
        %v1822 = vpop.f32.mrf.mxu0
        %v1823 = vadd.f32 %v481, %v1822
        %v1824 = vpop.f32.mrf.mxu0
        %v1825 = vadd.f32 %v485, %v1824
        %v1826 = vpop.f32.mrf.mxu0
        %v1827 = vadd.f32 %v481, %v1826
        %v1828 = vpop.f32.mrf.mxu0
        %v1829 = vadd.f32 %v485, %v1828
        %1830 = vmatprep.mubr.bf16.mxu0 %v621
        %1831 = vmatmul.mubr.bf16.gmra.mxu0 %v620
        %v1832 = vpop.f32.mrf.mxu0
        %v1833 = vadd.f32 %v481, %v1832
        %v1834 = vpop.f32.mrf.mxu0
        %v1835 = vadd.f32 %v485, %v1834
        %v1836 = vpop.f32.mrf.mxu0
        %v1837 = vadd.f32 %v481, %v1836
        %v1838 = vpop.f32.mrf.mxu0
        %v1839 = vadd.f32 %v485, %v1838
        %1840 = vmatprep.mubr.bf16.mxu0 %v623
        %1841 = vmatmul.mubr.bf16.gmra.mxu0 %v622
        %v1842 = vpop.f32.mrf.mxu0
        %v1843 = vadd.f32 %v481, %v1842
        %v1844 = vpop.f32.mrf.mxu0
        %v1845 = vadd.f32 %v485, %v1844
        %v1846 = vpop.f32.mrf.mxu0
        %v1847 = vadd.f32 %v481, %v1846
        %v1848 = vpop.f32.mrf.mxu0
        %v1849 = vadd.f32 %v485, %v1848
        %1850 = vmatprep.mubr.bf16.mxu0 %v625
        %1851 = vmatmul.mubr.bf16.gmra.mxu0 %v624
        %v1852 = vpop.f32.mrf.mxu0
        %v1853 = vadd.f32 %v481, %v1852
        %v1854 = vpop.f32.mrf.mxu0
        %v1855 = vadd.f32 %v485, %v1854
        %v1856 = vpop.f32.mrf.mxu0
        %v1857 = vadd.f32 %v481, %v1856
        %v1858 = vpop.f32.mrf.mxu0
        %v1859 = vadd.f32 %v485, %v1858
        %1860 = vmatprep.mubr.bf16.mxu0 %v627
        %1861 = vmatmul.mubr.bf16.gmra.mxu0 %v626
        %v1862 = vpop.f32.mrf.mxu0
        %v1863 = vadd.f32 %v481, %v1862
        %v1864 = vpop.f32.mrf.mxu0
        %v1865 = vadd.f32 %v485, %v1864
        %v1866 = vpop.f32.mrf.mxu0
        %v1867 = vadd.f32 %v481, %v1866
        %v1868 = vpop.f32.mrf.mxu0
        %v1869 = vadd.f32 %v485, %v1868
        %1870 = vmatprep.mubr.bf16.mxu0 %v629
        %1871 = vmatmul.mubr.bf16.gmra.mxu0 %v628
        %v1872 = vpop.f32.mrf.mxu0
        %v1873 = vadd.f32 %v481, %v1872
        %v1874 = vpop.f32.mrf.mxu0
        %v1875 = vadd.f32 %v485, %v1874
        %v1876 = vpop.f32.mrf.mxu0
        %v1877 = vadd.f32 %v481, %v1876
        %v1878 = vpop.f32.mrf.mxu0
        %v1879 = vadd.f32 %v485, %v1878
        %1880 = vdwg.mxu0
        %1881 = vmatprep.subr.bf16.mxu0 %v1109
        %1882 = vmatpush1.bf16.msra.mxu0 %v1108
        %1883 = vmatprep.subr.bf16.mxu0 %v1101
        %1884 = vmatpush1.bf16.msra.mxu0 %v1100
        %1885 = vmatprep.subr.bf16.mxu0 %v1093
        %1886 = vmatpush1.bf16.msra.mxu0 %v1092
        %1887 = vmatprep.subr.bf16.mxu0 %v1085
        %1888 = vmatpush1.bf16.msra.mxu0 %v1084
        %1889 = vmatprep.subr.bf16.mxu0 %v1077
        %1890 = vmatpush1.bf16.msra.mxu0 %v1076
        %1891 = vmatprep.subr.bf16.mxu0 %v1069
        %1892 = vmatpush1.bf16.msra.mxu0 %v1068
        %1893 = vmatprep.subr.bf16.mxu0 %v1061
        %1894 = vmatpush1.bf16.msra.mxu0 %v1060
        %1895 = vmatprep.subr.bf16.mxu0 %v1053
        %1896 = vmatpush1.bf16.msra.mxu0 %v1052
        %1897 = vmatprep.subr.bf16.mxu0 %v1173
        %1898 = vmatpush2.bf16.msra.mxu0 %v1172
        %1899 = vmatprep.subr.bf16.mxu0 %v1165
        %1900 = vmatpush2.bf16.msra.mxu0 %v1164
        %1901 = vmatprep.subr.bf16.mxu0 %v1157
        %1902 = vmatpush2.bf16.msra.mxu0 %v1156
        %1903 = vmatprep.subr.bf16.mxu0 %v1149
        %1904 = vmatpush2.bf16.msra.mxu0 %v1148
        %1905 = vmatprep.subr.bf16.mxu0 %v1141
        %1906 = vmatpush2.bf16.msra.mxu0 %v1140
        %1907 = vmatprep.subr.bf16.mxu0 %v1133
        %1908 = vmatpush2.bf16.msra.mxu0 %v1132
        %1909 = vmatprep.subr.bf16.mxu0 %v1125
        %1910 = vmatpush2.bf16.msra.mxu0 %v1124
        %1911 = vmatprep.subr.bf16.mxu0 %v1117
        %1912 = vmatpush2.bf16.msra.mxu0 %v1116
        %1913 = vmatprep.mubr.bf16.mxu0 %v599
        %1914 = vmatmul.mubr.bf16.gmra.mxu0 %v598
        %v1915 = vpop.f32.mrf.mxu0
        %v1916 = vadd.f32 %v489, %v1915
        %v1917 = vpop.f32.mrf.mxu0
        %v1918 = vadd.f32 %v493, %v1917
        %v1919 = vpop.f32.mrf.mxu0
        %v1920 = vadd.f32 %v489, %v1919
        %v1921 = vpop.f32.mrf.mxu0
        %v1922 = vadd.f32 %v493, %v1921
        %1923 = vmatprep.mubr.bf16.mxu0 %v601
        %1924 = vmatmul.mubr.bf16.gmra.mxu0 %v600
        %v1925 = vpop.f32.mrf.mxu0
        %v1926 = vadd.f32 %v489, %v1925
        %v1927 = vpop.f32.mrf.mxu0
        %v1928 = vadd.f32 %v493, %v1927
        %v1929 = vpop.f32.mrf.mxu0
        %v1930 = vadd.f32 %v489, %v1929
        %v1931 = vpop.f32.mrf.mxu0
        %v1932 = vadd.f32 %v493, %v1931
        %1933 = vmatprep.mubr.bf16.mxu0 %v603
        %1934 = vmatmul.mubr.bf16.gmra.mxu0 %v602
        %v1935 = vpop.f32.mrf.mxu0
        %v1936 = vadd.f32 %v489, %v1935
        %v1937 = vpop.f32.mrf.mxu0
        %v1938 = vadd.f32 %v493, %v1937
        %v1939 = vpop.f32.mrf.mxu0
        %v1940 = vadd.f32 %v489, %v1939
        %v1941 = vpop.f32.mrf.mxu0
        %v1942 = vadd.f32 %v493, %v1941
        %1943 = vmatprep.mubr.bf16.mxu0 %v605
        %1944 = vmatmul.mubr.bf16.gmra.mxu0 %v604
        %v1945 = vpop.f32.mrf.mxu0
        %v1946 = vadd.f32 %v489, %v1945
        %v1947 = vpop.f32.mrf.mxu0
        %v1948 = vadd.f32 %v493, %v1947
        %v1949 = vpop.f32.mrf.mxu0
        %v1950 = vadd.f32 %v489, %v1949
        %v1951 = vpop.f32.mrf.mxu0
        %v1952 = vadd.f32 %v493, %v1951
        %1953 = vmatprep.mubr.bf16.mxu0 %v607
        %1954 = vmatmul.mubr.bf16.gmra.mxu0 %v606
        %v1955 = vpop.f32.mrf.mxu0
        %v1956 = vadd.f32 %v489, %v1955
        %v1957 = vpop.f32.mrf.mxu0
        %v1958 = vadd.f32 %v493, %v1957
        %v1959 = vpop.f32.mrf.mxu0
        %v1960 = vadd.f32 %v489, %v1959
        %v1961 = vpop.f32.mrf.mxu0
        %v1962 = vadd.f32 %v493, %v1961
        %1963 = vmatprep.mubr.bf16.mxu0 %v609
        %1964 = vmatmul.mubr.bf16.gmra.mxu0 %v608
        %v1965 = vpop.f32.mrf.mxu0
        %v1966 = vadd.f32 %v489, %v1965
        %v1967 = vpop.f32.mrf.mxu0
        %v1968 = vadd.f32 %v493, %v1967
        %v1969 = vpop.f32.mrf.mxu0
        %v1970 = vadd.f32 %v489, %v1969
        %v1971 = vpop.f32.mrf.mxu0
        %v1972 = vadd.f32 %v493, %v1971
        %1973 = vmatprep.mubr.bf16.mxu0 %v611
        %1974 = vmatmul.mubr.bf16.gmra.mxu0 %v610
        %v1975 = vpop.f32.mrf.mxu0
        %v1976 = vadd.f32 %v489, %v1975
        %v1977 = vpop.f32.mrf.mxu0
        %v1978 = vadd.f32 %v493, %v1977
        %v1979 = vpop.f32.mrf.mxu0
        %v1980 = vadd.f32 %v489, %v1979
        %v1981 = vpop.f32.mrf.mxu0
        %v1982 = vadd.f32 %v493, %v1981
        %1983 = vmatprep.mubr.bf16.mxu0 %v613
        %1984 = vmatmul.mubr.bf16.gmra.mxu0 %v612
        %v1985 = vpop.f32.mrf.mxu0
        %v1986 = vadd.f32 %v489, %v1985
        %v1987 = vpop.f32.mrf.mxu0
        %v1988 = vadd.f32 %v493, %v1987
        %v1989 = vpop.f32.mrf.mxu0
        %v1990 = vadd.f32 %v489, %v1989
        %v1991 = vpop.f32.mrf.mxu0
        %v1992 = vadd.f32 %v493, %v1991
        %1993 = vmatprep.mubr.bf16.mxu0 %v615
        %1994 = vmatmul.mubr.bf16.gmra.mxu0 %v614
        %v1995 = vpop.f32.mrf.mxu0
        %v1996 = vadd.f32 %v489, %v1995
        %v1997 = vpop.f32.mrf.mxu0
        %v1998 = vadd.f32 %v493, %v1997
        %v1999 = vpop.f32.mrf.mxu0
        %v2000 = vadd.f32 %v489, %v1999
        %v2001 = vpop.f32.mrf.mxu0
        %v2002 = vadd.f32 %v493, %v2001
        %2003 = vmatprep.mubr.bf16.mxu0 %v617
        %2004 = vmatmul.mubr.bf16.gmra.mxu0 %v616
        %v2005 = vpop.f32.mrf.mxu0
        %v2006 = vadd.f32 %v489, %v2005
        %v2007 = vpop.f32.mrf.mxu0
        %v2008 = vadd.f32 %v493, %v2007
        %v2009 = vpop.f32.mrf.mxu0
        %v2010 = vadd.f32 %v489, %v2009
        %v2011 = vpop.f32.mrf.mxu0
        %v2012 = vadd.f32 %v493, %v2011
        %2013 = vmatprep.mubr.bf16.mxu0 %v619
        %2014 = vmatmul.mubr.bf16.gmra.mxu0 %v618
        %v2015 = vpop.f32.mrf.mxu0
        %v2016 = vadd.f32 %v489, %v2015
        %v2017 = vpop.f32.mrf.mxu0
        %v2018 = vadd.f32 %v493, %v2017
        %v2019 = vpop.f32.mrf.mxu0
        %v2020 = vadd.f32 %v489, %v2019
        %v2021 = vpop.f32.mrf.mxu0
        %v2022 = vadd.f32 %v493, %v2021
        %2023 = vmatprep.mubr.bf16.mxu0 %v621
        %2024 = vmatmul.mubr.bf16.gmra.mxu0 %v620
        %v2025 = vpop.f32.mrf.mxu0
        %v2026 = vadd.f32 %v489, %v2025
        %v2027 = vpop.f32.mrf.mxu0
        %v2028 = vadd.f32 %v493, %v2027
        %v2029 = vpop.f32.mrf.mxu0
        %v2030 = vadd.f32 %v489, %v2029
        %v2031 = vpop.f32.mrf.mxu0
        %v2032 = vadd.f32 %v493, %v2031
        %2033 = vmatprep.mubr.bf16.mxu0 %v623
        %2034 = vmatmul.mubr.bf16.gmra.mxu0 %v622
        %v2035 = vpop.f32.mrf.mxu0
        %v2036 = vadd.f32 %v489, %v2035
        %v2037 = vpop.f32.mrf.mxu0
        %v2038 = vadd.f32 %v493, %v2037
        %v2039 = vpop.f32.mrf.mxu0
        %v2040 = vadd.f32 %v489, %v2039
        %v2041 = vpop.f32.mrf.mxu0
        %v2042 = vadd.f32 %v493, %v2041
        %2043 = vmatprep.mubr.bf16.mxu0 %v625
        %2044 = vmatmul.mubr.bf16.gmra.mxu0 %v624
        %v2045 = vpop.f32.mrf.mxu0
        %v2046 = vadd.f32 %v489, %v2045
        %v2047 = vpop.f32.mrf.mxu0
        %v2048 = vadd.f32 %v493, %v2047
        %v2049 = vpop.f32.mrf.mxu0
        %v2050 = vadd.f32 %v489, %v2049
        %v2051 = vpop.f32.mrf.mxu0
        %v2052 = vadd.f32 %v493, %v2051
        %2053 = vmatprep.mubr.bf16.mxu0 %v627
        %2054 = vmatmul.mubr.bf16.gmra.mxu0 %v626
        %v2055 = vpop.f32.mrf.mxu0
        %v2056 = vadd.f32 %v489, %v2055
        %v2057 = vpop.f32.mrf.mxu0
        %v2058 = vadd.f32 %v493, %v2057
        %v2059 = vpop.f32.mrf.mxu0
        %v2060 = vadd.f32 %v489, %v2059
        %v2061 = vpop.f32.mrf.mxu0
        %v2062 = vadd.f32 %v493, %v2061
        %2063 = vmatprep.mubr.bf16.mxu0 %v629
        %2064 = vmatmul.mubr.bf16.gmra.mxu0 %v628
        %v2065 = vpop.f32.mrf.mxu0
        %v2066 = vadd.f32 %v489, %v2065
        %v2067 = vpop.f32.mrf.mxu0
        %v2068 = vadd.f32 %v493, %v2067
        %v2069 = vpop.f32.mrf.mxu0
        %v2070 = vadd.f32 %v489, %v2069
        %v2071 = vpop.f32.mrf.mxu0
        %v2072 = vadd.f32 %v493, %v2071
        %2073 = vdwg.mxu0
        %v2074 = vmax.f32 %v1337, 0.0
        %v2075 = vmax.f32 %v1339, 0.0
        %v2076 = vmax.f32 %v1530, 0.0
        %v2077 = vmax.f32 %v1532, 0.0
        %v2078 = vmax.f32 %v1723, 0.0
        %v2079 = vmax.f32 %v1725, 0.0
        %v2080 = vmax.f32 %v1916, 0.0
        %v2081 = vmax.f32 %v1918, 0.0
        %v2082 = vmax.f32 %v1341, 0.0
        %v2083 = vmax.f32 %v1343, 0.0
        %v2084 = vmax.f32 %v1534, 0.0
        %v2085 = vmax.f32 %v1536, 0.0
        %v2086 = vmax.f32 %v1727, 0.0
        %v2087 = vmax.f32 %v1729, 0.0
        %v2088 = vmax.f32 %v1920, 0.0
        %v2089 = vmax.f32 %v1922, 0.0
        %v2090 = vmax.f32 %v1347, 0.0
        %v2091 = vmax.f32 %v1349, 0.0
        %v2092 = vmax.f32 %v1540, 0.0
        %v2093 = vmax.f32 %v1542, 0.0
        %v2094 = vmax.f32 %v1733, 0.0
        %v2095 = vmax.f32 %v1735, 0.0
        %v2096 = vmax.f32 %v1926, 0.0
        %v2097 = vmax.f32 %v1928, 0.0
        %v2098 = vmax.f32 %v1351, 0.0
        %v2099 = vmax.f32 %v1353, 0.0
        %v2100 = vmax.f32 %v1544, 0.0
        %v2101 = vmax.f32 %v1546, 0.0
        %v2102 = vmax.f32 %v1737, 0.0
        %v2103 = vmax.f32 %v1739, 0.0
        %v2104 = vmax.f32 %v1930, 0.0
        %v2105 = vmax.f32 %v1932, 0.0
        %v2106 = vmax.f32 %v1357, 0.0
        %v2107 = vmax.f32 %v1359, 0.0
        %v2108 = vmax.f32 %v1550, 0.0
        %v2109 = vmax.f32 %v1552, 0.0
        %v2110 = vmax.f32 %v1743, 0.0
        %v2111 = vmax.f32 %v1745, 0.0
        %v2112 = vmax.f32 %v1936, 0.0
        %v2113 = vmax.f32 %v1938, 0.0
        %v2114 = vmax.f32 %v1361, 0.0
        %v2115 = vmax.f32 %v1363, 0.0
        %v2116 = vmax.f32 %v1554, 0.0
        %v2117 = vmax.f32 %v1556, 0.0
        %v2118 = vmax.f32 %v1747, 0.0
        %v2119 = vmax.f32 %v1749, 0.0
        %v2120 = vmax.f32 %v1940, 0.0
        %v2121 = vmax.f32 %v1942, 0.0
        %v2122 = vmax.f32 %v1367, 0.0
        %v2123 = vmax.f32 %v1369, 0.0
        %v2124 = vmax.f32 %v1560, 0.0
        %v2125 = vmax.f32 %v1562, 0.0
        %v2126 = vmax.f32 %v1753, 0.0
        %v2127 = vmax.f32 %v1755, 0.0
        %v2128 = vmax.f32 %v1946, 0.0
        %v2129 = vmax.f32 %v1948, 0.0
        %v2130 = vmax.f32 %v1371, 0.0
        %v2131 = vmax.f32 %v1373, 0.0
        %v2132 = vmax.f32 %v1564, 0.0
        %v2133 = vmax.f32 %v1566, 0.0
        %v2134 = vmax.f32 %v1757, 0.0
        %v2135 = vmax.f32 %v1759, 0.0
        %v2136 = vmax.f32 %v1950, 0.0
        %v2137 = vmax.f32 %v1952, 0.0
        %v2138 = vmax.f32 %v1377, 0.0
        %v2139 = vmax.f32 %v1379, 0.0
        %v2140 = vmax.f32 %v1570, 0.0
        %v2141 = vmax.f32 %v1572, 0.0
        %v2142 = vmax.f32 %v1763, 0.0
        %v2143 = vmax.f32 %v1765, 0.0
        %v2144 = vmax.f32 %v1956, 0.0
        %v2145 = vmax.f32 %v1958, 0.0
        %v2146 = vmax.f32 %v1381, 0.0
        %v2147 = vmax.f32 %v1383, 0.0
        %v2148 = vmax.f32 %v1574, 0.0
        %v2149 = vmax.f32 %v1576, 0.0
        %v2150 = vmax.f32 %v1767, 0.0
        %v2151 = vmax.f32 %v1769, 0.0
        %v2152 = vmax.f32 %v1960, 0.0
        %v2153 = vmax.f32 %v1962, 0.0
        %v2154 = vmax.f32 %v1387, 0.0
        %v2155 = vmax.f32 %v1389, 0.0
        %v2156 = vmax.f32 %v1580, 0.0
        %v2157 = vmax.f32 %v1582, 0.0
        %v2158 = vmax.f32 %v1773, 0.0
        %v2159 = vmax.f32 %v1775, 0.0
        %v2160 = vmax.f32 %v1966, 0.0
        %v2161 = vmax.f32 %v1968, 0.0
        %v2162 = vmax.f32 %v1391, 0.0
        %v2163 = vmax.f32 %v1393, 0.0
        %v2164 = vmax.f32 %v1584, 0.0
        %v2165 = vmax.f32 %v1586, 0.0
        %v2166 = vmax.f32 %v1777, 0.0
        %v2167 = vmax.f32 %v1779, 0.0
        %v2168 = vmax.f32 %v1970, 0.0
        %v2169 = vmax.f32 %v1972, 0.0
        %v2170 = vmax.f32 %v1397, 0.0
        %v2171 = vmax.f32 %v1399, 0.0
        %v2172 = vmax.f32 %v1590, 0.0
        %v2173 = vmax.f32 %v1592, 0.0
        %v2174 = vmax.f32 %v1783, 0.0
        %v2175 = vmax.f32 %v1785, 0.0
        %v2176 = vmax.f32 %v1976, 0.0
        %v2177 = vmax.f32 %v1978, 0.0
        %v2178 = vmax.f32 %v1401, 0.0
        %v2179 = vmax.f32 %v1403, 0.0
        %v2180 = vmax.f32 %v1594, 0.0
        %v2181 = vmax.f32 %v1596, 0.0
        %v2182 = vmax.f32 %v1787, 0.0
        %v2183 = vmax.f32 %v1789, 0.0
        %v2184 = vmax.f32 %v1980, 0.0
        %v2185 = vmax.f32 %v1982, 0.0
        %v2186 = vmax.f32 %v1407, 0.0
        %v2187 = vmax.f32 %v1409, 0.0
        %v2188 = vmax.f32 %v1600, 0.0
        %v2189 = vmax.f32 %v1602, 0.0
        %v2190 = vmax.f32 %v1793, 0.0
        %v2191 = vmax.f32 %v1795, 0.0
        %v2192 = vmax.f32 %v1986, 0.0
        %v2193 = vmax.f32 %v1988, 0.0
        %v2194 = vmax.f32 %v1411, 0.0
        %v2195 = vmax.f32 %v1413, 0.0
        %v2196 = vmax.f32 %v1604, 0.0
        %v2197 = vmax.f32 %v1606, 0.0
        %v2198 = vmax.f32 %v1797, 0.0
        %v2199 = vmax.f32 %v1799, 0.0
        %v2200 = vmax.f32 %v1990, 0.0
        %v2201 = vmax.f32 %v1992, 0.0
        %v2202 = vmax.f32 %v1417, 0.0
        %v2203 = vmax.f32 %v1419, 0.0
        %v2204 = vmax.f32 %v1610, 0.0
        %v2205 = vmax.f32 %v1612, 0.0
        %v2206 = vmax.f32 %v1803, 0.0
        %v2207 = vmax.f32 %v1805, 0.0
        %v2208 = vmax.f32 %v1996, 0.0
        %v2209 = vmax.f32 %v1998, 0.0
        %v2210 = vmax.f32 %v1421, 0.0
        %v2211 = vmax.f32 %v1423, 0.0
        %v2212 = vmax.f32 %v1614, 0.0
        %v2213 = vmax.f32 %v1616, 0.0
        %v2214 = vmax.f32 %v1807, 0.0
        %v2215 = vmax.f32 %v1809, 0.0
        %v2216 = vmax.f32 %v2000, 0.0
        %v2217 = vmax.f32 %v2002, 0.0
        %v2218 = vmax.f32 %v1427, 0.0
        %v2219 = vmax.f32 %v1429, 0.0
        %v2220 = vmax.f32 %v1620, 0.0
        %v2221 = vmax.f32 %v1622, 0.0
        %v2222 = vmax.f32 %v1813, 0.0
        %v2223 = vmax.f32 %v1815, 0.0
        %v2224 = vmax.f32 %v2006, 0.0
        %v2225 = vmax.f32 %v2008, 0.0
        %v2226 = vmax.f32 %v1431, 0.0
        %v2227 = vmax.f32 %v1433, 0.0
        %v2228 = vmax.f32 %v1624, 0.0
        %v2229 = vmax.f32 %v1626, 0.0
        %v2230 = vmax.f32 %v1817, 0.0
        %v2231 = vmax.f32 %v1819, 0.0
        %v2232 = vmax.f32 %v2010, 0.0
        %v2233 = vmax.f32 %v2012, 0.0
        %v2234 = vmax.f32 %v1437, 0.0
        %v2235 = vmax.f32 %v1439, 0.0
        %v2236 = vmax.f32 %v1630, 0.0
        %v2237 = vmax.f32 %v1632, 0.0
        %v2238 = vmax.f32 %v1823, 0.0
        %v2239 = vmax.f32 %v1825, 0.0
        %v2240 = vmax.f32 %v2016, 0.0
        %v2241 = vmax.f32 %v2018, 0.0
        %v2242 = vmax.f32 %v1441, 0.0
        %v2243 = vmax.f32 %v1443, 0.0
        %v2244 = vmax.f32 %v1634, 0.0
        %v2245 = vmax.f32 %v1636, 0.0
        %v2246 = vmax.f32 %v1827, 0.0
        %v2247 = vmax.f32 %v1829, 0.0
        %v2248 = vmax.f32 %v2020, 0.0
        %v2249 = vmax.f32 %v2022, 0.0
        %v2250 = vmax.f32 %v1447, 0.0
        %v2251 = vmax.f32 %v1449, 0.0
        %v2252 = vmax.f32 %v1640, 0.0
        %v2253 = vmax.f32 %v1642, 0.0
        %v2254 = vmax.f32 %v1833, 0.0
        %v2255 = vmax.f32 %v1835, 0.0
        %v2256 = vmax.f32 %v2026, 0.0
        %v2257 = vmax.f32 %v2028, 0.0
        %v2258 = vmax.f32 %v1451, 0.0
        %v2259 = vmax.f32 %v1453, 0.0
        %v2260 = vmax.f32 %v1644, 0.0
        %v2261 = vmax.f32 %v1646, 0.0
        %v2262 = vmax.f32 %v1837, 0.0
        %v2263 = vmax.f32 %v1839, 0.0
        %v2264 = vmax.f32 %v2030, 0.0
        %v2265 = vmax.f32 %v2032, 0.0
        %v2266 = vmax.f32 %v1457, 0.0
        %v2267 = vmax.f32 %v1459, 0.0
        %v2268 = vmax.f32 %v1650, 0.0
        %v2269 = vmax.f32 %v1652, 0.0
        %v2270 = vmax.f32 %v1843, 0.0
        %v2271 = vmax.f32 %v1845, 0.0
        %v2272 = vmax.f32 %v2036, 0.0
        %v2273 = vmax.f32 %v2038, 0.0
        %v2274 = vmax.f32 %v1461, 0.0
        %v2275 = vmax.f32 %v1463, 0.0
        %v2276 = vmax.f32 %v1654, 0.0
        %v2277 = vmax.f32 %v1656, 0.0
        %v2278 = vmax.f32 %v1847, 0.0
        %v2279 = vmax.f32 %v1849, 0.0
        %v2280 = vmax.f32 %v2040, 0.0
        %v2281 = vmax.f32 %v2042, 0.0
        %v2282 = vmax.f32 %v1467, 0.0
        %v2283 = vmax.f32 %v1469, 0.0
        %v2284 = vmax.f32 %v1660, 0.0
        %v2285 = vmax.f32 %v1662, 0.0
        %v2286 = vmax.f32 %v1853, 0.0
        %v2287 = vmax.f32 %v1855, 0.0
        %v2288 = vmax.f32 %v2046, 0.0
        %v2289 = vmax.f32 %v2048, 0.0
        %v2290 = vmax.f32 %v1471, 0.0
        %v2291 = vmax.f32 %v1473, 0.0
        %v2292 = vmax.f32 %v1664, 0.0
        %v2293 = vmax.f32 %v1666, 0.0
        %v2294 = vmax.f32 %v1857, 0.0
        %v2295 = vmax.f32 %v1859, 0.0
        %v2296 = vmax.f32 %v2050, 0.0
        %v2297 = vmax.f32 %v2052, 0.0
        %v2298 = vmax.f32 %v1477, 0.0
        %v2299 = vmax.f32 %v1479, 0.0
        %v2300 = vmax.f32 %v1670, 0.0
        %v2301 = vmax.f32 %v1672, 0.0
        %v2302 = vmax.f32 %v1863, 0.0
        %v2303 = vmax.f32 %v1865, 0.0
        %v2304 = vmax.f32 %v2056, 0.0
        %v2305 = vmax.f32 %v2058, 0.0
        %v2306 = vmax.f32 %v1481, 0.0
        %v2307 = vmax.f32 %v1483, 0.0
        %v2308 = vmax.f32 %v1674, 0.0
        %v2309 = vmax.f32 %v1676, 0.0
        %v2310 = vmax.f32 %v1867, 0.0
        %v2311 = vmax.f32 %v1869, 0.0
        %v2312 = vmax.f32 %v2060, 0.0
        %v2313 = vmax.f32 %v2062, 0.0
        %v2314 = vmax.f32 %v1487, 0.0
        %v2315 = vmax.f32 %v1489, 0.0
        %v2316 = vmax.f32 %v1680, 0.0
        %v2317 = vmax.f32 %v1682, 0.0
        %v2318 = vmax.f32 %v1873, 0.0
        %v2319 = vmax.f32 %v1875, 0.0
        %v2320 = vmax.f32 %v2066, 0.0
        %v2321 = vmax.f32 %v2068, 0.0
        %v2322 = vmax.f32 %v1491, 0.0
        %v2323 = vmax.f32 %v1493, 0.0
        %v2324 = vmax.f32 %v1684, 0.0
        %v2325 = vmax.f32 %v1686, 0.0
        %v2326 = vmax.f32 %v1877, 0.0
        %v2327 = vmax.f32 %v1879, 0.0
        %v2328 = vmax.f32 %v2070, 0.0
        %v2329 = vmax.f32 %v2072, 0.0
        %v2330 = vpack.c.bf16 %v2082, %v2074
        %v2331 = vpack.c.bf16 %v2083, %v2075
        %v2332 = vpack.c.bf16 %v2084, %v2076
        %v2333 = vpack.c.bf16 %v2085, %v2077
        %v2334 = vpack.c.bf16 %v2086, %v2078
        %v2335 = vpack.c.bf16 %v2087, %v2079
        %v2336 = vpack.c.bf16 %v2088, %v2080
        %v2337 = vpack.c.bf16 %v2089, %v2081
        %v2338 = vpack.c.bf16 %v2098, %v2090
        %v2339 = vpack.c.bf16 %v2099, %v2091
        %v2340 = vpack.c.bf16 %v2100, %v2092
        %v2341 = vpack.c.bf16 %v2101, %v2093
        %v2342 = vpack.c.bf16 %v2102, %v2094
        %v2343 = vpack.c.bf16 %v2103, %v2095
        %v2344 = vpack.c.bf16 %v2104, %v2096
        %v2345 = vpack.c.bf16 %v2105, %v2097
        %v2346 = vpack.c.bf16 %v2114, %v2106
        %v2347 = vpack.c.bf16 %v2115, %v2107
        %v2348 = vpack.c.bf16 %v2116, %v2108
        %v2349 = vpack.c.bf16 %v2117, %v2109
        %v2350 = vpack.c.bf16 %v2118, %v2110
        %v2351 = vpack.c.bf16 %v2119, %v2111
        %v2352 = vpack.c.bf16 %v2120, %v2112
        %v2353 = vpack.c.bf16 %v2121, %v2113
        %v2354 = vpack.c.bf16 %v2130, %v2122
        %v2355 = vpack.c.bf16 %v2131, %v2123
        %v2356 = vpack.c.bf16 %v2132, %v2124
        %v2357 = vpack.c.bf16 %v2133, %v2125
        %v2358 = vpack.c.bf16 %v2134, %v2126
        %v2359 = vpack.c.bf16 %v2135, %v2127
        %v2360 = vpack.c.bf16 %v2136, %v2128
        %v2361 = vpack.c.bf16 %v2137, %v2129
        %v2362 = vpack.c.bf16 %v2146, %v2138
        %v2363 = vpack.c.bf16 %v2147, %v2139
        %v2364 = vpack.c.bf16 %v2148, %v2140
        %v2365 = vpack.c.bf16 %v2149, %v2141
        %v2366 = vpack.c.bf16 %v2150, %v2142
        %v2367 = vpack.c.bf16 %v2151, %v2143
        %v2368 = vpack.c.bf16 %v2152, %v2144
        %v2369 = vpack.c.bf16 %v2153, %v2145
        %v2370 = vpack.c.bf16 %v2162, %v2154
        %v2371 = vpack.c.bf16 %v2163, %v2155
        %v2372 = vpack.c.bf16 %v2164, %v2156
        %v2373 = vpack.c.bf16 %v2165, %v2157
        %v2374 = vpack.c.bf16 %v2166, %v2158
        %v2375 = vpack.c.bf16 %v2167, %v2159
        %v2376 = vpack.c.bf16 %v2168, %v2160
        %v2377 = vpack.c.bf16 %v2169, %v2161
        %v2378 = vpack.c.bf16 %v2178, %v2170
        %v2379 = vpack.c.bf16 %v2179, %v2171
        %v2380 = vpack.c.bf16 %v2180, %v2172
        %v2381 = vpack.c.bf16 %v2181, %v2173
        %v2382 = vpack.c.bf16 %v2182, %v2174
        %v2383 = vpack.c.bf16 %v2183, %v2175
        %v2384 = vpack.c.bf16 %v2184, %v2176
        %v2385 = vpack.c.bf16 %v2185, %v2177
        %v2386 = vpack.c.bf16 %v2194, %v2186
        %v2387 = vpack.c.bf16 %v2195, %v2187
        %v2388 = vpack.c.bf16 %v2196, %v2188
        %v2389 = vpack.c.bf16 %v2197, %v2189
        %v2390 = vpack.c.bf16 %v2198, %v2190
        %v2391 = vpack.c.bf16 %v2199, %v2191
        %v2392 = vpack.c.bf16 %v2200, %v2192
        %v2393 = vpack.c.bf16 %v2201, %v2193
        %v2394 = vpack.c.bf16 %v2210, %v2202
        %v2395 = vpack.c.bf16 %v2211, %v2203
        %v2396 = vpack.c.bf16 %v2212, %v2204
        %v2397 = vpack.c.bf16 %v2213, %v2205
        %v2398 = vpack.c.bf16 %v2214, %v2206
        %v2399 = vpack.c.bf16 %v2215, %v2207
        %v2400 = vpack.c.bf16 %v2216, %v2208
        %v2401 = vpack.c.bf16 %v2217, %v2209
        %v2402 = vpack.c.bf16 %v2226, %v2218
        %v2403 = vpack.c.bf16 %v2227, %v2219
        %v2404 = vpack.c.bf16 %v2228, %v2220
        %v2405 = vpack.c.bf16 %v2229, %v2221
        %v2406 = vpack.c.bf16 %v2230, %v2222
        %v2407 = vpack.c.bf16 %v2231, %v2223
        %v2408 = vpack.c.bf16 %v2232, %v2224
        %v2409 = vpack.c.bf16 %v2233, %v2225
        %v2410 = vpack.c.bf16 %v2242, %v2234
        %v2411 = vpack.c.bf16 %v2243, %v2235
        %v2412 = vpack.c.bf16 %v2244, %v2236
        %v2413 = vpack.c.bf16 %v2245, %v2237
        %v2414 = vpack.c.bf16 %v2246, %v2238
        %v2415 = vpack.c.bf16 %v2247, %v2239
        %v2416 = vpack.c.bf16 %v2248, %v2240
        %v2417 = vpack.c.bf16 %v2249, %v2241
        %v2418 = vpack.c.bf16 %v2258, %v2250
        %v2419 = vpack.c.bf16 %v2259, %v2251
        %v2420 = vpack.c.bf16 %v2260, %v2252
        %v2421 = vpack.c.bf16 %v2261, %v2253
        %v2422 = vpack.c.bf16 %v2262, %v2254
        %v2423 = vpack.c.bf16 %v2263, %v2255
        %v2424 = vpack.c.bf16 %v2264, %v2256
        %v2425 = vpack.c.bf16 %v2265, %v2257
        %v2426 = vpack.c.bf16 %v2274, %v2266
        %v2427 = vpack.c.bf16 %v2275, %v2267
        %v2428 = vpack.c.bf16 %v2276, %v2268
        %v2429 = vpack.c.bf16 %v2277, %v2269
        %v2430 = vpack.c.bf16 %v2278, %v2270
        %v2431 = vpack.c.bf16 %v2279, %v2271
        %v2432 = vpack.c.bf16 %v2280, %v2272
        %v2433 = vpack.c.bf16 %v2281, %v2273
        %v2434 = vpack.c.bf16 %v2290, %v2282
        %v2435 = vpack.c.bf16 %v2291, %v2283
        %v2436 = vpack.c.bf16 %v2292, %v2284
        %v2437 = vpack.c.bf16 %v2293, %v2285
        %v2438 = vpack.c.bf16 %v2294, %v2286
        %v2439 = vpack.c.bf16 %v2295, %v2287
        %v2440 = vpack.c.bf16 %v2296, %v2288
        %v2441 = vpack.c.bf16 %v2297, %v2289
        %v2442 = vpack.c.bf16 %v2306, %v2298
        %v2443 = vpack.c.bf16 %v2307, %v2299
        %v2444 = vpack.c.bf16 %v2308, %v2300
        %v2445 = vpack.c.bf16 %v2309, %v2301
        %v2446 = vpack.c.bf16 %v2310, %v2302
        %v2447 = vpack.c.bf16 %v2311, %v2303
        %v2448 = vpack.c.bf16 %v2312, %v2304
        %v2449 = vpack.c.bf16 %v2313, %v2305
        %v2450 = vpack.c.bf16 %v2322, %v2314
        %v2451 = vpack.c.bf16 %v2323, %v2315
        %v2452 = vpack.c.bf16 %v2324, %v2316
        %v2453 = vpack.c.bf16 %v2325, %v2317
        %v2454 = vpack.c.bf16 %v2326, %v2318
        %v2455 = vpack.c.bf16 %v2327, %v2319
        %v2456 = vpack.c.bf16 %v2328, %v2320
        %v2457 = vpack.c.bf16 %v2329, %v2321
        %v2458 = vld [vmem:[#allocation8] sm:$0xff]
        %v2459 = vld [vmem:[#allocation8 + $0x8] sm:$0xff]
        %v2460 = vld [vmem:[#allocation8 + $0x10] sm:$0xff]
        %v2461 = vld [vmem:[#allocation8 + $0x18] sm:$0xff]
        %v2462 = vld [vmem:[#allocation8 + $0x20] sm:$0xff]
        %v2463 = vld [vmem:[#allocation8 + $0x28] sm:$0xff]
        %v2464 = vld [vmem:[#allocation8 + $0x30] sm:$0xff]
        %v2465 = vld [vmem:[#allocation8 + $0x38] sm:$0xff]
        %v2466 = vld [vmem:[#allocation8 + $0x40] sm:$0xff]
        %v2467 = vld [vmem:[#allocation8 + $0x48] sm:$0xff]
        %v2468 = vld [vmem:[#allocation8 + $0x50] sm:$0xff]
        %v2469 = vld [vmem:[#allocation8 + $0x58] sm:$0xff]
        %v2470 = vld [vmem:[#allocation8 + $0x60] sm:$0xff]
        %v2471 = vld [vmem:[#allocation8 + $0x68] sm:$0xff]
        %v2472 = vld [vmem:[#allocation8 + $0x70] sm:$0xff]
        %v2473 = vld [vmem:[#allocation8 + $0x78] sm:$0xff]
        %v2474 = vld [vmem:[#allocation8 + $0x80] sm:$0xff]
        %v2475 = vld [vmem:[#allocation8 + $0x88] sm:$0xff]
        %v2476 = vld [vmem:[#allocation8 + $0x90] sm:$0xff]
        %v2477 = vld [vmem:[#allocation8 + $0x98] sm:$0xff]
        %v2478 = vld [vmem:[#allocation8 + $0xa0] sm:$0xff]
        %v2479 = vld [vmem:[#allocation8 + $0xa8] sm:$0xff]
        %v2480 = vld [vmem:[#allocation8 + $0xb0] sm:$0xff]
        %v2481 = vld [vmem:[#allocation8 + $0xb8] sm:$0xff]
        %v2482 = vld [vmem:[#allocation8 + $0xc0] sm:$0xff]
        %v2483 = vld [vmem:[#allocation8 + $0xc8] sm:$0xff]
        %v2484 = vld [vmem:[#allocation8 + $0xd0] sm:$0xff]
        %v2485 = vld [vmem:[#allocation8 + $0xd8] sm:$0xff]
        %v2486 = vld [vmem:[#allocation8 + $0xe0] sm:$0xff]
        %v2487 = vld [vmem:[#allocation8 + $0xe8] sm:$0xff]
        %v2488 = vld [vmem:[#allocation8 + $0xf0] sm:$0xff]
        %v2489 = vld [vmem:[#allocation8 + $0xf8] sm:$0xff]
        %v2490 = vld [vmem:[#allocation8 + $0x100] sm:$0xff]
        %v2491 = vld [vmem:[#allocation8 + $0x108] sm:$0xff]
        %v2492 = vld [vmem:[#allocation8 + $0x110] sm:$0xff]
        %v2493 = vld [vmem:[#allocation8 + $0x118] sm:$0xff]
        %v2494 = vld [vmem:[#allocation8 + $0x120] sm:$0xff]
        %v2495 = vld [vmem:[#allocation8 + $0x128] sm:$0xff]
        %v2496 = vld [vmem:[#allocation8 + $0x130] sm:$0xff]
        %v2497 = vld [vmem:[#allocation8 + $0x138] sm:$0xff]
        %v2498 = vld [vmem:[#allocation8 + $0x140] sm:$0xff]
        %v2499 = vld [vmem:[#allocation8 + $0x148] sm:$0xff]
        %v2500 = vld [vmem:[#allocation8 + $0x150] sm:$0xff]
        %v2501 = vld [vmem:[#allocation8 + $0x158] sm:$0xff]
        %v2502 = vld [vmem:[#allocation8 + $0x160] sm:$0xff]
        %v2503 = vld [vmem:[#allocation8 + $0x168] sm:$0xff]
        %v2504 = vld [vmem:[#allocation8 + $0x170] sm:$0xff]
        %v2505 = vld [vmem:[#allocation8 + $0x178] sm:$0xff]
        %v2506 = vld [vmem:[#allocation8 + $0x180] sm:$0xff]
        %v2507 = vld [vmem:[#allocation8 + $0x188] sm:$0xff]
        %v2508 = vld [vmem:[#allocation8 + $0x190] sm:$0xff]
        %v2509 = vld [vmem:[#allocation8 + $0x198] sm:$0xff]
        %v2510 = vld [vmem:[#allocation8 + $0x1a0] sm:$0xff]
        %v2511 = vld [vmem:[#allocation8 + $0x1a8] sm:$0xff]
        %v2512 = vld [vmem:[#allocation8 + $0x1b0] sm:$0xff]
        %v2513 = vld [vmem:[#allocation8 + $0x1b8] sm:$0xff]
        %v2514 = vld [vmem:[#allocation8 + $0x1c0] sm:$0xff]
        %v2515 = vld [vmem:[#allocation8 + $0x1c8] sm:$0xff]
        %v2516 = vld [vmem:[#allocation8 + $0x1d0] sm:$0xff]
        %v2517 = vld [vmem:[#allocation8 + $0x1d8] sm:$0xff]
        %v2518 = vld [vmem:[#allocation8 + $0x1e0] sm:$0xff]
        %v2519 = vld [vmem:[#allocation8 + $0x1e8] sm:$0xff]
        %v2520 = vld [vmem:[#allocation8 + $0x1f0] sm:$0xff]
        %v2521 = vld [vmem:[#allocation8 + $0x1f8] sm:$0xff]
        %v2522 = vld [vmem:[#allocation8 + $0x200] sm:$0xff]
        %v2523 = vld [vmem:[#allocation8 + $0x208] sm:$0xff]
        %v2524 = vld [vmem:[#allocation8 + $0x210] sm:$0xff]
        %v2525 = vld [vmem:[#allocation8 + $0x218] sm:$0xff]
        %v2526 = vld [vmem:[#allocation8 + $0x220] sm:$0xff]
        %v2527 = vld [vmem:[#allocation8 + $0x228] sm:$0xff]
        %v2528 = vld [vmem:[#allocation8 + $0x230] sm:$0xff]
        %v2529 = vld [vmem:[#allocation8 + $0x238] sm:$0xff]
        %v2530 = vld [vmem:[#allocation8 + $0x240] sm:$0xff]
        %v2531 = vld [vmem:[#allocation8 + $0x248] sm:$0xff]
        %v2532 = vld [vmem:[#allocation8 + $0x250] sm:$0xff]
        %v2533 = vld [vmem:[#allocation8 + $0x258] sm:$0xff]
        %v2534 = vld [vmem:[#allocation8 + $0x260] sm:$0xff]
        %v2535 = vld [vmem:[#allocation8 + $0x268] sm:$0xff]
        %v2536 = vld [vmem:[#allocation8 + $0x270] sm:$0xff]
        %v2537 = vld [vmem:[#allocation8 + $0x278] sm:$0xff]
        %v2538 = vld [vmem:[#allocation8 + $0x280] sm:$0xff]
        %v2539 = vld [vmem:[#allocation8 + $0x288] sm:$0xff]
        %v2540 = vld [vmem:[#allocation8 + $0x290] sm:$0xff]
        %v2541 = vld [vmem:[#allocation8 + $0x298] sm:$0xff]
        %v2542 = vld [vmem:[#allocation8 + $0x2a0] sm:$0xff]
        %v2543 = vld [vmem:[#allocation8 + $0x2a8] sm:$0xff]
        %v2544 = vld [vmem:[#allocation8 + $0x2b0] sm:$0xff]
        %v2545 = vld [vmem:[#allocation8 + $0x2b8] sm:$0xff]
        %v2546 = vld [vmem:[#allocation8 + $0x2c0] sm:$0xff]
        %v2547 = vld [vmem:[#allocation8 + $0x2c8] sm:$0xff]
        %v2548 = vld [vmem:[#allocation8 + $0x2d0] sm:$0xff]
        %v2549 = vld [vmem:[#allocation8 + $0x2d8] sm:$0xff]
        %v2550 = vld [vmem:[#allocation8 + $0x2e0] sm:$0xff]
        %v2551 = vld [vmem:[#allocation8 + $0x2e8] sm:$0xff]
        %v2552 = vld [vmem:[#allocation8 + $0x2f0] sm:$0xff]
        %v2553 = vld [vmem:[#allocation8 + $0x2f8] sm:$0xff]
        %v2554 = vld [vmem:[#allocation8 + $0x300] sm:$0xff]
        %v2555 = vld [vmem:[#allocation8 + $0x308] sm:$0xff]
        %v2556 = vld [vmem:[#allocation8 + $0x310] sm:$0xff]
        %v2557 = vld [vmem:[#allocation8 + $0x318] sm:$0xff]
        %v2558 = vld [vmem:[#allocation8 + $0x320] sm:$0xff]
        %v2559 = vld [vmem:[#allocation8 + $0x328] sm:$0xff]
        %v2560 = vld [vmem:[#allocation8 + $0x330] sm:$0xff]
        %v2561 = vld [vmem:[#allocation8 + $0x338] sm:$0xff]
        %v2562 = vld [vmem:[#allocation8 + $0x340] sm:$0xff]
        %v2563 = vld [vmem:[#allocation8 + $0x348] sm:$0xff]
        %v2564 = vld [vmem:[#allocation8 + $0x350] sm:$0xff]
        %v2565 = vld [vmem:[#allocation8 + $0x358] sm:$0xff]
        %v2566 = vld [vmem:[#allocation8 + $0x360] sm:$0xff]
        %v2567 = vld [vmem:[#allocation8 + $0x368] sm:$0xff]
        %v2568 = vld [vmem:[#allocation8 + $0x370] sm:$0xff]
        %v2569 = vld [vmem:[#allocation8 + $0x378] sm:$0xff]
        %v2570 = vld [vmem:[#allocation8 + $0x380] sm:$0xff]
        %v2571 = vld [vmem:[#allocation8 + $0x388] sm:$0xff]
        %v2572 = vld [vmem:[#allocation8 + $0x390] sm:$0xff]
        %v2573 = vld [vmem:[#allocation8 + $0x398] sm:$0xff]
        %v2574 = vld [vmem:[#allocation8 + $0x3a0] sm:$0xff]
        %v2575 = vld [vmem:[#allocation8 + $0x3a8] sm:$0xff]
        %v2576 = vld [vmem:[#allocation8 + $0x3b0] sm:$0xff]
        %v2577 = vld [vmem:[#allocation8 + $0x3b8] sm:$0xff]
        %v2578 = vld [vmem:[#allocation8 + $0x3c0] sm:$0xff]
        %v2579 = vld [vmem:[#allocation8 + $0x3c8] sm:$0xff]
        %v2580 = vld [vmem:[#allocation8 + $0x3d0] sm:$0xff]
        %v2581 = vld [vmem:[#allocation8 + $0x3d8] sm:$0xff]
        %v2582 = vld [vmem:[#allocation8 + $0x3e0] sm:$0xff]
        %v2583 = vld [vmem:[#allocation8 + $0x3e8] sm:$0xff]
        %v2584 = vld [vmem:[#allocation8 + $0x3f0] sm:$0xff]
        %v2585 = vld [vmem:[#allocation8 + $0x3f8] sm:$0xff]
        %v2586 = vld [vmem:[#allocation10] sm:$0x3]
        %v2588 = vlaneseq
        %v2589 = vshrl.u32 %v2588, 7
        %v2590 = vsub.s32 0, %v2589
        %v2591 = vrot.slane %v2586, %v2590
        %v2592 = vlaneseq
        %v2593 = vshrl.u32 %v2592, 7
        %v2594 = vsub.s32 1, %v2593
        %v2595 = vrot.slane %v2586, %v2594
        %v2726 = vunpack.c.l.b16 %v2458
        %v2727 = vunpack.c.h.b16 %v2458
        %v2728 = vunpack.c.l.b16 %v2459
        %v2729 = vunpack.c.h.b16 %v2459
        %v2730 = vunpack.c.l.b16 %v2460
        %v2731 = vunpack.c.h.b16 %v2460
        %v2732 = vunpack.c.l.b16 %v2461
        %v2733 = vunpack.c.h.b16 %v2461
        %v2734 = vunpack.c.l.b16 %v2462
        %v2735 = vunpack.c.h.b16 %v2462
        %v2736 = vunpack.c.l.b16 %v2463
        %v2737 = vunpack.c.h.b16 %v2463
        %v2738 = vunpack.c.l.b16 %v2464
        %v2739 = vunpack.c.h.b16 %v2464
        %v2740 = vunpack.c.l.b16 %v2465
        %v2741 = vunpack.c.h.b16 %v2465
        %v2742 = vunpack.c.l.b16 %v2466
        %v2743 = vunpack.c.h.b16 %v2466
        %v2744 = vunpack.c.l.b16 %v2467
        %v2745 = vunpack.c.h.b16 %v2467
        %v2746 = vunpack.c.l.b16 %v2468
        %v2747 = vunpack.c.h.b16 %v2468
        %v2748 = vunpack.c.l.b16 %v2469
        %v2749 = vunpack.c.h.b16 %v2469
        %v2750 = vunpack.c.l.b16 %v2470
        %v2751 = vunpack.c.h.b16 %v2470
        %v2752 = vunpack.c.l.b16 %v2471
        %v2753 = vunpack.c.h.b16 %v2471
        %v2754 = vunpack.c.l.b16 %v2472
        %v2755 = vunpack.c.h.b16 %v2472
        %v2756 = vunpack.c.l.b16 %v2473
        %v2757 = vunpack.c.h.b16 %v2473
        %v2758 = vunpack.c.l.b16 %v2474
        %v2759 = vunpack.c.h.b16 %v2474
        %v2760 = vunpack.c.l.b16 %v2475
        %v2761 = vunpack.c.h.b16 %v2475
        %v2762 = vunpack.c.l.b16 %v2476
        %v2763 = vunpack.c.h.b16 %v2476
        %v2764 = vunpack.c.l.b16 %v2477
        %v2765 = vunpack.c.h.b16 %v2477
        %v2766 = vunpack.c.l.b16 %v2478
        %v2767 = vunpack.c.h.b16 %v2478
        %v2768 = vunpack.c.l.b16 %v2479
        %v2769 = vunpack.c.h.b16 %v2479
        %v2770 = vunpack.c.l.b16 %v2480
        %v2771 = vunpack.c.h.b16 %v2480
        %v2772 = vunpack.c.l.b16 %v2481
        %v2773 = vunpack.c.h.b16 %v2481
        %v2774 = vunpack.c.l.b16 %v2482
        %v2775 = vunpack.c.h.b16 %v2482
        %v2776 = vunpack.c.l.b16 %v2483
        %v2777 = vunpack.c.h.b16 %v2483
        %v2778 = vunpack.c.l.b16 %v2484
        %v2779 = vunpack.c.h.b16 %v2484
        %v2780 = vunpack.c.l.b16 %v2485
        %v2781 = vunpack.c.h.b16 %v2485
        %v2782 = vunpack.c.l.b16 %v2486
        %v2783 = vunpack.c.h.b16 %v2486
        %v2784 = vunpack.c.l.b16 %v2487
        %v2785 = vunpack.c.h.b16 %v2487
        %v2786 = vunpack.c.l.b16 %v2488
        %v2787 = vunpack.c.h.b16 %v2488
        %v2788 = vunpack.c.l.b16 %v2489
        %v2789 = vunpack.c.h.b16 %v2489
        %v2790 = vunpack.c.l.b16 %v2490
        %v2791 = vunpack.c.h.b16 %v2490
        %v2792 = vunpack.c.l.b16 %v2491
        %v2793 = vunpack.c.h.b16 %v2491
        %v2794 = vunpack.c.l.b16 %v2492
        %v2795 = vunpack.c.h.b16 %v2492
        %v2796 = vunpack.c.l.b16 %v2493
        %v2797 = vunpack.c.h.b16 %v2493
        %v2798 = vunpack.c.l.b16 %v2494
        %v2799 = vunpack.c.h.b16 %v2494
        %v2800 = vunpack.c.l.b16 %v2495
        %v2801 = vunpack.c.h.b16 %v2495
        %v2802 = vunpack.c.l.b16 %v2496
        %v2803 = vunpack.c.h.b16 %v2496
        %v2804 = vunpack.c.l.b16 %v2497
        %v2805 = vunpack.c.h.b16 %v2497
        %v2806 = vunpack.c.l.b16 %v2498
        %v2807 = vunpack.c.h.b16 %v2498
        %v2808 = vunpack.c.l.b16 %v2499
        %v2809 = vunpack.c.h.b16 %v2499
        %v2810 = vunpack.c.l.b16 %v2500
        %v2811 = vunpack.c.h.b16 %v2500
        %v2812 = vunpack.c.l.b16 %v2501
        %v2813 = vunpack.c.h.b16 %v2501
        %v2814 = vunpack.c.l.b16 %v2502
        %v2815 = vunpack.c.h.b16 %v2502
        %v2816 = vunpack.c.l.b16 %v2503
        %v2817 = vunpack.c.h.b16 %v2503
        %v2818 = vunpack.c.l.b16 %v2504
        %v2819 = vunpack.c.h.b16 %v2504
        %v2820 = vunpack.c.l.b16 %v2505
        %v2821 = vunpack.c.h.b16 %v2505
        %v2822 = vunpack.c.l.b16 %v2506
        %v2823 = vunpack.c.h.b16 %v2506
        %v2824 = vunpack.c.l.b16 %v2507
        %v2825 = vunpack.c.h.b16 %v2507
        %v2826 = vunpack.c.l.b16 %v2508
        %v2827 = vunpack.c.h.b16 %v2508
        %v2828 = vunpack.c.l.b16 %v2509
        %v2829 = vunpack.c.h.b16 %v2509
        %v2830 = vunpack.c.l.b16 %v2510
        %v2831 = vunpack.c.h.b16 %v2510
        %v2832 = vunpack.c.l.b16 %v2511
        %v2833 = vunpack.c.h.b16 %v2511
        %v2834 = vunpack.c.l.b16 %v2512
        %v2835 = vunpack.c.h.b16 %v2512
        %v2836 = vunpack.c.l.b16 %v2513
        %v2837 = vunpack.c.h.b16 %v2513
        %v2838 = vunpack.c.l.b16 %v2514
        %v2839 = vunpack.c.h.b16 %v2514
        %v2840 = vunpack.c.l.b16 %v2515
        %v2841 = vunpack.c.h.b16 %v2515
        %v2842 = vunpack.c.l.b16 %v2516
        %v2843 = vunpack.c.h.b16 %v2516
        %v2844 = vunpack.c.l.b16 %v2517
        %v2845 = vunpack.c.h.b16 %v2517
        %v2846 = vunpack.c.l.b16 %v2518
        %v2847 = vunpack.c.h.b16 %v2518
        %v2848 = vunpack.c.l.b16 %v2519
        %v2849 = vunpack.c.h.b16 %v2519
        %v2850 = vunpack.c.l.b16 %v2520
        %v2851 = vunpack.c.h.b16 %v2520
        %v2852 = vunpack.c.l.b16 %v2521
        %v2853 = vunpack.c.h.b16 %v2521
        %v2854 = vunpack.c.l.b16 %v2522
        %v2855 = vunpack.c.h.b16 %v2522
        %v2856 = vunpack.c.l.b16 %v2523
        %v2857 = vunpack.c.h.b16 %v2523
        %v2858 = vunpack.c.l.b16 %v2524
        %v2859 = vunpack.c.h.b16 %v2524
        %v2860 = vunpack.c.l.b16 %v2525
        %v2861 = vunpack.c.h.b16 %v2525
        %v2862 = vunpack.c.l.b16 %v2526
        %v2863 = vunpack.c.h.b16 %v2526
        %v2864 = vunpack.c.l.b16 %v2527
        %v2865 = vunpack.c.h.b16 %v2527
        %v2866 = vunpack.c.l.b16 %v2528
        %v2867 = vunpack.c.h.b16 %v2528
        %v2868 = vunpack.c.l.b16 %v2529
        %v2869 = vunpack.c.h.b16 %v2529
        %v2870 = vunpack.c.l.b16 %v2530
        %v2871 = vunpack.c.h.b16 %v2530
        %v2872 = vunpack.c.l.b16 %v2531
        %v2873 = vunpack.c.h.b16 %v2531
        %v2874 = vunpack.c.l.b16 %v2532
        %v2875 = vunpack.c.h.b16 %v2532
        %v2876 = vunpack.c.l.b16 %v2533
        %v2877 = vunpack.c.h.b16 %v2533
        %v2878 = vunpack.c.l.b16 %v2534
        %v2879 = vunpack.c.h.b16 %v2534
        %v2880 = vunpack.c.l.b16 %v2535
        %v2881 = vunpack.c.h.b16 %v2535
        %v2882 = vunpack.c.l.b16 %v2536
        %v2883 = vunpack.c.h.b16 %v2536
        %v2884 = vunpack.c.l.b16 %v2537
        %v2885 = vunpack.c.h.b16 %v2537
        %v2886 = vunpack.c.l.b16 %v2538
        %v2887 = vunpack.c.h.b16 %v2538
        %v2888 = vunpack.c.l.b16 %v2539
        %v2889 = vunpack.c.h.b16 %v2539
        %v2890 = vunpack.c.l.b16 %v2540
        %v2891 = vunpack.c.h.b16 %v2540
        %v2892 = vunpack.c.l.b16 %v2541
        %v2893 = vunpack.c.h.b16 %v2541
        %v2894 = vunpack.c.l.b16 %v2542
        %v2895 = vunpack.c.h.b16 %v2542
        %v2896 = vunpack.c.l.b16 %v2543
        %v2897 = vunpack.c.h.b16 %v2543
        %v2898 = vunpack.c.l.b16 %v2544
        %v2899 = vunpack.c.h.b16 %v2544
        %v2900 = vunpack.c.l.b16 %v2545
        %v2901 = vunpack.c.h.b16 %v2545
        %v2902 = vunpack.c.l.b16 %v2546
        %v2903 = vunpack.c.h.b16 %v2546
        %v2904 = vunpack.c.l.b16 %v2547
        %v2905 = vunpack.c.h.b16 %v2547
        %v2906 = vunpack.c.l.b16 %v2548
        %v2907 = vunpack.c.h.b16 %v2548
        %v2908 = vunpack.c.l.b16 %v2549
        %v2909 = vunpack.c.h.b16 %v2549
        %v2910 = vunpack.c.l.b16 %v2550
        %v2911 = vunpack.c.h.b16 %v2550
        %v2912 = vunpack.c.l.b16 %v2551
        %v2913 = vunpack.c.h.b16 %v2551
        %v2914 = vunpack.c.l.b16 %v2552
        %v2915 = vunpack.c.h.b16 %v2552
        %v2916 = vunpack.c.l.b16 %v2553
        %v2917 = vunpack.c.h.b16 %v2553
        %v2918 = vunpack.c.l.b16 %v2554
        %v2919 = vunpack.c.h.b16 %v2554
        %v2920 = vunpack.c.l.b16 %v2555
        %v2921 = vunpack.c.h.b16 %v2555
        %v2922 = vunpack.c.l.b16 %v2556
        %v2923 = vunpack.c.h.b16 %v2556
        %v2924 = vunpack.c.l.b16 %v2557
        %v2925 = vunpack.c.h.b16 %v2557
        %v2926 = vunpack.c.l.b16 %v2558
        %v2927 = vunpack.c.h.b16 %v2558
        %v2928 = vunpack.c.l.b16 %v2559
        %v2929 = vunpack.c.h.b16 %v2559
        %v2930 = vunpack.c.l.b16 %v2560
        %v2931 = vunpack.c.h.b16 %v2560
        %v2932 = vunpack.c.l.b16 %v2561
        %v2933 = vunpack.c.h.b16 %v2561
        %v2934 = vunpack.c.l.b16 %v2562
        %v2935 = vunpack.c.h.b16 %v2562
        %v2936 = vunpack.c.l.b16 %v2563
        %v2937 = vunpack.c.h.b16 %v2563
        %v2938 = vunpack.c.l.b16 %v2564
        %v2939 = vunpack.c.h.b16 %v2564
        %v2940 = vunpack.c.l.b16 %v2565
        %v2941 = vunpack.c.h.b16 %v2565
        %v2942 = vunpack.c.l.b16 %v2566
        %v2943 = vunpack.c.h.b16 %v2566
        %v2944 = vunpack.c.l.b16 %v2567
        %v2945 = vunpack.c.h.b16 %v2567
        %v2946 = vunpack.c.l.b16 %v2568
        %v2947 = vunpack.c.h.b16 %v2568
        %v2948 = vunpack.c.l.b16 %v2569
        %v2949 = vunpack.c.h.b16 %v2569
        %v2950 = vunpack.c.l.b16 %v2570
        %v2951 = vunpack.c.h.b16 %v2570
        %v2952 = vunpack.c.l.b16 %v2571
        %v2953 = vunpack.c.h.b16 %v2571
        %v2954 = vunpack.c.l.b16 %v2572
        %v2955 = vunpack.c.h.b16 %v2572
        %v2956 = vunpack.c.l.b16 %v2573
        %v2957 = vunpack.c.h.b16 %v2573
        %v2958 = vunpack.c.l.b16 %v2574
        %v2959 = vunpack.c.h.b16 %v2574
        %v2960 = vunpack.c.l.b16 %v2575
        %v2961 = vunpack.c.h.b16 %v2575
        %v2962 = vunpack.c.l.b16 %v2576
        %v2963 = vunpack.c.h.b16 %v2576
        %v2964 = vunpack.c.l.b16 %v2577
        %v2965 = vunpack.c.h.b16 %v2577
        %v2966 = vunpack.c.l.b16 %v2578
        %v2967 = vunpack.c.h.b16 %v2578
        %v2968 = vunpack.c.l.b16 %v2579
        %v2969 = vunpack.c.h.b16 %v2579
        %v2970 = vunpack.c.l.b16 %v2580
        %v2971 = vunpack.c.h.b16 %v2580
        %v2972 = vunpack.c.l.b16 %v2581
        %v2973 = vunpack.c.h.b16 %v2581
        %v2974 = vunpack.c.l.b16 %v2582
        %v2975 = vunpack.c.h.b16 %v2582
        %v2976 = vunpack.c.l.b16 %v2583
        %v2977 = vunpack.c.h.b16 %v2583
        %v2978 = vunpack.c.l.b16 %v2584
        %v2979 = vunpack.c.h.b16 %v2584
        %v2980 = vunpack.c.l.b16 %v2585
        %v2981 = vunpack.c.h.b16 %v2585
        %v2982 = vpack.c.b16 %v2728, %v2726
        %v2983 = vpack.c.b16 %v2729, %v2727
        %v2984 = vpack.c.b16 %v2732, %v2730
        %v2985 = vpack.c.b16 %v2733, %v2731
        %v2986 = vpack.c.b16 %v2736, %v2734
        %v2987 = vpack.c.b16 %v2737, %v2735
        %v2988 = vpack.c.b16 %v2740, %v2738
        %v2989 = vpack.c.b16 %v2741, %v2739
        %v2990 = vpack.c.b16 %v2744, %v2742
        %v2991 = vpack.c.b16 %v2745, %v2743
        %v2992 = vpack.c.b16 %v2748, %v2746
        %v2993 = vpack.c.b16 %v2749, %v2747
        %v2994 = vpack.c.b16 %v2752, %v2750
        %v2995 = vpack.c.b16 %v2753, %v2751
        %v2996 = vpack.c.b16 %v2756, %v2754
        %v2997 = vpack.c.b16 %v2757, %v2755
        %v2998 = vpack.c.b16 %v2760, %v2758
        %v2999 = vpack.c.b16 %v2761, %v2759
        %v3000 = vpack.c.b16 %v2764, %v2762
        %v3001 = vpack.c.b16 %v2765, %v2763
        %v3002 = vpack.c.b16 %v2768, %v2766
        %v3003 = vpack.c.b16 %v2769, %v2767
        %v3004 = vpack.c.b16 %v2772, %v2770
        %v3005 = vpack.c.b16 %v2773, %v2771
        %v3006 = vpack.c.b16 %v2776, %v2774
        %v3007 = vpack.c.b16 %v2777, %v2775
        %v3008 = vpack.c.b16 %v2780, %v2778
        %v3009 = vpack.c.b16 %v2781, %v2779
        %v3010 = vpack.c.b16 %v2784, %v2782
        %v3011 = vpack.c.b16 %v2785, %v2783
        %v3012 = vpack.c.b16 %v2788, %v2786
        %v3013 = vpack.c.b16 %v2789, %v2787
        %v3014 = vpack.c.b16 %v2792, %v2790
        %v3015 = vpack.c.b16 %v2793, %v2791
        %v3016 = vpack.c.b16 %v2796, %v2794
        %v3017 = vpack.c.b16 %v2797, %v2795
        %v3018 = vpack.c.b16 %v2800, %v2798
        %v3019 = vpack.c.b16 %v2801, %v2799
        %v3020 = vpack.c.b16 %v2804, %v2802
        %v3021 = vpack.c.b16 %v2805, %v2803
        %v3022 = vpack.c.b16 %v2808, %v2806
        %v3023 = vpack.c.b16 %v2809, %v2807
        %v3024 = vpack.c.b16 %v2812, %v2810
        %v3025 = vpack.c.b16 %v2813, %v2811
        %v3026 = vpack.c.b16 %v2816, %v2814
        %v3027 = vpack.c.b16 %v2817, %v2815
        %v3028 = vpack.c.b16 %v2820, %v2818
        %v3029 = vpack.c.b16 %v2821, %v2819
        %v3030 = vpack.c.b16 %v2824, %v2822
        %v3031 = vpack.c.b16 %v2825, %v2823
        %v3032 = vpack.c.b16 %v2828, %v2826
        %v3033 = vpack.c.b16 %v2829, %v2827
        %v3034 = vpack.c.b16 %v2832, %v2830
        %v3035 = vpack.c.b16 %v2833, %v2831
        %v3036 = vpack.c.b16 %v2836, %v2834
        %v3037 = vpack.c.b16 %v2837, %v2835
        %v3038 = vpack.c.b16 %v2840, %v2838
        %v3039 = vpack.c.b16 %v2841, %v2839
        %v3040 = vpack.c.b16 %v2844, %v2842
        %v3041 = vpack.c.b16 %v2845, %v2843
        %v3042 = vpack.c.b16 %v2848, %v2846
        %v3043 = vpack.c.b16 %v2849, %v2847
        %v3044 = vpack.c.b16 %v2852, %v2850
        %v3045 = vpack.c.b16 %v2853, %v2851
        %v3046 = vpack.c.b16 %v2856, %v2854
        %v3047 = vpack.c.b16 %v2857, %v2855
        %v3048 = vpack.c.b16 %v2860, %v2858
        %v3049 = vpack.c.b16 %v2861, %v2859
        %v3050 = vpack.c.b16 %v2864, %v2862
        %v3051 = vpack.c.b16 %v2865, %v2863
        %v3052 = vpack.c.b16 %v2868, %v2866
        %v3053 = vpack.c.b16 %v2869, %v2867
        %v3054 = vpack.c.b16 %v2872, %v2870
        %v3055 = vpack.c.b16 %v2873, %v2871
        %v3056 = vpack.c.b16 %v2876, %v2874
        %v3057 = vpack.c.b16 %v2877, %v2875
        %v3058 = vpack.c.b16 %v2880, %v2878
        %v3059 = vpack.c.b16 %v2881, %v2879
        %v3060 = vpack.c.b16 %v2884, %v2882
        %v3061 = vpack.c.b16 %v2885, %v2883
        %v3062 = vpack.c.b16 %v2888, %v2886
        %v3063 = vpack.c.b16 %v2889, %v2887
        %v3064 = vpack.c.b16 %v2892, %v2890
        %v3065 = vpack.c.b16 %v2893, %v2891
        %v3066 = vpack.c.b16 %v2896, %v2894
        %v3067 = vpack.c.b16 %v2897, %v2895
        %v3068 = vpack.c.b16 %v2900, %v2898
        %v3069 = vpack.c.b16 %v2901, %v2899
        %v3070 = vpack.c.b16 %v2904, %v2902
        %v3071 = vpack.c.b16 %v2905, %v2903
        %v3072 = vpack.c.b16 %v2908, %v2906
        %v3073 = vpack.c.b16 %v2909, %v2907
        %v3074 = vpack.c.b16 %v2912, %v2910
        %v3075 = vpack.c.b16 %v2913, %v2911
        %v3076 = vpack.c.b16 %v2916, %v2914
        %v3077 = vpack.c.b16 %v2917, %v2915
        %v3078 = vpack.c.b16 %v2920, %v2918
        %v3079 = vpack.c.b16 %v2921, %v2919
        %v3080 = vpack.c.b16 %v2924, %v2922
        %v3081 = vpack.c.b16 %v2925, %v2923
        %v3082 = vpack.c.b16 %v2928, %v2926
        %v3083 = vpack.c.b16 %v2929, %v2927
        %v3084 = vpack.c.b16 %v2932, %v2930
        %v3085 = vpack.c.b16 %v2933, %v2931
        %v3086 = vpack.c.b16 %v2936, %v2934
        %v3087 = vpack.c.b16 %v2937, %v2935
        %v3088 = vpack.c.b16 %v2940, %v2938
        %v3089 = vpack.c.b16 %v2941, %v2939
        %v3090 = vpack.c.b16 %v2944, %v2942
        %v3091 = vpack.c.b16 %v2945, %v2943
        %v3092 = vpack.c.b16 %v2948, %v2946
        %v3093 = vpack.c.b16 %v2949, %v2947
        %v3094 = vpack.c.b16 %v2952, %v2950
        %v3095 = vpack.c.b16 %v2953, %v2951
        %v3096 = vpack.c.b16 %v2956, %v2954
        %v3097 = vpack.c.b16 %v2957, %v2955
        %v3098 = vpack.c.b16 %v2960, %v2958
        %v3099 = vpack.c.b16 %v2961, %v2959
        %v3100 = vpack.c.b16 %v2964, %v2962
        %v3101 = vpack.c.b16 %v2965, %v2963
        %v3102 = vpack.c.b16 %v2968, %v2966
        %v3103 = vpack.c.b16 %v2969, %v2967
        %v3104 = vpack.c.b16 %v2972, %v2970
        %v3105 = vpack.c.b16 %v2973, %v2971
        %v3106 = vpack.c.b16 %v2976, %v2974
        %v3107 = vpack.c.b16 %v2977, %v2975
        %v3108 = vpack.c.b16 %v2980, %v2978
        %v3109 = vpack.c.b16 %v2981, %v2979
        %3238 = vmatprep.subr.bf16.mxu0 %v2997
        %3239 = vmatpush1.bf16.msra.mxu0 %v2996
        %3240 = vmatprep.subr.bf16.mxu0 %v2995
        %3241 = vmatpush1.bf16.msra.mxu0 %v2994
        %3242 = vmatprep.subr.bf16.mxu0 %v2993
        %3243 = vmatpush1.bf16.msra.mxu0 %v2992
        %3244 = vmatprep.subr.bf16.mxu0 %v2991
        %3245 = vmatpush1.bf16.msra.mxu0 %v2990
        %3246 = vmatprep.subr.bf16.mxu0 %v2989
        %3247 = vmatpush1.bf16.msra.mxu0 %v2988
        %3248 = vmatprep.subr.bf16.mxu0 %v2987
        %3249 = vmatpush1.bf16.msra.mxu0 %v2986
        %3250 = vmatprep.subr.bf16.mxu0 %v2985
        %3251 = vmatpush1.bf16.msra.mxu0 %v2984
        %3252 = vmatprep.subr.bf16.mxu0 %v2983
        %3253 = vmatpush1.bf16.msra.mxu0 %v2982
        %3254 = vmatprep.subr.bf16.mxu0 %v3013
        %3255 = vmatpush2.bf16.msra.mxu0 %v3012
        %3256 = vmatprep.subr.bf16.mxu0 %v3011
        %3257 = vmatpush2.bf16.msra.mxu0 %v3010
        %3258 = vmatprep.subr.bf16.mxu0 %v3009
        %3259 = vmatpush2.bf16.msra.mxu0 %v3008
        %3260 = vmatprep.subr.bf16.mxu0 %v3007
        %3261 = vmatpush2.bf16.msra.mxu0 %v3006
        %3262 = vmatprep.subr.bf16.mxu0 %v3005
        %3263 = vmatpush2.bf16.msra.mxu0 %v3004
        %3264 = vmatprep.subr.bf16.mxu0 %v3003
        %3265 = vmatpush2.bf16.msra.mxu0 %v3002
        %3266 = vmatprep.subr.bf16.mxu0 %v3001
        %3267 = vmatpush2.bf16.msra.mxu0 %v3000
        %3268 = vmatprep.subr.bf16.mxu0 %v2999
        %3269 = vmatpush2.bf16.msra.mxu0 %v2998
        %3270 = vmatprep.mubr.bf16.mxu0 %v2331
        %3271 = vmatmul.mubr.bf16.gmra.mxu0 %v2330
        %v3272 = vpop.f32.mrf.mxu0
        %v3273 = vadd.f32 %v2591, %v3272
        %v3274 = vpop.f32.mrf.mxu0
        %v3275 = vadd.f32 %v2595, %v3274
        %v3276 = vpop.f32.mrf.mxu0
        %v3277 = vadd.f32 %v2591, %v3276
        %v3278 = vpop.f32.mrf.mxu0
        %v3279 = vadd.f32 %v2595, %v3278
        %3280 = vmatprep.mubr.bf16.mxu0 %v2339
        %3281 = vmatmul.mubr.bf16.gmra.mxu0 %v2338
        %v3282 = vpop.f32.mrf.mxu0
        %v3283 = vadd.f32 %v2591, %v3282
        %v3284 = vpop.f32.mrf.mxu0
        %v3285 = vadd.f32 %v2595, %v3284
        %v3286 = vpop.f32.mrf.mxu0
        %v3287 = vadd.f32 %v2591, %v3286
        %v3288 = vpop.f32.mrf.mxu0
        %v3289 = vadd.f32 %v2595, %v3288
        %3290 = vmatprep.mubr.bf16.mxu0 %v2347
        %3291 = vmatmul.mubr.bf16.gmra.mxu0 %v2346
        %v3292 = vpop.f32.mrf.mxu0
        %v3293 = vadd.f32 %v2591, %v3292
        %v3294 = vpop.f32.mrf.mxu0
        %v3295 = vadd.f32 %v2595, %v3294
        %v3296 = vpop.f32.mrf.mxu0
        %v3297 = vadd.f32 %v2591, %v3296
        %v3298 = vpop.f32.mrf.mxu0
        %v3299 = vadd.f32 %v2595, %v3298
        %3300 = vmatprep.mubr.bf16.mxu0 %v2355
        %3301 = vmatmul.mubr.bf16.gmra.mxu0 %v2354
        %v3302 = vpop.f32.mrf.mxu0
        %v3303 = vadd.f32 %v2591, %v3302
        %v3304 = vpop.f32.mrf.mxu0
        %v3305 = vadd.f32 %v2595, %v3304
        %v3306 = vpop.f32.mrf.mxu0
        %v3307 = vadd.f32 %v2591, %v3306
        %v3308 = vpop.f32.mrf.mxu0
        %v3309 = vadd.f32 %v2595, %v3308
        %3310 = vmatprep.mubr.bf16.mxu0 %v2363
        %3311 = vmatmul.mubr.bf16.gmra.mxu0 %v2362
        %v3312 = vpop.f32.mrf.mxu0
        %v3313 = vadd.f32 %v2591, %v3312
        %v3314 = vpop.f32.mrf.mxu0
        %v3315 = vadd.f32 %v2595, %v3314
        %v3316 = vpop.f32.mrf.mxu0
        %v3317 = vadd.f32 %v2591, %v3316
        %v3318 = vpop.f32.mrf.mxu0
        %v3319 = vadd.f32 %v2595, %v3318
        %3320 = vmatprep.mubr.bf16.mxu0 %v2371
        %3321 = vmatmul.mubr.bf16.gmra.mxu0 %v2370
        %v3322 = vpop.f32.mrf.mxu0
        %v3323 = vadd.f32 %v2591, %v3322
        %v3324 = vpop.f32.mrf.mxu0
        %v3325 = vadd.f32 %v2595, %v3324
        %v3326 = vpop.f32.mrf.mxu0
        %v3327 = vadd.f32 %v2591, %v3326
        %v3328 = vpop.f32.mrf.mxu0
        %v3329 = vadd.f32 %v2595, %v3328
        %3330 = vmatprep.mubr.bf16.mxu0 %v2379
        %3331 = vmatmul.mubr.bf16.gmra.mxu0 %v2378
        %v3332 = vpop.f32.mrf.mxu0
        %v3333 = vadd.f32 %v2591, %v3332
        %v3334 = vpop.f32.mrf.mxu0
        %v3335 = vadd.f32 %v2595, %v3334
        %v3336 = vpop.f32.mrf.mxu0
        %v3337 = vadd.f32 %v2591, %v3336
        %v3338 = vpop.f32.mrf.mxu0
        %v3339 = vadd.f32 %v2595, %v3338
        %3340 = vmatprep.mubr.bf16.mxu0 %v2387
        %3341 = vmatmul.mubr.bf16.gmra.mxu0 %v2386
        %v3342 = vpop.f32.mrf.mxu0
        %v3343 = vadd.f32 %v2591, %v3342
        %v3344 = vpop.f32.mrf.mxu0
        %v3345 = vadd.f32 %v2595, %v3344
        %v3346 = vpop.f32.mrf.mxu0
        %v3347 = vadd.f32 %v2591, %v3346
        %v3348 = vpop.f32.mrf.mxu0
        %v3349 = vadd.f32 %v2595, %v3348
        %3350 = vmatprep.mubr.bf16.mxu0 %v2395
        %3351 = vmatmul.mubr.bf16.gmra.mxu0 %v2394
        %v3352 = vpop.f32.mrf.mxu0
        %v3353 = vadd.f32 %v2591, %v3352
        %v3354 = vpop.f32.mrf.mxu0
        %v3355 = vadd.f32 %v2595, %v3354
        %v3356 = vpop.f32.mrf.mxu0
        %v3357 = vadd.f32 %v2591, %v3356
        %v3358 = vpop.f32.mrf.mxu0
        %v3359 = vadd.f32 %v2595, %v3358
        %3360 = vmatprep.mubr.bf16.mxu0 %v2403
        %3361 = vmatmul.mubr.bf16.gmra.mxu0 %v2402
        %v3362 = vpop.f32.mrf.mxu0
        %v3363 = vadd.f32 %v2591, %v3362
        %v3364 = vpop.f32.mrf.mxu0
        %v3365 = vadd.f32 %v2595, %v3364
        %v3366 = vpop.f32.mrf.mxu0
        %v3367 = vadd.f32 %v2591, %v3366
        %v3368 = vpop.f32.mrf.mxu0
        %v3369 = vadd.f32 %v2595, %v3368
        %3370 = vmatprep.mubr.bf16.mxu0 %v2411
        %3371 = vmatmul.mubr.bf16.gmra.mxu0 %v2410
        %v3372 = vpop.f32.mrf.mxu0
        %v3373 = vadd.f32 %v2591, %v3372
        %v3374 = vpop.f32.mrf.mxu0
        %v3375 = vadd.f32 %v2595, %v3374
        %v3376 = vpop.f32.mrf.mxu0
        %v3377 = vadd.f32 %v2591, %v3376
        %v3378 = vpop.f32.mrf.mxu0
        %v3379 = vadd.f32 %v2595, %v3378
        %3380 = vmatprep.mubr.bf16.mxu0 %v2419
        %3381 = vmatmul.mubr.bf16.gmra.mxu0 %v2418
        %v3382 = vpop.f32.mrf.mxu0
        %v3383 = vadd.f32 %v2591, %v3382
        %v3384 = vpop.f32.mrf.mxu0
        %v3385 = vadd.f32 %v2595, %v3384
        %v3386 = vpop.f32.mrf.mxu0
        %v3387 = vadd.f32 %v2591, %v3386
        %v3388 = vpop.f32.mrf.mxu0
        %v3389 = vadd.f32 %v2595, %v3388
        %3390 = vmatprep.mubr.bf16.mxu0 %v2427
        %3391 = vmatmul.mubr.bf16.gmra.mxu0 %v2426
        %v3392 = vpop.f32.mrf.mxu0
        %v3393 = vadd.f32 %v2591, %v3392
        %v3394 = vpop.f32.mrf.mxu0
        %v3395 = vadd.f32 %v2595, %v3394
        %v3396 = vpop.f32.mrf.mxu0
        %v3397 = vadd.f32 %v2591, %v3396
        %v3398 = vpop.f32.mrf.mxu0
        %v3399 = vadd.f32 %v2595, %v3398
        %3400 = vmatprep.mubr.bf16.mxu0 %v2435
        %3401 = vmatmul.mubr.bf16.gmra.mxu0 %v2434
        %v3402 = vpop.f32.mrf.mxu0
        %v3403 = vadd.f32 %v2591, %v3402
        %v3404 = vpop.f32.mrf.mxu0
        %v3405 = vadd.f32 %v2595, %v3404
        %v3406 = vpop.f32.mrf.mxu0
        %v3407 = vadd.f32 %v2591, %v3406
        %v3408 = vpop.f32.mrf.mxu0
        %v3409 = vadd.f32 %v2595, %v3408
        %3410 = vmatprep.mubr.bf16.mxu0 %v2443
        %3411 = vmatmul.mubr.bf16.gmra.mxu0 %v2442
        %v3412 = vpop.f32.mrf.mxu0
        %v3413 = vadd.f32 %v2591, %v3412
        %v3414 = vpop.f32.mrf.mxu0
        %v3415 = vadd.f32 %v2595, %v3414
        %v3416 = vpop.f32.mrf.mxu0
        %v3417 = vadd.f32 %v2591, %v3416
        %v3418 = vpop.f32.mrf.mxu0
        %v3419 = vadd.f32 %v2595, %v3418
        %3420 = vmatprep.mubr.bf16.mxu0 %v2451
        %3421 = vmatmul.mubr.bf16.gmra.mxu0 %v2450
        %v3422 = vpop.f32.mrf.mxu0
        %v3423 = vadd.f32 %v2591, %v3422
        %v3424 = vpop.f32.mrf.mxu0
        %v3425 = vadd.f32 %v2595, %v3424
        %v3426 = vpop.f32.mrf.mxu0
        %v3427 = vadd.f32 %v2591, %v3426
        %v3428 = vpop.f32.mrf.mxu0
        %v3429 = vadd.f32 %v2595, %v3428
        %3430 = vdwg.mxu0
        %3431 = vmatprep.subr.bf16.mxu0 %v3029
        %3432 = vmatpush1.bf16.msra.mxu0 %v3028
        %3433 = vmatprep.subr.bf16.mxu0 %v3027
        %3434 = vmatpush1.bf16.msra.mxu0 %v3026
        %3435 = vmatprep.subr.bf16.mxu0 %v3025
        %3436 = vmatpush1.bf16.msra.mxu0 %v3024
        %3437 = vmatprep.subr.bf16.mxu0 %v3023
        %3438 = vmatpush1.bf16.msra.mxu0 %v3022
        %3439 = vmatprep.subr.bf16.mxu0 %v3021
        %3440 = vmatpush1.bf16.msra.mxu0 %v3020
        %3441 = vmatprep.subr.bf16.mxu0 %v3019
        %3442 = vmatpush1.bf16.msra.mxu0 %v3018
        %3443 = vmatprep.subr.bf16.mxu0 %v3017
        %3444 = vmatpush1.bf16.msra.mxu0 %v3016
        %3445 = vmatprep.subr.bf16.mxu0 %v3015
        %3446 = vmatpush1.bf16.msra.mxu0 %v3014
        %3447 = vmatprep.subr.bf16.mxu0 %v3045
        %3448 = vmatpush2.bf16.msra.mxu0 %v3044
        %3449 = vmatprep.subr.bf16.mxu0 %v3043
        %3450 = vmatpush2.bf16.msra.mxu0 %v3042
        %3451 = vmatprep.subr.bf16.mxu0 %v3041
        %3452 = vmatpush2.bf16.msra.mxu0 %v3040
        %3453 = vmatprep.subr.bf16.mxu0 %v3039
        %3454 = vmatpush2.bf16.msra.mxu0 %v3038
        %3455 = vmatprep.subr.bf16.mxu0 %v3037
        %3456 = vmatpush2.bf16.msra.mxu0 %v3036
        %3457 = vmatprep.subr.bf16.mxu0 %v3035
        %3458 = vmatpush2.bf16.msra.mxu0 %v3034
        %3459 = vmatprep.subr.bf16.mxu0 %v3033
        %3460 = vmatpush2.bf16.msra.mxu0 %v3032
        %3461 = vmatprep.subr.bf16.mxu0 %v3031
        %3462 = vmatpush2.bf16.msra.mxu0 %v3030
        %3463 = vmatprep.mubr.bf16.mxu0 %v2333
        %3464 = vmatmul.mubr.bf16.gmra.mxu0 %v2332
        %v3465 = vpop.f32.mrf.mxu0
        %v3466 = vadd.f32 %v3273, %v3465
        %v3467 = vpop.f32.mrf.mxu0
        %v3468 = vadd.f32 %v3275, %v3467
        %v3469 = vpop.f32.mrf.mxu0
        %v3470 = vadd.f32 %v3277, %v3469
        %v3471 = vpop.f32.mrf.mxu0
        %v3472 = vadd.f32 %v3279, %v3471
        %3473 = vmatprep.mubr.bf16.mxu0 %v2341
        %3474 = vmatmul.mubr.bf16.gmra.mxu0 %v2340
        %v3475 = vpop.f32.mrf.mxu0
        %v3476 = vadd.f32 %v3283, %v3475
        %v3477 = vpop.f32.mrf.mxu0
        %v3478 = vadd.f32 %v3285, %v3477
        %v3479 = vpop.f32.mrf.mxu0
        %v3480 = vadd.f32 %v3287, %v3479
        %v3481 = vpop.f32.mrf.mxu0
        %v3482 = vadd.f32 %v3289, %v3481
        %3483 = vmatprep.mubr.bf16.mxu0 %v2349
        %3484 = vmatmul.mubr.bf16.gmra.mxu0 %v2348
        %v3485 = vpop.f32.mrf.mxu0
        %v3486 = vadd.f32 %v3293, %v3485
        %v3487 = vpop.f32.mrf.mxu0
        %v3488 = vadd.f32 %v3295, %v3487
        %v3489 = vpop.f32.mrf.mxu0
        %v3490 = vadd.f32 %v3297, %v3489
        %v3491 = vpop.f32.mrf.mxu0
        %v3492 = vadd.f32 %v3299, %v3491
        %3493 = vmatprep.mubr.bf16.mxu0 %v2357
        %3494 = vmatmul.mubr.bf16.gmra.mxu0 %v2356
        %v3495 = vpop.f32.mrf.mxu0
        %v3496 = vadd.f32 %v3303, %v3495
        %v3497 = vpop.f32.mrf.mxu0
        %v3498 = vadd.f32 %v3305, %v3497
        %v3499 = vpop.f32.mrf.mxu0
        %v3500 = vadd.f32 %v3307, %v3499
        %v3501 = vpop.f32.mrf.mxu0
        %v3502 = vadd.f32 %v3309, %v3501
        %3503 = vmatprep.mubr.bf16.mxu0 %v2365
        %3504 = vmatmul.mubr.bf16.gmra.mxu0 %v2364
        %v3505 = vpop.f32.mrf.mxu0
        %v3506 = vadd.f32 %v3313, %v3505
        %v3507 = vpop.f32.mrf.mxu0
        %v3508 = vadd.f32 %v3315, %v3507
        %v3509 = vpop.f32.mrf.mxu0
        %v3510 = vadd.f32 %v3317, %v3509
        %v3511 = vpop.f32.mrf.mxu0
        %v3512 = vadd.f32 %v3319, %v3511
        %3513 = vmatprep.mubr.bf16.mxu0 %v2373
        %3514 = vmatmul.mubr.bf16.gmra.mxu0 %v2372
        %v3515 = vpop.f32.mrf.mxu0
        %v3516 = vadd.f32 %v3323, %v3515
        %v3517 = vpop.f32.mrf.mxu0
        %v3518 = vadd.f32 %v3325, %v3517
        %v3519 = vpop.f32.mrf.mxu0
        %v3520 = vadd.f32 %v3327, %v3519
        %v3521 = vpop.f32.mrf.mxu0
        %v3522 = vadd.f32 %v3329, %v3521
        %3523 = vmatprep.mubr.bf16.mxu0 %v2381
        %3524 = vmatmul.mubr.bf16.gmra.mxu0 %v2380
        %v3525 = vpop.f32.mrf.mxu0
        %v3526 = vadd.f32 %v3333, %v3525
        %v3527 = vpop.f32.mrf.mxu0
        %v3528 = vadd.f32 %v3335, %v3527
        %v3529 = vpop.f32.mrf.mxu0
        %v3530 = vadd.f32 %v3337, %v3529
        %v3531 = vpop.f32.mrf.mxu0
        %v3532 = vadd.f32 %v3339, %v3531
        %3533 = vmatprep.mubr.bf16.mxu0 %v2389
        %3534 = vmatmul.mubr.bf16.gmra.mxu0 %v2388
        %v3535 = vpop.f32.mrf.mxu0
        %v3536 = vadd.f32 %v3343, %v3535
        %v3537 = vpop.f32.mrf.mxu0
        %v3538 = vadd.f32 %v3345, %v3537
        %v3539 = vpop.f32.mrf.mxu0
        %v3540 = vadd.f32 %v3347, %v3539
        %v3541 = vpop.f32.mrf.mxu0
        %v3542 = vadd.f32 %v3349, %v3541
        %3543 = vmatprep.mubr.bf16.mxu0 %v2397
        %3544 = vmatmul.mubr.bf16.gmra.mxu0 %v2396
        %v3545 = vpop.f32.mrf.mxu0
        %v3546 = vadd.f32 %v3353, %v3545
        %v3547 = vpop.f32.mrf.mxu0
        %v3548 = vadd.f32 %v3355, %v3547
        %v3549 = vpop.f32.mrf.mxu0
        %v3550 = vadd.f32 %v3357, %v3549
        %v3551 = vpop.f32.mrf.mxu0
        %v3552 = vadd.f32 %v3359, %v3551
        %3553 = vmatprep.mubr.bf16.mxu0 %v2405
        %3554 = vmatmul.mubr.bf16.gmra.mxu0 %v2404
        %v3555 = vpop.f32.mrf.mxu0
        %v3556 = vadd.f32 %v3363, %v3555
        %v3557 = vpop.f32.mrf.mxu0
        %v3558 = vadd.f32 %v3365, %v3557
        %v3559 = vpop.f32.mrf.mxu0
        %v3560 = vadd.f32 %v3367, %v3559
        %v3561 = vpop.f32.mrf.mxu0
        %v3562 = vadd.f32 %v3369, %v3561
        %3563 = vmatprep.mubr.bf16.mxu0 %v2413
        %3564 = vmatmul.mubr.bf16.gmra.mxu0 %v2412
        %v3565 = vpop.f32.mrf.mxu0
        %v3566 = vadd.f32 %v3373, %v3565
        %v3567 = vpop.f32.mrf.mxu0
        %v3568 = vadd.f32 %v3375, %v3567
        %v3569 = vpop.f32.mrf.mxu0
        %v3570 = vadd.f32 %v3377, %v3569
        %v3571 = vpop.f32.mrf.mxu0
        %v3572 = vadd.f32 %v3379, %v3571
        %3573 = vmatprep.mubr.bf16.mxu0 %v2421
        %3574 = vmatmul.mubr.bf16.gmra.mxu0 %v2420
        %v3575 = vpop.f32.mrf.mxu0
        %v3576 = vadd.f32 %v3383, %v3575
        %v3577 = vpop.f32.mrf.mxu0
        %v3578 = vadd.f32 %v3385, %v3577
        %v3579 = vpop.f32.mrf.mxu0
        %v3580 = vadd.f32 %v3387, %v3579
        %v3581 = vpop.f32.mrf.mxu0
        %v3582 = vadd.f32 %v3389, %v3581
        %3583 = vmatprep.mubr.bf16.mxu0 %v2429
        %3584 = vmatmul.mubr.bf16.gmra.mxu0 %v2428
        %v3585 = vpop.f32.mrf.mxu0
        %v3586 = vadd.f32 %v3393, %v3585
        %v3587 = vpop.f32.mrf.mxu0
        %v3588 = vadd.f32 %v3395, %v3587
        %v3589 = vpop.f32.mrf.mxu0
        %v3590 = vadd.f32 %v3397, %v3589
        %v3591 = vpop.f32.mrf.mxu0
        %v3592 = vadd.f32 %v3399, %v3591
        %3593 = vmatprep.mubr.bf16.mxu0 %v2437
        %3594 = vmatmul.mubr.bf16.gmra.mxu0 %v2436
        %v3595 = vpop.f32.mrf.mxu0
        %v3596 = vadd.f32 %v3403, %v3595
        %v3597 = vpop.f32.mrf.mxu0
        %v3598 = vadd.f32 %v3405, %v3597
        %v3599 = vpop.f32.mrf.mxu0
        %v3600 = vadd.f32 %v3407, %v3599
        %v3601 = vpop.f32.mrf.mxu0
        %v3602 = vadd.f32 %v3409, %v3601
        %3603 = vmatprep.mubr.bf16.mxu0 %v2445
        %3604 = vmatmul.mubr.bf16.gmra.mxu0 %v2444
        %v3605 = vpop.f32.mrf.mxu0
        %v3606 = vadd.f32 %v3413, %v3605
        %v3607 = vpop.f32.mrf.mxu0
        %v3608 = vadd.f32 %v3415, %v3607
        %v3609 = vpop.f32.mrf.mxu0
        %v3610 = vadd.f32 %v3417, %v3609
        %v3611 = vpop.f32.mrf.mxu0
        %v3612 = vadd.f32 %v3419, %v3611
        %3613 = vmatprep.mubr.bf16.mxu0 %v2453
        %3614 = vmatmul.mubr.bf16.gmra.mxu0 %v2452
        %v3615 = vpop.f32.mrf.mxu0
        %v3616 = vadd.f32 %v3423, %v3615
        %v3617 = vpop.f32.mrf.mxu0
        %v3618 = vadd.f32 %v3425, %v3617
        %v3619 = vpop.f32.mrf.mxu0
        %v3620 = vadd.f32 %v3427, %v3619
        %v3621 = vpop.f32.mrf.mxu0
        %v3622 = vadd.f32 %v3429, %v3621
        %3623 = vdwg.mxu0
        %3624 = vmatprep.subr.bf16.mxu0 %v3061
        %3625 = vmatpush1.bf16.msra.mxu0 %v3060
        %3626 = vmatprep.subr.bf16.mxu0 %v3059
        %3627 = vmatpush1.bf16.msra.mxu0 %v3058
        %3628 = vmatprep.subr.bf16.mxu0 %v3057
        %3629 = vmatpush1.bf16.msra.mxu0 %v3056
        %3630 = vmatprep.subr.bf16.mxu0 %v3055
        %3631 = vmatpush1.bf16.msra.mxu0 %v3054
        %3632 = vmatprep.subr.bf16.mxu0 %v3053
        %3633 = vmatpush1.bf16.msra.mxu0 %v3052
        %3634 = vmatprep.subr.bf16.mxu0 %v3051
        %3635 = vmatpush1.bf16.msra.mxu0 %v3050
        %3636 = vmatprep.subr.bf16.mxu0 %v3049
        %3637 = vmatpush1.bf16.msra.mxu0 %v3048
        %3638 = vmatprep.subr.bf16.mxu0 %v3047
        %3639 = vmatpush1.bf16.msra.mxu0 %v3046
        %3640 = vmatprep.subr.bf16.mxu0 %v3077
        %3641 = vmatpush2.bf16.msra.mxu0 %v3076
        %3642 = vmatprep.subr.bf16.mxu0 %v3075
        %3643 = vmatpush2.bf16.msra.mxu0 %v3074
        %3644 = vmatprep.subr.bf16.mxu0 %v3073
        %3645 = vmatpush2.bf16.msra.mxu0 %v3072
        %3646 = vmatprep.subr.bf16.mxu0 %v3071
        %3647 = vmatpush2.bf16.msra.mxu0 %v3070
        %3648 = vmatprep.subr.bf16.mxu0 %v3069
        %3649 = vmatpush2.bf16.msra.mxu0 %v3068
        %3650 = vmatprep.subr.bf16.mxu0 %v3067
        %3651 = vmatpush2.bf16.msra.mxu0 %v3066
        %3652 = vmatprep.subr.bf16.mxu0 %v3065
        %3653 = vmatpush2.bf16.msra.mxu0 %v3064
        %3654 = vmatprep.subr.bf16.mxu0 %v3063
        %3655 = vmatpush2.bf16.msra.mxu0 %v3062
        %3656 = vmatprep.mubr.bf16.mxu0 %v2335
        %3657 = vmatmul.mubr.bf16.gmra.mxu0 %v2334
        %v3658 = vpop.f32.mrf.mxu0
        %v3659 = vadd.f32 %v3466, %v3658
        %v3660 = vpop.f32.mrf.mxu0
        %v3661 = vadd.f32 %v3468, %v3660
        %v3662 = vpop.f32.mrf.mxu0
        %v3663 = vadd.f32 %v3470, %v3662
        %v3664 = vpop.f32.mrf.mxu0
        %v3665 = vadd.f32 %v3472, %v3664
        %3666 = vmatprep.mubr.bf16.mxu0 %v2343
        %3667 = vmatmul.mubr.bf16.gmra.mxu0 %v2342
        %v3668 = vpop.f32.mrf.mxu0
        %v3669 = vadd.f32 %v3476, %v3668
        %v3670 = vpop.f32.mrf.mxu0
        %v3671 = vadd.f32 %v3478, %v3670
        %v3672 = vpop.f32.mrf.mxu0
        %v3673 = vadd.f32 %v3480, %v3672
        %v3674 = vpop.f32.mrf.mxu0
        %v3675 = vadd.f32 %v3482, %v3674
        %3676 = vmatprep.mubr.bf16.mxu0 %v2351
        %3677 = vmatmul.mubr.bf16.gmra.mxu0 %v2350
        %v3678 = vpop.f32.mrf.mxu0
        %v3679 = vadd.f32 %v3486, %v3678
        %v3680 = vpop.f32.mrf.mxu0
        %v3681 = vadd.f32 %v3488, %v3680
        %v3682 = vpop.f32.mrf.mxu0
        %v3683 = vadd.f32 %v3490, %v3682
        %v3684 = vpop.f32.mrf.mxu0
        %v3685 = vadd.f32 %v3492, %v3684
        %3686 = vmatprep.mubr.bf16.mxu0 %v2359
        %3687 = vmatmul.mubr.bf16.gmra.mxu0 %v2358
        %v3688 = vpop.f32.mrf.mxu0
        %v3689 = vadd.f32 %v3496, %v3688
        %v3690 = vpop.f32.mrf.mxu0
        %v3691 = vadd.f32 %v3498, %v3690
        %v3692 = vpop.f32.mrf.mxu0
        %v3693 = vadd.f32 %v3500, %v3692
        %v3694 = vpop.f32.mrf.mxu0
        %v3695 = vadd.f32 %v3502, %v3694
        %3696 = vmatprep.mubr.bf16.mxu0 %v2367
        %3697 = vmatmul.mubr.bf16.gmra.mxu0 %v2366
        %v3698 = vpop.f32.mrf.mxu0
        %v3699 = vadd.f32 %v3506, %v3698
        %v3700 = vpop.f32.mrf.mxu0
        %v3701 = vadd.f32 %v3508, %v3700
        %v3702 = vpop.f32.mrf.mxu0
        %v3703 = vadd.f32 %v3510, %v3702
        %v3704 = vpop.f32.mrf.mxu0
        %v3705 = vadd.f32 %v3512, %v3704
        %3706 = vmatprep.mubr.bf16.mxu0 %v2375
        %3707 = vmatmul.mubr.bf16.gmra.mxu0 %v2374
        %v3708 = vpop.f32.mrf.mxu0
        %v3709 = vadd.f32 %v3516, %v3708
        %v3710 = vpop.f32.mrf.mxu0
        %v3711 = vadd.f32 %v3518, %v3710
        %v3712 = vpop.f32.mrf.mxu0
        %v3713 = vadd.f32 %v3520, %v3712
        %v3714 = vpop.f32.mrf.mxu0
        %v3715 = vadd.f32 %v3522, %v3714
        %3716 = vmatprep.mubr.bf16.mxu0 %v2383
        %3717 = vmatmul.mubr.bf16.gmra.mxu0 %v2382
        %v3718 = vpop.f32.mrf.mxu0
        %v3719 = vadd.f32 %v3526, %v3718
        %v3720 = vpop.f32.mrf.mxu0
        %v3721 = vadd.f32 %v3528, %v3720
        %v3722 = vpop.f32.mrf.mxu0
        %v3723 = vadd.f32 %v3530, %v3722
        %v3724 = vpop.f32.mrf.mxu0
        %v3725 = vadd.f32 %v3532, %v3724
        %3726 = vmatprep.mubr.bf16.mxu0 %v2391
        %3727 = vmatmul.mubr.bf16.gmra.mxu0 %v2390
        %v3728 = vpop.f32.mrf.mxu0
        %v3729 = vadd.f32 %v3536, %v3728
        %v3730 = vpop.f32.mrf.mxu0
        %v3731 = vadd.f32 %v3538, %v3730
        %v3732 = vpop.f32.mrf.mxu0
        %v3733 = vadd.f32 %v3540, %v3732
        %v3734 = vpop.f32.mrf.mxu0
        %v3735 = vadd.f32 %v3542, %v3734
        %3736 = vmatprep.mubr.bf16.mxu0 %v2399
        %3737 = vmatmul.mubr.bf16.gmra.mxu0 %v2398
        %v3738 = vpop.f32.mrf.mxu0
        %v3739 = vadd.f32 %v3546, %v3738
        %v3740 = vpop.f32.mrf.mxu0
        %v3741 = vadd.f32 %v3548, %v3740
        %v3742 = vpop.f32.mrf.mxu0
        %v3743 = vadd.f32 %v3550, %v3742
        %v3744 = vpop.f32.mrf.mxu0
        %v3745 = vadd.f32 %v3552, %v3744
        %3746 = vmatprep.mubr.bf16.mxu0 %v2407
        %3747 = vmatmul.mubr.bf16.gmra.mxu0 %v2406
        %v3748 = vpop.f32.mrf.mxu0
        %v3749 = vadd.f32 %v3556, %v3748
        %v3750 = vpop.f32.mrf.mxu0
        %v3751 = vadd.f32 %v3558, %v3750
        %v3752 = vpop.f32.mrf.mxu0
        %v3753 = vadd.f32 %v3560, %v3752
        %v3754 = vpop.f32.mrf.mxu0
        %v3755 = vadd.f32 %v3562, %v3754
        %3756 = vmatprep.mubr.bf16.mxu0 %v2415
        %3757 = vmatmul.mubr.bf16.gmra.mxu0 %v2414
        %v3758 = vpop.f32.mrf.mxu0
        %v3759 = vadd.f32 %v3566, %v3758
        %v3760 = vpop.f32.mrf.mxu0
        %v3761 = vadd.f32 %v3568, %v3760
        %v3762 = vpop.f32.mrf.mxu0
        %v3763 = vadd.f32 %v3570, %v3762
        %v3764 = vpop.f32.mrf.mxu0
        %v3765 = vadd.f32 %v3572, %v3764
        %3766 = vmatprep.mubr.bf16.mxu0 %v2423
        %3767 = vmatmul.mubr.bf16.gmra.mxu0 %v2422
        %v3768 = vpop.f32.mrf.mxu0
        %v3769 = vadd.f32 %v3576, %v3768
        %v3770 = vpop.f32.mrf.mxu0
        %v3771 = vadd.f32 %v3578, %v3770
        %v3772 = vpop.f32.mrf.mxu0
        %v3773 = vadd.f32 %v3580, %v3772
        %v3774 = vpop.f32.mrf.mxu0
        %v3775 = vadd.f32 %v3582, %v3774
        %3776 = vmatprep.mubr.bf16.mxu0 %v2431
        %3777 = vmatmul.mubr.bf16.gmra.mxu0 %v2430
        %v3778 = vpop.f32.mrf.mxu0
        %v3779 = vadd.f32 %v3586, %v3778
        %v3780 = vpop.f32.mrf.mxu0
        %v3781 = vadd.f32 %v3588, %v3780
        %v3782 = vpop.f32.mrf.mxu0
        %v3783 = vadd.f32 %v3590, %v3782
        %v3784 = vpop.f32.mrf.mxu0
        %v3785 = vadd.f32 %v3592, %v3784
        %3786 = vmatprep.mubr.bf16.mxu0 %v2439
        %3787 = vmatmul.mubr.bf16.gmra.mxu0 %v2438
        %v3788 = vpop.f32.mrf.mxu0
        %v3789 = vadd.f32 %v3596, %v3788
        %v3790 = vpop.f32.mrf.mxu0
        %v3791 = vadd.f32 %v3598, %v3790
        %v3792 = vpop.f32.mrf.mxu0
        %v3793 = vadd.f32 %v3600, %v3792
        %v3794 = vpop.f32.mrf.mxu0
        %v3795 = vadd.f32 %v3602, %v3794
        %3796 = vmatprep.mubr.bf16.mxu0 %v2447
        %3797 = vmatmul.mubr.bf16.gmra.mxu0 %v2446
        %v3798 = vpop.f32.mrf.mxu0
        %v3799 = vadd.f32 %v3606, %v3798
        %v3800 = vpop.f32.mrf.mxu0
        %v3801 = vadd.f32 %v3608, %v3800
        %v3802 = vpop.f32.mrf.mxu0
        %v3803 = vadd.f32 %v3610, %v3802
        %v3804 = vpop.f32.mrf.mxu0
        %v3805 = vadd.f32 %v3612, %v3804
        %3806 = vmatprep.mubr.bf16.mxu0 %v2455
        %3807 = vmatmul.mubr.bf16.gmra.mxu0 %v2454
        %v3808 = vpop.f32.mrf.mxu0
        %v3809 = vadd.f32 %v3616, %v3808
        %v3810 = vpop.f32.mrf.mxu0
        %v3811 = vadd.f32 %v3618, %v3810
        %v3812 = vpop.f32.mrf.mxu0
        %v3813 = vadd.f32 %v3620, %v3812
        %v3814 = vpop.f32.mrf.mxu0
        %v3815 = vadd.f32 %v3622, %v3814
        %3816 = vdwg.mxu0
        %3817 = vmatprep.subr.bf16.mxu0 %v3093
        %3818 = vmatpush1.bf16.msra.mxu0 %v3092
        %3819 = vmatprep.subr.bf16.mxu0 %v3091
        %3820 = vmatpush1.bf16.msra.mxu0 %v3090
        %3821 = vmatprep.subr.bf16.mxu0 %v3089
        %3822 = vmatpush1.bf16.msra.mxu0 %v3088
        %3823 = vmatprep.subr.bf16.mxu0 %v3087
        %3824 = vmatpush1.bf16.msra.mxu0 %v3086
        %3825 = vmatprep.subr.bf16.mxu0 %v3085
        %3826 = vmatpush1.bf16.msra.mxu0 %v3084
        %3827 = vmatprep.subr.bf16.mxu0 %v3083
        %3828 = vmatpush1.bf16.msra.mxu0 %v3082
        %3829 = vmatprep.subr.bf16.mxu0 %v3081
        %3830 = vmatpush1.bf16.msra.mxu0 %v3080
        %3831 = vmatprep.subr.bf16.mxu0 %v3079
        %3832 = vmatpush1.bf16.msra.mxu0 %v3078
        %3833 = vmatprep.subr.bf16.mxu0 %v3109
        %3834 = vmatpush2.bf16.msra.mxu0 %v3108
        %3835 = vmatprep.subr.bf16.mxu0 %v3107
        %3836 = vmatpush2.bf16.msra.mxu0 %v3106
        %3837 = vmatprep.subr.bf16.mxu0 %v3105
        %3838 = vmatpush2.bf16.msra.mxu0 %v3104
        %3839 = vmatprep.subr.bf16.mxu0 %v3103
        %3840 = vmatpush2.bf16.msra.mxu0 %v3102
        %3841 = vmatprep.subr.bf16.mxu0 %v3101
        %3842 = vmatpush2.bf16.msra.mxu0 %v3100
        %3843 = vmatprep.subr.bf16.mxu0 %v3099
        %3844 = vmatpush2.bf16.msra.mxu0 %v3098
        %3845 = vmatprep.subr.bf16.mxu0 %v3097
        %3846 = vmatpush2.bf16.msra.mxu0 %v3096
        %3847 = vmatprep.subr.bf16.mxu0 %v3095
        %3848 = vmatpush2.bf16.msra.mxu0 %v3094
        %3849 = vmatprep.mubr.bf16.mxu0 %v2337
        %3850 = vmatmul.mubr.bf16.gmra.mxu0 %v2336
        %v3851 = vpop.f32.mrf.mxu0
        %v3852 = vadd.f32 %v3659, %v3851
        %v3853 = vpop.f32.mrf.mxu0
        %v3854 = vadd.f32 %v3661, %v3853
        %v3855 = vpop.f32.mrf.mxu0
        %v3856 = vadd.f32 %v3663, %v3855
        %v3857 = vpop.f32.mrf.mxu0
        %v3858 = vadd.f32 %v3665, %v3857
        %3859 = vmatprep.mubr.bf16.mxu0 %v2345
        %3860 = vmatmul.mubr.bf16.gmra.mxu0 %v2344
        %v3861 = vpop.f32.mrf.mxu0
        %v3862 = vadd.f32 %v3669, %v3861
        %v3863 = vpop.f32.mrf.mxu0
        %v3864 = vadd.f32 %v3671, %v3863
        %v3865 = vpop.f32.mrf.mxu0
        %v3866 = vadd.f32 %v3673, %v3865
        %v3867 = vpop.f32.mrf.mxu0
        %v3868 = vadd.f32 %v3675, %v3867
        %3869 = vmatprep.mubr.bf16.mxu0 %v2353
        %3870 = vmatmul.mubr.bf16.gmra.mxu0 %v2352
        %v3871 = vpop.f32.mrf.mxu0
        %v3872 = vadd.f32 %v3679, %v3871
        %v3873 = vpop.f32.mrf.mxu0
        %v3874 = vadd.f32 %v3681, %v3873
        %v3875 = vpop.f32.mrf.mxu0
        %v3876 = vadd.f32 %v3683, %v3875
        %v3877 = vpop.f32.mrf.mxu0
        %v3878 = vadd.f32 %v3685, %v3877
        %3879 = vmatprep.mubr.bf16.mxu0 %v2361
        %3880 = vmatmul.mubr.bf16.gmra.mxu0 %v2360
        %v3881 = vpop.f32.mrf.mxu0
        %v3882 = vadd.f32 %v3689, %v3881
        %v3883 = vpop.f32.mrf.mxu0
        %v3884 = vadd.f32 %v3691, %v3883
        %v3885 = vpop.f32.mrf.mxu0
        %v3886 = vadd.f32 %v3693, %v3885
        %v3887 = vpop.f32.mrf.mxu0
        %v3888 = vadd.f32 %v3695, %v3887
        %3889 = vmatprep.mubr.bf16.mxu0 %v2369
        %3890 = vmatmul.mubr.bf16.gmra.mxu0 %v2368
        %v3891 = vpop.f32.mrf.mxu0
        %v3892 = vadd.f32 %v3699, %v3891
        %v3893 = vpop.f32.mrf.mxu0
        %v3894 = vadd.f32 %v3701, %v3893
        %v3895 = vpop.f32.mrf.mxu0
        %v3896 = vadd.f32 %v3703, %v3895
        %v3897 = vpop.f32.mrf.mxu0
        %v3898 = vadd.f32 %v3705, %v3897
        %3899 = vmatprep.mubr.bf16.mxu0 %v2377
        %3900 = vmatmul.mubr.bf16.gmra.mxu0 %v2376
        %v3901 = vpop.f32.mrf.mxu0
        %v3902 = vadd.f32 %v3709, %v3901
        %v3903 = vpop.f32.mrf.mxu0
        %v3904 = vadd.f32 %v3711, %v3903
        %v3905 = vpop.f32.mrf.mxu0
        %v3906 = vadd.f32 %v3713, %v3905
        %v3907 = vpop.f32.mrf.mxu0
        %v3908 = vadd.f32 %v3715, %v3907
        %3909 = vmatprep.mubr.bf16.mxu0 %v2385
        %3910 = vmatmul.mubr.bf16.gmra.mxu0 %v2384
        %v3911 = vpop.f32.mrf.mxu0
        %v3912 = vadd.f32 %v3719, %v3911
        %v3913 = vpop.f32.mrf.mxu0
        %v3914 = vadd.f32 %v3721, %v3913
        %v3915 = vpop.f32.mrf.mxu0
        %v3916 = vadd.f32 %v3723, %v3915
        %v3917 = vpop.f32.mrf.mxu0
        %v3918 = vadd.f32 %v3725, %v3917
        %3919 = vmatprep.mubr.bf16.mxu0 %v2393
        %3920 = vmatmul.mubr.bf16.gmra.mxu0 %v2392
        %v3921 = vpop.f32.mrf.mxu0
        %v3922 = vadd.f32 %v3729, %v3921
        %v3923 = vpop.f32.mrf.mxu0
        %v3924 = vadd.f32 %v3731, %v3923
        %v3925 = vpop.f32.mrf.mxu0
        %v3926 = vadd.f32 %v3733, %v3925
        %v3927 = vpop.f32.mrf.mxu0
        %v3928 = vadd.f32 %v3735, %v3927
        %3929 = vmatprep.mubr.bf16.mxu0 %v2401
        %3930 = vmatmul.mubr.bf16.gmra.mxu0 %v2400
        %v3931 = vpop.f32.mrf.mxu0
        %v3932 = vadd.f32 %v3739, %v3931
        %v3933 = vpop.f32.mrf.mxu0
        %v3934 = vadd.f32 %v3741, %v3933
        %v3935 = vpop.f32.mrf.mxu0
        %v3936 = vadd.f32 %v3743, %v3935
        %v3937 = vpop.f32.mrf.mxu0
        %v3938 = vadd.f32 %v3745, %v3937
        %3939 = vmatprep.mubr.bf16.mxu0 %v2409
        %3940 = vmatmul.mubr.bf16.gmra.mxu0 %v2408
        %v3941 = vpop.f32.mrf.mxu0
        %v3942 = vadd.f32 %v3749, %v3941
        %v3943 = vpop.f32.mrf.mxu0
        %v3944 = vadd.f32 %v3751, %v3943
        %v3945 = vpop.f32.mrf.mxu0
        %v3946 = vadd.f32 %v3753, %v3945
        %v3947 = vpop.f32.mrf.mxu0
        %v3948 = vadd.f32 %v3755, %v3947
        %3949 = vmatprep.mubr.bf16.mxu0 %v2417
        %3950 = vmatmul.mubr.bf16.gmra.mxu0 %v2416
        %v3951 = vpop.f32.mrf.mxu0
        %v3952 = vadd.f32 %v3759, %v3951
        %v3953 = vpop.f32.mrf.mxu0
        %v3954 = vadd.f32 %v3761, %v3953
        %v3955 = vpop.f32.mrf.mxu0
        %v3956 = vadd.f32 %v3763, %v3955
        %v3957 = vpop.f32.mrf.mxu0
        %v3958 = vadd.f32 %v3765, %v3957
        %3959 = vmatprep.mubr.bf16.mxu0 %v2425
        %3960 = vmatmul.mubr.bf16.gmra.mxu0 %v2424
        %v3961 = vpop.f32.mrf.mxu0
        %v3962 = vadd.f32 %v3769, %v3961
        %v3963 = vpop.f32.mrf.mxu0
        %v3964 = vadd.f32 %v3771, %v3963
        %v3965 = vpop.f32.mrf.mxu0
        %v3966 = vadd.f32 %v3773, %v3965
        %v3967 = vpop.f32.mrf.mxu0
        %v3968 = vadd.f32 %v3775, %v3967
        %3969 = vmatprep.mubr.bf16.mxu0 %v2433
        %3970 = vmatmul.mubr.bf16.gmra.mxu0 %v2432
        %v3971 = vpop.f32.mrf.mxu0
        %v3972 = vadd.f32 %v3779, %v3971
        %v3973 = vpop.f32.mrf.mxu0
        %v3974 = vadd.f32 %v3781, %v3973
        %v3975 = vpop.f32.mrf.mxu0
        %v3976 = vadd.f32 %v3783, %v3975
        %v3977 = vpop.f32.mrf.mxu0
        %v3978 = vadd.f32 %v3785, %v3977
        %3979 = vmatprep.mubr.bf16.mxu0 %v2441
        %3980 = vmatmul.mubr.bf16.gmra.mxu0 %v2440
        %v3981 = vpop.f32.mrf.mxu0
        %v3982 = vadd.f32 %v3789, %v3981
        %v3983 = vpop.f32.mrf.mxu0
        %v3984 = vadd.f32 %v3791, %v3983
        %v3985 = vpop.f32.mrf.mxu0
        %v3986 = vadd.f32 %v3793, %v3985
        %v3987 = vpop.f32.mrf.mxu0
        %v3988 = vadd.f32 %v3795, %v3987
        %3989 = vmatprep.mubr.bf16.mxu0 %v2449
        %3990 = vmatmul.mubr.bf16.gmra.mxu0 %v2448
        %v3991 = vpop.f32.mrf.mxu0
        %v3992 = vadd.f32 %v3799, %v3991
        %v3993 = vpop.f32.mrf.mxu0
        %v3994 = vadd.f32 %v3801, %v3993
        %v3995 = vpop.f32.mrf.mxu0
        %v3996 = vadd.f32 %v3803, %v3995
        %v3997 = vpop.f32.mrf.mxu0
        %v3998 = vadd.f32 %v3805, %v3997
        %3999 = vmatprep.mubr.bf16.mxu0 %v2457
        %4000 = vmatmul.mubr.bf16.gmra.mxu0 %v2456
        %v4001 = vpop.f32.mrf.mxu0
        %v4002 = vadd.f32 %v3809, %v4001
        %v4003 = vpop.f32.mrf.mxu0
        %v4004 = vadd.f32 %v3811, %v4003
        %v4005 = vpop.f32.mrf.mxu0
        %v4006 = vadd.f32 %v3813, %v4005
        %v4007 = vpop.f32.mrf.mxu0
        %v4008 = vadd.f32 %v3815, %v4007
        %4009 = vdwg.mxu0
        %4010 = vst [vmem:[%s297] sm:$0xff] %v3852
        %4011 = vst [vmem:[%s297 + $0x8] sm:$0xff] %v3854
        %4012 = vst [vmem:[%s297 + $0x10] sm:$0xff] %v3856
        %4013 = vst [vmem:[%s297 + $0x18] sm:$0xff] %v3858
        %4014 = vst [vmem:[%s297 + $0x20] sm:$0xff] %v3862
        %4015 = vst [vmem:[%s297 + $0x28] sm:$0xff] %v3864
        %4016 = vst [vmem:[%s297 + $0x30] sm:$0xff] %v3866
        %4017 = vst [vmem:[%s297 + $0x38] sm:$0xff] %v3868
        %4018 = vst [vmem:[%s297 + $0x40] sm:$0xff] %v3872
        %4019 = vst [vmem:[%s297 + $0x48] sm:$0xff] %v3874
        %4020 = vst [vmem:[%s297 + $0x50] sm:$0xff] %v3876
        %4021 = vst [vmem:[%s297 + $0x58] sm:$0xff] %v3878
        %4022 = vst [vmem:[%s297 + $0x60] sm:$0xff] %v3882
        %4023 = vst [vmem:[%s297 + $0x68] sm:$0xff] %v3884
        %4024 = vst [vmem:[%s297 + $0x70] sm:$0xff] %v3886
        %4025 = vst [vmem:[%s297 + $0x78] sm:$0xff] %v3888
        %4026 = vst [vmem:[%s297 + $0x80] sm:$0xff] %v3892
        %4027 = vst [vmem:[%s297 + $0x88] sm:$0xff] %v3894
        %4028 = vst [vmem:[%s297 + $0x90] sm:$0xff] %v3896
        %4029 = vst [vmem:[%s297 + $0x98] sm:$0xff] %v3898
        %4030 = vst [vmem:[%s297 + $0xa0] sm:$0xff] %v3902
        %4031 = vst [vmem:[%s297 + $0xa8] sm:$0xff] %v3904
        %4032 = vst [vmem:[%s297 + $0xb0] sm:$0xff] %v3906
        %4033 = vst [vmem:[%s297 + $0xb8] sm:$0xff] %v3908
        %4034 = vst [vmem:[%s297 + $0xc0] sm:$0xff] %v3912
        %4035 = vst [vmem:[%s297 + $0xc8] sm:$0xff] %v3914
        %4036 = vst [vmem:[%s297 + $0xd0] sm:$0xff] %v3916
        %4037 = vst [vmem:[%s297 + $0xd8] sm:$0xff] %v3918
        %4038 = vst [vmem:[%s297 + $0xe0] sm:$0xff] %v3922
        %4039 = vst [vmem:[%s297 + $0xe8] sm:$0xff] %v3924
        %4040 = vst [vmem:[%s297 + $0xf0] sm:$0xff] %v3926
        %4041 = vst [vmem:[%s297 + $0xf8] sm:$0xff] %v3928
        %4042 = vst [vmem:[%s297 + $0x100] sm:$0xff] %v3932
        %4043 = vst [vmem:[%s297 + $0x108] sm:$0xff] %v3934
        %4044 = vst [vmem:[%s297 + $0x110] sm:$0xff] %v3936
        %4045 = vst [vmem:[%s297 + $0x118] sm:$0xff] %v3938
        %4046 = vst [vmem:[%s297 + $0x120] sm:$0xff] %v3942
        %4047 = vst [vmem:[%s297 + $0x128] sm:$0xff] %v3944
        %4048 = vst [vmem:[%s297 + $0x130] sm:$0xff] %v3946
        %4049 = vst [vmem:[%s297 + $0x138] sm:$0xff] %v3948
        %4050 = vst [vmem:[%s297 + $0x140] sm:$0xff] %v3952
        %4051 = vst [vmem:[%s297 + $0x148] sm:$0xff] %v3954
        %4052 = vst [vmem:[%s297 + $0x150] sm:$0xff] %v3956
        %4053 = vst [vmem:[%s297 + $0x158] sm:$0xff] %v3958
        %4054 = vst [vmem:[%s297 + $0x160] sm:$0xff] %v3962
        %4055 = vst [vmem:[%s297 + $0x168] sm:$0xff] %v3964
        %4056 = vst [vmem:[%s297 + $0x170] sm:$0xff] %v3966
        %4057 = vst [vmem:[%s297 + $0x178] sm:$0xff] %v3968
        %4058 = vst [vmem:[%s297 + $0x180] sm:$0xff] %v3972
        %4059 = vst [vmem:[%s297 + $0x188] sm:$0xff] %v3974
        %4060 = vst [vmem:[%s297 + $0x190] sm:$0xff] %v3976
        %4061 = vst [vmem:[%s297 + $0x198] sm:$0xff] %v3978
        %4062 = vst [vmem:[%s297 + $0x1a0] sm:$0xff] %v3982
        %4063 = vst [vmem:[%s297 + $0x1a8] sm:$0xff] %v3984
        %4064 = vst [vmem:[%s297 + $0x1b0] sm:$0xff] %v3986
        %4065 = vst [vmem:[%s297 + $0x1b8] sm:$0xff] %v3988
        %4066 = vst [vmem:[%s297 + $0x1c0] sm:$0xff] %v3992
        %4067 = vst [vmem:[%s297 + $0x1c8] sm:$0xff] %v3994
        %4068 = vst [vmem:[%s297 + $0x1d0] sm:$0xff] %v3996
        %4069 = vst [vmem:[%s297 + $0x1d8] sm:$0xff] %v3998
        %4070 = vst [vmem:[%s297 + $0x1e0] sm:$0xff] %v4002
        %4071 = vst [vmem:[%s297 + $0x1e8] sm:$0xff] %v4004
        %4072 = vst [vmem:[%s297 + $0x1f0] sm:$0xff] %v4006
        %4073 = vst [vmem:[%s297 + $0x1f8] sm:$0xff] %v4008
        %s4074 = sand.u32 %s142, 1
        %s4075 = scalar_lea.sflag [#allocation4], %s4074
        %s4076 = sand.u32 %s142, 1
        %s4077 = smul.addr %s4076, 512
        %s4078 = scalar_lea.vmem [#allocation11], %s4077
        // Predicated region
        $region61: #{tpu_custom_call.1} parent=39 // pred_check
          %p4079 = pneg %p152
        $region62: #{tpu_custom_call.1} parent=39 // pred_check_branch
          %4081 = sbr.rel (%p4079) target = $region64
        $region63: #{tpu_custom_call.1} parent=39 // pred_region
          %s4082 = smul.u32 32, %s24
          %s4084 = ssub.s32 8192, 8192
          %4085 = vsyncadd %s4075, %s4084
          %s4086 = smul.addr %s4082, 2
          %s4087 = smul.addr %s4086, 128
          %s4088 = scalar_lea.hbm %s5, %s4087
          %s4089 = sshll.u32 %s4078, 4
          %s4090 = int_to_ptr.vmem [resolvable:$true] %s4089
          %4095 = dma.vmem_to_hbm [thread:$0]  %s4090, 8192, %s4088, %s4075, 256, 256, 16
        $region64: #{tpu_custom_call.1} parent=39 // pred_fallthru
          _
      $region40: #{tpu_custom_call.1} parent=5 // pred_fallthru
        _
      %p4096 = scmp.le.s32.totalorder 2, %s19
      // Predicated region
      $region65: #{tpu_custom_call.1} parent=5 // pred_check
        %p4097 = pneg %p4096
      $region66: #{tpu_custom_call.1} parent=5 // pred_check_branch
        %4099 = sbr.rel (%p4097) target = $region68
      $region67: #{tpu_custom_call.1} parent=5 // pred_region
        %s4100 = ssub.s32 %s19, 2
        // Predicated region
        $region69: #{tpu_custom_call.1} parent=67 // pred_check
          %p4101 = pneg %p158
        $region70: #{tpu_custom_call.1} parent=67 // pred_check_branch
          %4103 = sbr.rel (%p4101) target = $region72
        $region71: #{tpu_custom_call.1} parent=67 // pred_region
          %s4104 = sand.u32 %s143, 1
          %s4105 = scalar_lea.sflag [#allocation4], %s4104
          %s4106 = sand.u32 %s143, 1
          %s4107 = smul.addr %s4106, 512
          %s4108 = scalar_lea.vmem [#allocation11], %s4107
          %4109 = dma.done %s4105, 8192
        $region72: #{tpu_custom_call.1} parent=67 // pred_fallthru
          _
      $region68: #{tpu_custom_call.1} parent=5 // pred_fallthru
        _
    $region6: #{tpu_custom_call.1} parent=1 // loop_footer
      %s23 = sadd.s32 1, %s19
    $region7: #{tpu_custom_call.1} parent=1 // loop_footer_branch
      %18 = sbr.rel target = $region3
    $region8: #{tpu_custom_call.1} parent=1 // loop_exit
      _
    %4110 = vsyncpa [#allocation3], 1
    %s4111 = scalar_lea.sflag [#allocation3], 1
    %4112 = vsyncpa %s4111, 1
    %4113 = vsyncpa [#allocation6], 1
    %4114 = vsyncpa [#allocation9], 1
    %4115 = vsyncpa [#allocation4], 1
    %s4116 = scalar_lea.sflag [#allocation4], 1
    %4117 = vsyncpa %s4116, 1

</llo_original>
